<compile_context>
chip_gen: v5e
topology: v5e:2x2
jax: 0.10.0
libtpu: 0.0.40
codegen_flags: <defaults>
</compile_context>

<pallas_src>
import math
import functools
import numpy as np

import jax
import jax.numpy as jnp
from jax import lax
from jax.experimental import pallas as pl
from jax.experimental.pallas import tpu as pltpu


def _ceil_div(a, b):
    return -(-a // b)


@functools.lru_cache(maxsize=None)
def _vmem_limit():
    # ~108 MiB on v5e/v6e (128 MiB phys), ~44 MiB on v7x (64 MiB phys).
    try:
        cap = int(pltpu.get_tpu_info().vmem_capacity_bytes)
        return int(max(32 << 20, min(cap - (20 << 20), 112 << 20)))
    except Exception:
        return 48 << 20


# ----------------------------------------------------------------------------
# In-kernel math helpers
# ----------------------------------------------------------------------------
def _erf(x):
    # Rational approximation of erf (Eigen/XLA f32 form) -- mul/add only plus a
    # single reciprocal pushed to the EUP.
    x = jnp.clip(x, -4.0, 4.0)
    z = x * x
    alpha = (-2.72614225801306e-10, 2.77068142495902e-08, -2.10102402082508e-06,
             -5.69250639462346e-05, -7.34990630326855e-04, -2.95459980854025e-03,
             -1.60960333262415e-02)
    beta = (-1.45660718464996e-05, -2.13374055278905e-04, -1.68282697438203e-03,
            -7.37332916720468e-03, -1.42647390514189e-02)
    num = jnp.full_like(z, alpha[0])
    for a in alpha[1:]:
        num = num * z + a
    num = num * x
    den = jnp.full_like(z, beta[0])
    for b in beta[1:]:
        den = den * z + b
    return num * pl.reciprocal(den, approx=True)


def _gelu_exact(x):
    # torch nn.GELU() default (erf-based)
    return 0.5 * x * (1.0 + _erf(x * (1.0 / math.sqrt(2.0))))


def _layernorm(x, g, b, eps):
    mu = jnp.mean(x, axis=-1, keepdims=True)
    var = jnp.mean((x - mu) ** 2, axis=-1, keepdims=True)
    return (x - mu) * lax.rsqrt(var + eps) * g + b


# ----------------------------------------------------------------------------
# Pallas kernel: patch embed (linear + bias + sinusoid pos-embed add)
# ----------------------------------------------------------------------------
def _patch_embed_kernel(x_ref, w_ref, b_ref, pos_ref, o_ref):
    bt, tn, K = x_ref.shape
    D = w_ref.shape[1]
    x2 = x_ref[...].reshape(bt * tn, K).astype(jnp.bfloat16)
    y = jnp.dot(x2, w_ref[...], preferred_element_type=jnp.float32) + b_ref[...]
    o_ref[...] = y.reshape(bt, tn, D) + pos_ref[...]


def pallas_patch_embed(tokens, w, b, pos, *, bt):
    Bp, Np, K = tokens.shape
    D = w.shape[1]
    tn = Np if Np <= 512 else 512
    grid = (Bp // bt, _ceil_div(Np, tn))
    return pl.pallas_call(
        _patch_embed_kernel,
        grid=grid,
        out_shape=jax.ShapeDtypeStruct((Bp, Np, D), jnp.float32),
        in_specs=[pl.BlockSpec((bt, tn, K), lambda i, j: (i, j, 0)),
                  pl.BlockSpec((K, D), lambda i, j: (0, 0)),
                  pl.BlockSpec((1, D), lambda i, j: (0, 0)),
                  pl.BlockSpec((tn, D), lambda i, j: (j, 0))],
        out_specs=pl.BlockSpec((bt, tn, D), lambda i, j: (i, j, 0)),
        compiler_params=pltpu.CompilerParams(
            dimension_semantics=("parallel", "parallel"),
            vmem_limit_bytes=_vmem_limit()),
    )(tokens, w, b.reshape(1, D), pos)


# ----------------------------------------------------------------------------
# Pallas kernel: LayerNorm + linear (encoder_to_decoder, decoder head)
# ----------------------------------------------------------------------------
def _norm_linear_kernel(x_ref, g_ref, bt_ref, w_ref, b_ref, o_ref, *, eps):
    xn = _layernorm(x_ref[...], g_ref[...], bt_ref[...], eps)
    o_ref[...] = (jnp.dot(xn.astype(jnp.bfloat16), w_ref[...],
                          preferred_element_type=jnp.float32) + b_ref[...])


def pallas_norm_linear(x2d, g, bt, w, b=None, eps=1e-5):
    M, K = x2d.shape
    N = w.shape[1]
    if b is None:
        b = jnp.zeros((N,), jnp.float32)
    tm = min(512, M)
    if tm == M and M >= 256 and M % 16 == 0:
        tm = M // 2                       # keep >=2 tiles for megacore balance
    grid = (_ceil_div(M, tm),)
    kernel = functools.partial(_norm_linear_kernel, eps=eps)
    return pl.pallas_call(
        kernel,
        grid=grid,
        out_shape=jax.ShapeDtypeStruct((M, N), jnp.float32),
        in_specs=[pl.BlockSpec((tm, K), lambda i: (i, 0)),
                  pl.BlockSpec((1, K), lambda i: (0, 0)),
                  pl.BlockSpec((1, K), lambda i: (0, 0)),
                  pl.BlockSpec((K, N), lambda i: (0, 0)),
                  pl.BlockSpec((1, N), lambda i: (0, 0))],
        out_specs=pl.BlockSpec((tm, N), lambda i: (i, 0)),
        compiler_params=pltpu.CompilerParams(
            dimension_semantics=("parallel",),
            vmem_limit_bytes=_vmem_limit()),
    )(x2d, g.reshape(1, K), bt.reshape(1, K), w, b.reshape(1, N))


# ----------------------------------------------------------------------------
# Pallas kernel: fused pre-norm transformer block
#   LN1 -> fused QKV -> per-(b,h) softmax(QK^T)V -> merged proj -> +res
#   LN2 -> GELU MLP -> +res
# ----------------------------------------------------------------------------
def _block_kernel(x_ref, g1_ref, b1_ref, wqkv_ref, wpr_ref, bpr_ref,
                  g2_ref, b2_ref, wf1_ref, bf1_ref, wf2_ref, bf2_ref,
                  o_ref, qkv_s, att_s, *, num_heads, eps):
    bt, N, D = x_ref.shape
    H = num_heads
    hd = D // H
    x = x_ref[...].reshape(bt * N, D)                        # (M, D) f32

    # --- LayerNorm1 + fused QKV (lane-dense (M,D)x(D,3D)) --------------------
    xn = _layernorm(x, g1_ref[...], b1_ref[...], eps)
    qkv_s[...] = jnp.dot(xn.astype(jnp.bfloat16), wqkv_ref[...],
                         preferred_element_type=jnp.float32).astype(jnp.bfloat16)

    # --- per (batch element, head) attention; scale already folded into Wq ---
    for b in range(bt):
        r0, r1 = b * N, (b + 1) * N
        for h in range(H):
            c0 = h * hd
            q = qkv_s[r0:r1, c0:c0 + hd]                     # (N, hd) bf16
            k = qkv_s[r0:r1, D + c0:D + c0 + hd]
            v = qkv_s[r0:r1, 2 * D + c0:2 * D + c0 + hd]
            s = lax.dot_general(q, k, (((1,), (1,)), ((), ())),
                                preferred_element_type=jnp.float32)   # (N, N)
            s = s - jnp.max(s, axis=-1, keepdims=True)
            p = jnp.exp(s)
            p = p * pl.reciprocal(jnp.sum(p, axis=-1, keepdims=True), approx=True)
            att_s[r0:r1, c0:c0 + hd] = jnp.dot(
                p.astype(jnp.bfloat16), v, preferred_element_type=jnp.float32)

    # --- merged-head output projection (lane-dense (M,D)x(D,D)) + residual ---
    attn = jnp.dot(att_s[...].astype(jnp.bfloat16), wpr_ref[...],
                   preferred_element_type=jnp.float32) + bpr_ref[...]
    x = x + attn

    # --- LayerNorm2 + GELU MLP + residual ------------------------------------
    xn2 = _layernorm(x, g2_ref[...], b2_ref[...], eps)
    h1 = jnp.dot(xn2.astype(jnp.bfloat16), wf1_ref[...],
                 preferred_element_type=jnp.float32) + bf1_ref[...]
    h1 = _gelu_exact(h1)
    h2 = jnp.dot(h1.astype(jnp.bfloat16), wf2_ref[...],
                 preferred_element_type=jnp.float32) + bf2_ref[...]
    o_ref[...] = (x + h2).reshape(bt, N, D)                  # lane-dense store


def pallas_block(x, p, *, num_heads, bt, eps=1e-5):
    Bp, N, D = x.shape
    hidden = p['w_fc1'].shape[1]
    kernel = functools.partial(_block_kernel, num_heads=num_heads, eps=eps)

    def const(shape):
        n = len(shape)
        return pl.BlockSpec(shape, lambda i, _n=n: (0,) * _n)

    return pl.pallas_call(
        kernel,
        grid=(Bp // bt,),
        out_shape=jax.ShapeDtypeStruct((Bp, N, D), jnp.float32),
        in_specs=[pl.BlockSpec((bt, N, D), lambda i: (i, 0, 0)),
                  const((1, D)), const((1, D)),
                  const((D, 3 * D)),
                  const((D, D)), const((1, D)),
                  const((1, D)), const((1, D)),
                  const((D, hidden)), const((1, hidden)),
                  const((hidden, D)), const((1, D))],
        out_specs=pl.BlockSpec((bt, N, D), lambda i: (i, 0, 0)),
        scratch_shapes=[pltpu.VMEM((bt * N, 3 * D), jnp.bfloat16),
                        pltpu.VMEM((bt * N, D), jnp.float32)],
        compiler_params=pltpu.CompilerParams(
            dimension_semantics=("parallel",),       # megacore-shard over batch
            vmem_limit_bytes=_vmem_limit()),
    )(x, p['ln1_g'], p['ln1_b'], p['w_qkv'], p['w_proj'], p['b_proj'],
      p['ln2_g'], p['ln2_b'], p['w_fc1'], p['b_fc1'], p['w_fc2'], p['b_fc2'])


# ----------------------------------------------------------------------------
# Parameter construction (deterministic, synthetic)
# ----------------------------------------------------------------------------
def sinusoid_table(n_position, d_hid):
    pos = np.arange(n_position)[:, None].astype(np.float64)
    i = np.arange(d_hid)[None, :]
    table = pos / np.power(10000.0, 2 * (i // 2) / d_hid)
    table[:, 0::2] = np.sin(table[:, 0::2])
    table[:, 1::2] = np.cos(table[:, 1::2])
    return jnp.asarray(table, dtype=jnp.float32)             # (n, d)


def init_linear(key, k_in, k_out, scale=0.02, bias=True):
    kw, kb = jax.random.split(key)
    w = jax.random.normal(kw, (k_in, k_out), jnp.float32) * scale
    if bias:
        b = jax.random.normal(kb, (k_out,), jnp.float32) * scale
    else:
        b = jnp.zeros((k_out,), jnp.float32)
    return w, b


def init_block(key, dim, num_heads, mlp_ratio):
    assert dim % num_heads == 0
    hidden = int(dim * mlp_ratio)
    hd = dim // num_heads
    ks = jax.random.split(key, 4)
    wqkv, _ = init_linear(ks[0], dim, 3 * dim, bias=False)    # qkv_bias=False
    wqkv = wqkv.at[:, :dim].multiply(hd ** -0.5)              # fold attn scale
    w_proj, b_proj = init_linear(ks[1], dim, dim)
    w_fc1, b_fc1 = init_linear(ks[2], dim, hidden)
    w_fc2, b_fc2 = init_linear(ks[3], hidden, dim)
    return dict(
        ln1_g=jnp.ones((1, dim), jnp.float32), ln1_b=jnp.zeros((1, dim), jnp.float32),
        w_qkv=wqkv.astype(jnp.bfloat16),
        w_proj=w_proj.astype(jnp.bfloat16), b_proj=b_proj.reshape(1, dim),
        ln2_g=jnp.ones((1, dim), jnp.float32), ln2_b=jnp.zeros((1, dim), jnp.float32),
        w_fc1=w_fc1.astype(jnp.bfloat16), b_fc1=b_fc1.reshape(1, hidden),
        w_fc2=w_fc2.astype(jnp.bfloat16), b_fc2=b_fc2.reshape(1, dim))


def init_params(key, cfg):
    C, tt = cfg['in_chans'], cfg['tubelet']
    px, py, pz = cfg['patch_size']
    in_dim = C * tt * px * py * pz          # PatchEmbed3D.proj input
    out_dim = in_dim                        # decoder head output
    De, Dd = cfg['enc_dim'], cfg['dec_dim']
    nkeys = 3 + cfg['enc_depth'] + cfg['dec_depth']
    keys = jax.random.split(key, nkeys)
    patch_w, patch_b = init_linear(keys[0], in_dim, De)
    e2d_w, _ = init_linear(keys[1], De, Dd, bias=False)       # encoder_to_decoder
    head_w, head_b = init_linear(keys[2], Dd, out_dim)
    enc_blocks = [init_block(keys[3 + i], De, cfg['enc_heads'], cfg['mlp_ratio'])
                  for i in range(cfg['enc_depth'])]
    dec_blocks = [init_block(keys[3 + cfg['enc_depth'] + i], Dd,
                             cfg['dec_heads'], cfg['mlp_ratio'])
                  for i in range(cfg['dec_depth'])]
    Np = ((cfg['num_frames'] // tt)
          * (cfg['img_size'][0] // px)
          * (cfg['img_size'][1] // py)
          * (cfg['img_size'][2] // pz))
    return dict(
        patch_w=patch_w.astype(jnp.bfloat16), patch_b=patch_b,
        pos_embed=sinusoid_table(Np, De),
        enc_blocks=enc_blocks,
        enc_norm_g=jnp.ones((De,), jnp.float32), enc_norm_b=jnp.zeros((De,), jnp.float32),
        e2d_w=e2d_w.astype(jnp.bfloat16),
        dec_blocks=dec_blocks,
        dec_norm_g=jnp.ones((Dd,), jnp.float32), dec_norm_b=jnp.zeros((Dd,), jnp.float32),
        head_w=head_w.astype(jnp.bfloat16), head_b=head_b)


# ----------------------------------------------------------------------------
# Forward pass (PretrainVisionTransformer, i.e. vit_core)
# ----------------------------------------------------------------------------
def vit_core_forward(x, params, cfg, bt=2):
    # x: (T, B, C, X, Y, Z)
    T, B, C, X, Y, Z = x.shape
    # internal normalisation of PretrainVisionTransformer.forward
    mean = jnp.mean(x, axis=(0, -3, -2, -1), keepdims=True)
    std = jnp.std(x, axis=(0, -3, -2, -1), ddof=1, keepdims=True) + 1e-7
    xn = (x - mean) / std
    xb = jnp.transpose(xn, (1, 2, 0, 3, 4, 5))               # (B, C, T, X, Y, Z)

    # --- PatchEmbed3D layout glue (no padding: dims divisible by patch size) --
    px, py, pz = cfg['patch_size']
    tt = cfg['tubelet']
    nt, nx, ny, nz = T // tt, X // px, Y // py, Z // pz
    # permute(0,1,3,4,5,2).contiguous().view(B,C*T,X,Y,Z).view(B,C,T,X,Y,Z)
    xe = jnp.transpose(xb, (0, 1, 3, 4, 5, 2)).reshape(B, C, T, X, Y, Z)
    # 'b c (t tt) (x px) (y py) (z pz) -> b (t x y z) (tt px py pz c)'
    xe = xe.reshape(B, C, nt, tt, nx, px, ny, py, nz, pz)
    xe = jnp.transpose(xe, (0, 2, 4, 6, 8, 3, 5, 7, 9, 1))
    Np = nt * nx * ny * nz
    in_dim = tt * px * py * pz * C
    tokens = xe.reshape(B, Np, in_dim)

    # pad batch so the per-block parallel grid is even (v7x megacore balance)
    gb = _ceil_div(B, bt)
    if gb > 1 and gb % 2 == 1:
        gb += 1
    Bp = gb * bt
    if Bp != B:
        tokens = jnp.pad(tokens, ((0, Bp - B), (0, 0), (0, 0)))

    # --- patch embed (+bias +pos embed) ---------------------------------------
    h = pallas_patch_embed(tokens, params['patch_w'], params['patch_b'],
                           params['pos_embed'], bt=bt)

    # --- encoder blocks -------------------------------------------------------
    for blk in params['enc_blocks']:
        h = pallas_block(h, blk, num_heads=cfg['enc_heads'], bt=bt)
    De, Dd = cfg['enc_dim'], cfg['dec_dim']
    # encoder final norm fused with encoder_to_decoder (no bias)
    h = pallas_norm_linear(h.reshape(Bp * Np, De),
                           params['enc_norm_g'], params['enc_norm_b'],
                           params['e2d_w'], None).reshape(Bp, Np, Dd)

    # --- decoder blocks + (norm, head) ----------------------------------------
    for blk in params['dec_blocks']:
        h = pallas_block(h, blk, num_heads=cfg['dec_heads'], bt=bt)
    out_dim = C * tt * px * py * pz
    y = pallas_norm_linear(h.reshape(Bp * Np, Dd),
                           params['dec_norm_g'], params['dec_norm_b'],
                           params['head_w'], params['head_b'])
    y = y.reshape(Bp, Np, out_dim)[:B]                        # drop pad rows

    # 'b (t x y z) (tt px py pz c) -> b c (t tt) (x px) (y py) (z pz)'
    y = y.reshape(B, nt, nx, ny, nz, tt, px, py, pz, C)
    y = jnp.transpose(y, (0, 9, 1, 5, 2, 6, 3, 7, 4, 8))
    y = y.reshape(B, C, T, X, Y, Z)

    y_hat = y[:, :, -1] * jnp.squeeze(std, 0) + jnp.squeeze(mean, 0)
    return y_hat                                              # (B, C, X, Y, Z)


# ----------------------------------------------------------------------------
# Transformer3DAux.forward
# ----------------------------------------------------------------------------
def transformer3d_aux_forward(x, grid, x_aux, grid_aux, params, cfg):
    # x: (B, T, C, X, Y, Z); x_aux: (B, N, T, C, X, Y, Z); grids unused by forward.
    del grid, grid_aux
    B = x.shape[0]
    Ba, Na, Ta, Ca, Xa, Ya, Za = x_aux.shape

    x_p = jnp.transpose(x, (1, 0, 2, 3, 4, 5))                      # (T, B, ...)
    x_a = jnp.transpose(x_aux.reshape(Ba * Na, Ta, Ca, Xa, Ya, Za),
                        (1, 0, 2, 3, 4, 5))                         # (T, B*Na, ...)

    def normalise(xt):
        mean = jnp.mean(xt, axis=(0, -3, -2, -1), keepdims=True)
        std = jnp.std(xt, axis=(0, -3, -2, -1), ddof=1, keepdims=True) + 1e-7
        return (xt - mean) / std, jnp.squeeze(std, 0), jnp.squeeze(mean, 0)

    xp_n, std_p, mean_p = normalise(x_p)
    xa_n, std_a, mean_a = normalise(x_a)

    # the vit core is independent per batch element, so the primary and aux
    # branches are concatenated into ONE pass (bigger parallel grid, amortised
    # weight streaming; batch is padded to an even grid inside vit_core).
    x_all = jnp.concatenate([xp_n, xa_n], axis=1)                   # (T, B+B*Na, ...)
    y_all = vit_core_forward(x_all, params, cfg)                    # (B+B*Na, C, X, Y, Z)

    y_p = y_all[:B] * std_p + mean_p
    y_a = y_all[B:] * std_a + mean_a
    out_primary = jnp.transpose(y_p, (0, 2, 3, 4, 1))[:, :, :, :, None, :]
    out_aux = jnp.transpose(y_a, (0, 2, 3, 4, 1))[:, :, :, :, None, :]
    return out_primary, out_aux


# ----------------------------------------------------------------------------
if __name__ == "__main__":
    # Small but structurally faithful config (depths/heads reduced from the
    # 12/8-layer defaults; mlp_ratio, qkv_bias=False, LayerNorm eps, sinusoid
    # pos-emb and tubelet patching preserved).  D=128 keeps every feature /
    # output store lane-dense.
    cfg = dict(img_size=(16, 16, 8), patch_size=(4, 4, 4), tubelet=2,
               num_frames=4, in_chans=2,
               enc_dim=128, enc_depth=2, enc_heads=4,
               dec_dim=128, dec_depth=2, dec_heads=4,
               mlp_ratio=4.0)

    key = jax.random.PRNGKey(0)
    kp, kx, ka = jax.random.split(key, 3)
    params = init_params(kp, cfg)

    B, T, C = 1, cfg['num_frames'], cfg['in_chans']
    X, Y, Z = cfg['img_size']
    Naux = 2
    x = jax.random.normal(kx, (B, T, C, X, Y, Z), jnp.float32)
    x_aux = jax.random.normal(ka, (B, Naux, T, C, X, Y, Z), jnp.float32)
    grid = jnp.zeros((B, X, Y, Z, 3), jnp.float32)          # unused by forward
    grid_aux = jnp.zeros((B, Naux, X, Y, Z, 3), jnp.float32)

    fwd = jax.jit(functools.partial(transformer3d_aux_forward,
                                    params=params, cfg=cfg))
    out_primary, out_aux = fwd(x, grid, x_aux, grid_aux)
    jax.block_until_ready((out_primary, out_aux))

    assert out_primary.shape == (B, X, Y, Z, 1, C), out_primary.shape
    assert out_aux.shape == (B * Naux, X, Y, Z, 1, C), out_aux.shape
    assert bool(jnp.all(jnp.isfinite(out_primary))) and bool(jnp.all(jnp.isfinite(out_aux)))
    print("KERNEL_OK")
</pallas_src>

<mosaic_0001>
module attributes {stable_mosaic.version = 11 : i64} {
  func.func @_patch_embed_kernel(%arg0: i32, %arg1: i32, %arg2: memref<2x64x256xf32, #tpu.memory_space<vmem>>, %arg3: memref<256x128xbf16, #tpu.memory_space<vmem>>, %arg4: memref<1x128xf32, #tpu.memory_space<vmem>>, %arg5: memref<64x128xf32, #tpu.memory_space<vmem>>, %arg6: memref<2x64x128xf32, #tpu.memory_space<vmem>>) attributes {dimension_semantics = [#tpu.dimension_semantics<parallel>, #tpu.dimension_semantics<parallel>], iteration_bounds = array<i64: 2, 1>, scalar_prefetch = 0 : i64, scratch_operands = 0 : i64, tpu.core_type = #tpu.core_type<tc>, window_params = [{transform_indices = @transform_0, window_bounds = array<i64: 2, 64, 256>}, {pipeline_mode = #tpu.pipeline_mode<synchronous>, transform_indices = @transform_1, window_bounds = array<i64: 256, 128>}, {pipeline_mode = #tpu.pipeline_mode<synchronous>, transform_indices = @transform_2, window_bounds = array<i64: 1, 128>}, {transform_indices = @transform_3, window_bounds = array<i64: 64, 128>}, {transform_indices = @transform_4, window_bounds = array<i64: 2, 64, 128>}]} {
    %c0 = arith.constant 0 : index
    %c0_0 = arith.constant 0 : index
    %c0_1 = arith.constant 0 : index
    %0 = vector.load %arg2[%c0, %c0_0, %c0_1] : memref<2x64x256xf32, #tpu.memory_space<vmem>>, vector<2x64x256xf32>
    %1 = vector.shape_cast %0 : vector<2x64x256xf32> to vector<128x256xf32>
    %2 = arith.truncf %1 : vector<128x256xf32> to vector<128x256xbf16>
    %c0_2 = arith.constant 0 : index
    %c0_3 = arith.constant 0 : index
    %3 = vector.load %arg3[%c0_2, %c0_3] : memref<256x128xbf16, #tpu.memory_space<vmem>>, vector<256x128xbf16>
    %cst = arith.constant dense<0.000000e+00> : vector<128x128xf32>
    %4 = tpu.matmul %2, %3, %cst {dimension_numbers = #tpu.dot_dimension_numbers<[1], [0], [0], [1], [0, 0, 1, 1], [], []>} : vector<128x256xbf16>, vector<256x128xbf16>, vector<128x128xf32> -> vector<128x128xf32>
    %c0_4 = arith.constant 0 : index
    %c0_5 = arith.constant 0 : index
    %5 = vector.load %arg4[%c0_4, %c0_5] : memref<1x128xf32, #tpu.memory_space<vmem>>, vector<1x128xf32>
    %6 = vector.broadcast %5 : vector<1x128xf32> to vector<128x128xf32>
    %7 = arith.addf %4, %6 : vector<128x128xf32>
    %8 = vector.shape_cast %7 : vector<128x128xf32> to vector<2x64x128xf32>
    %c0_6 = arith.constant 0 : index
    %c0_7 = arith.constant 0 : index
    %9 = vector.load %arg5[%c0_6, %c0_7] : memref<64x128xf32, #tpu.memory_space<vmem>>, vector<64x128xf32>
    %10 = vector.shape_cast %9 : vector<64x128xf32> to vector<1x64x128xf32>
    %11 = vector.broadcast %10 : vector<1x64x128xf32> to vector<2x64x128xf32>
    %12 = arith.addf %8, %11 : vector<2x64x128xf32>
    %c0_8 = arith.constant 0 : index
    %c0_9 = arith.constant 0 : index
    %c0_10 = arith.constant 0 : index
    %13 = vector.load %arg6[%c0_8, %c0_9, %c0_10] : memref<2x64x128xf32, #tpu.memory_space<vmem>>, vector<2x64x128xf32>
    tpu.vector_store %arg6[%c0_8, %c0_9, %c0_10], %12 {strides = array<i32>} : memref<2x64x128xf32, #tpu.memory_space<vmem>>, vector<2x64x128xf32>,
    return
  }
  func.func @transform_0(%arg0: i32, %arg1: i32) -> (i32, i32, i32) {
    %c0_i32 = arith.constant 0 : i32
    %c0_i32_0 = arith.constant 0 : i32
    return %arg0, %arg1, %c0_i32 : i32, i32, i32
  }
  func.func @transform_1(%arg0: i32, %arg1: i32) -> (i32, i32) {
    %c0_i32 = arith.constant 0 : i32
    %c0_i32_0 = arith.constant 0 : i32
    %c0_i32_1 = arith.constant 0 : i32
    return %c0_i32, %c0_i32_0 : i32, i32
  }
  func.func @transform_2(%arg0: i32, %arg1: i32) -> (i32, i32) {
    %c0_i32 = arith.constant 0 : i32
    %c0_i32_0 = arith.constant 0 : i32
    %c0_i32_1 = arith.constant 0 : i32
    return %c0_i32, %c0_i32_0 : i32, i32
  }
  func.func @transform_3(%arg0: i32, %arg1: i32) -> (i32, i32) {
    %c0_i32 = arith.constant 0 : i32
    %c0_i32_0 = arith.constant 0 : i32
    return %arg1, %c0_i32 : i32, i32
  }
  func.func @transform_4(%arg0: i32, %arg1: i32) -> (i32, i32, i32) {
    %c0_i32 = arith.constant 0 : i32
    %c0_i32_0 = arith.constant 0 : i32
    return %arg0, %arg1, %c0_i32 : i32, i32, i32
  }
}

module attributes {stable_mosaic.version = 11 : i64} {
  func.func @_block_kernel(%arg0: i32, %arg1: memref<2x64x128xf32, #tpu.memory_space<vmem>>, %arg2: memref<1x128xf32, #tpu.memory_space<vmem>>, %arg3: memref<1x128xf32, #tpu.memory_space<vmem>>, %arg4: memref<128x384xbf16, #tpu.memory_space<vmem>>, %arg5: memref<128x128xbf16, #tpu.memory_space<vmem>>, %arg6: memref<1x128xf32, #tpu.memory_space<vmem>>, %arg7: memref<1x128xf32, #tpu.memory_space<vmem>>, %arg8: memref<1x128xf32, #tpu.memory_space<vmem>>, %arg9: memref<128x512xbf16, #tpu.memory_space<vmem>>, %arg10: memref<1x512xf32, #tpu.memory_space<vmem>>, %arg11: memref<512x128xbf16, #tpu.memory_space<vmem>>, %arg12: memref<1x128xf32, #tpu.memory_space<vmem>>, %arg13: memref<2x64x128xf32, #tpu.memory_space<vmem>>, %arg14: memref<128x384xbf16, #tpu.memory_space<vmem>>, %arg15: memref<128x128xf32, #tpu.memory_space<vmem>>) attributes {dimension_semantics = [#tpu.dimension_semantics<parallel>], iteration_bounds = array<i64: 2>, scalar_prefetch = 0 : i64, scratch_operands = 2 : i64, tpu.core_type = #tpu.core_type<tc>, window_params = [{transform_indices = @transform_0, window_bounds = array<i64: 2, 64, 128>}, {pipeline_mode = #tpu.pipeline_mode<synchronous>, transform_indices = @transform_1, window_bounds = array<i64: 1, 128>}, {pipeline_mode = #tpu.pipeline_mode<synchronous>, transform_indices = @transform_2, window_bounds = array<i64: 1, 128>}, {pipeline_mode = #tpu.pipeline_mode<synchronous>, transform_indices = @transform_3, window_bounds = array<i64: 128, 384>}, {pipeline_mode = #tpu.pipeline_mode<synchronous>, transform_indices = @transform_4, window_bounds = array<i64: 128, 128>}, {pipeline_mode = #tpu.pipeline_mode<synchronous>, transform_indices = @transform_5, window_bounds = array<i64: 1, 128>}, {pipeline_mode = #tpu.pipeline_mode<synchronous>, transform_indices = @transform_6, window_bounds = array<i64: 1, 128>}, {pipeline_mode = #tpu.pipeline_mode<synchronous>, transform_indices = @transform_7, window_bounds = array<i64: 1, 128>}, {pipeline_mode = #tpu.pipeline_mode<synchronous>, transform_indices = @transform_8, window_bounds = array<i64: 128, 512>}, {pipeline_mode = #tpu.pipeline_mode<synchronous>, transform_indices = @transform_9, window_bounds = array<i64: 1, 512>}, {pipeline_mode = #tpu.pipeline_mode<synchronous>, transform_indices = @transform_10, window_bounds = array<i64: 512, 128>}, {pipeline_mode = #tpu.pipeline_mode<synchronous>, transform_indices = @transform_11, window_bounds = array<i64: 1, 128>}, {transform_indices = @transform_12, window_bounds = array<i64: 2, 64, 128>}]} {
    %c0 = arith.constant 0 : index
    %c0_0 = arith.constant 0 : index
    %c0_1 = arith.constant 0 : index
    %0 = vector.load %arg1[%c0, %c0_0, %c0_1] : memref<2x64x128xf32, #tpu.memory_space<vmem>>, vector<2x64x128xf32>
    %1 = vector.shape_cast %0 : vector<2x64x128xf32> to vector<128x128xf32>
    %c0_2 = arith.constant 0 : index
    %c0_3 = arith.constant 0 : index
    %2 = vector.load %arg2[%c0_2, %c0_3] : memref<1x128xf32, #tpu.memory_space<vmem>>, vector<1x128xf32>
    %c0_4 = arith.constant 0 : index
    %c0_5 = arith.constant 0 : index
    %3 = vector.load %arg3[%c0_4, %c0_5] : memref<1x128xf32, #tpu.memory_space<vmem>>, vector<1x128xf32>
    %cst = arith.constant dense<0.000000e+00> : vector<128xf32>
    %4 = vector.multi_reduction <add>, %1, %cst [1] : vector<128x128xf32> to vector<128xf32>
    %5 = vector.shape_cast %4 : vector<128xf32> to vector<128x1xf32>
    %cst_6 = arith.constant 1.280000e+02 : f32
    %6 = vector.broadcast %cst_6 : f32 to vector<128x1xf32>
    %7 = arith.divf %5, %6 : vector<128x1xf32>
    %8 = vector.broadcast %7 : vector<128x1xf32> to vector<128x128xf32>
    %9 = arith.subf %1, %8 : vector<128x128xf32>
    %10 = arith.mulf %9, %9 : vector<128x128xf32>
    %cst_7 = arith.constant dense<0.000000e+00> : vector<128xf32>
    %11 = vector.multi_reduction <add>, %10, %cst_7 [1] : vector<128x128xf32> to vector<128xf32>
    %12 = vector.shape_cast %11 : vector<128xf32> to vector<128x1xf32>
    %cst_8 = arith.constant 1.280000e+02 : f32
    %13 = vector.broadcast %cst_8 : f32 to vector<128x1xf32>
    %14 = arith.divf %12, %13 : vector<128x1xf32>
    %15 = vector.broadcast %7 : vector<128x1xf32> to vector<128x128xf32>
    %16 = arith.subf %1, %15 : vector<128x128xf32>
    %cst_9 = arith.constant 9.99999974E-6 : f32
    %17 = vector.broadcast %cst_9 : f32 to vector<128x1xf32>
    %18 = arith.addf %14, %17 : vector<128x1xf32>
    %19 = math.rsqrt %18 : vector<128x1xf32>
    %20 = vector.broadcast %19 : vector<128x1xf32> to vector<128x128xf32>
    %21 = arith.mulf %16, %20 : vector<128x128xf32>
    %22 = vector.broadcast %2 : vector<1x128xf32> to vector<128x128xf32>
    %23 = arith.mulf %21, %22 : vector<128x128xf32>
    %24 = vector.broadcast %3 : vector<1x128xf32> to vector<128x128xf32>
    %25 = arith.addf %23, %24 : vector<128x128xf32>
    %26 = arith.truncf %25 : vector<128x128xf32> to vector<128x128xbf16>
    %c0_10 = arith.constant 0 : index
    %c0_11 = arith.constant 0 : index
    %27 = vector.load %arg4[%c0_10, %c0_11] : memref<128x384xbf16, #tpu.memory_space<vmem>>, vector<128x384xbf16>
    %cst_12 = arith.constant dense<0.000000e+00> : vector<128x384xf32>
    %28 = tpu.matmul %26, %27, %cst_12 {dimension_numbers = #tpu.dot_dimension_numbers<[1], [0], [0], [1], [0, 0, 1, 1], [], []>} : vector<128x128xbf16>, vector<128x384xbf16>, vector<128x384xf32> -> vector<128x384xf32>
    %29 = arith.truncf %28 : vector<128x384xf32> to vector<128x384xbf16>
    %c0_13 = arith.constant 0 : index
    %c0_14 = arith.constant 0 : index
    %30 = vector.load %arg14[%c0_13, %c0_14] : memref<128x384xbf16, #tpu.memory_space<vmem>>, vector<128x384xbf16>
    tpu.vector_store %arg14[%c0_13, %c0_14], %29 {strides = array<i32>} : memref<128x384xbf16, #tpu.memory_space<vmem>>, vector<128x384xbf16>,
    %c0_15 = arith.constant 0 : index
    %c0_16 = arith.constant 0 : index
    %31 = vector.load %arg14[%c0_15, %c0_16] : memref<128x384xbf16, #tpu.memory_space<vmem>>, vector<64x32xbf16>
    %c0_17 = arith.constant 0 : index
    %c128 = arith.constant 128 : index
    %32 = vector.load %arg14[%c0_17, %c128] : memref<128x384xbf16, #tpu.memory_space<vmem>>, vector<64x32xbf16>
    %c0_18 = arith.constant 0 : index
    %c256 = arith.constant 256 : index
    %33 = vector.load %arg14[%c0_18, %c256] : memref<128x384xbf16, #tpu.memory_space<vmem>>, vector<64x32xbf16>
    %cst_19 = arith.constant dense<0.000000e+00> : vector<64x64xf32>
    %34 = tpu.matmul %31, %32, %cst_19 {dimension_numbers = #tpu.dot_dimension_numbers<[1], [1], [0], [0], [0, 0, 1, 0], [], []>} : vector<64x32xbf16>, vector<64x32xbf16>, vector<64x64xf32> -> vector<64x64xf32>
    %cst_20 = arith.constant dense<0xFF800000> : vector<64xf32>
    %35 = vector.multi_reduction <maximumf>, %34, %cst_20 [1] : vector<64x64xf32> to vector<64xf32>
    %36 = vector.shape_cast %35 : vector<64xf32> to vector<64x1xf32>
    %37 = vector.broadcast %36 : vector<64x1xf32> to vector<64x64xf32>
    %38 = arith.subf %34, %37 : vector<64x64xf32>
    %39 = math.exp %38 : vector<64x64xf32>
    %cst_21 = arith.constant dense<0.000000e+00> : vector<64xf32>
    %40 = vector.multi_reduction <add>, %39, %cst_21 [1] : vector<64x64xf32> to vector<64xf32>
    %41 = vector.shape_cast %40 : vector<64xf32> to vector<64x1xf32>
    %42 = tpu.reciprocal %41 {approx = true} : vector<64x1xf32> -> vector<64x1xf32>
    %43 = vector.broadcast %42 : vector<64x1xf32> to vector<64x64xf32>
    %44 = arith.mulf %39, %43 : vector<64x64xf32>
    %45 = arith.truncf %44 : vector<64x64xf32> to vector<64x64xbf16>
    %cst_22 = arith.constant dense<0.000000e+00> : vector<64x32xf32>
    %46 = tpu.matmul %45, %33, %cst_22 {dimension_numbers = #tpu.dot_dimension_numbers<[1], [0], [0], [1], [0, 0, 1, 1], [], []>} : vector<64x64xbf16>, vector<64x32xbf16>, vector<64x32xf32> -> vector<64x32xf32>
    %c0_23 = arith.constant 0 : index
    %c0_24 = arith.constant 0 : index
    %47 = vector.load %arg15[%c0_23, %c0_24] : memref<128x128xf32, #tpu.memory_space<vmem>>, vector<64x32xf32>
    tpu.vector_store %arg15[%c0_23, %c0_24], %46 {strides = array<i32>} : memref<128x128xf32, #tpu.memory_space<vmem>>, vector<64x32xf32>,
    %c0_25 = arith.constant 0 : index
    %c32 = arith.constant 32 : index
    %48 = vector.load %arg14[%c0_25, %c32] : memref<128x384xbf16, #tpu.memory_space<vmem>>, vector<64x32xbf16>
    %c0_26 = arith.constant 0 : index
    %c160 = arith.constant 160 : index
    %49 = vector.load %arg14[%c0_26, %c160] : memref<128x384xbf16, #tpu.memory_space<vmem>>, vector<64x32xbf16>
    %c0_27 = arith.constant 0 : index
    %c288 = arith.constant 288 : index
    %50 = vector.load %arg14[%c0_27, %c288] : memref<128x384xbf16, #tpu.memory_space<vmem>>, vector<64x32xbf16>
    %cst_28 = arith.constant dense<0.000000e+00> : vector<64x64xf32>
    %51 = tpu.matmul %48, %49, %cst_28 {dimension_numbers = #tpu.dot_dimension_numbers<[1], [1], [0], [0], [0, 0, 1, 0], [], []>} : vector<64x32xbf16>, vector<64x32xbf16>, vector<64x64xf32> -> vector<64x64xf32>
    %cst_29 = arith.constant dense<0xFF800000> : vector<64xf32>
    %52 = vector.multi_reduction <maximumf>, %51, %cst_29 [1] : vector<64x64xf32> to vector<64xf32>
    %53 = vector.shape_cast %52 : vector<64xf32> to vector<64x1xf32>
    %54 = vector.broadcast %53 : vector<64x1xf32> to vector<64x64xf32>
    %55 = arith.subf %51, %54 : vector<64x64xf32>
    %56 = math.exp %55 : vector<64x64xf32>
    %cst_30 = arith.constant dense<0.000000e+00> : vector<64xf32>
    %57 = vector.multi_reduction <add>, %56, %cst_30 [1] : vector<64x64xf32> to vector<64xf32>
    %58 = vector.shape_cast %57 : vector<64xf32> to vector<64x1xf32>
    %59 = tpu.reciprocal %58 {approx = true} : vector<64x1xf32> -> vector<64x1xf32>
    %60 = vector.broadcast %59 : vector<64x1xf32> to vector<64x64xf32>
    %61 = arith.mulf %56, %60 : vector<64x64xf32>
    %62 = arith.truncf %61 : vector<64x64xf32> to vector<64x64xbf16>
    %cst_31 = arith.constant dense<0.000000e+00> : vector<64x32xf32>
    %63 = tpu.matmul %62, %50, %cst_31 {dimension_numbers = #tpu.dot_dimension_numbers<[1], [0], [0], [1], [0, 0, 1, 1], [], []>} : vector<64x64xbf16>, vector<64x32xbf16>, vector<64x32xf32> -> vector<64x32xf32>
    %c0_32 = arith.constant 0 : index
    %c32_33 = arith.constant 32 : index
    %64 = vector.load %arg15[%c0_32, %c32_33] : memref<128x128xf32, #tpu.memory_space<vmem>>, vector<64x32xf32>
    tpu.vector_store %arg15[%c0_32, %c32_33], %63 {strides = array<i32>} : memref<128x128xf32, #tpu.memory_space<vmem>>, vector<64x32xf32>,
    %c0_34 = arith.constant 0 : index
    %c64 = arith.constant 64 : index
    %65 = vector.load %arg14[%c0_34, %c64] : memref<128x384xbf16, #tpu.memory_space<vmem>>, vector<64x32xbf16>
    %c0_35 = arith.constant 0 : index
    %c192 = arith.constant 192 : index
    %66 = vector.load %arg14[%c0_35, %c192] : memref<128x384xbf16, #tpu.memory_space<vmem>>, vector<64x32xbf16>
    %c0_36 = arith.constant 0 : index
    %c320 = arith.constant 320 : index
    %67 = vector.load %arg14[%c0_36, %c320] : memref<128x384xbf16, #tpu.memory_space<vmem>>, vector<64x32xbf16>
    %cst_37 = arith.constant dense<0.000000e+00> : vector<64x64xf32>
    %68 = tpu.matmul %65, %66, %cst_37 {dimension_numbers = #tpu.dot_dimension_numbers<[1], [1], [0], [0], [0, 0, 1, 0], [], []>} : vector<64x32xbf16>, vector<64x32xbf16>, vector<64x64xf32> -> vector<64x64xf32>
    %cst_38 = arith.constant dense<0xFF800000> : vector<64xf32>
    %69 = vector.multi_reduction <maximumf>, %68, %cst_38 [1] : vector<64x64xf32> to vector<64xf32>
    %70 = vector.shape_cast %69 : vector<64xf32> to vector<64x1xf32>
    %71 = vector.broadcast %70 : vector<64x1xf32> to vector<64x64xf32>
    %72 = arith.subf %68, %71 : vector<64x64xf32>
    %73 = math.exp %72 : vector<64x64xf32>
    %cst_39 = arith.constant dense<0.000000e+00> : vector<64xf32>
    %74 = vector.multi_reduction <add>, %73, %cst_39 [1] : vector<64x64xf32> to vector<64xf32>
    %75 = vector.shape_cast %74 : vector<64xf32> to vector<64x1xf32>
    %76 = tpu.reciprocal %75 {approx = true} : vector<64x1xf32> -> vector<64x1xf32>
    %77 = vector.broadcast %76 : vector<64x1xf32> to vector<64x64xf32>
    %78 = arith.mulf %73, %77 : vector<64x64xf32>
    %79 = arith.truncf %78 : vector<64x64xf32> to vector<64x64xbf16>
    %cst_40 = arith.constant dense<0.000000e+00> : vector<64x32xf32>
    %80 = tpu.matmul %79, %67, %cst_40 {dimension_numbers = #tpu.dot_dimension_numbers<[1], [0], [0], [1], [0, 0, 1, 1], [], []>} : vector<64x64xbf16>, vector<64x32xbf16>, vector<64x32xf32> -> vector<64x32xf32>
    %c0_41 = arith.constant 0 : index
    %c64_42 = arith.constant 64 : index
    %81 = vector.load %arg15[%c0_41, %c64_42] : memref<128x128xf32, #tpu.memory_space<vmem>>, vector<64x32xf32>
    tpu.vector_store %arg15[%c0_41, %c64_42], %80 {strides = array<i32>} : memref<128x128xf32, #tpu.memory_space<vmem>>, vector<64x32xf32>,
    %c0_43 = arith.constant 0 : index
    %c96 = arith.constant 96 : index
    %82 = vector.load %arg14[%c0_43, %c96] : memref<128x384xbf16, #tpu.memory_space<vmem>>, vector<64x32xbf16>
    %c0_44 = arith.constant 0 : index
    %c224 = arith.constant 224 : index
    %83 = vector.load %arg14[%c0_44, %c224] : memref<128x384xbf16, #tpu.memory_space<vmem>>, vector<64x32xbf16>
    %c0_45 = arith.constant 0 : index
    %c352 = arith.constant 352 : index
    %84 = vector.load %arg14[%c0_45, %c352] : memref<128x384xbf16, #tpu.memory_space<vmem>>, vector<64x32xbf16>
    %cst_46 = arith.constant dense<0.000000e+00> : vector<64x64xf32>
    %85 = tpu.matmul %82, %83, %cst_46 {dimension_numbers = #tpu.dot_dimension_numbers<[1], [1], [0], [0], [0, 0, 1, 0], [], []>} : vector<64x32xbf16>, vector<64x32xbf16>, vector<64x64xf32> -> vector<64x64xf32>
    %cst_47 = arith.constant dense<0xFF800000> : vector<64xf32>
    %86 = vector.multi_reduction <maximumf>, %85, %cst_47 [1] : vector<64x64xf32> to vector<64xf32>
    %87 = vector.shape_cast %86 : vector<64xf32> to vector<64x1xf32>
    %88 = vector.broadcast %87 : vector<64x1xf32> to vector<64x64xf32>
    %89 = arith.subf %85, %88 : vector<64x64xf32>
    %90 = math.exp %89 : vector<64x64xf32>
    %cst_48 = arith.constant dense<0.000000e+00> : vector<64xf32>
    %91 = vector.multi_reduction <add>, %90, %cst_48 [1] : vector<64x64xf32> to vector<64xf32>
    %92 = vector.shape_cast %91 : vector<64xf32> to vector<64x1xf32>
    %93 = tpu.reciprocal %92 {approx = true} : vector<64x1xf32> -> vector<64x1xf32>
    %94 = vector.broadcast %93 : vector<64x1xf32> to vector<64x64xf32>
    %95 = arith.mulf %90, %94 : vector<64x64xf32>
    %96 = arith.truncf %95 : vector<64x64xf32> to vector<64x64xbf16>
    %cst_49 = arith.constant dense<0.000000e+00> : vector<64x32xf32>
    %97 = tpu.matmul %96, %84, %cst_49 {dimension_numbers = #tpu.dot_dimension_numbers<[1], [0], [0], [1], [0, 0, 1, 1], [], []>} : vector<64x64xbf16>, vector<64x32xbf16>, vector<64x32xf32> -> vector<64x32xf32>
    %c0_50 = arith.constant 0 : index
    %c96_51 = arith.constant 96 : index
    %98 = vector.load %arg15[%c0_50, %c96_51] : memref<128x128xf32, #tpu.memory_space<vmem>>, vector<64x32xf32>
    tpu.vector_store %arg15[%c0_50, %c96_51], %97 {strides = array<i32>} : memref<128x128xf32, #tpu.memory_space<vmem>>, vector<64x32xf32>,
    %c64_52 = arith.constant 64 : index
    %c0_53 = arith.constant 0 : index
    %99 = vector.load %arg14[%c64_52, %c0_53] : memref<128x384xbf16, #tpu.memory_space<vmem>>, vector<64x32xbf16>
    %c64_54 = arith.constant 64 : index
    %c128_55 = arith.constant 128 : index
    %100 = vector.load %arg14[%c64_54, %c128_55] : memref<128x384xbf16, #tpu.memory_space<vmem>>, vector<64x32xbf16>
    %c64_56 = arith.constant 64 : index
    %c256_57 = arith.constant 256 : index
    %101 = vector.load %arg14[%c64_56, %c256_57] : memref<128x384xbf16, #tpu.memory_space<vmem>>, vector<64x32xbf16>
    %cst_58 = arith.constant dense<0.000000e+00> : vector<64x64xf32>
    %102 = tpu.matmul %99, %100, %cst_58 {dimension_numbers = #tpu.dot_dimension_numbers<[1], [1], [0], [0], [0, 0, 1, 0], [], []>} : vector<64x32xbf16>, vector<64x32xbf16>, vector<64x64xf32> -> vector<64x64xf32>
    %cst_59 = arith.constant dense<0xFF800000> : vector<64xf32>
    %103 = vector.multi_reduction <maximumf>, %102, %cst_59 [1] : vector<64x64xf32> to vector<64xf32>
    %104 = vector.shape_cast %103 : vector<64xf32> to vector<64x1xf32>
    %105 = vector.broadcast %104 : vector<64x1xf32> to vector<64x64xf32>
    %106 = arith.subf %102, %105 : vector<64x64xf32>
    %107 = math.exp %106 : vector<64x64xf32>
    %cst_60 = arith.constant dense<0.000000e+00> : vector<64xf32>
    %108 = vector.multi_reduction <add>, %107, %cst_60 [1] : vector<64x64xf32> to vector<64xf32>
    %109 = vector.shape_cast %108 : vector<64xf32> to vector<64x1xf32>
    %110 = tpu.reciprocal %109 {approx = true} : vector<64x1xf32> -> vector<64x1xf32>
    %111 = vector.broadcast %110 : vector<64x1xf32> to vector<64x64xf32>
    %112 = arith.mulf %107, %111 : vector<64x64xf32>
    %113 = arith.truncf %112 : vector<64x64xf32> to vector<64x64xbf16>
    %cst_61 = arith.constant dense<0.000000e+00> : vector<64x32xf32>
    %114 = tpu.matmul %113, %101, %cst_61 {dimension_numbers = #tpu.dot_dimension_numbers<[1], [0], [0], [1], [0, 0, 1, 1], [], []>} : vector<64x64xbf16>, vector<64x32xbf16>, vector<64x32xf32> -> vector<64x32xf32>
    %c64_62 = arith.constant 64 : index
    %c0_63 = arith.constant 0 : index
    %115 = vector.load %arg15[%c64_62, %c0_63] : memref<128x128xf32, #tpu.memory_space<vmem>>, vector<64x32xf32>
    tpu.vector_store %arg15[%c64_62, %c0_63], %114 {strides = array<i32>} : memref<128x128xf32, #tpu.memory_space<vmem>>, vector<64x32xf32>,
    %c64_64 = arith.constant 64 : index
    %c32_65 = arith.constant 32 : index
    %116 = vector.load %arg14[%c64_64, %c32_65] : memref<128x384xbf16, #tpu.memory_space<vmem>>, vector<64x32xbf16>
    %c64_66 = arith.constant 64 : index
    %c160_67 = arith.constant 160 : index
    %117 = vector.load %arg14[%c64_66, %c160_67] : memref<128x384xbf16, #tpu.memory_space<vmem>>, vector<64x32xbf16>
    %c64_68 = arith.constant 64 : index
    %c288_69 = arith.constant 288 : index
    %118 = vector.load %arg14[%c64_68, %c288_69] : memref<128x384xbf16, #tpu.memory_space<vmem>>, vector<64x32xbf16>
    %cst_70 = arith.constant dense<0.000000e+00> : vector<64x64xf32>
    %119 = tpu.matmul %116, %117, %cst_70 {dimension_numbers = #tpu.dot_dimension_numbers<[1], [1], [0], [0], [0, 0, 1, 0], [], []>} : vector<64x32xbf16>, vector<64x32xbf16>, vector<64x64xf32> -> vector<64x64xf32>
    %cst_71 = arith.constant dense<0xFF800000> : vector<64xf32>
    %120 = vector.multi_reduction <maximumf>, %119, %cst_71 [1] : vector<64x64xf32> to vector<64xf32>
    %121 = vector.shape_cast %120 : vector<64xf32> to vector<64x1xf32>
    %122 = vector.broadcast %121 : vector<64x1xf32> to vector<64x64xf32>
    %123 = arith.subf %119, %122 : vector<64x64xf32>
    %124 = math.exp %123 : vector<64x64xf32>
    %cst_72 = arith.constant dense<0.000000e+00> : vector<64xf32>
    %125 = vector.multi_reduction <add>, %124, %cst_72 [1] : vector<64x64xf32> to vector<64xf32>
    %126 = vector.shape_cast %125 : vector<64xf32> to vector<64x1xf32>
    %127 = tpu.reciprocal %126 {approx = true} : vector<64x1xf32> -> vector<64x1xf32>
    %128 = vector.broadcast %127 : vector<64x1xf32> to vector<64x64xf32>
    %129 = arith.mulf %124, %128 : vector<64x64xf32>
    %130 = arith.truncf %129 : vector<64x64xf32> to vector<64x64xbf16>
    %cst_73 = arith.constant dense<0.000000e+00> : vector<64x32xf32>
    %131 = tpu.matmul %130, %118, %cst_73 {dimension_numbers = #tpu.dot_dimension_numbers<[1], [0], [0], [1], [0, 0, 1, 1], [], []>} : vector<64x64xbf16>, vector<64x32xbf16>, vector<64x32xf32> -> vector<64x32xf32>
    %c64_74 = arith.constant 64 : index
    %c32_75 = arith.constant 32 : index
    %132 = vector.load %arg15[%c64_74, %c32_75] : memref<128x128xf32, #tpu.memory_space<vmem>>, vector<64x32xf32>
    tpu.vector_store %arg15[%c64_74, %c32_75], %131 {strides = array<i32>} : memref<128x128xf32, #tpu.memory_space<vmem>>, vector<64x32xf32>,
    %c64_76 = arith.constant 64 : index
    %c64_77 = arith.constant 64 : index
    %133 = vector.load %arg14[%c64_76, %c64_77] : memref<128x384xbf16, #tpu.memory_space<vmem>>, vector<64x32xbf16>
    %c64_78 = arith.constant 64 : index
    %c192_79 = arith.constant 192 : index
    %134 = vector.load %arg14[%c64_78, %c192_79] : memref<128x384xbf16, #tpu.memory_space<vmem>>, vector<64x32xbf16>
    %c64_80 = arith.constant 64 : index
    %c320_81 = arith.constant 320 : index
    %135 = vector.load %arg14[%c64_80, %c320_81] : memref<128x384xbf16, #tpu.memory_space<vmem>>, vector<64x32xbf16>
    %cst_82 = arith.constant dense<0.000000e+00> : vector<64x64xf32>
    %136 = tpu.matmul %133, %134, %cst_82 {dimension_numbers = #tpu.dot_dimension_numbers<[1], [1], [0], [0], [0, 0, 1, 0], [], []>} : vector<64x32xbf16>, vector<64x32xbf16>, vector<64x64xf32> -> vector<64x64xf32>
    %cst_83 = arith.constant dense<0xFF800000> : vector<64xf32>
    %137 = vector.multi_reduction <maximumf>, %136, %cst_83 [1] : vector<64x64xf32> to vector<64xf32>
    %138 = vector.shape_cast %137 : vector<64xf32> to vector<64x1xf32>
    %139 = vector.broadcast %138 : vector<64x1xf32> to vector<64x64xf32>
    %140 = arith.subf %136, %139 : vector<64x64xf32>
    %141 = math.exp %140 : vector<64x64xf32>
    %cst_84 = arith.constant dense<0.000000e+00> : vector<64xf32>
    %142 = vector.multi_reduction <add>, %141, %cst_84 [1] : vector<64x64xf32> to vector<64xf32>
    %143 = vector.shape_cast %142 : vector<64xf32> to vector<64x1xf32>
    %144 = tpu.reciprocal %143 {approx = true} : vector<64x1xf32> -> vector<64x1xf32>
    %145 = vector.broadcast %144 : vector<64x1xf32> to vector<64x64xf32>
    %146 = arith.mulf %141, %145 : vector<64x64xf32>
    %147 = arith.truncf %146 : vector<64x64xf32> to vector<64x64xbf16>
    %cst_85 = arith.constant dense<0.000000e+00> : vector<64x32xf32>
    %148 = tpu.matmul %147, %135, %cst_85 {dimension_numbers = #tpu.dot_dimension_numbers<[1], [0], [0], [1], [0, 0, 1, 1], [], []>} : vector<64x64xbf16>, vector<64x32xbf16>, vector<64x32xf32> -> vector<64x32xf32>
    %c64_86 = arith.constant 64 : index
    %c64_87 = arith.constant 64 : index
    %149 = vector.load %arg15[%c64_86, %c64_87] : memref<128x128xf32, #tpu.memory_space<vmem>>, vector<64x32xf32>
    tpu.vector_store %arg15[%c64_86, %c64_87], %148 {strides = array<i32>} : memref<128x128xf32, #tpu.memory_space<vmem>>, vector<64x32xf32>,
    %c64_88 = arith.constant 64 : index
    %c96_89 = arith.constant 96 : index
    %150 = vector.load %arg14[%c64_88, %c96_89] : memref<128x384xbf16, #tpu.memory_space<vmem>>, vector<64x32xbf16>
    %c64_90 = arith.constant 64 : index
    %c224_91 = arith.constant 224 : index
    %151 = vector.load %arg14[%c64_90, %c224_91] : memref<128x384xbf16, #tpu.memory_space<vmem>>, vector<64x32xbf16>
    %c64_92 = arith.constant 64 : index
    %c352_93 = arith.constant 352 : index
    %152 = vector.load %arg14[%c64_92, %c352_93] : memref<128x384xbf16, #tpu.memory_space<vmem>>, vector<64x32xbf16>
    %cst_94 = arith.constant dense<0.000000e+00> : vector<64x64xf32>
    %153 = tpu.matmul %150, %151, %cst_94 {dimension_numbers = #tpu.dot_dimension_numbers<[1], [1], [0], [0], [0, 0, 1, 0], [], []>} : vector<64x32xbf16>, vector<64x32xbf16>, vector<64x64xf32> -> vector<64x64xf32>
    %cst_95 = arith.constant dense<0xFF800000> : vector<64xf32>
    %154 = vector.multi_reduction <maximumf>, %153, %cst_95 [1] : vector<64x64xf32> to vector<64xf32>
    %155 = vector.shape_cast %154 : vector<64xf32> to vector<64x1xf32>
    %156 = vector.broadcast %155 : vector<64x1xf32> to vector<64x64xf32>
    %157 = arith.subf %153, %156 : vector<64x64xf32>
    %158 = math.exp %157 : vector<64x64xf32>
    %cst_96 = arith.constant dense<0.000000e+00> : vector<64xf32>
    %159 = vector.multi_reduction <add>, %158, %cst_96 [1] : vector<64x64xf32> to vector<64xf32>
    %160 = vector.shape_cast %159 : vector<64xf32> to vector<64x1xf32>
    %161 = tpu.reciprocal %160 {approx = true} : vector<64x1xf32> -> vector<64x1xf32>
    %162 = vector.broadcast %161 : vector<64x1xf32> to vector<64x64xf32>
    %163 = arith.mulf %158, %162 : vector<64x64xf32>
    %164 = arith.truncf %163 : vector<64x64xf32> to vector<64x64xbf16>
    %cst_97 = arith.constant dense<0.000000e+00> : vector<64x32xf32>
    %165 = tpu.matmul %164, %152, %cst_97 {dimension_numbers = #tpu.dot_dimension_numbers<[1], [0], [0], [1], [0, 0, 1, 1], [], []>} : vector<64x64xbf16>, vector<64x32xbf16>, vector<64x32xf32> -> vector<64x32xf32>
    %c64_98 = arith.constant 64 : index
    %c96_99 = arith.constant 96 : index
    %166 = vector.load %arg15[%c64_98, %c96_99] : memref<128x128xf32, #tpu.memory_space<vmem>>, vector<64x32xf32>
    tpu.vector_store %arg15[%c64_98, %c96_99], %165 {strides = array<i32>} : memref<128x128xf32, #tpu.memory_space<vmem>>, vector<64x32xf32>,
    %c0_100 = arith.constant 0 : index
    %c0_101 = arith.constant 0 : index
    %167 = vector.load %arg15[%c0_100, %c0_101] : memref<128x128xf32, #tpu.memory_space<vmem>>, vector<128x128xf32>
    %168 = arith.truncf %167 : vector<128x128xf32> to vector<128x128xbf16>
    %c0_102 = arith.constant 0 : index
    %c0_103 = arith.constant 0 : index
    %169 = vector.load %arg5[%c0_102, %c0_103] : memref<128x128xbf16, #tpu.memory_space<vmem>>, vector<128x128xbf16>
    %cst_104 = arith.constant dense<0.000000e+00> : vector<128x128xf32>
    %170 = tpu.matmul %168, %169, %cst_104 {dimension_numbers = #tpu.dot_dimension_numbers<[1], [0], [0], [1], [0, 0, 1, 1], [], []>} : vector<128x128xbf16>, vector<128x128xbf16>, vector<128x128xf32> -> vector<128x128xf32>
    %c0_105 = arith.constant 0 : index
    %c0_106 = arith.constant 0 : index
    %171 = vector.load %arg6[%c0_105, %c0_106] : memref<1x128xf32, #tpu.memory_space<vmem>>, vector<1x128xf32>
    %172 = vector.broadcast %171 : vector<1x128xf32> to vector<128x128xf32>
    %173 = arith.addf %170, %172 : vector<128x128xf32>
    %174 = arith.addf %1, %173 : vector<128x128xf32>
    %c0_107 = arith.constant 0 : index
    %c0_108 = arith.constant 0 : index
    %175 = vector.load %arg7[%c0_107, %c0_108] : memref<1x128xf32, #tpu.memory_space<vmem>>, vector<1x128xf32>
    %c0_109 = arith.constant 0 : index
    %c0_110 = arith.constant 0 : index
    %176 = vector.load %arg8[%c0_109, %c0_110] : memref<1x128xf32, #tpu.memory_space<vmem>>, vector<1x128xf32>
    %cst_111 = arith.constant dense<0.000000e+00> : vector<128xf32>
    %177 = vector.multi_reduction <add>, %174, %cst_111 [1] : vector<128x128xf32> to vector<128xf32>
    %178 = vector.shape_cast %177 : vector<128xf32> to vector<128x1xf32>
    %cst_112 = arith.constant 1.280000e+02 : f32
    %179 = vector.broadcast %cst_112 : f32 to vector<128x1xf32>
    %180 = arith.divf %178, %179 : vector<128x1xf32>
    %181 = vector.broadcast %180 : vector<128x1xf32> to vector<128x128xf32>
    %182 = arith.subf %174, %181 : vector<128x128xf32>
    %183 = arith.mulf %182, %182 : vector<128x128xf32>
    %cst_113 = arith.constant dense<0.000000e+00> : vector<128xf32>
    %184 = vector.multi_reduction <add>, %183, %cst_113 [1] : vector<128x128xf32> to vector<128xf32>
    %185 = vector.shape_cast %184 : vector<128xf32> to vector<128x1xf32>
    %cst_114 = arith.constant 1.280000e+02 : f32
    %186 = vector.broadcast %cst_114 : f32 to vector<128x1xf32>
    %187 = arith.divf %185, %186 : vector<128x1xf32>
    %188 = vector.broadcast %180 : vector<128x1xf32> to vector<128x128xf32>
    %189 = arith.subf %174, %188 : vector<128x128xf32>
    %cst_115 = arith.constant 9.99999974E-6 : f32
    %190 = vector.broadcast %cst_115 : f32 to vector<128x1xf32>
    %191 = arith.addf %187, %190 : vector<128x1xf32>
    %192 = math.rsqrt %191 : vector<128x1xf32>
    %193 = vector.broadcast %192 : vector<128x1xf32> to vector<128x128xf32>
    %194 = arith.mulf %189, %193 : vector<128x128xf32>
    %195 = vector.broadcast %175 : vector<1x128xf32> to vector<128x128xf32>
    %196 = arith.mulf %194, %195 : vector<128x128xf32>
    %197 = vector.broadcast %176 : vector<1x128xf32> to vector<128x128xf32>
    %198 = arith.addf %196, %197 : vector<128x128xf32>
    %199 = arith.truncf %198 : vector<128x128xf32> to vector<128x128xbf16>
    %c0_116 = arith.constant 0 : index
    %c0_117 = arith.constant 0 : index
    %200 = vector.load %arg9[%c0_116, %c0_117] : memref<128x512xbf16, #tpu.memory_space<vmem>>, vector<128x512xbf16>
    %cst_118 = arith.constant dense<0.000000e+00> : vector<128x512xf32>
    %201 = tpu.matmul %199, %200, %cst_118 {dimension_numbers = #tpu.dot_dimension_numbers<[1], [0], [0], [1], [0, 0, 1, 1], [], []>} : vector<128x128xbf16>, vector<128x512xbf16>, vector<128x512xf32> -> vector<128x512xf32>
    %c0_119 = arith.constant 0 : index
    %c0_120 = arith.constant 0 : index
    %202 = vector.load %arg10[%c0_119, %c0_120] : memref<1x512xf32, #tpu.memory_space<vmem>>, vector<1x512xf32>
    %203 = vector.broadcast %202 : vector<1x512xf32> to vector<128x512xf32>
    %204 = arith.addf %201, %203 : vector<128x512xf32>
    %cst_121 = arith.constant 5.000000e-01 : f32
    %205 = vector.broadcast %cst_121 : f32 to vector<128x512xf32>
    %206 = arith.mulf %205, %204 : vector<128x512xf32>
    %cst_122 = arith.constant 0.707106769 : f32
    %207 = vector.broadcast %cst_122 : f32 to vector<128x512xf32>
    %208 = arith.mulf %204, %207 : vector<128x512xf32>
    %cst_123 = arith.constant -4.000000e+00 : f32
    %cst_124 = arith.constant 4.000000e+00 : f32
    %209 = vector.broadcast %cst_123 : f32 to vector<128x512xf32>
    %210 = arith.maximumf %209, %208 : vector<128x512xf32>
    %211 = vector.broadcast %cst_124 : f32 to vector<128x512xf32>
    %212 = arith.minimumf %211, %210 : vector<128x512xf32>
    %213 = arith.mulf %212, %212 : vector<128x512xf32>
    %cst_125 = arith.constant -2.72614237E-10 : f32
    %214 = vector.broadcast %cst_125 : f32 to vector<128x512xf32>
    %215 = arith.mulf %214, %213 : vector<128x512xf32>
    %cst_126 = arith.constant 2.77068146E-8 : f32
    %216 = vector.broadcast %cst_126 : f32 to vector<128x512xf32>
    %217 = arith.addf %215, %216 : vector<128x512xf32>
    %218 = arith.mulf %217, %213 : vector<128x512xf32>
    %cst_127 = arith.constant -2.10102394E-6 : f32
    %219 = vector.broadcast %cst_127 : f32 to vector<128x512xf32>
    %220 = arith.addf %218, %219 : vector<128x512xf32>
    %221 = arith.mulf %220, %213 : vector<128x512xf32>
    %cst_128 = arith.constant -5.69250624E-5 : f32
    %222 = vector.broadcast %cst_128 : f32 to vector<128x512xf32>
    %223 = arith.addf %221, %222 : vector<128x512xf32>
    %224 = arith.mulf %223, %213 : vector<128x512xf32>
    %cst_129 = arith.constant -7.34990637E-4 : f32
    %225 = vector.broadcast %cst_129 : f32 to vector<128x512xf32>
    %226 = arith.addf %224, %225 : vector<128x512xf32>
    %227 = arith.mulf %226, %213 : vector<128x512xf32>
    %cst_130 = arith.constant -2.954600e-03 : f32
    %228 = vector.broadcast %cst_130 : f32 to vector<128x512xf32>
    %229 = arith.addf %227, %228 : vector<128x512xf32>
    %230 = arith.mulf %229, %213 : vector<128x512xf32>
    %cst_131 = arith.constant -0.0160960332 : f32
    %231 = vector.broadcast %cst_131 : f32 to vector<128x512xf32>
    %232 = arith.addf %230, %231 : vector<128x512xf32>
    %233 = arith.mulf %232, %212 : vector<128x512xf32>
    %cst_132 = arith.constant -1.45660715E-5 : f32
    %234 = vector.broadcast %cst_132 : f32 to vector<128x512xf32>
    %235 = arith.mulf %234, %213 : vector<128x512xf32>
    %cst_133 = arith.constant -2.13374049E-4 : f32
    %236 = vector.broadcast %cst_133 : f32 to vector<128x512xf32>
    %237 = arith.addf %235, %236 : vector<128x512xf32>
    %238 = arith.mulf %237, %213 : vector<128x512xf32>
    %cst_134 = arith.constant -0.00168282702 : f32
    %239 = vector.broadcast %cst_134 : f32 to vector<128x512xf32>
    %240 = arith.addf %238, %239 : vector<128x512xf32>
    %241 = arith.mulf %240, %213 : vector<128x512xf32>
    %cst_135 = arith.constant -0.00737332925 : f32
    %242 = vector.broadcast %cst_135 : f32 to vector<128x512xf32>
    %243 = arith.addf %241, %242 : vector<128x512xf32>
    %244 = arith.mulf %243, %213 : vector<128x512xf32>
    %cst_136 = arith.constant -0.0142647391 : f32
    %245 = vector.broadcast %cst_136 : f32 to vector<128x512xf32>
    %246 = arith.addf %244, %245 : vector<128x512xf32>
    %247 = tpu.reciprocal %246 {approx = true} : vector<128x512xf32> -> vector<128x512xf32>
    %248 = arith.mulf %233, %247 : vector<128x512xf32>
    %cst_137 = arith.constant 1.000000e+00 : f32
    %249 = vector.broadcast %cst_137 : f32 to vector<128x512xf32>
    %250 = arith.addf %249, %248 : vector<128x512xf32>
    %251 = arith.mulf %206, %250 : vector<128x512xf32>
    %252 = arith.truncf %251 : vector<128x512xf32> to vector<128x512xbf16>
    %c0_138 = arith.constant 0 : index
    %c0_139 = arith.constant 0 : index
    %253 = vector.load %arg11[%c0_138, %c0_139] : memref<512x128xbf16, #tpu.memory_space<vmem>>, vector<512x128xbf16>
    %cst_140 = arith.constant dense<0.000000e+00> : vector<128x128xf32>
    %254 = tpu.matmul %252, %253, %cst_140 {dimension_numbers = #tpu.dot_dimension_numbers<[1], [0], [0], [1], [0, 0, 1, 1], [], []>} : vector<128x512xbf16>, vector<512x128xbf16>, vector<128x128xf32> -> vector<128x128xf32>
    %c0_141 = arith.constant 0 : index
    %c0_142 = arith.constant 0 : index
    %255 = vector.load %arg12[%c0_141, %c0_142] : memref<1x128xf32, #tpu.memory_space<vmem>>, vector<1x128xf32>
    %256 = vector.broadcast %255 : vector<1x128xf32> to vector<128x128xf32>
    %257 = arith.addf %254, %256 : vector<128x128xf32>
    %258 = arith.addf %174, %257 : vector<128x128xf32>
    %259 = vector.shape_cast %258 : vector<128x128xf32> to vector<2x64x128xf32>
    %c0_143 = arith.constant 0 : index
    %c0_144 = arith.constant 0 : index
    %c0_145 = arith.constant 0 : index
    %260 = vector.load %arg13[%c0_143, %c0_144, %c0_145] : memref<2x64x128xf32, #tpu.memory_space<vmem>>, vector<2x64x128xf32>
    tpu.vector_store %arg13[%c0_143, %c0_144, %c0_145], %259 {strides = array<i32>} : memref<2x64x128xf32, #tpu.memory_space<vmem>>, vector<2x64x128xf32>,
    return
  }
  func.func @transform_0(%arg0: i32) -> (i32, i32, i32) {
    %c0_i32 = arith.constant 0 : i32
    %c0_i32_0 = arith.constant 0 : i32
    %c0_i32_1 = arith.constant 0 : i32
    return %arg0, %c0_i32, %c0_i32_0 : i32, i32, i32
  }
  func.func @transform_1(%arg0: i32) -> (i32, i32) {
    %c0_i32 = arith.constant 0 : i32
    %c0_i32_0 = arith.constant 0 : i32
    %c0_i32_1 = arith.constant 0 : i32
    return %c0_i32, %c0_i32_0 : i32, i32
  }
  func.func @transform_2(%arg0: i32) -> (i32, i32) {
    %c0_i32 = arith.constant 0 : i32
    %c0_i32_0 = arith.constant 0 : i32
    %c0_i32_1 = arith.constant 0 : i32
    return %c0_i32, %c0_i32_0 : i32, i32
  }
  func.func @transform_3(%arg0: i32) -> (i32, i32) {
    %c0_i32 = arith.constant 0 : i32
    %c0_i32_0 = arith.constant 0 : i32
    %c0_i32_1 = arith.constant 0 : i32
    return %c0_i32, %c0_i32_0 : i32, i32
  }
  func.func @transform_4(%arg0: i32) -> (i32, i32) {
    %c0_i32 = arith.constant 0 : i32
    %c0_i32_0 = arith.constant 0 : i32
    %c0_i32_1 = arith.constant 0 : i32
    return %c0_i32, %c0_i32_0 : i32, i32
  }
  func.func @transform_5(%arg0: i32) -> (i32, i32) {
    %c0_i32 = arith.constant 0 : i32
    %c0_i32_0 = arith.constant 0 : i32
    %c0_i32_1 = arith.constant 0 : i32
    return %c0_i32, %c0_i32_0 : i32, i32
  }
  func.func @transform_6(%arg0: i32) -> (i32, i32) {
    %c0_i32 = arith.constant 0 : i32
    %c0_i32_0 = arith.constant 0 : i32
    %c0_i32_1 = arith.constant 0 : i32
    return %c0_i32, %c0_i32_0 : i32, i32
  }
  func.func @transform_7(%arg0: i32) -> (i32, i32) {
    %c0_i32 = arith.constant 0 : i32
    %c0_i32_0 = arith.constant 0 : i32
    %c0_i32_1 = arith.constant 0 : i32
    return %c0_i32, %c0_i32_0 : i32, i32
  }
  func.func @transform_8(%arg0: i32) -> (i32, i32) {
    %c0_i32 = arith.constant 0 : i32
    %c0_i32_0 = arith.constant 0 : i32
    %c0_i32_1 = arith.constant 0 : i32
    return %c0_i32, %c0_i32_0 : i32, i32
  }
  func.func @transform_9(%arg0: i32) -> (i32, i32) {
    %c0_i32 = arith.constant 0 : i32
    %c0_i32_0 = arith.constant 0 : i32
    %c0_i32_1 = arith.constant 0 : i32
    return %c0_i32, %c0_i32_0 : i32, i32
  }
  func.func @transform_10(%arg0: i32) -> (i32, i32) {
    %c0_i32 = arith.constant 0 : i32
    %c0_i32_0 = arith.constant 0 : i32
    %c0_i32_1 = arith.constant 0 : i32
    return %c0_i32, %c0_i32_0 : i32, i32
  }
  func.func @transform_11(%arg0: i32) -> (i32, i32) {
    %c0_i32 = arith.constant 0 : i32
    %c0_i32_0 = arith.constant 0 : i32
    %c0_i32_1 = arith.constant 0 : i32
    return %c0_i32, %c0_i32_0 : i32, i32
  }
  func.func @transform_12(%arg0: i32) -> (i32, i32, i32) {
    %c0_i32 = arith.constant 0 : i32
    %c0_i32_0 = arith.constant 0 : i32
    %c0_i32_1 = arith.constant 0 : i32
    return %arg0, %c0_i32, %c0_i32_0 : i32, i32, i32
  }
}

module attributes {stable_mosaic.version = 11 : i64} {
  func.func @_norm_linear_kernel(%arg0: i32, %arg1: memref<128x128xf32, #tpu.memory_space<vmem>>, %arg2: memref<1x128xf32, #tpu.memory_space<vmem>>, %arg3: memref<1x128xf32, #tpu.memory_space<vmem>>, %arg4: memref<128x128xbf16, #tpu.memory_space<vmem>>, %arg5: memref<1x128xf32, #tpu.memory_space<vmem>>, %arg6: memref<128x128xf32, #tpu.memory_space<vmem>>) attributes {dimension_semantics = [#tpu.dimension_semantics<parallel>], iteration_bounds = array<i64: 2>, scalar_prefetch = 0 : i64, scratch_operands = 0 : i64, tpu.core_type = #tpu.core_type<tc>, window_params = [{transform_indices = @transform_0, window_bounds = array<i64: 128, 128>}, {pipeline_mode = #tpu.pipeline_mode<synchronous>, transform_indices = @transform_1, window_bounds = array<i64: 1, 128>}, {pipeline_mode = #tpu.pipeline_mode<synchronous>, transform_indices = @transform_2, window_bounds = array<i64: 1, 128>}, {pipeline_mode = #tpu.pipeline_mode<synchronous>, transform_indices = @transform_3, window_bounds = array<i64: 128, 128>}, {pipeline_mode = #tpu.pipeline_mode<synchronous>, transform_indices = @transform_4, window_bounds = array<i64: 1, 128>}, {transform_indices = @transform_5, window_bounds = array<i64: 128, 128>}]} {
    %c0 = arith.constant 0 : index
    %c0_0 = arith.constant 0 : index
    %0 = vector.load %arg1[%c0, %c0_0] : memref<128x128xf32, #tpu.memory_space<vmem>>, vector<128x128xf32>
    %c0_1 = arith.constant 0 : index
    %c0_2 = arith.constant 0 : index
    %1 = vector.load %arg2[%c0_1, %c0_2] : memref<1x128xf32, #tpu.memory_space<vmem>>, vector<1x128xf32>
    %c0_3 = arith.constant 0 : index
    %c0_4 = arith.constant 0 : index
    %2 = vector.load %arg3[%c0_3, %c0_4] : memref<1x128xf32, #tpu.memory_space<vmem>>, vector<1x128xf32>
    %cst = arith.constant dense<0.000000e+00> : vector<128xf32>
    %3 = vector.multi_reduction <add>, %0, %cst [1] : vector<128x128xf32> to vector<128xf32>
    %4 = vector.shape_cast %3 : vector<128xf32> to vector<128x1xf32>
    %cst_5 = arith.constant 1.280000e+02 : f32
    %5 = vector.broadcast %cst_5 : f32 to vector<128x1xf32>
    %6 = arith.divf %4, %5 : vector<128x1xf32>
    %7 = vector.broadcast %6 : vector<128x1xf32> to vector<128x128xf32>
    %8 = arith.subf %0, %7 : vector<128x128xf32>
    %9 = arith.mulf %8, %8 : vector<128x128xf32>
    %cst_6 = arith.constant dense<0.000000e+00> : vector<128xf32>
    %10 = vector.multi_reduction <add>, %9, %cst_6 [1] : vector<128x128xf32> to vector<128xf32>
    %11 = vector.shape_cast %10 : vector<128xf32> to vector<128x1xf32>
    %cst_7 = arith.constant 1.280000e+02 : f32
    %12 = vector.broadcast %cst_7 : f32 to vector<128x1xf32>
    %13 = arith.divf %11, %12 : vector<128x1xf32>
    %14 = vector.broadcast %6 : vector<128x1xf32> to vector<128x128xf32>
    %15 = arith.subf %0, %14 : vector<128x128xf32>
    %cst_8 = arith.constant 9.99999974E-6 : f32
    %16 = vector.broadcast %cst_8 : f32 to vector<128x1xf32>
    %17 = arith.addf %13, %16 : vector<128x1xf32>
    %18 = math.rsqrt %17 : vector<128x1xf32>
    %19 = vector.broadcast %18 : vector<128x1xf32> to vector<128x128xf32>
    %20 = arith.mulf %15, %19 : vector<128x128xf32>
    %21 = vector.broadcast %1 : vector<1x128xf32> to vector<128x128xf32>
    %22 = arith.mulf %20, %21 : vector<128x128xf32>
    %23 = vector.broadcast %2 : vector<1x128xf32> to vector<128x128xf32>
    %24 = arith.addf %22, %23 : vector<128x128xf32>
    %25 = arith.truncf %24 : vector<128x128xf32> to vector<128x128xbf16>
    %c0_9 = arith.constant 0 : index
    %c0_10 = arith.constant 0 : index
    %26 = vector.load %arg4[%c0_9, %c0_10] : memref<128x128xbf16, #tpu.memory_space<vmem>>, vector<128x128xbf16>
    %cst_11 = arith.constant dense<0.000000e+00> : vector<128x128xf32>
    %27 = tpu.matmul %25, %26, %cst_11 {dimension_numbers = #tpu.dot_dimension_numbers<[1], [0], [0], [1], [0, 0, 1, 1], [], []>} : vector<128x128xbf16>, vector<128x128xbf16>, vector<128x128xf32> -> vector<128x128xf32>
    %c0_12 = arith.constant 0 : index
    %c0_13 = arith.constant 0 : index
    %28 = vector.load %arg5[%c0_12, %c0_13] : memref<1x128xf32, #tpu.memory_space<vmem>>, vector<1x128xf32>
    %29 = vector.broadcast %28 : vector<1x128xf32> to vector<128x128xf32>
    %30 = arith.addf %27, %29 : vector<128x128xf32>
    %c0_14 = arith.constant 0 : index
    %c0_15 = arith.constant 0 : index
    %31 = vector.load %arg6[%c0_14, %c0_15] : memref<128x128xf32, #tpu.memory_space<vmem>>, vector<128x128xf32>
    tpu.vector_store %arg6[%c0_14, %c0_15], %30 {strides = array<i32>} : memref<128x128xf32, #tpu.memory_space<vmem>>, vector<128x128xf32>,
    return
  }
  func.func @transform_0(%arg0: i32) -> (i32, i32) {
    %c0_i32 = arith.constant 0 : i32
    %c0_i32_0 = arith.constant 0 : i32
    return %arg0, %c0_i32 : i32, i32
  }
  func.func @transform_1(%arg0: i32) -> (i32, i32) {
    %c0_i32 = arith.constant 0 : i32
    %c0_i32_0 = arith.constant 0 : i32
    %c0_i32_1 = arith.constant 0 : i32
    return %c0_i32, %c0_i32_0 : i32, i32
  }
  func.func @transform_2(%arg0: i32) -> (i32, i32) {
    %c0_i32 = arith.constant 0 : i32
    %c0_i32_0 = arith.constant 0 : i32
    %c0_i32_1 = arith.constant 0 : i32
    return %c0_i32, %c0_i32_0 : i32, i32
  }
  func.func @transform_3(%arg0: i32) -> (i32, i32) {
    %c0_i32 = arith.constant 0 : i32
    %c0_i32_0 = arith.constant 0 : i32
    %c0_i32_1 = arith.constant 0 : i32
    return %c0_i32, %c0_i32_0 : i32, i32
  }
  func.func @transform_4(%arg0: i32) -> (i32, i32) {
    %c0_i32 = arith.constant 0 : i32
    %c0_i32_0 = arith.constant 0 : i32
    %c0_i32_1 = arith.constant 0 : i32
    return %c0_i32, %c0_i32_0 : i32, i32
  }
  func.func @transform_5(%arg0: i32) -> (i32, i32) {
    %c0_i32 = arith.constant 0 : i32
    %c0_i32_0 = arith.constant 0 : i32
    return %arg0, %c0_i32 : i32, i32
  }
}

module attributes {stable_mosaic.version = 11 : i64} {
  func.func @_norm_linear_kernel(%arg0: i32, %arg1: memref<128x128xf32, #tpu.memory_space<vmem>>, %arg2: memref<1x128xf32, #tpu.memory_space<vmem>>, %arg3: memref<1x128xf32, #tpu.memory_space<vmem>>, %arg4: memref<128x256xbf16, #tpu.memory_space<vmem>>, %arg5: memref<1x256xf32, #tpu.memory_space<vmem>>, %arg6: memref<128x256xf32, #tpu.memory_space<vmem>>) attributes {dimension_semantics = [#tpu.dimension_semantics<parallel>], iteration_bounds = array<i64: 2>, scalar_prefetch = 0 : i64, scratch_operands = 0 : i64, tpu.core_type = #tpu.core_type<tc>, window_params = [{transform_indices = @transform_0, window_bounds = array<i64: 128, 128>}, {pipeline_mode = #tpu.pipeline_mode<synchronous>, transform_indices = @transform_1, window_bounds = array<i64: 1, 128>}, {pipeline_mode = #tpu.pipeline_mode<synchronous>, transform_indices = @transform_2, window_bounds = array<i64: 1, 128>}, {pipeline_mode = #tpu.pipeline_mode<synchronous>, transform_indices = @transform_3, window_bounds = array<i64: 128, 256>}, {pipeline_mode = #tpu.pipeline_mode<synchronous>, transform_indices = @transform_4, window_bounds = array<i64: 1, 256>}, {transform_indices = @transform_5, window_bounds = array<i64: 128, 256>}]} {
    %c0 = arith.constant 0 : index
    %c0_0 = arith.constant 0 : index
    %0 = vector.load %arg1[%c0, %c0_0] : memref<128x128xf32, #tpu.memory_space<vmem>>, vector<128x128xf32>
    %c0_1 = arith.constant 0 : index
    %c0_2 = arith.constant 0 : index
    %1 = vector.load %arg2[%c0_1, %c0_2] : memref<1x128xf32, #tpu.memory_space<vmem>>, vector<1x128xf32>
    %c0_3 = arith.constant 0 : index
    %c0_4 = arith.constant 0 : index
    %2 = vector.load %arg3[%c0_3, %c0_4] : memref<1x128xf32, #tpu.memory_space<vmem>>, vector<1x128xf32>
    %cst = arith.constant dense<0.000000e+00> : vector<128xf32>
    %3 = vector.multi_reduction <add>, %0, %cst [1] : vector<128x128xf32> to vector<128xf32>
    %4 = vector.shape_cast %3 : vector<128xf32> to vector<128x1xf32>
    %cst_5 = arith.constant 1.280000e+02 : f32
    %5 = vector.broadcast %cst_5 : f32 to vector<128x1xf32>
    %6 = arith.divf %4, %5 : vector<128x1xf32>
    %7 = vector.broadcast %6 : vector<128x1xf32> to vector<128x128xf32>
    %8 = arith.subf %0, %7 : vector<128x128xf32>
    %9 = arith.mulf %8, %8 : vector<128x128xf32>
    %cst_6 = arith.constant dense<0.000000e+00> : vector<128xf32>
    %10 = vector.multi_reduction <add>, %9, %cst_6 [1] : vector<128x128xf32> to vector<128xf32>
    %11 = vector.shape_cast %10 : vector<128xf32> to vector<128x1xf32>
    %cst_7 = arith.constant 1.280000e+02 : f32
    %12 = vector.broadcast %cst_7 : f32 to vector<128x1xf32>
    %13 = arith.divf %11, %12 : vector<128x1xf32>
    %14 = vector.broadcast %6 : vector<128x1xf32> to vector<128x128xf32>
    %15 = arith.subf %0, %14 : vector<128x128xf32>
    %cst_8 = arith.constant 9.99999974E-6 : f32
    %16 = vector.broadcast %cst_8 : f32 to vector<128x1xf32>
    %17 = arith.addf %13, %16 : vector<128x1xf32>
    %18 = math.rsqrt %17 : vector<128x1xf32>
    %19 = vector.broadcast %18 : vector<128x1xf32> to vector<128x128xf32>
    %20 = arith.mulf %15, %19 : vector<128x128xf32>
    %21 = vector.broadcast %1 : vector<1x128xf32> to vector<128x128xf32>
    %22 = arith.mulf %20, %21 : vector<128x128xf32>
    %23 = vector.broadcast %2 : vector<1x128xf32> to vector<128x128xf32>
    %24 = arith.addf %22, %23 : vector<128x128xf32>
    %25 = arith.truncf %24 : vector<128x128xf32> to vector<128x128xbf16>
    %c0_9 = arith.constant 0 : index
    %c0_10 = arith.constant 0 : index
    %26 = vector.load %arg4[%c0_9, %c0_10] : memref<128x256xbf16, #tpu.memory_space<vmem>>, vector<128x256xbf16>
    %cst_11 = arith.constant dense<0.000000e+00> : vector<128x256xf32>
    %27 = tpu.matmul %25, %26, %cst_11 {dimension_numbers = #tpu.dot_dimension_numbers<[1], [0], [0], [1], [0, 0, 1, 1], [], []>} : vector<128x128xbf16>, vector<128x256xbf16>, vector<128x256xf32> -> vector<128x256xf32>
    %c0_12 = arith.constant 0 : index
    %c0_13 = arith.constant 0 : index
    %28 = vector.load %arg5[%c0_12, %c0_13] : memref<1x256xf32, #tpu.memory_space<vmem>>, vector<1x256xf32>
    %29 = vector.broadcast %28 : vector<1x256xf32> to vector<128x256xf32>
    %30 = arith.addf %27, %29 : vector<128x256xf32>
    %c0_14 = arith.constant 0 : index
    %c0_15 = arith.constant 0 : index
    %31 = vector.load %arg6[%c0_14, %c0_15] : memref<128x256xf32, #tpu.memory_space<vmem>>, vector<128x256xf32>
    tpu.vector_store %arg6[%c0_14, %c0_15], %30 {strides = array<i32>} : memref<128x256xf32, #tpu.memory_space<vmem>>, vector<128x256xf32>,
    return
  }
  func.func @transform_0(%arg0: i32) -> (i32, i32) {
    %c0_i32 = arith.constant 0 : i32
    %c0_i32_0 = arith.constant 0 : i32
    return %arg0, %c0_i32 : i32, i32
  }
  func.func @transform_1(%arg0: i32) -> (i32, i32) {
    %c0_i32 = arith.constant 0 : i32
    %c0_i32_0 = arith.constant 0 : i32
    %c0_i32_1 = arith.constant 0 : i32
    return %c0_i32, %c0_i32_0 : i32, i32
  }
  func.func @transform_2(%arg0: i32) -> (i32, i32) {
    %c0_i32 = arith.constant 0 : i32
    %c0_i32_0 = arith.constant 0 : i32
    %c0_i32_1 = arith.constant 0 : i32
    return %c0_i32, %c0_i32_0 : i32, i32
  }
  func.func @transform_3(%arg0: i32) -> (i32, i32) {
    %c0_i32 = arith.constant 0 : i32
    %c0_i32_0 = arith.constant 0 : i32
    %c0_i32_1 = arith.constant 0 : i32
    return %c0_i32, %c0_i32_0 : i32, i32
  }
  func.func @transform_4(%arg0: i32) -> (i32, i32) {
    %c0_i32 = arith.constant 0 : i32
    %c0_i32_0 = arith.constant 0 : i32
    %c0_i32_1 = arith.constant 0 : i32
    return %c0_i32, %c0_i32_0 : i32, i32
  }
  func.func @transform_5(%arg0: i32) -> (i32, i32) {
    %c0_i32 = arith.constant 0 : i32
    %c0_i32_0 = arith.constant 0 : i32
    return %arg0, %c0_i32 : i32, i32
  }
}

</mosaic_0001>

<llo_original>
// kernel: transformer3d_aux_forward.7
$region0: #{transformer3d_aux_forward.7}
  #allocation0 [shape = 'u32[]', space=smem, size = 0x4, offset = 0x4, fixed_abs, tag = 'smem constant byte address 0x4 - core index']
  #allocation1 [shape = 'u32[72,128]{1,0:T(1,128)}', space=vmem, size = 0x9000, scoped, tag = 'internal scratch']
  %s0 = inlined_call_operand.vmem [shape: f32[4,64,256], index: 0, kind: input, shape index: {}]
  %s1 = inlined_call_operand.vmem [shape: bf16[256,128], index: 1, kind: input, shape index: {}]
  %s2 = inlined_call_operand.vmem [shape: f32[1,128], index: 2, kind: input, shape index: {}]
  %s3 = inlined_call_operand.vmem [shape: f32[64,128], index: 3, kind: input, shape index: {}]
  %s4 = inlined_call_operand.vmem [shape: f32[4,64,128], index: 4, kind: output, shape index: {}]
  %s5 = sld [smem:[#allocation0]]
  $region49: #{transformer3d_aux_forward.7} parent=0
    _
  %s7 = ssub.s32 1, %s5
  %s8 = scalar_select 0, %s7, %s5
  loop: start=0, step=1, limit=4
  $region2: #{transformer3d_aux_forward.7} parent=0 // loop_pre_header
    _
  $region3: #{transformer3d_aux_forward.7} parent=0 // loop_header
    %s10 = sphi 0, %s14
    %p11 = scmp.ge.s32.totalorder %s10, 4
    %s17 = sphi 0, %s29
    %s18 = sphi 0, %s25
    %s19 = sphi 0, %s17
    %s20 = sphi 0, %s18
    %s21 = sphi 0, %s19
    %s22 = sphi 0, %s20
    %s34 = sphi 0, %s36
    %s37 = sphi 0, %s34
    %s38 = sphi 0, %s37
    %s54 = sphi 0, %s38
    %s58 = sphi 0, %s58
    %s60 = sphi 0, %s58
    %s61 = sphi 0, %s60
    %s75 = sphi 0, %s61
    %s79 = sphi 0, %s79
    %s81 = sphi 0, %s79
    %s82 = sphi 0, %s81
    %s96 = sphi 0, %s82
    %s102 = sphi 0, %s104
    %s105 = sphi 0, %s102
    %s106 = sphi 0, %s105
    %s122 = sphi 0, %s106
    %s130 = sphi 0, %s132
    %s133 = sphi 0, %s130
    %s134 = sphi 0, %s133
    %s150 = sphi 0, %s134
  $region4: #{transformer3d_aux_forward.7} parent=0 // loop_header_branch
    %13 = sbr.rel (%p11) target = $region8
  $region5: #{transformer3d_aux_forward.7} parent=0 // loop_body
    %s15 = ssub.s32 %s10, 1
    %s16 = ssub.s32 %s10, 2
    %s23 = sadd.s32 1, %s18
    %p24 = scmp.ge.s32.totalorder %s23, 1
    %s25 = scalar_select %p24, 0, %s23
    %s26 = sadd.s32 1, %s17
    %s27 = scalar_select %p24, %s26, %s17
    %p28 = scmp.ge.s32.totalorder %s27, 2
    %s29 = scalar_select %p28, 0, %s27
    %s30 = ssub.s32 %s17, %s29
    %s31 = ssub.s32 %s18, %s25
    %s32 = sor.u32 %s30, %s31
    %p33 = scmp.eq.s32.totalorder %s32, 0
    %s35 = sadd.s32 %s34, 1
    %s36 = scalar_select %p33, %s34, %s35
    %p39 = pneg %p33
    %p40 = scmp.eq.s32.totalorder %s10, 1
    %p41 = por %p39, %p40
    %p42 = scmp.ne.s32.totalorder %s34, %s37
    %p43 = scmp.eq.s32.totalorder %s10, 0
    %p44 = por %p42, %p43
    %p45 = scmp.ne.s32.totalorder %s34, %s37
    %p46 = scmp.eq.s32.totalorder %s15, 1
    %p47 = por %p45, %p46
    %p48 = scmp.ne.s32.totalorder %s37, %s38
    %p49 = scmp.eq.s32.totalorder %s15, 0
    %p50 = por %p48, %p49
    %p51 = scmp.ne.s32.totalorder %s37, %s38
    %p52 = scmp.eq.s32.totalorder %s16, 1
    %p53 = por %p51, %p52
    %p55 = scmp.ne.s32.totalorder %s38, %s54
    %p56 = scmp.eq.s32.totalorder %s16, 0
    %p57 = por %p55, %p56
    %s59 = sadd.s32 %s58, 1
    %p62 = scmp.eq.s32.totalorder %s10, 1
    %p63 = scmp.ne.s32.totalorder %s58, %s60
    %p64 = scmp.eq.s32.totalorder %s10, 0
    %p65 = por %p63, %p64
    %p66 = scmp.ne.s32.totalorder %s58, %s60
    %p67 = scmp.eq.s32.totalorder %s15, 1
    %p68 = por %p66, %p67
    %p69 = scmp.ne.s32.totalorder %s60, %s61
    %p70 = scmp.eq.s32.totalorder %s15, 0
    %p71 = por %p69, %p70
    %p72 = scmp.ne.s32.totalorder %s60, %s61
    %p73 = scmp.eq.s32.totalorder %s16, 1
    %p74 = por %p72, %p73
    %p76 = scmp.ne.s32.totalorder %s61, %s75
    %p77 = scmp.eq.s32.totalorder %s16, 0
    %p78 = por %p76, %p77
    %s80 = sadd.s32 %s79, 1
    %p83 = scmp.eq.s32.totalorder %s10, 1
    %p84 = scmp.ne.s32.totalorder %s79, %s81
    %p85 = scmp.eq.s32.totalorder %s10, 0
    %p86 = por %p84, %p85
    %p87 = scmp.ne.s32.totalorder %s79, %s81
    %p88 = scmp.eq.s32.totalorder %s15, 1
    %p89 = por %p87, %p88
    %p90 = scmp.ne.s32.totalorder %s81, %s82
    %p91 = scmp.eq.s32.totalorder %s15, 0
    %p92 = por %p90, %p91
    %p93 = scmp.ne.s32.totalorder %s81, %s82
    %p94 = scmp.eq.s32.totalorder %s16, 1
    %p95 = por %p93, %p94
    %p97 = scmp.ne.s32.totalorder %s82, %s96
    %p98 = scmp.eq.s32.totalorder %s16, 0
    %p99 = por %p97, %p98
    %s100 = ssub.s32 %s18, %s25
    %p101 = scmp.eq.s32.totalorder %s100, 0
    %s103 = sadd.s32 %s102, 1
    %s104 = scalar_select %p101, %s102, %s103
    %p107 = pneg %p101
    %p108 = scmp.eq.s32.totalorder %s10, 1
    %p109 = por %p107, %p108
    %p110 = scmp.ne.s32.totalorder %s102, %s105
    %p111 = scmp.eq.s32.totalorder %s10, 0
    %p112 = por %p110, %p111
    %p113 = scmp.ne.s32.totalorder %s102, %s105
    %p114 = scmp.eq.s32.totalorder %s15, 1
    %p115 = por %p113, %p114
    %p116 = scmp.ne.s32.totalorder %s105, %s106
    %p117 = scmp.eq.s32.totalorder %s15, 0
    %p118 = por %p116, %p117
    %p119 = scmp.ne.s32.totalorder %s105, %s106
    %p120 = scmp.eq.s32.totalorder %s16, 1
    %p121 = por %p119, %p120
    %p123 = scmp.ne.s32.totalorder %s106, %s122
    %p124 = scmp.eq.s32.totalorder %s16, 0
    %p125 = por %p123, %p124
    %s126 = ssub.s32 %s17, %s29
    %s127 = ssub.s32 %s18, %s25
    %s128 = sor.u32 %s126, %s127
    %p129 = scmp.eq.s32.totalorder %s128, 0
    %s131 = sadd.s32 %s130, 1
    %s132 = scalar_select %p129, %s130, %s131
    %p135 = pneg %p129
    %p136 = scmp.eq.s32.totalorder %s10, 1
    %p137 = por %p135, %p136
    %p138 = scmp.ne.s32.totalorder %s130, %s133
    %p139 = scmp.eq.s32.totalorder %s10, 0
    %p140 = por %p138, %p139
    %p141 = scmp.ne.s32.totalorder %s130, %s133
    %p142 = scmp.eq.s32.totalorder %s15, 1
    %p143 = por %p141, %p142
    %p144 = scmp.ne.s32.totalorder %s133, %s134
    %p145 = scmp.eq.s32.totalorder %s15, 0
    %p146 = por %p144, %p145
    %p147 = scmp.ne.s32.totalorder %s133, %s134
    %p148 = scmp.eq.s32.totalorder %s16, 1
    %p149 = por %p147, %p148
    %p151 = scmp.ne.s32.totalorder %s134, %s150
    %p152 = scmp.eq.s32.totalorder %s16, 0
    %p153 = por %p151, %p152
    %p154 = scmp.le.s32.totalorder 1, %s10
    %p155 = scmp.lt.s32.totalorder %s10, 3
    %p156 = pnand %p154, %p155
    %p157 = pneg %p156
    // Predicated region
    $region9: #{transformer3d_aux_forward.7} parent=5 // pred_check
      _
    $region10: #{transformer3d_aux_forward.7} parent=5 // pred_check_branch
      %159 = sbr.rel (%p156) target = $region12
    $region11: #{transformer3d_aux_forward.7} parent=5 // pred_region
      %s160 = ssub.s32 %s10, 1
      // Predicated region
      $region13: #{transformer3d_aux_forward.7} parent=11 // pred_check
        %p161 = pneg %p71
      $region14: #{transformer3d_aux_forward.7} parent=11 // pred_check_branch
        %163 = sbr.rel (%p161) target = $region16
      $region15: #{transformer3d_aux_forward.7} parent=11 // pred_region
        _
      $region16: #{transformer3d_aux_forward.7} parent=11 // pred_fallthru
        _
      // Predicated region
      $region17: #{transformer3d_aux_forward.7} parent=11 // pred_check
        %p164 = pneg %p92
      $region18: #{transformer3d_aux_forward.7} parent=11 // pred_check_branch
        %166 = sbr.rel (%p164) target = $region20
      $region19: #{transformer3d_aux_forward.7} parent=11 // pred_region
        _
      $region20: #{transformer3d_aux_forward.7} parent=11 // pred_fallthru
        _
      // Predicated region
      $region21: #{transformer3d_aux_forward.7} parent=11 // pred_check
        %p167 = pneg %p118
      $region22: #{transformer3d_aux_forward.7} parent=11 // pred_check_branch
        %169 = sbr.rel (%p167) target = $region24
      $region23: #{transformer3d_aux_forward.7} parent=11 // pred_region
        %s170 = smul.u32 8, %s20
        %p171 = scmp.lt.s32.totalorder %s170, 7
        %s172 = scalar_select %p171, %s170, 7
        %s173 = smul.addr %s172, 8
        %s174 = scalar_lea.vmem %s3, %s173
        %s175 = smul.u32 8, %s20
      $region24: #{transformer3d_aux_forward.7} parent=11 // pred_fallthru
        _
    $region12: #{transformer3d_aux_forward.7} parent=5 // pred_fallthru
      _
    %p176 = scmp.lt.s32.totalorder %s10, 2
    // Predicated region
    $region25: #{transformer3d_aux_forward.7} parent=5 // pred_check
      %p177 = pneg %p176
    $region26: #{transformer3d_aux_forward.7} parent=5 // pred_check_branch
      %179 = sbr.rel (%p177) target = $region28
    $region27: #{transformer3d_aux_forward.7} parent=5 // pred_region
      // Predicated region
      $region29: #{transformer3d_aux_forward.7} parent=27 // pred_check
        %p180 = pneg %p44
      $region30: #{transformer3d_aux_forward.7} parent=27 // pred_check_branch
        %182 = sbr.rel (%p180) target = $region32
      $region31: #{transformer3d_aux_forward.7} parent=27 // pred_region
        %s183 = smul.u32 2, %s17
        %s184 = smul.u32 8, %s18
        %p185 = scmp.lt.s32.totalorder %s183, 3
        %s186 = scalar_select %p185, %s183, 3
        %p187 = scmp.lt.s32.totalorder %s184, 7
        %s188 = scalar_select %p187, %s184, 7
        %s189 = smul.addr %s188, 2
        %s190 = smul.addr %s186, 16
        %s191 = sadd.s32 %s189, %s190
        %s192 = smul.addr %s191, 8
        %s193 = scalar_lea.vmem %s0, %s192
        %s194 = smul.u32 2, %s17
        %s195 = smul.u32 8, %s18
      $region32: #{transformer3d_aux_forward.7} parent=27 // pred_fallthru
        _
    $region28: #{transformer3d_aux_forward.7} parent=5 // pred_fallthru
      _
    %p196 = scmp.le.s32.totalorder 1, %s10
    %p197 = scmp.lt.s32.totalorder %s10, 3
    %p198 = pnand %p196, %p197
    %p199 = pneg %p198
    // Predicated region
    $region33: #{transformer3d_aux_forward.7} parent=5 // pred_check
      _
    $region34: #{transformer3d_aux_forward.7} parent=5 // pred_check_branch
      %201 = sbr.rel (%p198) target = $region36
    $region35: #{transformer3d_aux_forward.7} parent=5 // pred_region
      %s202 = ssub.s32 %s10, 1
      %s203 = smul.u32 2, %s19
      %s204 = smul.u32 8, %s20
      %p205 = scmp.lt.s32.totalorder %s203, 3
      %s206 = scalar_select %p205, %s203, 3
      %p207 = scmp.lt.s32.totalorder %s204, 7
      %s208 = scalar_select %p207, %s204, 7
      %s209 = smul.addr %s208, 2
      %s210 = smul.addr %s206, 16
      %s211 = sadd.s32 %s209, %s210
      %s212 = smul.addr %s211, 8
      %s213 = scalar_lea.vmem %s0, %s212
      %p214 = pneg %p50
      %p215 = pneg %p47
      %p216 = pneg %p71
      %p217 = pneg %p68
      %p218 = pneg %p92
      %p219 = pneg %p89
      %s220 = smul.u32 8, %s20
      %p221 = scmp.lt.s32.totalorder %s220, 7
      %s222 = scalar_select %p221, %s220, 7
      %s223 = smul.addr %s222, 8
      %s224 = scalar_lea.vmem %s3, %s223
      %p225 = pneg %p118
      %p226 = pneg %p115
      %p227 = pneg %p146
      %p228 = pneg %p143
      %s229 = smul.u32 2, %s19
      %s230 = smul.u32 8, %s20
      %p231 = scmp.lt.s32.totalorder %s229, 3
      %s232 = scalar_select %p231, %s229, 3
      %p233 = scmp.lt.s32.totalorder %s230, 7
      %s234 = scalar_select %p233, %s230, 7
      %s235 = smul.addr %s232, 8
      %s236 = sadd.s32 %s234, %s235
      %s237 = smul.addr %s236, 8
      %s238 = scalar_lea.vmem %s4, %s237
      %s239 = smul.u32 2, %s19
      %s240 = smul.u32 8, %s20
      %p241 = scmp.lt.s32.totalorder %s239, 3
      %s242 = scalar_select %p241, %s239, 3
      %p243 = scmp.lt.s32.totalorder %s240, 7
      %s244 = scalar_select %p243, %s240, 7
      %s245 = smul.addr %s244, 2
      %s246 = smul.addr %s242, 16
      %s247 = sadd.s32 %s245, %s246
      %s248 = smul.addr %s247, 8
      %s249 = scalar_lea.vmem %s0, %s248
      %s250 = smul.u32 2, %s19
      %s251 = smul.u32 8, %s20
      %s252 = smul.u32 8, %s20
      %p253 = scmp.lt.s32.totalorder %s252, 7
      %s254 = scalar_select %p253, %s252, 7
      %s255 = smul.addr %s254, 8
      %s256 = scalar_lea.vmem %s3, %s255
      %s257 = smul.u32 8, %s20
      %s258 = smul.u32 2, %s19
      %s259 = smul.u32 8, %s20
      %p260 = scmp.lt.s32.totalorder %s258, 3
      %s261 = scalar_select %p260, %s258, 3
      %p262 = scmp.lt.s32.totalorder %s259, 7
      %s263 = scalar_select %p262, %s259, 7
      %s264 = smul.addr %s261, 8
      %s265 = sadd.s32 %s263, %s264
      %s266 = smul.addr %s265, 8
      %s267 = scalar_lea.vmem %s4, %s266
      %s268 = smul.u32 2, %s19
      %s269 = smul.u32 8, %s20
      %v270 = vld [vmem:[%s249] sm:$0xff]
      %v271 = vld [vmem:[%s249 + $0x8] sm:$0xff]
      %v272 = vld [vmem:[%s249 + $0x10] sm:$0xff]
      %v273 = vld [vmem:[%s249 + $0x18] sm:$0xff]
      %v274 = vld [vmem:[%s249 + $0x20] sm:$0xff]
      %v275 = vld [vmem:[%s249 + $0x28] sm:$0xff]
      %v276 = vld [vmem:[%s249 + $0x30] sm:$0xff]
      %v277 = vld [vmem:[%s249 + $0x38] sm:$0xff]
      %v278 = vld [vmem:[%s249 + $0x40] sm:$0xff]
      %v279 = vld [vmem:[%s249 + $0x48] sm:$0xff]
      %v280 = vld [vmem:[%s249 + $0x50] sm:$0xff]
      %v281 = vld [vmem:[%s249 + $0x58] sm:$0xff]
      %v282 = vld [vmem:[%s249 + $0x60] sm:$0xff]
      %v283 = vld [vmem:[%s249 + $0x68] sm:$0xff]
      %v284 = vld [vmem:[%s249 + $0x70] sm:$0xff]
      %v285 = vld [vmem:[%s249 + $0x78] sm:$0xff]
      %v286 = vld [vmem:[%s249 + $0x80] sm:$0xff]
      %v287 = vld [vmem:[%s249 + $0x88] sm:$0xff]
      %v288 = vld [vmem:[%s249 + $0x90] sm:$0xff]
      %v289 = vld [vmem:[%s249 + $0x98] sm:$0xff]
      %v290 = vld [vmem:[%s249 + $0xa0] sm:$0xff]
      %v291 = vld [vmem:[%s249 + $0xa8] sm:$0xff]
      %v292 = vld [vmem:[%s249 + $0xb0] sm:$0xff]
      %v293 = vld [vmem:[%s249 + $0xb8] sm:$0xff]
      %v294 = vld [vmem:[%s249 + $0xc0] sm:$0xff]
      %v295 = vld [vmem:[%s249 + $0xc8] sm:$0xff]
      %v296 = vld [vmem:[%s249 + $0xd0] sm:$0xff]
      %v297 = vld [vmem:[%s249 + $0xd8] sm:$0xff]
      %v298 = vld [vmem:[%s249 + $0xe0] sm:$0xff]
      %v299 = vld [vmem:[%s249 + $0xe8] sm:$0xff]
      %v300 = vld [vmem:[%s249 + $0xf0] sm:$0xff]
      %v301 = vld [vmem:[%s249 + $0xf8] sm:$0xff]
      %v302 = vpack.c.bf16 %v272, %v270
      %v303 = vpack.c.bf16 %v273, %v271
      %v304 = vpack.c.bf16 %v276, %v274
      %v305 = vpack.c.bf16 %v277, %v275
      %v306 = vpack.c.bf16 %v280, %v278
      %v307 = vpack.c.bf16 %v281, %v279
      %v308 = vpack.c.bf16 %v284, %v282
      %v309 = vpack.c.bf16 %v285, %v283
      %v310 = vpack.c.bf16 %v288, %v286
      %v311 = vpack.c.bf16 %v289, %v287
      %v312 = vpack.c.bf16 %v292, %v290
      %v313 = vpack.c.bf16 %v293, %v291
      %v314 = vpack.c.bf16 %v296, %v294
      %v315 = vpack.c.bf16 %v297, %v295
      %v316 = vpack.c.bf16 %v300, %v298
      %v317 = vpack.c.bf16 %v301, %v299
      %v318 = vld [vmem:[%s1] sm:$0xf]
      %v319 = vld [vmem:[%s1 + $0x4] sm:$0xf]
      %v320 = vld [vmem:[%s1 + $0x8] sm:$0xf]
      %v321 = vld [vmem:[%s1 + $0xc] sm:$0xf]
      %v322 = vld [vmem:[%s1 + $0x10] sm:$0xf]
      %v323 = vld [vmem:[%s1 + $0x14] sm:$0xf]
      %v324 = vld [vmem:[%s1 + $0x18] sm:$0xf]
      %v325 = vld [vmem:[%s1 + $0x1c] sm:$0xf]
      %v326 = vld [vmem:[%s1 + $0x20] sm:$0xf]
      %v327 = vld [vmem:[%s1 + $0x24] sm:$0xf]
      %v328 = vld [vmem:[%s1 + $0x28] sm:$0xf]
      %v329 = vld [vmem:[%s1 + $0x2c] sm:$0xf]
      %v330 = vld [vmem:[%s1 + $0x30] sm:$0xf]
      %v331 = vld [vmem:[%s1 + $0x34] sm:$0xf]
      %v332 = vld [vmem:[%s1 + $0x38] sm:$0xf]
      %v333 = vld [vmem:[%s1 + $0x3c] sm:$0xf]
      %v334 = vld [vmem:[%s1 + $0x40] sm:$0xf]
      %v335 = vld [vmem:[%s1 + $0x44] sm:$0xf]
      %v336 = vld [vmem:[%s1 + $0x48] sm:$0xf]
      %v337 = vld [vmem:[%s1 + $0x4c] sm:$0xf]
      %v338 = vld [vmem:[%s1 + $0x50] sm:$0xf]
      %v339 = vld [vmem:[%s1 + $0x54] sm:$0xf]
      %v340 = vld [vmem:[%s1 + $0x58] sm:$0xf]
      %v341 = vld [vmem:[%s1 + $0x5c] sm:$0xf]
      %v342 = vld [vmem:[%s1 + $0x60] sm:$0xf]
      %v343 = vld [vmem:[%s1 + $0x64] sm:$0xf]
      %v344 = vld [vmem:[%s1 + $0x68] sm:$0xf]
      %v345 = vld [vmem:[%s1 + $0x6c] sm:$0xf]
      %v346 = vld [vmem:[%s1 + $0x70] sm:$0xf]
      %v347 = vld [vmem:[%s1 + $0x74] sm:$0xf]
      %v348 = vld [vmem:[%s1 + $0x78] sm:$0xf]
      %v349 = vld [vmem:[%s1 + $0x7c] sm:$0xf]
      %v350 = vld [vmem:[%s2] sm:$0x1]
      %v352 = vperm.slane %v350, 0
      %v386 = vunpack.c.l.b16 %v318
      %v387 = vunpack.c.l.b16 %v319
      %v388 = vunpack.c.l.b16 %v320
      %v389 = vunpack.c.l.b16 %v321
      %v390 = vunpack.c.l.b16 %v322
      %v391 = vunpack.c.l.b16 %v323
      %v392 = vunpack.c.l.b16 %v324
      %v393 = vunpack.c.l.b16 %v325
      %v394 = vunpack.c.l.b16 %v326
      %v395 = vunpack.c.l.b16 %v327
      %v396 = vunpack.c.l.b16 %v328
      %v397 = vunpack.c.l.b16 %v329
      %v398 = vunpack.c.l.b16 %v330
      %v399 = vunpack.c.l.b16 %v331
      %v400 = vunpack.c.l.b16 %v332
      %v401 = vunpack.c.l.b16 %v333
      %v402 = vunpack.c.l.b16 %v334
      %v403 = vunpack.c.l.b16 %v335
      %v404 = vunpack.c.l.b16 %v336
      %v405 = vunpack.c.l.b16 %v337
      %v406 = vunpack.c.l.b16 %v338
      %v407 = vunpack.c.l.b16 %v339
      %v408 = vunpack.c.l.b16 %v340
      %v409 = vunpack.c.l.b16 %v341
      %v410 = vunpack.c.l.b16 %v342
      %v411 = vunpack.c.l.b16 %v343
      %v412 = vunpack.c.l.b16 %v344
      %v413 = vunpack.c.l.b16 %v345
      %v414 = vunpack.c.l.b16 %v346
      %v415 = vunpack.c.l.b16 %v347
      %v416 = vunpack.c.l.b16 %v348
      %v417 = vunpack.c.l.b16 %v349
      %v418 = vpack.c.b16 %v387, %v386
      %v419 = vpack.c.b16 %v389, %v388
      %v420 = vpack.c.b16 %v391, %v390
      %v421 = vpack.c.b16 %v393, %v392
      %v422 = vpack.c.b16 %v395, %v394
      %v423 = vpack.c.b16 %v397, %v396
      %v424 = vpack.c.b16 %v399, %v398
      %v425 = vpack.c.b16 %v401, %v400
      %v426 = vpack.c.b16 %v403, %v402
      %v427 = vpack.c.b16 %v405, %v404
      %v428 = vpack.c.b16 %v407, %v406
      %v429 = vpack.c.b16 %v409, %v408
      %v430 = vpack.c.b16 %v411, %v410
      %v431 = vpack.c.b16 %v413, %v412
      %v432 = vpack.c.b16 %v415, %v414
      %v433 = vpack.c.b16 %v417, %v416
      %450 = vmatpush.bf16.msra.mxu0 %v425
      %451 = vmatpush.bf16.msra.mxu0 %v424
      %452 = vmatpush.bf16.msra.mxu0 %v423
      %453 = vmatpush.bf16.msra.mxu0 %v422
      %454 = vmatpush.bf16.msra.mxu0 %v421
      %455 = vmatpush.bf16.msra.mxu0 %v420
      %456 = vmatpush.bf16.msra.mxu0 %v419
      %457 = vmatpush.bf16.msra.mxu0 %v418
      %458 = vmatmul.bf16.gmra.mxu0 %v302
      %v459 = vpop.f32.mrf.mxu0
      %v460 = vadd.f32 %v352, %v459
      %v461 = vpop.f32.mrf.mxu0
      %v462 = vadd.f32 %v352, %v461
      %463 = vmatmul.bf16.gmra.mxu0 %v304
      %v464 = vpop.f32.mrf.mxu0
      %v465 = vadd.f32 %v352, %v464
      %v466 = vpop.f32.mrf.mxu0
      %v467 = vadd.f32 %v352, %v466
      %468 = vmatmul.bf16.gmra.mxu0 %v306
      %v469 = vpop.f32.mrf.mxu0
      %v470 = vadd.f32 %v352, %v469
      %v471 = vpop.f32.mrf.mxu0
      %v472 = vadd.f32 %v352, %v471
      %473 = vmatmul.bf16.gmra.mxu0 %v308
      %v474 = vpop.f32.mrf.mxu0
      %v475 = vadd.f32 %v352, %v474
      %v476 = vpop.f32.mrf.mxu0
      %v477 = vadd.f32 %v352, %v476
      %478 = vmatmul.bf16.gmra.mxu0 %v310
      %v479 = vpop.f32.mrf.mxu0
      %v480 = vadd.f32 %v352, %v479
      %v481 = vpop.f32.mrf.mxu0
      %v482 = vadd.f32 %v352, %v481
      %483 = vmatmul.bf16.gmra.mxu0 %v312
      %v484 = vpop.f32.mrf.mxu0
      %v485 = vadd.f32 %v352, %v484
      %v486 = vpop.f32.mrf.mxu0
      %v487 = vadd.f32 %v352, %v486
      %488 = vmatmul.bf16.gmra.mxu0 %v314
      %v489 = vpop.f32.mrf.mxu0
      %v490 = vadd.f32 %v352, %v489
      %v491 = vpop.f32.mrf.mxu0
      %v492 = vadd.f32 %v352, %v491
      %493 = vmatmul.bf16.gmra.mxu0 %v316
      %v494 = vpop.f32.mrf.mxu0
      %v495 = vadd.f32 %v352, %v494
      %v496 = vpop.f32.mrf.mxu0
      %v497 = vadd.f32 %v352, %v496
      %498 = vdwg.mxu0
      %499 = vmatpush.bf16.msra.mxu0 %v433
      %500 = vmatpush.bf16.msra.mxu0 %v432
      %501 = vmatpush.bf16.msra.mxu0 %v431
      %502 = vmatpush.bf16.msra.mxu0 %v430
      %503 = vmatpush.bf16.msra.mxu0 %v429
      %504 = vmatpush.bf16.msra.mxu0 %v428
      %505 = vmatpush.bf16.msra.mxu0 %v427
      %506 = vmatpush.bf16.msra.mxu0 %v426
      %507 = vmatmul.bf16.gmra.mxu0 %v303
      %v508 = vpop.f32.mrf.mxu0
      %v509 = vadd.f32 %v460, %v508
      %v510 = vpop.f32.mrf.mxu0
      %v511 = vadd.f32 %v462, %v510
      %512 = vmatmul.bf16.gmra.mxu0 %v305
      %v513 = vpop.f32.mrf.mxu0
      %v514 = vadd.f32 %v465, %v513
      %v515 = vpop.f32.mrf.mxu0
      %v516 = vadd.f32 %v467, %v515
      %517 = vmatmul.bf16.gmra.mxu0 %v307
      %v518 = vpop.f32.mrf.mxu0
      %v519 = vadd.f32 %v470, %v518
      %v520 = vpop.f32.mrf.mxu0
      %v521 = vadd.f32 %v472, %v520
      %522 = vmatmul.bf16.gmra.mxu0 %v309
      %v523 = vpop.f32.mrf.mxu0
      %v524 = vadd.f32 %v475, %v523
      %v525 = vpop.f32.mrf.mxu0
      %v526 = vadd.f32 %v477, %v525
      %527 = vmatmul.bf16.gmra.mxu0 %v311
      %v528 = vpop.f32.mrf.mxu0
      %v529 = vadd.f32 %v480, %v528
      %v530 = vpop.f32.mrf.mxu0
      %v531 = vadd.f32 %v482, %v530
      %532 = vmatmul.bf16.gmra.mxu0 %v313
      %v533 = vpop.f32.mrf.mxu0
      %v534 = vadd.f32 %v485, %v533
      %v535 = vpop.f32.mrf.mxu0
      %v536 = vadd.f32 %v487, %v535
      %537 = vmatmul.bf16.gmra.mxu0 %v315
      %v538 = vpop.f32.mrf.mxu0
      %v539 = vadd.f32 %v490, %v538
      %v540 = vpop.f32.mrf.mxu0
      %v541 = vadd.f32 %v492, %v540
      %542 = vmatmul.bf16.gmra.mxu0 %v317
      %v543 = vpop.f32.mrf.mxu0
      %v544 = vadd.f32 %v495, %v543
      %v545 = vpop.f32.mrf.mxu0
      %v546 = vadd.f32 %v497, %v545
      %547 = vdwg.mxu0
      %v548 = vld [vmem:[%s256] sm:$0xff]
      %v549 = vld [vmem:[%s256 + $0x8] sm:$0xff]
      %v550 = vld [vmem:[%s256 + $0x10] sm:$0xff]
      %v551 = vld [vmem:[%s256 + $0x18] sm:$0xff]
      %v552 = vld [vmem:[%s256 + $0x20] sm:$0xff]
      %v553 = vld [vmem:[%s256 + $0x28] sm:$0xff]
      %v554 = vld [vmem:[%s256 + $0x30] sm:$0xff]
      %v555 = vld [vmem:[%s256 + $0x38] sm:$0xff]
      %v556 = vadd.f32 %v509, %v548
      %v557 = vadd.f32 %v511, %v549
      %v558 = vadd.f32 %v514, %v550
      %v559 = vadd.f32 %v516, %v551
      %v560 = vadd.f32 %v519, %v552
      %v561 = vadd.f32 %v521, %v553
      %v562 = vadd.f32 %v524, %v554
      %v563 = vadd.f32 %v526, %v555
      %v564 = vadd.f32 %v529, %v548
      %v565 = vadd.f32 %v531, %v549
      %v566 = vadd.f32 %v534, %v550
      %v567 = vadd.f32 %v536, %v551
      %v568 = vadd.f32 %v539, %v552
      %v569 = vadd.f32 %v541, %v553
      %v570 = vadd.f32 %v544, %v554
      %v571 = vadd.f32 %v546, %v555
      %572 = vst [vmem:[%s267] sm:$0xff] %v556
      %573 = vst [vmem:[%s267 + $0x8] sm:$0xff] %v557
      %574 = vst [vmem:[%s267 + $0x10] sm:$0xff] %v558
      %575 = vst [vmem:[%s267 + $0x18] sm:$0xff] %v559
      %576 = vst [vmem:[%s267 + $0x20] sm:$0xff] %v560
      %577 = vst [vmem:[%s267 + $0x28] sm:$0xff] %v561
      %578 = vst [vmem:[%s267 + $0x30] sm:$0xff] %v562
      %579 = vst [vmem:[%s267 + $0x38] sm:$0xff] %v563
      %580 = vst [vmem:[%s267 + $0x40] sm:$0xff] %v564
      %581 = vst [vmem:[%s267 + $0x48] sm:$0xff] %v565
      %582 = vst [vmem:[%s267 + $0x50] sm:$0xff] %v566
      %583 = vst [vmem:[%s267 + $0x58] sm:$0xff] %v567
      %584 = vst [vmem:[%s267 + $0x60] sm:$0xff] %v568
      %585 = vst [vmem:[%s267 + $0x68] sm:$0xff] %v569
      %586 = vst [vmem:[%s267 + $0x70] sm:$0xff] %v570
      %587 = vst [vmem:[%s267 + $0x78] sm:$0xff] %v571
      %s588 = smul.u32 2, %s19
      %s589 = smul.u32 8, %s20
      %p590 = scmp.lt.s32.totalorder %s588, 3
      %s591 = scalar_select %p590, %s588, 3
      %p592 = scmp.lt.s32.totalorder %s589, 7
      %s593 = scalar_select %p592, %s589, 7
      %s594 = smul.addr %s591, 8
      %s595 = sadd.s32 %s593, %s594
      %s596 = smul.addr %s595, 8
      %s597 = scalar_lea.vmem %s4, %s596
      // Predicated region
      $region37: #{transformer3d_aux_forward.7} parent=35 // pred_check
        %p598 = pneg %p143
      $region38: #{transformer3d_aux_forward.7} parent=35 // pred_check_branch
        %600 = sbr.rel (%p598) target = $region40
      $region39: #{transformer3d_aux_forward.7} parent=35 // pred_region
        %s601 = smul.u32 2, %s19
        %s602 = smul.u32 8, %s20
      $region40: #{transformer3d_aux_forward.7} parent=35 // pred_fallthru
        _
    $region36: #{transformer3d_aux_forward.7} parent=5 // pred_fallthru
      _
    %p603 = scmp.le.s32.totalorder 2, %s10
    // Predicated region
    $region41: #{transformer3d_aux_forward.7} parent=5 // pred_check
      %p604 = pneg %p603
    $region42: #{transformer3d_aux_forward.7} parent=5 // pred_check_branch
      %606 = sbr.rel (%p604) target = $region44
    $region43: #{transformer3d_aux_forward.7} parent=5 // pred_region
      %s607 = ssub.s32 %s10, 2
      // Predicated region
      $region45: #{transformer3d_aux_forward.7} parent=43 // pred_check
        %p608 = pneg %p149
      $region46: #{transformer3d_aux_forward.7} parent=43 // pred_check_branch
        %610 = sbr.rel (%p608) target = $region48
      $region47: #{transformer3d_aux_forward.7} parent=43 // pred_region
        %s611 = smul.u32 2, %s21
        %s612 = smul.u32 8, %s22
        %p613 = scmp.lt.s32.totalorder %s611, 3
        %s614 = scalar_select %p613, %s611, 3
        %p615 = scmp.lt.s32.totalorder %s612, 7
        %s616 = scalar_select %p615, %s612, 7
        %s617 = smul.addr %s614, 8
        %s618 = sadd.s32 %s616, %s617
        %s619 = smul.addr %s618, 8
        %s620 = scalar_lea.vmem %s4, %s619
      $region48: #{transformer3d_aux_forward.7} parent=43 // pred_fallthru
        _
    $region44: #{transformer3d_aux_forward.7} parent=5 // pred_fallthru
      _
  $region6: #{transformer3d_aux_forward.7} parent=0 // loop_footer
    %s14 = sadd.s32 1, %s10
  $region7: #{transformer3d_aux_forward.7} parent=0 // loop_footer_branch
    %9 = sbr.rel target = $region3
  $region8: #{transformer3d_aux_forward.7} parent=0 // loop_exit
    _

// kernel: transformer3d_aux_forward.10
$region0: #{transformer3d_aux_forward.10}
  #allocation0 [shape = 'u32[]', space=smem, size = 0x4, offset = 0x4, fixed_abs, tag = 'smem constant byte address 0x4 - core index']
  #allocation1 [shape = 'u32[72,128]{1,0:T(1,128)}', space=vmem, size = 0x9000, scoped, tag = 'internal scratch']
  %s0 = inlined_call_operand.vmem [shape: f32[256,128], index: 0, kind: input, shape index: {}]
  %s1 = inlined_call_operand.vmem [shape: f32[1,128], index: 1, kind: input, shape index: {}]
  %s2 = inlined_call_operand.vmem [shape: f32[1,128], index: 2, kind: input, shape index: {}, may-alias: {2,4}]
  %s3 = inlined_call_operand.vmem [shape: bf16[128,128], index: 3, kind: input, shape index: {}]
  %s4 = inlined_call_operand.vmem [shape: f32[1,128], index: 4, kind: input, shape index: {}, may-alias: {2,4}]
  %s5 = inlined_call_operand.vmem [shape: f32[256,128], index: 5, kind: output, shape index: {}]
  %s6 = sld [smem:[#allocation0]]
  $region53: #{transformer3d_aux_forward.10} parent=0
    _
  %s8 = ssub.s32 1, %s6
  %s9 = scalar_select 0, %s8, %s6
  loop: start=0, step=1, limit=4
  $region2: #{transformer3d_aux_forward.10} parent=0 // loop_pre_header
    _
  $region3: #{transformer3d_aux_forward.10} parent=0 // loop_header
    %s11 = sphi 0, %s15
    %p12 = scmp.ge.s32.totalorder %s11, 4
    %s21 = sphi 0, %s23
    %s24 = sphi 0, %s21
    %s25 = sphi 0, %s24
    %s41 = sphi 0, %s25
    %s45 = sphi 0, %s45
    %s47 = sphi 0, %s45
    %s48 = sphi 0, %s47
    %s62 = sphi 0, %s48
    %s66 = sphi 0, %s66
    %s68 = sphi 0, %s66
    %s69 = sphi 0, %s68
    %s83 = sphi 0, %s69
    %s87 = sphi 0, %s87
    %s89 = sphi 0, %s87
    %s90 = sphi 0, %s89
    %s104 = sphi 0, %s90
    %s108 = sphi 0, %s108
    %s110 = sphi 0, %s108
    %s111 = sphi 0, %s110
    %s125 = sphi 0, %s111
    %s131 = sphi 0, %s133
    %s134 = sphi 0, %s131
    %s135 = sphi 0, %s134
    %s151 = sphi 0, %s135
  $region4: #{transformer3d_aux_forward.10} parent=0 // loop_header_branch
    %14 = sbr.rel (%p12) target = $region8
  $region5: #{transformer3d_aux_forward.10} parent=0 // loop_body
    %s16 = ssub.s32 %s11, 1
    %s17 = ssub.s32 %s11, 2
    %s18 = sadd.s32 %s11, 1
    %s19 = ssub.s32 %s11, %s18
    %p20 = scmp.eq.s32.totalorder %s19, 0
    %s22 = sadd.s32 %s21, 1
    %s23 = scalar_select %p20, %s21, %s22
    %p26 = pneg %p20
    %p27 = scmp.eq.s32.totalorder %s11, 1
    %p28 = por %p26, %p27
    %p29 = scmp.ne.s32.totalorder %s21, %s24
    %p30 = scmp.eq.s32.totalorder %s11, 0
    %p31 = por %p29, %p30
    %p32 = scmp.ne.s32.totalorder %s21, %s24
    %p33 = scmp.eq.s32.totalorder %s16, 1
    %p34 = por %p32, %p33
    %p35 = scmp.ne.s32.totalorder %s24, %s25
    %p36 = scmp.eq.s32.totalorder %s16, 0
    %p37 = por %p35, %p36
    %p38 = scmp.ne.s32.totalorder %s24, %s25
    %p39 = scmp.eq.s32.totalorder %s17, 1
    %p40 = por %p38, %p39
    %p42 = scmp.ne.s32.totalorder %s25, %s41
    %p43 = scmp.eq.s32.totalorder %s17, 0
    %p44 = por %p42, %p43
    %s46 = sadd.s32 %s45, 1
    %p49 = scmp.eq.s32.totalorder %s11, 1
    %p50 = scmp.ne.s32.totalorder %s45, %s47
    %p51 = scmp.eq.s32.totalorder %s11, 0
    %p52 = por %p50, %p51
    %p53 = scmp.ne.s32.totalorder %s45, %s47
    %p54 = scmp.eq.s32.totalorder %s16, 1
    %p55 = por %p53, %p54
    %p56 = scmp.ne.s32.totalorder %s47, %s48
    %p57 = scmp.eq.s32.totalorder %s16, 0
    %p58 = por %p56, %p57
    %p59 = scmp.ne.s32.totalorder %s47, %s48
    %p60 = scmp.eq.s32.totalorder %s17, 1
    %p61 = por %p59, %p60
    %p63 = scmp.ne.s32.totalorder %s48, %s62
    %p64 = scmp.eq.s32.totalorder %s17, 0
    %p65 = por %p63, %p64
    %s67 = sadd.s32 %s66, 1
    %p70 = scmp.eq.s32.totalorder %s11, 1
    %p71 = scmp.ne.s32.totalorder %s66, %s68
    %p72 = scmp.eq.s32.totalorder %s11, 0
    %p73 = por %p71, %p72
    %p74 = scmp.ne.s32.totalorder %s66, %s68
    %p75 = scmp.eq.s32.totalorder %s16, 1
    %p76 = por %p74, %p75
    %p77 = scmp.ne.s32.totalorder %s68, %s69
    %p78 = scmp.eq.s32.totalorder %s16, 0
    %p79 = por %p77, %p78
    %p80 = scmp.ne.s32.totalorder %s68, %s69
    %p81 = scmp.eq.s32.totalorder %s17, 1
    %p82 = por %p80, %p81
    %p84 = scmp.ne.s32.totalorder %s69, %s83
    %p85 = scmp.eq.s32.totalorder %s17, 0
    %p86 = por %p84, %p85
    %s88 = sadd.s32 %s87, 1
    %p91 = scmp.eq.s32.totalorder %s11, 1
    %p92 = scmp.ne.s32.totalorder %s87, %s89
    %p93 = scmp.eq.s32.totalorder %s11, 0
    %p94 = por %p92, %p93
    %p95 = scmp.ne.s32.totalorder %s87, %s89
    %p96 = scmp.eq.s32.totalorder %s16, 1
    %p97 = por %p95, %p96
    %p98 = scmp.ne.s32.totalorder %s89, %s90
    %p99 = scmp.eq.s32.totalorder %s16, 0
    %p100 = por %p98, %p99
    %p101 = scmp.ne.s32.totalorder %s89, %s90
    %p102 = scmp.eq.s32.totalorder %s17, 1
    %p103 = por %p101, %p102
    %p105 = scmp.ne.s32.totalorder %s90, %s104
    %p106 = scmp.eq.s32.totalorder %s17, 0
    %p107 = por %p105, %p106
    %s109 = sadd.s32 %s108, 1
    %p112 = scmp.eq.s32.totalorder %s11, 1
    %p113 = scmp.ne.s32.totalorder %s108, %s110
    %p114 = scmp.eq.s32.totalorder %s11, 0
    %p115 = por %p113, %p114
    %p116 = scmp.ne.s32.totalorder %s108, %s110
    %p117 = scmp.eq.s32.totalorder %s16, 1
    %p118 = por %p116, %p117
    %p119 = scmp.ne.s32.totalorder %s110, %s111
    %p120 = scmp.eq.s32.totalorder %s16, 0
    %p121 = por %p119, %p120
    %p122 = scmp.ne.s32.totalorder %s110, %s111
    %p123 = scmp.eq.s32.totalorder %s17, 1
    %p124 = por %p122, %p123
    %p126 = scmp.ne.s32.totalorder %s111, %s125
    %p127 = scmp.eq.s32.totalorder %s17, 0
    %p128 = por %p126, %p127
    %s129 = ssub.s32 %s11, %s18
    %p130 = scmp.eq.s32.totalorder %s129, 0
    %s132 = sadd.s32 %s131, 1
    %s133 = scalar_select %p130, %s131, %s132
    %p136 = pneg %p130
    %p137 = scmp.eq.s32.totalorder %s11, 1
    %p138 = por %p136, %p137
    %p139 = scmp.ne.s32.totalorder %s131, %s134
    %p140 = scmp.eq.s32.totalorder %s11, 0
    %p141 = por %p139, %p140
    %p142 = scmp.ne.s32.totalorder %s131, %s134
    %p143 = scmp.eq.s32.totalorder %s16, 1
    %p144 = por %p142, %p143
    %p145 = scmp.ne.s32.totalorder %s134, %s135
    %p146 = scmp.eq.s32.totalorder %s16, 0
    %p147 = por %p145, %p146
    %p148 = scmp.ne.s32.totalorder %s134, %s135
    %p149 = scmp.eq.s32.totalorder %s17, 1
    %p150 = por %p148, %p149
    %p152 = scmp.ne.s32.totalorder %s135, %s151
    %p153 = scmp.eq.s32.totalorder %s17, 0
    %p154 = por %p152, %p153
    %p155 = scmp.le.s32.totalorder 1, %s11
    %p156 = scmp.lt.s32.totalorder %s11, 3
    %p157 = pnand %p155, %p156
    %p158 = pneg %p157
    // Predicated region
    $region9: #{transformer3d_aux_forward.10} parent=5 // pred_check
      _
    $region10: #{transformer3d_aux_forward.10} parent=5 // pred_check_branch
      %160 = sbr.rel (%p157) target = $region12
    $region11: #{transformer3d_aux_forward.10} parent=5 // pred_region
      %s161 = ssub.s32 %s11, 1
      // Predicated region
      $region13: #{transformer3d_aux_forward.10} parent=11 // pred_check
        %p162 = pneg %p58
      $region14: #{transformer3d_aux_forward.10} parent=11 // pred_check_branch
        %164 = sbr.rel (%p162) target = $region16
      $region15: #{transformer3d_aux_forward.10} parent=11 // pred_region
        _
      $region16: #{transformer3d_aux_forward.10} parent=11 // pred_fallthru
        _
      // Predicated region
      $region17: #{transformer3d_aux_forward.10} parent=11 // pred_check
        %p165 = pneg %p79
      $region18: #{transformer3d_aux_forward.10} parent=11 // pred_check_branch
        %167 = sbr.rel (%p165) target = $region20
      $region19: #{transformer3d_aux_forward.10} parent=11 // pred_region
        _
      $region20: #{transformer3d_aux_forward.10} parent=11 // pred_fallthru
        _
      // Predicated region
      $region21: #{transformer3d_aux_forward.10} parent=11 // pred_check
        %p168 = pneg %p100
      $region22: #{transformer3d_aux_forward.10} parent=11 // pred_check_branch
        %170 = sbr.rel (%p168) target = $region24
      $region23: #{transformer3d_aux_forward.10} parent=11 // pred_region
        _
      $region24: #{transformer3d_aux_forward.10} parent=11 // pred_fallthru
        _
      // Predicated region
      $region25: #{transformer3d_aux_forward.10} parent=11 // pred_check
        %p171 = pneg %p121
      $region26: #{transformer3d_aux_forward.10} parent=11 // pred_check_branch
        %173 = sbr.rel (%p171) target = $region28
      $region27: #{transformer3d_aux_forward.10} parent=11 // pred_region
        _
      $region28: #{transformer3d_aux_forward.10} parent=11 // pred_fallthru
        _
    $region12: #{transformer3d_aux_forward.10} parent=5 // pred_fallthru
      _
    %p174 = scmp.lt.s32.totalorder %s11, 2
    // Predicated region
    $region29: #{transformer3d_aux_forward.10} parent=5 // pred_check
      %p175 = pneg %p174
    $region30: #{transformer3d_aux_forward.10} parent=5 // pred_check_branch
      %177 = sbr.rel (%p175) target = $region32
    $region31: #{transformer3d_aux_forward.10} parent=5 // pred_region
      // Predicated region
      $region33: #{transformer3d_aux_forward.10} parent=31 // pred_check
        %p178 = pneg %p31
      $region34: #{transformer3d_aux_forward.10} parent=31 // pred_check_branch
        %180 = sbr.rel (%p178) target = $region36
      $region35: #{transformer3d_aux_forward.10} parent=31 // pred_region
        %s181 = smul.u32 16, %s11
        %p182 = scmp.lt.s32.totalorder %s181, 31
        %s183 = scalar_select %p182, %s181, 31
        %s184 = smul.addr %s183, 8
        %s185 = scalar_lea.vmem %s0, %s184
        %s186 = smul.u32 16, %s11
      $region36: #{transformer3d_aux_forward.10} parent=31 // pred_fallthru
        _
    $region32: #{transformer3d_aux_forward.10} parent=5 // pred_fallthru
      _
    %p187 = scmp.le.s32.totalorder 1, %s11
    %p188 = scmp.lt.s32.totalorder %s11, 3
    %p189 = pnand %p187, %p188
    %p190 = pneg %p189
    // Predicated region
    $region37: #{transformer3d_aux_forward.10} parent=5 // pred_check
      _
    $region38: #{transformer3d_aux_forward.10} parent=5 // pred_check_branch
      %192 = sbr.rel (%p189) target = $region40
    $region39: #{transformer3d_aux_forward.10} parent=5 // pred_region
      %s193 = ssub.s32 %s11, 1
      %s194 = smul.u32 16, %s16
      %p195 = scmp.lt.s32.totalorder %s194, 31
      %s196 = scalar_select %p195, %s194, 31
      %s197 = smul.addr %s196, 8
      %s198 = scalar_lea.vmem %s0, %s197
      %p199 = pneg %p37
      %p200 = pneg %p34
      %p201 = pneg %p58
      %p202 = pneg %p55
      %p203 = pneg %p79
      %p204 = pneg %p76
      %p205 = pneg %p100
      %p206 = pneg %p97
      %p207 = pneg %p121
      %p208 = pneg %p118
      %p209 = pneg %p147
      %p210 = pneg %p144
      %s211 = smul.u32 16, %s16
      %p212 = scmp.lt.s32.totalorder %s211, 31
      %s213 = scalar_select %p212, %s211, 31
      %s214 = smul.addr %s213, 8
      %s215 = scalar_lea.vmem %s5, %s214
      %s216 = smul.u32 16, %s16
      %p217 = scmp.lt.s32.totalorder %s216, 31
      %s218 = scalar_select %p217, %s216, 31
      %s219 = smul.addr %s218, 8
      %s220 = scalar_lea.vmem %s0, %s219
      %s221 = smul.u32 16, %s16
      %s222 = smul.u32 16, %s16
      %p223 = scmp.lt.s32.totalorder %s222, 31
      %s224 = scalar_select %p223, %s222, 31
      %s225 = smul.addr %s224, 8
      %s226 = scalar_lea.vmem %s5, %s225
      %s227 = smul.u32 16, %s16
      %v228 = vld [vmem:[%s220] sm:$0xff]
      %v229 = vld [vmem:[%s220 + $0x8] sm:$0xff]
      %v230 = vld [vmem:[%s220 + $0x10] sm:$0xff]
      %v231 = vld [vmem:[%s220 + $0x18] sm:$0xff]
      %v232 = vld [vmem:[%s220 + $0x20] sm:$0xff]
      %v233 = vld [vmem:[%s220 + $0x28] sm:$0xff]
      %v234 = vld [vmem:[%s220 + $0x30] sm:$0xff]
      %v235 = vld [vmem:[%s220 + $0x38] sm:$0xff]
      %v236 = vld [vmem:[%s220 + $0x40] sm:$0xff]
      %v237 = vld [vmem:[%s220 + $0x48] sm:$0xff]
      %v238 = vld [vmem:[%s220 + $0x50] sm:$0xff]
      %v239 = vld [vmem:[%s220 + $0x58] sm:$0xff]
      %v240 = vld [vmem:[%s220 + $0x60] sm:$0xff]
      %v241 = vld [vmem:[%s220 + $0x68] sm:$0xff]
      %v242 = vld [vmem:[%s220 + $0x70] sm:$0xff]
      %v243 = vld [vmem:[%s220 + $0x78] sm:$0xff]
      %v244 = vld [vmem:[%s1] sm:$0x1]
      %v245 = vld [vmem:[%s2] sm:$0x1]
      %246 = vadd.xlane.f32.xlu0 %v228
      %v247 = vpop.xlane.xlu0 %246
      %248 = vadd.xlane.f32.xlu0 %v229
      %v249 = vpop.xlane.xlu0 %248
      %250 = vadd.xlane.f32.xlu0 %v230
      %v251 = vpop.xlane.xlu0 %250
      %252 = vadd.xlane.f32.xlu0 %v231
      %v253 = vpop.xlane.xlu0 %252
      %254 = vadd.xlane.f32.xlu0 %v232
      %v255 = vpop.xlane.xlu0 %254
      %256 = vadd.xlane.f32.xlu0 %v233
      %v257 = vpop.xlane.xlu0 %256
      %258 = vadd.xlane.f32.xlu0 %v234
      %v259 = vpop.xlane.xlu0 %258
      %260 = vadd.xlane.f32.xlu0 %v235
      %v261 = vpop.xlane.xlu0 %260
      %262 = vadd.xlane.f32.xlu0 %v236
      %v263 = vpop.xlane.xlu0 %262
      %264 = vadd.xlane.f32.xlu0 %v237
      %v265 = vpop.xlane.xlu0 %264
      %266 = vadd.xlane.f32.xlu0 %v238
      %v267 = vpop.xlane.xlu0 %266
      %268 = vadd.xlane.f32.xlu0 %v239
      %v269 = vpop.xlane.xlu0 %268
      %270 = vadd.xlane.f32.xlu0 %v240
      %v271 = vpop.xlane.xlu0 %270
      %272 = vadd.xlane.f32.xlu0 %v241
      %v273 = vpop.xlane.xlu0 %272
      %274 = vadd.xlane.f32.xlu0 %v242
      %v275 = vpop.xlane.xlu0 %274
      %276 = vadd.xlane.f32.xlu0 %v243
      %v277 = vpop.xlane.xlu0 %276
      %v278 = vrcp.pop 128.0
      %v279 = vmul.f32 128.0, %v278
      %v280 = vsub.f32 1.0, %v279
      %v281 = vmul.f32 %v278, %v280
      %v282 = vadd.f32 %v278, %v281
      %vm283 = vweird.f32 %v278
      %v284 = vsel %vm283, %v278, %v282
      %v285 = vmul.f32 %v247, %v284
      %v286 = vmul.f32 %v249, %v284
      %v287 = vmul.f32 %v251, %v284
      %v288 = vmul.f32 %v253, %v284
      %v289 = vmul.f32 %v255, %v284
      %v290 = vmul.f32 %v257, %v284
      %v291 = vmul.f32 %v259, %v284
      %v292 = vmul.f32 %v261, %v284
      %v293 = vmul.f32 %v263, %v284
      %v294 = vmul.f32 %v265, %v284
      %v295 = vmul.f32 %v267, %v284
      %v296 = vmul.f32 %v269, %v284
      %v297 = vmul.f32 %v271, %v284
      %v298 = vmul.f32 %v273, %v284
      %v299 = vmul.f32 %v275, %v284
      %v300 = vmul.f32 %v277, %v284
      %v301 = vsub.f32 %v228, %v285
      %v302 = vsub.f32 %v229, %v286
      %v303 = vsub.f32 %v230, %v287
      %v304 = vsub.f32 %v231, %v288
      %v305 = vsub.f32 %v232, %v289
      %v306 = vsub.f32 %v233, %v290
      %v307 = vsub.f32 %v234, %v291
      %v308 = vsub.f32 %v235, %v292
      %v309 = vsub.f32 %v236, %v293
      %v310 = vsub.f32 %v237, %v294
      %v311 = vsub.f32 %v238, %v295
      %v312 = vsub.f32 %v239, %v296
      %v313 = vsub.f32 %v240, %v297
      %v314 = vsub.f32 %v241, %v298
      %v315 = vsub.f32 %v242, %v299
      %v316 = vsub.f32 %v243, %v300
      %v317 = vmul.f32 %v301, %v301
      %v318 = vmul.f32 %v302, %v302
      %v319 = vmul.f32 %v303, %v303
      %v320 = vmul.f32 %v304, %v304
      %v321 = vmul.f32 %v305, %v305
      %v322 = vmul.f32 %v306, %v306
      %v323 = vmul.f32 %v307, %v307
      %v324 = vmul.f32 %v308, %v308
      %v325 = vmul.f32 %v309, %v309
      %v326 = vmul.f32 %v310, %v310
      %v327 = vmul.f32 %v311, %v311
      %v328 = vmul.f32 %v312, %v312
      %v329 = vmul.f32 %v313, %v313
      %v330 = vmul.f32 %v314, %v314
      %v331 = vmul.f32 %v315, %v315
      %v332 = vmul.f32 %v316, %v316
      %333 = vadd.xlane.f32.xlu0 %v317
      %v334 = vpop.xlane.xlu0 %333
      %335 = vadd.xlane.f32.xlu0 %v318
      %v336 = vpop.xlane.xlu0 %335
      %337 = vadd.xlane.f32.xlu0 %v319
      %v338 = vpop.xlane.xlu0 %337
      %339 = vadd.xlane.f32.xlu0 %v320
      %v340 = vpop.xlane.xlu0 %339
      %341 = vadd.xlane.f32.xlu0 %v321
      %v342 = vpop.xlane.xlu0 %341
      %343 = vadd.xlane.f32.xlu0 %v322
      %v344 = vpop.xlane.xlu0 %343
      %345 = vadd.xlane.f32.xlu0 %v323
      %v346 = vpop.xlane.xlu0 %345
      %347 = vadd.xlane.f32.xlu0 %v324
      %v348 = vpop.xlane.xlu0 %347
      %349 = vadd.xlane.f32.xlu0 %v325
      %v350 = vpop.xlane.xlu0 %349
      %351 = vadd.xlane.f32.xlu0 %v326
      %v352 = vpop.xlane.xlu0 %351
      %353 = vadd.xlane.f32.xlu0 %v327
      %v354 = vpop.xlane.xlu0 %353
      %355 = vadd.xlane.f32.xlu0 %v328
      %v356 = vpop.xlane.xlu0 %355
      %357 = vadd.xlane.f32.xlu0 %v329
      %v358 = vpop.xlane.xlu0 %357
      %359 = vadd.xlane.f32.xlu0 %v330
      %v360 = vpop.xlane.xlu0 %359
      %361 = vadd.xlane.f32.xlu0 %v331
      %v362 = vpop.xlane.xlu0 %361
      %363 = vadd.xlane.f32.xlu0 %v332
      %v364 = vpop.xlane.xlu0 %363
      %v365 = vmul.f32 %v334, %v284
      %v366 = vmul.f32 %v336, %v284
      %v367 = vmul.f32 %v338, %v284
      %v368 = vmul.f32 %v340, %v284
      %v369 = vmul.f32 %v342, %v284
      %v370 = vmul.f32 %v344, %v284
      %v371 = vmul.f32 %v346, %v284
      %v372 = vmul.f32 %v348, %v284
      %v373 = vmul.f32 %v350, %v284
      %v374 = vmul.f32 %v352, %v284
      %v375 = vmul.f32 %v354, %v284
      %v376 = vmul.f32 %v356, %v284
      %v377 = vmul.f32 %v358, %v284
      %v378 = vmul.f32 %v360, %v284
      %v379 = vmul.f32 %v362, %v284
      %v380 = vmul.f32 %v364, %v284
      %v381 = vadd.f32 %v365, 1e-05
      %v382 = vadd.f32 %v366, 1e-05
      %v383 = vadd.f32 %v367, 1e-05
      %v384 = vadd.f32 %v368, 1e-05
      %v385 = vadd.f32 %v369, 1e-05
      %v386 = vadd.f32 %v370, 1e-05
      %v387 = vadd.f32 %v371, 1e-05
      %v388 = vadd.f32 %v372, 1e-05
      %v389 = vadd.f32 %v373, 1e-05
      %v390 = vadd.f32 %v374, 1e-05
      %v391 = vadd.f32 %v375, 1e-05
      %v392 = vadd.f32 %v376, 1e-05
      %v393 = vadd.f32 %v377, 1e-05
      %v394 = vadd.f32 %v378, 1e-05
      %v395 = vadd.f32 %v379, 1e-05
      %v396 = vadd.f32 %v380, 1e-05
      %v397 = vrsqrt.pop %v381
      %v398 = vmul.f32 %v397, %v381
      %v399 = vmul.f32 %v398, %v397
      %v400 = vmul.f32 0.5, %v399
      %v401 = vsub.f32 1.5, %v400
      %v402 = vmul.f32 %v397, %v401
      %vm403 = vweird.f32 %v381
      %vm404 = vweird.f32 %v397
      %vm405 = vmor %vm403, %vm404
      %v406 = vsel %vm405, %v397, %v402
      %v407 = vrsqrt.pop %v382
      %v408 = vmul.f32 %v407, %v382
      %v409 = vmul.f32 %v408, %v407
      %v410 = vmul.f32 0.5, %v409
      %v411 = vsub.f32 1.5, %v410
      %v412 = vmul.f32 %v407, %v411
      %vm413 = vweird.f32 %v382
      %vm414 = vweird.f32 %v407
      %vm415 = vmor %vm413, %vm414
      %v416 = vsel %vm415, %v407, %v412
      %v417 = vrsqrt.pop %v383
      %v418 = vmul.f32 %v417, %v383
      %v419 = vmul.f32 %v418, %v417
      %v420 = vmul.f32 0.5, %v419
      %v421 = vsub.f32 1.5, %v420
      %v422 = vmul.f32 %v417, %v421
      %vm423 = vweird.f32 %v383
      %vm424 = vweird.f32 %v417
      %vm425 = vmor %vm423, %vm424
      %v426 = vsel %vm425, %v417, %v422
      %v427 = vrsqrt.pop %v384
      %v428 = vmul.f32 %v427, %v384
      %v429 = vmul.f32 %v428, %v427
      %v430 = vmul.f32 0.5, %v429
      %v431 = vsub.f32 1.5, %v430
      %v432 = vmul.f32 %v427, %v431
      %vm433 = vweird.f32 %v384
      %vm434 = vweird.f32 %v427
      %vm435 = vmor %vm433, %vm434
      %v436 = vsel %vm435, %v427, %v432
      %v437 = vrsqrt.pop %v385
      %v438 = vmul.f32 %v437, %v385
      %v439 = vmul.f32 %v438, %v437
      %v440 = vmul.f32 0.5, %v439
      %v441 = vsub.f32 1.5, %v440
      %v442 = vmul.f32 %v437, %v441
      %vm443 = vweird.f32 %v385
      %vm444 = vweird.f32 %v437
      %vm445 = vmor %vm443, %vm444
      %v446 = vsel %vm445, %v437, %v442
      %v447 = vrsqrt.pop %v386
      %v448 = vmul.f32 %v447, %v386
      %v449 = vmul.f32 %v448, %v447
      %v450 = vmul.f32 0.5, %v449
      %v451 = vsub.f32 1.5, %v450
      %v452 = vmul.f32 %v447, %v451
      %vm453 = vweird.f32 %v386
      %vm454 = vweird.f32 %v447
      %vm455 = vmor %vm453, %vm454
      %v456 = vsel %vm455, %v447, %v452
      %v457 = vrsqrt.pop %v387
      %v458 = vmul.f32 %v457, %v387
      %v459 = vmul.f32 %v458, %v457
      %v460 = vmul.f32 0.5, %v459
      %v461 = vsub.f32 1.5, %v460
      %v462 = vmul.f32 %v457, %v461
      %vm463 = vweird.f32 %v387
      %vm464 = vweird.f32 %v457
      %vm465 = vmor %vm463, %vm464
      %v466 = vsel %vm465, %v457, %v462
      %v467 = vrsqrt.pop %v388
      %v468 = vmul.f32 %v467, %v388
      %v469 = vmul.f32 %v468, %v467
      %v470 = vmul.f32 0.5, %v469
      %v471 = vsub.f32 1.5, %v470
      %v472 = vmul.f32 %v467, %v471
      %vm473 = vweird.f32 %v388
      %vm474 = vweird.f32 %v467
      %vm475 = vmor %vm473, %vm474
      %v476 = vsel %vm475, %v467, %v472
      %v477 = vrsqrt.pop %v389
      %v478 = vmul.f32 %v477, %v389
      %v479 = vmul.f32 %v478, %v477
      %v480 = vmul.f32 0.5, %v479
      %v481 = vsub.f32 1.5, %v480
      %v482 = vmul.f32 %v477, %v481
      %vm483 = vweird.f32 %v389
      %vm484 = vweird.f32 %v477
      %vm485 = vmor %vm483, %vm484
      %v486 = vsel %vm485, %v477, %v482
      %v487 = vrsqrt.pop %v390
      %v488 = vmul.f32 %v487, %v390
      %v489 = vmul.f32 %v488, %v487
      %v490 = vmul.f32 0.5, %v489
      %v491 = vsub.f32 1.5, %v490
      %v492 = vmul.f32 %v487, %v491
      %vm493 = vweird.f32 %v390
      %vm494 = vweird.f32 %v487
      %vm495 = vmor %vm493, %vm494
      %v496 = vsel %vm495, %v487, %v492
      %v497 = vrsqrt.pop %v391
      %v498 = vmul.f32 %v497, %v391
      %v499 = vmul.f32 %v498, %v497
      %v500 = vmul.f32 0.5, %v499
      %v501 = vsub.f32 1.5, %v500
      %v502 = vmul.f32 %v497, %v501
      %vm503 = vweird.f32 %v391
      %vm504 = vweird.f32 %v497
      %vm505 = vmor %vm503, %vm504
      %v506 = vsel %vm505, %v497, %v502
      %v507 = vrsqrt.pop %v392
      %v508 = vmul.f32 %v507, %v392
      %v509 = vmul.f32 %v508, %v507
      %v510 = vmul.f32 0.5, %v509
      %v511 = vsub.f32 1.5, %v510
      %v512 = vmul.f32 %v507, %v511
      %vm513 = vweird.f32 %v392
      %vm514 = vweird.f32 %v507
      %vm515 = vmor %vm513, %vm514
      %v516 = vsel %vm515, %v507, %v512
      %v517 = vrsqrt.pop %v393
      %v518 = vmul.f32 %v517, %v393
      %v519 = vmul.f32 %v518, %v517
      %v520 = vmul.f32 0.5, %v519
      %v521 = vsub.f32 1.5, %v520
      %v522 = vmul.f32 %v517, %v521
      %vm523 = vweird.f32 %v393
      %vm524 = vweird.f32 %v517
      %vm525 = vmor %vm523, %vm524
      %v526 = vsel %vm525, %v517, %v522
      %v527 = vrsqrt.pop %v394
      %v528 = vmul.f32 %v527, %v394
      %v529 = vmul.f32 %v528, %v527
      %v530 = vmul.f32 0.5, %v529
      %v531 = vsub.f32 1.5, %v530
      %v532 = vmul.f32 %v527, %v531
      %vm533 = vweird.f32 %v394
      %vm534 = vweird.f32 %v527
      %vm535 = vmor %vm533, %vm534
      %v536 = vsel %vm535, %v527, %v532
      %v537 = vrsqrt.pop %v395
      %v538 = vmul.f32 %v537, %v395
      %v539 = vmul.f32 %v538, %v537
      %v540 = vmul.f32 0.5, %v539
      %v541 = vsub.f32 1.5, %v540
      %v542 = vmul.f32 %v537, %v541
      %vm543 = vweird.f32 %v395
      %vm544 = vweird.f32 %v537
      %vm545 = vmor %vm543, %vm544
      %v546 = vsel %vm545, %v537, %v542
      %v547 = vrsqrt.pop %v396
      %v548 = vmul.f32 %v547, %v396
      %v549 = vmul.f32 %v548, %v547
      %v550 = vmul.f32 0.5, %v549
      %v551 = vsub.f32 1.5, %v550
      %v552 = vmul.f32 %v547, %v551
      %vm553 = vweird.f32 %v396
      %vm554 = vweird.f32 %v547
      %vm555 = vmor %vm553, %vm554
      %v556 = vsel %vm555, %v547, %v552
      %v557 = vmul.f32 %v301, %v406
      %v558 = vmul.f32 %v302, %v416
      %v559 = vmul.f32 %v303, %v426
      %v560 = vmul.f32 %v304, %v436
      %v561 = vmul.f32 %v305, %v446
      %v562 = vmul.f32 %v306, %v456
      %v563 = vmul.f32 %v307, %v466
      %v564 = vmul.f32 %v308, %v476
      %v565 = vmul.f32 %v309, %v486
      %v566 = vmul.f32 %v310, %v496
      %v567 = vmul.f32 %v311, %v506
      %v568 = vmul.f32 %v312, %v516
      %v569 = vmul.f32 %v313, %v526
      %v570 = vmul.f32 %v314, %v536
      %v571 = vmul.f32 %v315, %v546
      %v572 = vmul.f32 %v316, %v556
      %v574 = vperm.slane %v244, 0
      %v576 = vmul.f32 %v557, %v574
      %v577 = vmul.f32 %v558, %v574
      %v578 = vmul.f32 %v559, %v574
      %v579 = vmul.f32 %v560, %v574
      %v580 = vmul.f32 %v561, %v574
      %v581 = vmul.f32 %v562, %v574
      %v582 = vmul.f32 %v563, %v574
      %v583 = vmul.f32 %v564, %v574
      %v584 = vmul.f32 %v565, %v574
      %v585 = vmul.f32 %v566, %v574
      %v586 = vmul.f32 %v567, %v574
      %v587 = vmul.f32 %v568, %v574
      %v588 = vmul.f32 %v569, %v574
      %v589 = vmul.f32 %v570, %v574
      %v590 = vmul.f32 %v571, %v574
      %v591 = vmul.f32 %v572, %v574
      %v593 = vperm.slane %v245, 0
      %v595 = vadd.f32 %v576, %v593
      %v596 = vadd.f32 %v577, %v593
      %v597 = vadd.f32 %v578, %v593
      %v598 = vadd.f32 %v579, %v593
      %v599 = vadd.f32 %v580, %v593
      %v600 = vadd.f32 %v581, %v593
      %v601 = vadd.f32 %v582, %v593
      %v602 = vadd.f32 %v583, %v593
      %v603 = vadd.f32 %v584, %v593
      %v604 = vadd.f32 %v585, %v593
      %v605 = vadd.f32 %v586, %v593
      %v606 = vadd.f32 %v587, %v593
      %v607 = vadd.f32 %v588, %v593
      %v608 = vadd.f32 %v589, %v593
      %v609 = vadd.f32 %v590, %v593
      %v610 = vadd.f32 %v591, %v593
      %v611 = vpack.c.bf16 %v596, %v595
      %v612 = vpack.c.bf16 %v598, %v597
      %v613 = vpack.c.bf16 %v600, %v599
      %v614 = vpack.c.bf16 %v602, %v601
      %v615 = vpack.c.bf16 %v604, %v603
      %v616 = vpack.c.bf16 %v606, %v605
      %v617 = vpack.c.bf16 %v608, %v607
      %v618 = vpack.c.bf16 %v610, %v609
      %v619 = vld [vmem:[%s3] sm:$0xf]
      %v620 = vld [vmem:[%s3 + $0x4] sm:$0xf]
      %v621 = vld [vmem:[%s3 + $0x8] sm:$0xf]
      %v622 = vld [vmem:[%s3 + $0xc] sm:$0xf]
      %v623 = vld [vmem:[%s3 + $0x10] sm:$0xf]
      %v624 = vld [vmem:[%s3 + $0x14] sm:$0xf]
      %v625 = vld [vmem:[%s3 + $0x18] sm:$0xf]
      %v626 = vld [vmem:[%s3 + $0x1c] sm:$0xf]
      %v627 = vld [vmem:[%s3 + $0x20] sm:$0xf]
      %v628 = vld [vmem:[%s3 + $0x24] sm:$0xf]
      %v629 = vld [vmem:[%s3 + $0x28] sm:$0xf]
      %v630 = vld [vmem:[%s3 + $0x2c] sm:$0xf]
      %v631 = vld [vmem:[%s3 + $0x30] sm:$0xf]
      %v632 = vld [vmem:[%s3 + $0x34] sm:$0xf]
      %v633 = vld [vmem:[%s3 + $0x38] sm:$0xf]
      %v634 = vld [vmem:[%s3 + $0x3c] sm:$0xf]
      %v635 = vld [vmem:[%s4] sm:$0x1]
      %v637 = vperm.slane %v635, 0
      %v655 = vunpack.c.l.b16 %v619
      %v656 = vunpack.c.l.b16 %v620
      %v657 = vunpack.c.l.b16 %v621
      %v658 = vunpack.c.l.b16 %v622
      %v659 = vunpack.c.l.b16 %v623
      %v660 = vunpack.c.l.b16 %v624
      %v661 = vunpack.c.l.b16 %v625
      %v662 = vunpack.c.l.b16 %v626
      %v663 = vunpack.c.l.b16 %v627
      %v664 = vunpack.c.l.b16 %v628
      %v665 = vunpack.c.l.b16 %v629
      %v666 = vunpack.c.l.b16 %v630
      %v667 = vunpack.c.l.b16 %v631
      %v668 = vunpack.c.l.b16 %v632
      %v669 = vunpack.c.l.b16 %v633
      %v670 = vunpack.c.l.b16 %v634
      %v671 = vpack.c.b16 %v656, %v655
      %v672 = vpack.c.b16 %v658, %v657
      %v673 = vpack.c.b16 %v660, %v659
      %v674 = vpack.c.b16 %v662, %v661
      %v675 = vpack.c.b16 %v664, %v663
      %v676 = vpack.c.b16 %v666, %v665
      %v677 = vpack.c.b16 %v668, %v667
      %v678 = vpack.c.b16 %v670, %v669
      %687 = vmatpush.bf16.msra.mxu0 %v678
      %688 = vmatpush.bf16.msra.mxu0 %v677
      %689 = vmatpush.bf16.msra.mxu0 %v676
      %690 = vmatpush.bf16.msra.mxu0 %v675
      %691 = vmatpush.bf16.msra.mxu0 %v674
      %692 = vmatpush.bf16.msra.mxu0 %v673
      %693 = vmatpush.bf16.msra.mxu0 %v672
      %694 = vmatpush.bf16.msra.mxu0 %v671
      %695 = vmatmul.bf16.gmra.mxu0 %v611
      %v696 = vpop.f32.mrf.mxu0
      %v697 = vadd.f32 %v637, %v696
      %v698 = vpop.f32.mrf.mxu0
      %v699 = vadd.f32 %v637, %v698
      %700 = vmatmul.bf16.gmra.mxu0 %v612
      %v701 = vpop.f32.mrf.mxu0
      %v702 = vadd.f32 %v637, %v701
      %v703 = vpop.f32.mrf.mxu0
      %v704 = vadd.f32 %v637, %v703
      %705 = vmatmul.bf16.gmra.mxu0 %v613
      %v706 = vpop.f32.mrf.mxu0
      %v707 = vadd.f32 %v637, %v706
      %v708 = vpop.f32.mrf.mxu0
      %v709 = vadd.f32 %v637, %v708
      %710 = vmatmul.bf16.gmra.mxu0 %v614
      %v711 = vpop.f32.mrf.mxu0
      %v712 = vadd.f32 %v637, %v711
      %v713 = vpop.f32.mrf.mxu0
      %v714 = vadd.f32 %v637, %v713
      %715 = vmatmul.bf16.gmra.mxu0 %v615
      %v716 = vpop.f32.mrf.mxu0
      %v717 = vadd.f32 %v637, %v716
      %v718 = vpop.f32.mrf.mxu0
      %v719 = vadd.f32 %v637, %v718
      %720 = vmatmul.bf16.gmra.mxu0 %v616
      %v721 = vpop.f32.mrf.mxu0
      %v722 = vadd.f32 %v637, %v721
      %v723 = vpop.f32.mrf.mxu0
      %v724 = vadd.f32 %v637, %v723
      %725 = vmatmul.bf16.gmra.mxu0 %v617
      %v726 = vpop.f32.mrf.mxu0
      %v727 = vadd.f32 %v637, %v726
      %v728 = vpop.f32.mrf.mxu0
      %v729 = vadd.f32 %v637, %v728
      %730 = vmatmul.bf16.gmra.mxu0 %v618
      %v731 = vpop.f32.mrf.mxu0
      %v732 = vadd.f32 %v637, %v731
      %v733 = vpop.f32.mrf.mxu0
      %v734 = vadd.f32 %v637, %v733
      %735 = vdwg.mxu0
      %736 = vst [vmem:[%s226] sm:$0xff] %v697
      %737 = vst [vmem:[%s226 + $0x8] sm:$0xff] %v699
      %738 = vst [vmem:[%s226 + $0x10] sm:$0xff] %v702
      %739 = vst [vmem:[%s226 + $0x18] sm:$0xff] %v704
      %740 = vst [vmem:[%s226 + $0x20] sm:$0xff] %v707
      %741 = vst [vmem:[%s226 + $0x28] sm:$0xff] %v709
      %742 = vst [vmem:[%s226 + $0x30] sm:$0xff] %v712
      %743 = vst [vmem:[%s226 + $0x38] sm:$0xff] %v714
      %744 = vst [vmem:[%s226 + $0x40] sm:$0xff] %v717
      %745 = vst [vmem:[%s226 + $0x48] sm:$0xff] %v719
      %746 = vst [vmem:[%s226 + $0x50] sm:$0xff] %v722
      %747 = vst [vmem:[%s226 + $0x58] sm:$0xff] %v724
      %748 = vst [vmem:[%s226 + $0x60] sm:$0xff] %v727
      %749 = vst [vmem:[%s226 + $0x68] sm:$0xff] %v729
      %750 = vst [vmem:[%s226 + $0x70] sm:$0xff] %v732
      %751 = vst [vmem:[%s226 + $0x78] sm:$0xff] %v734
      %s752 = smul.u32 16, %s16
      %p753 = scmp.lt.s32.totalorder %s752, 31
      %s754 = scalar_select %p753, %s752, 31
      %s755 = smul.addr %s754, 8
      %s756 = scalar_lea.vmem %s5, %s755
      // Predicated region
      $region41: #{transformer3d_aux_forward.10} parent=39 // pred_check
        %p757 = pneg %p144
      $region42: #{transformer3d_aux_forward.10} parent=39 // pred_check_branch
        %759 = sbr.rel (%p757) target = $region44
      $region43: #{transformer3d_aux_forward.10} parent=39 // pred_region
        %s760 = smul.u32 16, %s16
      $region44: #{transformer3d_aux_forward.10} parent=39 // pred_fallthru
        _
    $region40: #{transformer3d_aux_forward.10} parent=5 // pred_fallthru
      _
    %p761 = scmp.le.s32.totalorder 2, %s11
    // Predicated region
    $region45: #{transformer3d_aux_forward.10} parent=5 // pred_check
      %p762 = pneg %p761
    $region46: #{transformer3d_aux_forward.10} parent=5 // pred_check_branch
      %764 = sbr.rel (%p762) target = $region48
    $region47: #{transformer3d_aux_forward.10} parent=5 // pred_region
      %s765 = ssub.s32 %s11, 2
      // Predicated region
      $region49: #{transformer3d_aux_forward.10} parent=47 // pred_check
        %p766 = pneg %p150
      $region50: #{transformer3d_aux_forward.10} parent=47 // pred_check_branch
        %768 = sbr.rel (%p766) target = $region52
      $region51: #{transformer3d_aux_forward.10} parent=47 // pred_region
        %s769 = smul.u32 16, %s17
        %p770 = scmp.lt.s32.totalorder %s769, 31
        %s771 = scalar_select %p770, %s769, 31
        %s772 = smul.addr %s771, 8
        %s773 = scalar_lea.vmem %s5, %s772
      $region52: #{transformer3d_aux_forward.10} parent=47 // pred_fallthru
        _
    $region48: #{transformer3d_aux_forward.10} parent=5 // pred_fallthru
      _
  $region6: #{transformer3d_aux_forward.10} parent=0 // loop_footer
    %s15 = sadd.s32 1, %s11
  $region7: #{transformer3d_aux_forward.10} parent=0 // loop_footer_branch
    %10 = sbr.rel target = $region3
  $region8: #{transformer3d_aux_forward.10} parent=0 // loop_exit
    _

// kernel: transformer3d_aux_forward.13
$region0: #{transformer3d_aux_forward.13}
  #allocation0 [shape = 'u32[]', space=smem, size = 0x4, offset = 0x4, fixed_abs, tag = 'smem constant byte address 0x4 - core index']
  #allocation1 [shape = 'u32[72,128]{1,0:T(1,128)}', space=vmem, size = 0x9000, scoped, tag = 'internal scratch']
  %s0 = inlined_call_operand.vmem [shape: f32[256,128], index: 0, kind: input, shape index: {}]
  %s1 = inlined_call_operand.vmem [shape: f32[1,128], index: 1, kind: input, shape index: {}]
  %s2 = inlined_call_operand.vmem [shape: f32[1,128], index: 2, kind: input, shape index: {}]
  %s3 = inlined_call_operand.vmem [shape: bf16[128,256], index: 3, kind: input, shape index: {}]
  %s4 = inlined_call_operand.vmem [shape: f32[1,256], index: 4, kind: input, shape index: {}]
  %s5 = inlined_call_operand.vmem [shape: f32[256,256], index: 5, kind: output, shape index: {}]
  %s6 = sld [smem:[#allocation0]]
  $region53: #{transformer3d_aux_forward.13} parent=0
    _
  %s8 = ssub.s32 1, %s6
  %s9 = scalar_select 0, %s8, %s6
  loop: start=0, step=1, limit=4
  $region2: #{transformer3d_aux_forward.13} parent=0 // loop_pre_header
    _
  $region3: #{transformer3d_aux_forward.13} parent=0 // loop_header
    %s11 = sphi 0, %s15
    %p12 = scmp.ge.s32.totalorder %s11, 4
    %s21 = sphi 0, %s23
    %s24 = sphi 0, %s21
    %s25 = sphi 0, %s24
    %s41 = sphi 0, %s25
    %s45 = sphi 0, %s45
    %s47 = sphi 0, %s45
    %s48 = sphi 0, %s47
    %s62 = sphi 0, %s48
    %s66 = sphi 0, %s66
    %s68 = sphi 0, %s66
    %s69 = sphi 0, %s68
    %s83 = sphi 0, %s69
    %s87 = sphi 0, %s87
    %s89 = sphi 0, %s87
    %s90 = sphi 0, %s89
    %s104 = sphi 0, %s90
    %s108 = sphi 0, %s108
    %s110 = sphi 0, %s108
    %s111 = sphi 0, %s110
    %s125 = sphi 0, %s111
    %s131 = sphi 0, %s133
    %s134 = sphi 0, %s131
    %s135 = sphi 0, %s134
    %s151 = sphi 0, %s135
  $region4: #{transformer3d_aux_forward.13} parent=0 // loop_header_branch
    %14 = sbr.rel (%p12) target = $region8
  $region5: #{transformer3d_aux_forward.13} parent=0 // loop_body
    %s16 = ssub.s32 %s11, 1
    %s17 = ssub.s32 %s11, 2
    %s18 = sadd.s32 %s11, 1
    %s19 = ssub.s32 %s11, %s18
    %p20 = scmp.eq.s32.totalorder %s19, 0
    %s22 = sadd.s32 %s21, 1
    %s23 = scalar_select %p20, %s21, %s22
    %p26 = pneg %p20
    %p27 = scmp.eq.s32.totalorder %s11, 1
    %p28 = por %p26, %p27
    %p29 = scmp.ne.s32.totalorder %s21, %s24
    %p30 = scmp.eq.s32.totalorder %s11, 0
    %p31 = por %p29, %p30
    %p32 = scmp.ne.s32.totalorder %s21, %s24
    %p33 = scmp.eq.s32.totalorder %s16, 1
    %p34 = por %p32, %p33
    %p35 = scmp.ne.s32.totalorder %s24, %s25
    %p36 = scmp.eq.s32.totalorder %s16, 0
    %p37 = por %p35, %p36
    %p38 = scmp.ne.s32.totalorder %s24, %s25
    %p39 = scmp.eq.s32.totalorder %s17, 1
    %p40 = por %p38, %p39
    %p42 = scmp.ne.s32.totalorder %s25, %s41
    %p43 = scmp.eq.s32.totalorder %s17, 0
    %p44 = por %p42, %p43
    %s46 = sadd.s32 %s45, 1
    %p49 = scmp.eq.s32.totalorder %s11, 1
    %p50 = scmp.ne.s32.totalorder %s45, %s47
    %p51 = scmp.eq.s32.totalorder %s11, 0
    %p52 = por %p50, %p51
    %p53 = scmp.ne.s32.totalorder %s45, %s47
    %p54 = scmp.eq.s32.totalorder %s16, 1
    %p55 = por %p53, %p54
    %p56 = scmp.ne.s32.totalorder %s47, %s48
    %p57 = scmp.eq.s32.totalorder %s16, 0
    %p58 = por %p56, %p57
    %p59 = scmp.ne.s32.totalorder %s47, %s48
    %p60 = scmp.eq.s32.totalorder %s17, 1
    %p61 = por %p59, %p60
    %p63 = scmp.ne.s32.totalorder %s48, %s62
    %p64 = scmp.eq.s32.totalorder %s17, 0
    %p65 = por %p63, %p64
    %s67 = sadd.s32 %s66, 1
    %p70 = scmp.eq.s32.totalorder %s11, 1
    %p71 = scmp.ne.s32.totalorder %s66, %s68
    %p72 = scmp.eq.s32.totalorder %s11, 0
    %p73 = por %p71, %p72
    %p74 = scmp.ne.s32.totalorder %s66, %s68
    %p75 = scmp.eq.s32.totalorder %s16, 1
    %p76 = por %p74, %p75
    %p77 = scmp.ne.s32.totalorder %s68, %s69
    %p78 = scmp.eq.s32.totalorder %s16, 0
    %p79 = por %p77, %p78
    %p80 = scmp.ne.s32.totalorder %s68, %s69
    %p81 = scmp.eq.s32.totalorder %s17, 1
    %p82 = por %p80, %p81
    %p84 = scmp.ne.s32.totalorder %s69, %s83
    %p85 = scmp.eq.s32.totalorder %s17, 0
    %p86 = por %p84, %p85
    %s88 = sadd.s32 %s87, 1
    %p91 = scmp.eq.s32.totalorder %s11, 1
    %p92 = scmp.ne.s32.totalorder %s87, %s89
    %p93 = scmp.eq.s32.totalorder %s11, 0
    %p94 = por %p92, %p93
    %p95 = scmp.ne.s32.totalorder %s87, %s89
    %p96 = scmp.eq.s32.totalorder %s16, 1
    %p97 = por %p95, %p96
    %p98 = scmp.ne.s32.totalorder %s89, %s90
    %p99 = scmp.eq.s32.totalorder %s16, 0
    %p100 = por %p98, %p99
    %p101 = scmp.ne.s32.totalorder %s89, %s90
    %p102 = scmp.eq.s32.totalorder %s17, 1
    %p103 = por %p101, %p102
    %p105 = scmp.ne.s32.totalorder %s90, %s104
    %p106 = scmp.eq.s32.totalorder %s17, 0
    %p107 = por %p105, %p106
    %s109 = sadd.s32 %s108, 1
    %p112 = scmp.eq.s32.totalorder %s11, 1
    %p113 = scmp.ne.s32.totalorder %s108, %s110
    %p114 = scmp.eq.s32.totalorder %s11, 0
    %p115 = por %p113, %p114
    %p116 = scmp.ne.s32.totalorder %s108, %s110
    %p117 = scmp.eq.s32.totalorder %s16, 1
    %p118 = por %p116, %p117
    %p119 = scmp.ne.s32.totalorder %s110, %s111
    %p120 = scmp.eq.s32.totalorder %s16, 0
    %p121 = por %p119, %p120
    %p122 = scmp.ne.s32.totalorder %s110, %s111
    %p123 = scmp.eq.s32.totalorder %s17, 1
    %p124 = por %p122, %p123
    %p126 = scmp.ne.s32.totalorder %s111, %s125
    %p127 = scmp.eq.s32.totalorder %s17, 0
    %p128 = por %p126, %p127
    %s129 = ssub.s32 %s11, %s18
    %p130 = scmp.eq.s32.totalorder %s129, 0
    %s132 = sadd.s32 %s131, 1
    %s133 = scalar_select %p130, %s131, %s132
    %p136 = pneg %p130
    %p137 = scmp.eq.s32.totalorder %s11, 1
    %p138 = por %p136, %p137
    %p139 = scmp.ne.s32.totalorder %s131, %s134
    %p140 = scmp.eq.s32.totalorder %s11, 0
    %p141 = por %p139, %p140
    %p142 = scmp.ne.s32.totalorder %s131, %s134
    %p143 = scmp.eq.s32.totalorder %s16, 1
    %p144 = por %p142, %p143
    %p145 = scmp.ne.s32.totalorder %s134, %s135
    %p146 = scmp.eq.s32.totalorder %s16, 0
    %p147 = por %p145, %p146
    %p148 = scmp.ne.s32.totalorder %s134, %s135
    %p149 = scmp.eq.s32.totalorder %s17, 1
    %p150 = por %p148, %p149
    %p152 = scmp.ne.s32.totalorder %s135, %s151
    %p153 = scmp.eq.s32.totalorder %s17, 0
    %p154 = por %p152, %p153
    %p155 = scmp.le.s32.totalorder 1, %s11
    %p156 = scmp.lt.s32.totalorder %s11, 3
    %p157 = pnand %p155, %p156
    %p158 = pneg %p157
    // Predicated region
    $region9: #{transformer3d_aux_forward.13} parent=5 // pred_check
      _
    $region10: #{transformer3d_aux_forward.13} parent=5 // pred_check_branch
      %160 = sbr.rel (%p157) target = $region12
    $region11: #{transformer3d_aux_forward.13} parent=5 // pred_region
      %s161 = ssub.s32 %s11, 1
      // Predicated region
      $region13: #{transformer3d_aux_forward.13} parent=11 // pred_check
        %p162 = pneg %p58
      $region14: #{transformer3d_aux_forward.13} parent=11 // pred_check_branch
        %164 = sbr.rel (%p162) target = $region16
      $region15: #{transformer3d_aux_forward.13} parent=11 // pred_region
        _
      $region16: #{transformer3d_aux_forward.13} parent=11 // pred_fallthru
        _
      // Predicated region
      $region17: #{transformer3d_aux_forward.13} parent=11 // pred_check
        %p165 = pneg %p79
      $region18: #{transformer3d_aux_forward.13} parent=11 // pred_check_branch
        %167 = sbr.rel (%p165) target = $region20
      $region19: #{transformer3d_aux_forward.13} parent=11 // pred_region
        _
      $region20: #{transformer3d_aux_forward.13} parent=11 // pred_fallthru
        _
      // Predicated region
      $region21: #{transformer3d_aux_forward.13} parent=11 // pred_check
        %p168 = pneg %p100
      $region22: #{transformer3d_aux_forward.13} parent=11 // pred_check_branch
        %170 = sbr.rel (%p168) target = $region24
      $region23: #{transformer3d_aux_forward.13} parent=11 // pred_region
        _
      $region24: #{transformer3d_aux_forward.13} parent=11 // pred_fallthru
        _
      // Predicated region
      $region25: #{transformer3d_aux_forward.13} parent=11 // pred_check
        %p171 = pneg %p121
      $region26: #{transformer3d_aux_forward.13} parent=11 // pred_check_branch
        %173 = sbr.rel (%p171) target = $region28
      $region27: #{transformer3d_aux_forward.13} parent=11 // pred_region
        _
      $region28: #{transformer3d_aux_forward.13} parent=11 // pred_fallthru
        _
    $region12: #{transformer3d_aux_forward.13} parent=5 // pred_fallthru
      _
    %p174 = scmp.lt.s32.totalorder %s11, 2
    // Predicated region
    $region29: #{transformer3d_aux_forward.13} parent=5 // pred_check
      %p175 = pneg %p174
    $region30: #{transformer3d_aux_forward.13} parent=5 // pred_check_branch
      %177 = sbr.rel (%p175) target = $region32
    $region31: #{transformer3d_aux_forward.13} parent=5 // pred_region
      // Predicated region
      $region33: #{transformer3d_aux_forward.13} parent=31 // pred_check
        %p178 = pneg %p31
      $region34: #{transformer3d_aux_forward.13} parent=31 // pred_check_branch
        %180 = sbr.rel (%p178) target = $region36
      $region35: #{transformer3d_aux_forward.13} parent=31 // pred_region
        %s181 = smul.u32 16, %s11
        %p182 = scmp.lt.s32.totalorder %s181, 31
        %s183 = scalar_select %p182, %s181, 31
        %s184 = smul.addr %s183, 8
        %s185 = scalar_lea.vmem %s0, %s184
        %s186 = smul.u32 16, %s11
      $region36: #{transformer3d_aux_forward.13} parent=31 // pred_fallthru
        _
    $region32: #{transformer3d_aux_forward.13} parent=5 // pred_fallthru
      _
    %p187 = scmp.le.s32.totalorder 1, %s11
    %p188 = scmp.lt.s32.totalorder %s11, 3
    %p189 = pnand %p187, %p188
    %p190 = pneg %p189
    // Predicated region
    $region37: #{transformer3d_aux_forward.13} parent=5 // pred_check
      _
    $region38: #{transformer3d_aux_forward.13} parent=5 // pred_check_branch
      %192 = sbr.rel (%p189) target = $region40
    $region39: #{transformer3d_aux_forward.13} parent=5 // pred_region
      %s193 = ssub.s32 %s11, 1
      %s194 = smul.u32 16, %s16
      %p195 = scmp.lt.s32.totalorder %s194, 31
      %s196 = scalar_select %p195, %s194, 31
      %s197 = smul.addr %s196, 8
      %s198 = scalar_lea.vmem %s0, %s197
      %p199 = pneg %p37
      %p200 = pneg %p34
      %p201 = pneg %p58
      %p202 = pneg %p55
      %p203 = pneg %p79
      %p204 = pneg %p76
      %p205 = pneg %p100
      %p206 = pneg %p97
      %p207 = pneg %p121
      %p208 = pneg %p118
      %p209 = pneg %p147
      %p210 = pneg %p144
      %s211 = smul.u32 16, %s16
      %p212 = scmp.lt.s32.totalorder %s211, 31
      %s213 = scalar_select %p212, %s211, 31
      %s214 = smul.addr %s213, 2
      %s215 = smul.addr %s214, 8
      %s216 = scalar_lea.vmem %s5, %s215
      %s217 = smul.u32 16, %s16
      %p218 = scmp.lt.s32.totalorder %s217, 31
      %s219 = scalar_select %p218, %s217, 31
      %s220 = smul.addr %s219, 8
      %s221 = scalar_lea.vmem %s0, %s220
      %s222 = smul.u32 16, %s16
      %s223 = smul.u32 16, %s16
      %p224 = scmp.lt.s32.totalorder %s223, 31
      %s225 = scalar_select %p224, %s223, 31
      %s226 = smul.addr %s225, 2
      %s227 = smul.addr %s226, 8
      %s228 = scalar_lea.vmem %s5, %s227
      %s229 = smul.u32 16, %s16
      %v230 = vld [vmem:[%s221] sm:$0xff]
      %v231 = vld [vmem:[%s221 + $0x8] sm:$0xff]
      %v232 = vld [vmem:[%s221 + $0x10] sm:$0xff]
      %v233 = vld [vmem:[%s221 + $0x18] sm:$0xff]
      %v234 = vld [vmem:[%s221 + $0x20] sm:$0xff]
      %v235 = vld [vmem:[%s221 + $0x28] sm:$0xff]
      %v236 = vld [vmem:[%s221 + $0x30] sm:$0xff]
      %v237 = vld [vmem:[%s221 + $0x38] sm:$0xff]
      %v238 = vld [vmem:[%s221 + $0x40] sm:$0xff]
      %v239 = vld [vmem:[%s221 + $0x48] sm:$0xff]
      %v240 = vld [vmem:[%s221 + $0x50] sm:$0xff]
      %v241 = vld [vmem:[%s221 + $0x58] sm:$0xff]
      %v242 = vld [vmem:[%s221 + $0x60] sm:$0xff]
      %v243 = vld [vmem:[%s221 + $0x68] sm:$0xff]
      %v244 = vld [vmem:[%s221 + $0x70] sm:$0xff]
      %v245 = vld [vmem:[%s221 + $0x78] sm:$0xff]
      %v246 = vld [vmem:[%s1] sm:$0x1]
      %v247 = vld [vmem:[%s2] sm:$0x1]
      %248 = vadd.xlane.f32.xlu0 %v230
      %v249 = vpop.xlane.xlu0 %248
      %250 = vadd.xlane.f32.xlu0 %v231
      %v251 = vpop.xlane.xlu0 %250
      %252 = vadd.xlane.f32.xlu0 %v232
      %v253 = vpop.xlane.xlu0 %252
      %254 = vadd.xlane.f32.xlu0 %v233
      %v255 = vpop.xlane.xlu0 %254
      %256 = vadd.xlane.f32.xlu0 %v234
      %v257 = vpop.xlane.xlu0 %256
      %258 = vadd.xlane.f32.xlu0 %v235
      %v259 = vpop.xlane.xlu0 %258
      %260 = vadd.xlane.f32.xlu0 %v236
      %v261 = vpop.xlane.xlu0 %260
      %262 = vadd.xlane.f32.xlu0 %v237
      %v263 = vpop.xlane.xlu0 %262
      %264 = vadd.xlane.f32.xlu0 %v238
      %v265 = vpop.xlane.xlu0 %264
      %266 = vadd.xlane.f32.xlu0 %v239
      %v267 = vpop.xlane.xlu0 %266
      %268 = vadd.xlane.f32.xlu0 %v240
      %v269 = vpop.xlane.xlu0 %268
      %270 = vadd.xlane.f32.xlu0 %v241
      %v271 = vpop.xlane.xlu0 %270
      %272 = vadd.xlane.f32.xlu0 %v242
      %v273 = vpop.xlane.xlu0 %272
      %274 = vadd.xlane.f32.xlu0 %v243
      %v275 = vpop.xlane.xlu0 %274
      %276 = vadd.xlane.f32.xlu0 %v244
      %v277 = vpop.xlane.xlu0 %276
      %278 = vadd.xlane.f32.xlu0 %v245
      %v279 = vpop.xlane.xlu0 %278
      %v280 = vrcp.pop 128.0
      %v281 = vmul.f32 128.0, %v280
      %v282 = vsub.f32 1.0, %v281
      %v283 = vmul.f32 %v280, %v282
      %v284 = vadd.f32 %v280, %v283
      %vm285 = vweird.f32 %v280
      %v286 = vsel %vm285, %v280, %v284
      %v287 = vmul.f32 %v249, %v286
      %v288 = vmul.f32 %v251, %v286
      %v289 = vmul.f32 %v253, %v286
      %v290 = vmul.f32 %v255, %v286
      %v291 = vmul.f32 %v257, %v286
      %v292 = vmul.f32 %v259, %v286
      %v293 = vmul.f32 %v261, %v286
      %v294 = vmul.f32 %v263, %v286
      %v295 = vmul.f32 %v265, %v286
      %v296 = vmul.f32 %v267, %v286
      %v297 = vmul.f32 %v269, %v286
      %v298 = vmul.f32 %v271, %v286
      %v299 = vmul.f32 %v273, %v286
      %v300 = vmul.f32 %v275, %v286
      %v301 = vmul.f32 %v277, %v286
      %v302 = vmul.f32 %v279, %v286
      %v303 = vsub.f32 %v230, %v287
      %v304 = vsub.f32 %v231, %v288
      %v305 = vsub.f32 %v232, %v289
      %v306 = vsub.f32 %v233, %v290
      %v307 = vsub.f32 %v234, %v291
      %v308 = vsub.f32 %v235, %v292
      %v309 = vsub.f32 %v236, %v293
      %v310 = vsub.f32 %v237, %v294
      %v311 = vsub.f32 %v238, %v295
      %v312 = vsub.f32 %v239, %v296
      %v313 = vsub.f32 %v240, %v297
      %v314 = vsub.f32 %v241, %v298
      %v315 = vsub.f32 %v242, %v299
      %v316 = vsub.f32 %v243, %v300
      %v317 = vsub.f32 %v244, %v301
      %v318 = vsub.f32 %v245, %v302
      %v319 = vmul.f32 %v303, %v303
      %v320 = vmul.f32 %v304, %v304
      %v321 = vmul.f32 %v305, %v305
      %v322 = vmul.f32 %v306, %v306
      %v323 = vmul.f32 %v307, %v307
      %v324 = vmul.f32 %v308, %v308
      %v325 = vmul.f32 %v309, %v309
      %v326 = vmul.f32 %v310, %v310
      %v327 = vmul.f32 %v311, %v311
      %v328 = vmul.f32 %v312, %v312
      %v329 = vmul.f32 %v313, %v313
      %v330 = vmul.f32 %v314, %v314
      %v331 = vmul.f32 %v315, %v315
      %v332 = vmul.f32 %v316, %v316
      %v333 = vmul.f32 %v317, %v317
      %v334 = vmul.f32 %v318, %v318
      %335 = vadd.xlane.f32.xlu0 %v319
      %v336 = vpop.xlane.xlu0 %335
      %337 = vadd.xlane.f32.xlu0 %v320
      %v338 = vpop.xlane.xlu0 %337
      %339 = vadd.xlane.f32.xlu0 %v321
      %v340 = vpop.xlane.xlu0 %339
      %341 = vadd.xlane.f32.xlu0 %v322
      %v342 = vpop.xlane.xlu0 %341
      %343 = vadd.xlane.f32.xlu0 %v323
      %v344 = vpop.xlane.xlu0 %343
      %345 = vadd.xlane.f32.xlu0 %v324
      %v346 = vpop.xlane.xlu0 %345
      %347 = vadd.xlane.f32.xlu0 %v325
      %v348 = vpop.xlane.xlu0 %347
      %349 = vadd.xlane.f32.xlu0 %v326
      %v350 = vpop.xlane.xlu0 %349
      %351 = vadd.xlane.f32.xlu0 %v327
      %v352 = vpop.xlane.xlu0 %351
      %353 = vadd.xlane.f32.xlu0 %v328
      %v354 = vpop.xlane.xlu0 %353
      %355 = vadd.xlane.f32.xlu0 %v329
      %v356 = vpop.xlane.xlu0 %355
      %357 = vadd.xlane.f32.xlu0 %v330
      %v358 = vpop.xlane.xlu0 %357
      %359 = vadd.xlane.f32.xlu0 %v331
      %v360 = vpop.xlane.xlu0 %359
      %361 = vadd.xlane.f32.xlu0 %v332
      %v362 = vpop.xlane.xlu0 %361
      %363 = vadd.xlane.f32.xlu0 %v333
      %v364 = vpop.xlane.xlu0 %363
      %365 = vadd.xlane.f32.xlu0 %v334
      %v366 = vpop.xlane.xlu0 %365
      %v367 = vmul.f32 %v336, %v286
      %v368 = vmul.f32 %v338, %v286
      %v369 = vmul.f32 %v340, %v286
      %v370 = vmul.f32 %v342, %v286
      %v371 = vmul.f32 %v344, %v286
      %v372 = vmul.f32 %v346, %v286
      %v373 = vmul.f32 %v348, %v286
      %v374 = vmul.f32 %v350, %v286
      %v375 = vmul.f32 %v352, %v286
      %v376 = vmul.f32 %v354, %v286
      %v377 = vmul.f32 %v356, %v286
      %v378 = vmul.f32 %v358, %v286
      %v379 = vmul.f32 %v360, %v286
      %v380 = vmul.f32 %v362, %v286
      %v381 = vmul.f32 %v364, %v286
      %v382 = vmul.f32 %v366, %v286
      %v383 = vadd.f32 %v367, 1e-05
      %v384 = vadd.f32 %v368, 1e-05
      %v385 = vadd.f32 %v369, 1e-05
      %v386 = vadd.f32 %v370, 1e-05
      %v387 = vadd.f32 %v371, 1e-05
      %v388 = vadd.f32 %v372, 1e-05
      %v389 = vadd.f32 %v373, 1e-05
      %v390 = vadd.f32 %v374, 1e-05
      %v391 = vadd.f32 %v375, 1e-05
      %v392 = vadd.f32 %v376, 1e-05
      %v393 = vadd.f32 %v377, 1e-05
      %v394 = vadd.f32 %v378, 1e-05
      %v395 = vadd.f32 %v379, 1e-05
      %v396 = vadd.f32 %v380, 1e-05
      %v397 = vadd.f32 %v381, 1e-05
      %v398 = vadd.f32 %v382, 1e-05
      %v399 = vrsqrt.pop %v383
      %v400 = vmul.f32 %v399, %v383
      %v401 = vmul.f32 %v400, %v399
      %v402 = vmul.f32 0.5, %v401
      %v403 = vsub.f32 1.5, %v402
      %v404 = vmul.f32 %v399, %v403
      %vm405 = vweird.f32 %v383
      %vm406 = vweird.f32 %v399
      %vm407 = vmor %vm405, %vm406
      %v408 = vsel %vm407, %v399, %v404
      %v409 = vrsqrt.pop %v384
      %v410 = vmul.f32 %v409, %v384
      %v411 = vmul.f32 %v410, %v409
      %v412 = vmul.f32 0.5, %v411
      %v413 = vsub.f32 1.5, %v412
      %v414 = vmul.f32 %v409, %v413
      %vm415 = vweird.f32 %v384
      %vm416 = vweird.f32 %v409
      %vm417 = vmor %vm415, %vm416
      %v418 = vsel %vm417, %v409, %v414
      %v419 = vrsqrt.pop %v385
      %v420 = vmul.f32 %v419, %v385
      %v421 = vmul.f32 %v420, %v419
      %v422 = vmul.f32 0.5, %v421
      %v423 = vsub.f32 1.5, %v422
      %v424 = vmul.f32 %v419, %v423
      %vm425 = vweird.f32 %v385
      %vm426 = vweird.f32 %v419
      %vm427 = vmor %vm425, %vm426
      %v428 = vsel %vm427, %v419, %v424
      %v429 = vrsqrt.pop %v386
      %v430 = vmul.f32 %v429, %v386
      %v431 = vmul.f32 %v430, %v429
      %v432 = vmul.f32 0.5, %v431
      %v433 = vsub.f32 1.5, %v432
      %v434 = vmul.f32 %v429, %v433
      %vm435 = vweird.f32 %v386
      %vm436 = vweird.f32 %v429
      %vm437 = vmor %vm435, %vm436
      %v438 = vsel %vm437, %v429, %v434
      %v439 = vrsqrt.pop %v387
      %v440 = vmul.f32 %v439, %v387
      %v441 = vmul.f32 %v440, %v439
      %v442 = vmul.f32 0.5, %v441
      %v443 = vsub.f32 1.5, %v442
      %v444 = vmul.f32 %v439, %v443
      %vm445 = vweird.f32 %v387
      %vm446 = vweird.f32 %v439
      %vm447 = vmor %vm445, %vm446
      %v448 = vsel %vm447, %v439, %v444
      %v449 = vrsqrt.pop %v388
      %v450 = vmul.f32 %v449, %v388
      %v451 = vmul.f32 %v450, %v449
      %v452 = vmul.f32 0.5, %v451
      %v453 = vsub.f32 1.5, %v452
      %v454 = vmul.f32 %v449, %v453
      %vm455 = vweird.f32 %v388
      %vm456 = vweird.f32 %v449
      %vm457 = vmor %vm455, %vm456
      %v458 = vsel %vm457, %v449, %v454
      %v459 = vrsqrt.pop %v389
      %v460 = vmul.f32 %v459, %v389
      %v461 = vmul.f32 %v460, %v459
      %v462 = vmul.f32 0.5, %v461
      %v463 = vsub.f32 1.5, %v462
      %v464 = vmul.f32 %v459, %v463
      %vm465 = vweird.f32 %v389
      %vm466 = vweird.f32 %v459
      %vm467 = vmor %vm465, %vm466
      %v468 = vsel %vm467, %v459, %v464
      %v469 = vrsqrt.pop %v390
      %v470 = vmul.f32 %v469, %v390
      %v471 = vmul.f32 %v470, %v469
      %v472 = vmul.f32 0.5, %v471
      %v473 = vsub.f32 1.5, %v472
      %v474 = vmul.f32 %v469, %v473
      %vm475 = vweird.f32 %v390
      %vm476 = vweird.f32 %v469
      %vm477 = vmor %vm475, %vm476
      %v478 = vsel %vm477, %v469, %v474
      %v479 = vrsqrt.pop %v391
      %v480 = vmul.f32 %v479, %v391
      %v481 = vmul.f32 %v480, %v479
      %v482 = vmul.f32 0.5, %v481
      %v483 = vsub.f32 1.5, %v482
      %v484 = vmul.f32 %v479, %v483
      %vm485 = vweird.f32 %v391
      %vm486 = vweird.f32 %v479
      %vm487 = vmor %vm485, %vm486
      %v488 = vsel %vm487, %v479, %v484
      %v489 = vrsqrt.pop %v392
      %v490 = vmul.f32 %v489, %v392
      %v491 = vmul.f32 %v490, %v489
      %v492 = vmul.f32 0.5, %v491
      %v493 = vsub.f32 1.5, %v492
      %v494 = vmul.f32 %v489, %v493
      %vm495 = vweird.f32 %v392
      %vm496 = vweird.f32 %v489
      %vm497 = vmor %vm495, %vm496
      %v498 = vsel %vm497, %v489, %v494
      %v499 = vrsqrt.pop %v393
      %v500 = vmul.f32 %v499, %v393
      %v501 = vmul.f32 %v500, %v499
      %v502 = vmul.f32 0.5, %v501
      %v503 = vsub.f32 1.5, %v502
      %v504 = vmul.f32 %v499, %v503
      %vm505 = vweird.f32 %v393
      %vm506 = vweird.f32 %v499
      %vm507 = vmor %vm505, %vm506
      %v508 = vsel %vm507, %v499, %v504
      %v509 = vrsqrt.pop %v394
      %v510 = vmul.f32 %v509, %v394
      %v511 = vmul.f32 %v510, %v509
      %v512 = vmul.f32 0.5, %v511
      %v513 = vsub.f32 1.5, %v512
      %v514 = vmul.f32 %v509, %v513
      %vm515 = vweird.f32 %v394
      %vm516 = vweird.f32 %v509
      %vm517 = vmor %vm515, %vm516
      %v518 = vsel %vm517, %v509, %v514
      %v519 = vrsqrt.pop %v395
      %v520 = vmul.f32 %v519, %v395
      %v521 = vmul.f32 %v520, %v519
      %v522 = vmul.f32 0.5, %v521
      %v523 = vsub.f32 1.5, %v522
      %v524 = vmul.f32 %v519, %v523
      %vm525 = vweird.f32 %v395
      %vm526 = vweird.f32 %v519
      %vm527 = vmor %vm525, %vm526
      %v528 = vsel %vm527, %v519, %v524
      %v529 = vrsqrt.pop %v396
      %v530 = vmul.f32 %v529, %v396
      %v531 = vmul.f32 %v530, %v529
      %v532 = vmul.f32 0.5, %v531
      %v533 = vsub.f32 1.5, %v532
      %v534 = vmul.f32 %v529, %v533
      %vm535 = vweird.f32 %v396
      %vm536 = vweird.f32 %v529
      %vm537 = vmor %vm535, %vm536
      %v538 = vsel %vm537, %v529, %v534
      %v539 = vrsqrt.pop %v397
      %v540 = vmul.f32 %v539, %v397
      %v541 = vmul.f32 %v540, %v539
      %v542 = vmul.f32 0.5, %v541
      %v543 = vsub.f32 1.5, %v542
      %v544 = vmul.f32 %v539, %v543
      %vm545 = vweird.f32 %v397
      %vm546 = vweird.f32 %v539
      %vm547 = vmor %vm545, %vm546
      %v548 = vsel %vm547, %v539, %v544
      %v549 = vrsqrt.pop %v398
      %v550 = vmul.f32 %v549, %v398
      %v551 = vmul.f32 %v550, %v549
      %v552 = vmul.f32 0.5, %v551
      %v553 = vsub.f32 1.5, %v552
      %v554 = vmul.f32 %v549, %v553
      %vm555 = vweird.f32 %v398
      %vm556 = vweird.f32 %v549
      %vm557 = vmor %vm555, %vm556
      %v558 = vsel %vm557, %v549, %v554
      %v559 = vmul.f32 %v303, %v408
      %v560 = vmul.f32 %v304, %v418
      %v561 = vmul.f32 %v305, %v428
      %v562 = vmul.f32 %v306, %v438
      %v563 = vmul.f32 %v307, %v448
      %v564 = vmul.f32 %v308, %v458
      %v565 = vmul.f32 %v309, %v468
      %v566 = vmul.f32 %v310, %v478
      %v567 = vmul.f32 %v311, %v488
      %v568 = vmul.f32 %v312, %v498
      %v569 = vmul.f32 %v313, %v508
      %v570 = vmul.f32 %v314, %v518
      %v571 = vmul.f32 %v315, %v528
      %v572 = vmul.f32 %v316, %v538
      %v573 = vmul.f32 %v317, %v548
      %v574 = vmul.f32 %v318, %v558
      %v576 = vperm.slane %v246, 0
      %v578 = vmul.f32 %v559, %v576
      %v579 = vmul.f32 %v560, %v576
      %v580 = vmul.f32 %v561, %v576
      %v581 = vmul.f32 %v562, %v576
      %v582 = vmul.f32 %v563, %v576
      %v583 = vmul.f32 %v564, %v576
      %v584 = vmul.f32 %v565, %v576
      %v585 = vmul.f32 %v566, %v576
      %v586 = vmul.f32 %v567, %v576
      %v587 = vmul.f32 %v568, %v576
      %v588 = vmul.f32 %v569, %v576
      %v589 = vmul.f32 %v570, %v576
      %v590 = vmul.f32 %v571, %v576
      %v591 = vmul.f32 %v572, %v576
      %v592 = vmul.f32 %v573, %v576
      %v593 = vmul.f32 %v574, %v576
      %v595 = vperm.slane %v247, 0
      %v597 = vadd.f32 %v578, %v595
      %v598 = vadd.f32 %v579, %v595
      %v599 = vadd.f32 %v580, %v595
      %v600 = vadd.f32 %v581, %v595
      %v601 = vadd.f32 %v582, %v595
      %v602 = vadd.f32 %v583, %v595
      %v603 = vadd.f32 %v584, %v595
      %v604 = vadd.f32 %v585, %v595
      %v605 = vadd.f32 %v586, %v595
      %v606 = vadd.f32 %v587, %v595
      %v607 = vadd.f32 %v588, %v595
      %v608 = vadd.f32 %v589, %v595
      %v609 = vadd.f32 %v590, %v595
      %v610 = vadd.f32 %v591, %v595
      %v611 = vadd.f32 %v592, %v595
      %v612 = vadd.f32 %v593, %v595
      %v613 = vpack.c.bf16 %v598, %v597
      %v614 = vpack.c.bf16 %v600, %v599
      %v615 = vpack.c.bf16 %v602, %v601
      %v616 = vpack.c.bf16 %v604, %v603
      %v617 = vpack.c.bf16 %v606, %v605
      %v618 = vpack.c.bf16 %v608, %v607
      %v619 = vpack.c.bf16 %v610, %v609
      %v620 = vpack.c.bf16 %v612, %v611
      %v621 = vld [vmem:[%s3] sm:$0xff]
      %v622 = vld [vmem:[%s3 + $0x8] sm:$0xff]
      %v623 = vld [vmem:[%s3 + $0x10] sm:$0xff]
      %v624 = vld [vmem:[%s3 + $0x18] sm:$0xff]
      %v625 = vld [vmem:[%s3 + $0x20] sm:$0xff]
      %v626 = vld [vmem:[%s3 + $0x28] sm:$0xff]
      %v627 = vld [vmem:[%s3 + $0x30] sm:$0xff]
      %v628 = vld [vmem:[%s3 + $0x38] sm:$0xff]
      %v629 = vld [vmem:[%s3 + $0x40] sm:$0xff]
      %v630 = vld [vmem:[%s3 + $0x48] sm:$0xff]
      %v631 = vld [vmem:[%s3 + $0x50] sm:$0xff]
      %v632 = vld [vmem:[%s3 + $0x58] sm:$0xff]
      %v633 = vld [vmem:[%s3 + $0x60] sm:$0xff]
      %v634 = vld [vmem:[%s3 + $0x68] sm:$0xff]
      %v635 = vld [vmem:[%s3 + $0x70] sm:$0xff]
      %v636 = vld [vmem:[%s3 + $0x78] sm:$0xff]
      %v637 = vld [vmem:[%s4] sm:$0x3]
      %v639 = vperm.slane %v637, 0
      %v640 = vperm.slane %v637, 1
      %v659 = vunpack.c.l.b16 %v621
      %v660 = vunpack.c.h.b16 %v621
      %v661 = vunpack.c.l.b16 %v622
      %v662 = vunpack.c.h.b16 %v622
      %v663 = vunpack.c.l.b16 %v623
      %v664 = vunpack.c.h.b16 %v623
      %v665 = vunpack.c.l.b16 %v624
      %v666 = vunpack.c.h.b16 %v624
      %v667 = vunpack.c.l.b16 %v625
      %v668 = vunpack.c.h.b16 %v625
      %v669 = vunpack.c.l.b16 %v626
      %v670 = vunpack.c.h.b16 %v626
      %v671 = vunpack.c.l.b16 %v627
      %v672 = vunpack.c.h.b16 %v627
      %v673 = vunpack.c.l.b16 %v628
      %v674 = vunpack.c.h.b16 %v628
      %v675 = vunpack.c.l.b16 %v629
      %v676 = vunpack.c.h.b16 %v629
      %v677 = vunpack.c.l.b16 %v630
      %v678 = vunpack.c.h.b16 %v630
      %v679 = vunpack.c.l.b16 %v631
      %v680 = vunpack.c.h.b16 %v631
      %v681 = vunpack.c.l.b16 %v632
      %v682 = vunpack.c.h.b16 %v632
      %v683 = vunpack.c.l.b16 %v633
      %v684 = vunpack.c.h.b16 %v633
      %v685 = vunpack.c.l.b16 %v634
      %v686 = vunpack.c.h.b16 %v634
      %v687 = vunpack.c.l.b16 %v635
      %v688 = vunpack.c.h.b16 %v635
      %v689 = vunpack.c.l.b16 %v636
      %v690 = vunpack.c.h.b16 %v636
      %v691 = vpack.c.b16 %v661, %v659
      %v692 = vpack.c.b16 %v662, %v660
      %v693 = vpack.c.b16 %v665, %v663
      %v694 = vpack.c.b16 %v666, %v664
      %v695 = vpack.c.b16 %v669, %v667
      %v696 = vpack.c.b16 %v670, %v668
      %v697 = vpack.c.b16 %v673, %v671
      %v698 = vpack.c.b16 %v674, %v672
      %v699 = vpack.c.b16 %v677, %v675
      %v700 = vpack.c.b16 %v678, %v676
      %v701 = vpack.c.b16 %v681, %v679
      %v702 = vpack.c.b16 %v682, %v680
      %v703 = vpack.c.b16 %v685, %v683
      %v704 = vpack.c.b16 %v686, %v684
      %v705 = vpack.c.b16 %v689, %v687
      %v706 = vpack.c.b16 %v690, %v688
      %723 = vmatpush.bf16.msra.mxu0 %v705
      %724 = vmatpush.bf16.msra.mxu0 %v703
      %725 = vmatpush.bf16.msra.mxu0 %v701
      %726 = vmatpush.bf16.msra.mxu0 %v699
      %727 = vmatpush.bf16.msra.mxu0 %v697
      %728 = vmatpush.bf16.msra.mxu0 %v695
      %729 = vmatpush.bf16.msra.mxu0 %v693
      %730 = vmatpush.bf16.msra.mxu0 %v691
      %731 = vmatmul.bf16.gmra.mxu0 %v613
      %v732 = vpop.f32.mrf.mxu0
      %v733 = vadd.f32 %v639, %v732
      %v734 = vpop.f32.mrf.mxu0
      %v735 = vadd.f32 %v639, %v734
      %736 = vmatmul.bf16.gmra.mxu0 %v614
      %v737 = vpop.f32.mrf.mxu0
      %v738 = vadd.f32 %v639, %v737
      %v739 = vpop.f32.mrf.mxu0
      %v740 = vadd.f32 %v639, %v739
      %741 = vmatmul.bf16.gmra.mxu0 %v615
      %v742 = vpop.f32.mrf.mxu0
      %v743 = vadd.f32 %v639, %v742
      %v744 = vpop.f32.mrf.mxu0
      %v745 = vadd.f32 %v639, %v744
      %746 = vmatmul.bf16.gmra.mxu0 %v616
      %v747 = vpop.f32.mrf.mxu0
      %v748 = vadd.f32 %v639, %v747
      %v749 = vpop.f32.mrf.mxu0
      %v750 = vadd.f32 %v639, %v749
      %751 = vmatmul.bf16.gmra.mxu0 %v617
      %v752 = vpop.f32.mrf.mxu0
      %v753 = vadd.f32 %v639, %v752
      %v754 = vpop.f32.mrf.mxu0
      %v755 = vadd.f32 %v639, %v754
      %756 = vmatmul.bf16.gmra.mxu0 %v618
      %v757 = vpop.f32.mrf.mxu0
      %v758 = vadd.f32 %v639, %v757
      %v759 = vpop.f32.mrf.mxu0
      %v760 = vadd.f32 %v639, %v759
      %761 = vmatmul.bf16.gmra.mxu0 %v619
      %v762 = vpop.f32.mrf.mxu0
      %v763 = vadd.f32 %v639, %v762
      %v764 = vpop.f32.mrf.mxu0
      %v765 = vadd.f32 %v639, %v764
      %766 = vmatmul.bf16.gmra.mxu0 %v620
      %v767 = vpop.f32.mrf.mxu0
      %v768 = vadd.f32 %v639, %v767
      %v769 = vpop.f32.mrf.mxu0
      %v770 = vadd.f32 %v639, %v769
      %771 = vdwg.mxu0
      %772 = vmatpush.bf16.msra.mxu0 %v706
      %773 = vmatpush.bf16.msra.mxu0 %v704
      %774 = vmatpush.bf16.msra.mxu0 %v702
      %775 = vmatpush.bf16.msra.mxu0 %v700
      %776 = vmatpush.bf16.msra.mxu0 %v698
      %777 = vmatpush.bf16.msra.mxu0 %v696
      %778 = vmatpush.bf16.msra.mxu0 %v694
      %779 = vmatpush.bf16.msra.mxu0 %v692
      %780 = vmatmul.bf16.gmra.mxu0 %v613
      %v781 = vpop.f32.mrf.mxu0
      %v782 = vadd.f32 %v640, %v781
      %v783 = vpop.f32.mrf.mxu0
      %v784 = vadd.f32 %v640, %v783
      %785 = vmatmul.bf16.gmra.mxu0 %v614
      %v786 = vpop.f32.mrf.mxu0
      %v787 = vadd.f32 %v640, %v786
      %v788 = vpop.f32.mrf.mxu0
      %v789 = vadd.f32 %v640, %v788
      %790 = vmatmul.bf16.gmra.mxu0 %v615
      %v791 = vpop.f32.mrf.mxu0
      %v792 = vadd.f32 %v640, %v791
      %v793 = vpop.f32.mrf.mxu0
      %v794 = vadd.f32 %v640, %v793
      %795 = vmatmul.bf16.gmra.mxu0 %v616
      %v796 = vpop.f32.mrf.mxu0
      %v797 = vadd.f32 %v640, %v796
      %v798 = vpop.f32.mrf.mxu0
      %v799 = vadd.f32 %v640, %v798
      %800 = vmatmul.bf16.gmra.mxu0 %v617
      %v801 = vpop.f32.mrf.mxu0
      %v802 = vadd.f32 %v640, %v801
      %v803 = vpop.f32.mrf.mxu0
      %v804 = vadd.f32 %v640, %v803
      %805 = vmatmul.bf16.gmra.mxu0 %v618
      %v806 = vpop.f32.mrf.mxu0
      %v807 = vadd.f32 %v640, %v806
      %v808 = vpop.f32.mrf.mxu0
      %v809 = vadd.f32 %v640, %v808
      %810 = vmatmul.bf16.gmra.mxu0 %v619
      %v811 = vpop.f32.mrf.mxu0
      %v812 = vadd.f32 %v640, %v811
      %v813 = vpop.f32.mrf.mxu0
      %v814 = vadd.f32 %v640, %v813
      %815 = vmatmul.bf16.gmra.mxu0 %v620
      %v816 = vpop.f32.mrf.mxu0
      %v817 = vadd.f32 %v640, %v816
      %v818 = vpop.f32.mrf.mxu0
      %v819 = vadd.f32 %v640, %v818
      %820 = vdwg.mxu0
      %821 = vst [vmem:[%s228] sm:$0xff] %v733
      %822 = vst [vmem:[%s228 + $0x8] sm:$0xff] %v782
      %823 = vst [vmem:[%s228 + $0x10] sm:$0xff] %v735
      %824 = vst [vmem:[%s228 + $0x18] sm:$0xff] %v784
      %825 = vst [vmem:[%s228 + $0x20] sm:$0xff] %v738
      %826 = vst [vmem:[%s228 + $0x28] sm:$0xff] %v787
      %827 = vst [vmem:[%s228 + $0x30] sm:$0xff] %v740
      %828 = vst [vmem:[%s228 + $0x38] sm:$0xff] %v789
      %829 = vst [vmem:[%s228 + $0x40] sm:$0xff] %v743
      %830 = vst [vmem:[%s228 + $0x48] sm:$0xff] %v792
      %831 = vst [vmem:[%s228 + $0x50] sm:$0xff] %v745
      %832 = vst [vmem:[%s228 + $0x58] sm:$0xff] %v794
      %833 = vst [vmem:[%s228 + $0x60] sm:$0xff] %v748
      %834 = vst [vmem:[%s228 + $0x68] sm:$0xff] %v797
      %835 = vst [vmem:[%s228 + $0x70] sm:$0xff] %v750
      %836 = vst [vmem:[%s228 + $0x78] sm:$0xff] %v799
      %837 = vst [vmem:[%s228 + $0x80] sm:$0xff] %v753
      %838 = vst [vmem:[%s228 + $0x88] sm:$0xff] %v802
      %839 = vst [vmem:[%s228 + $0x90] sm:$0xff] %v755
      %840 = vst [vmem:[%s228 + $0x98] sm:$0xff] %v804
      %841 = vst [vmem:[%s228 + $0xa0] sm:$0xff] %v758
      %842 = vst [vmem:[%s228 + $0xa8] sm:$0xff] %v807
      %843 = vst [vmem:[%s228 + $0xb0] sm:$0xff] %v760
      %844 = vst [vmem:[%s228 + $0xb8] sm:$0xff] %v809
      %845 = vst [vmem:[%s228 + $0xc0] sm:$0xff] %v763
      %846 = vst [vmem:[%s228 + $0xc8] sm:$0xff] %v812
      %847 = vst [vmem:[%s228 + $0xd0] sm:$0xff] %v765
      %848 = vst [vmem:[%s228 + $0xd8] sm:$0xff] %v814
      %849 = vst [vmem:[%s228 + $0xe0] sm:$0xff] %v768
      %850 = vst [vmem:[%s228 + $0xe8] sm:$0xff] %v817
      %851 = vst [vmem:[%s228 + $0xf0] sm:$0xff] %v770
      %852 = vst [vmem:[%s228 + $0xf8] sm:$0xff] %v819
      %s853 = smul.u32 16, %s16
      %p854 = scmp.lt.s32.totalorder %s853, 31
      %s855 = scalar_select %p854, %s853, 31
      %s856 = smul.addr %s855, 2
      %s857 = smul.addr %s856, 8
      %s858 = scalar_lea.vmem %s5, %s857
      // Predicated region
      $region41: #{transformer3d_aux_forward.13} parent=39 // pred_check
        %p859 = pneg %p144
      $region42: #{transformer3d_aux_forward.13} parent=39 // pred_check_branch
        %861 = sbr.rel (%p859) target = $region44
      $region43: #{transformer3d_aux_forward.13} parent=39 // pred_region
        %s862 = smul.u32 16, %s16
      $region44: #{transformer3d_aux_forward.13} parent=39 // pred_fallthru
        _
    $region40: #{transformer3d_aux_forward.13} parent=5 // pred_fallthru
      _
    %p863 = scmp.le.s32.totalorder 2, %s11
    // Predicated region
    $region45: #{transformer3d_aux_forward.13} parent=5 // pred_check
      %p864 = pneg %p863
    $region46: #{transformer3d_aux_forward.13} parent=5 // pred_check_branch
      %866 = sbr.rel (%p864) target = $region48
    $region47: #{transformer3d_aux_forward.13} parent=5 // pred_region
      %s867 = ssub.s32 %s11, 2
      // Predicated region
      $region49: #{transformer3d_aux_forward.13} parent=47 // pred_check
        %p868 = pneg %p150
      $region50: #{transformer3d_aux_forward.13} parent=47 // pred_check_branch
        %870 = sbr.rel (%p868) target = $region52
      $region51: #{transformer3d_aux_forward.13} parent=47 // pred_region
        %s871 = smul.u32 16, %s17
        %p872 = scmp.lt.s32.totalorder %s871, 31
        %s873 = scalar_select %p872, %s871, 31
        %s874 = smul.addr %s873, 2
        %s875 = smul.addr %s874, 8
        %s876 = scalar_lea.vmem %s5, %s875
      $region52: #{transformer3d_aux_forward.13} parent=47 // pred_fallthru
        _
    $region48: #{transformer3d_aux_forward.13} parent=5 // pred_fallthru
      _
  $region6: #{transformer3d_aux_forward.13} parent=0 // loop_footer
    %s15 = sadd.s32 1, %s11
  $region7: #{transformer3d_aux_forward.13} parent=0 // loop_footer_branch
    %10 = sbr.rel target = $region3
  $region8: #{transformer3d_aux_forward.13} parent=0 // loop_exit
    _

// kernel: transformer3d_aux_forward.8
$region0: #{transformer3d_aux_forward.8}
  #allocation0 [shape = 'u32[]', space=smem, size = 0x4, offset = 0x4, fixed_abs, tag = 'smem constant byte address 0x4 - core index']
  #allocation1 [shape = 'u32[72,128]{1,0:T(1,128)}', space=vmem, size = 0x9000, scoped, tag = 'internal scratch']
  #allocation2 [shape = 'bf16[128,384]{1,0:T(8,128)(2,1)}', space=vmem, size = 0x18000, scoped, tag = 'scratch operand']
  #allocation3 [shape = 'f32[128,128]{1,0:T(8,128)}', space=vmem, size = 0x10000, scoped, tag = 'scratch operand']
  %s0 = inlined_call_operand.vmem [shape: f32[4,64,128], index: 0, kind: input, shape index: {}]
  %s1 = inlined_call_operand.vmem [shape: f32[1,128], index: 1, kind: input, shape index: {}, may-alias: {1,6}]
  %s2 = inlined_call_operand.vmem [shape: f32[1,128], index: 2, kind: input, shape index: {}, may-alias: {2,7}]
  %s3 = inlined_call_operand.vmem [shape: bf16[128,384], index: 3, kind: input, shape index: {}]
  %s4 = inlined_call_operand.vmem [shape: bf16[128,128], index: 4, kind: input, shape index: {}]
  %s5 = inlined_call_operand.vmem [shape: f32[1,128], index: 5, kind: input, shape index: {}]
  %s6 = inlined_call_operand.vmem [shape: f32[1,128], index: 6, kind: input, shape index: {}, may-alias: {1,6}]
  %s7 = inlined_call_operand.vmem [shape: f32[1,128], index: 7, kind: input, shape index: {}, may-alias: {2,7}]
  %s8 = inlined_call_operand.vmem [shape: bf16[128,512], index: 8, kind: input, shape index: {}]
  %s9 = inlined_call_operand.vmem [shape: f32[1,512], index: 9, kind: input, shape index: {}]
  %s10 = inlined_call_operand.vmem [shape: bf16[512,128], index: 10, kind: input, shape index: {}]
  %s11 = inlined_call_operand.vmem [shape: f32[1,128], index: 11, kind: input, shape index: {}]
  %s12 = inlined_call_operand.vmem [shape: f32[4,64,128], index: 12, kind: output, shape index: {}]
  %s13 = sld [smem:[#allocation0]]
  $region81: #{transformer3d_aux_forward.8} parent=0
    _
  %s15 = ssub.s32 1, %s13
  %s16 = scalar_select 0, %s15, %s13
  loop: start=0, step=1, limit=4
  $region2: #{transformer3d_aux_forward.8} parent=0 // loop_pre_header
    _
  $region3: #{transformer3d_aux_forward.8} parent=0 // loop_header
    %s18 = sphi 0, %s22
    %p19 = scmp.ge.s32.totalorder %s18, 4
    %s28 = sphi 0, %s30
    %s31 = sphi 0, %s28
    %s32 = sphi 0, %s31
    %s48 = sphi 0, %s32
    %s52 = sphi 0, %s52
    %s54 = sphi 0, %s52
    %s55 = sphi 0, %s54
    %s69 = sphi 0, %s55
    %s73 = sphi 0, %s73
    %s75 = sphi 0, %s73
    %s76 = sphi 0, %s75
    %s90 = sphi 0, %s76
    %s94 = sphi 0, %s94
    %s96 = sphi 0, %s94
    %s97 = sphi 0, %s96
    %s111 = sphi 0, %s97
    %s115 = sphi 0, %s115
    %s117 = sphi 0, %s115
    %s118 = sphi 0, %s117
    %s132 = sphi 0, %s118
    %s136 = sphi 0, %s136
    %s138 = sphi 0, %s136
    %s139 = sphi 0, %s138
    %s153 = sphi 0, %s139
    %s157 = sphi 0, %s157
    %s159 = sphi 0, %s157
    %s160 = sphi 0, %s159
    %s174 = sphi 0, %s160
    %s178 = sphi 0, %s178
    %s180 = sphi 0, %s178
    %s181 = sphi 0, %s180
    %s195 = sphi 0, %s181
    %s199 = sphi 0, %s199
    %s201 = sphi 0, %s199
    %s202 = sphi 0, %s201
    %s216 = sphi 0, %s202
    %s220 = sphi 0, %s220
    %s222 = sphi 0, %s220
    %s223 = sphi 0, %s222
    %s237 = sphi 0, %s223
    %s241 = sphi 0, %s241
    %s243 = sphi 0, %s241
    %s244 = sphi 0, %s243
    %s258 = sphi 0, %s244
    %s262 = sphi 0, %s262
    %s264 = sphi 0, %s262
    %s265 = sphi 0, %s264
    %s279 = sphi 0, %s265
    %s285 = sphi 0, %s287
    %s288 = sphi 0, %s285
    %s289 = sphi 0, %s288
    %s305 = sphi 0, %s289
  $region4: #{transformer3d_aux_forward.8} parent=0 // loop_header_branch
    %21 = sbr.rel (%p19) target = $region8
  $region5: #{transformer3d_aux_forward.8} parent=0 // loop_body
    %s23 = ssub.s32 %s18, 1
    %s24 = ssub.s32 %s18, 2
    %s25 = sadd.s32 %s18, 1
    %s26 = ssub.s32 %s18, %s25
    %p27 = scmp.eq.s32.totalorder %s26, 0
    %s29 = sadd.s32 %s28, 1
    %s30 = scalar_select %p27, %s28, %s29
    %p33 = pneg %p27
    %p34 = scmp.eq.s32.totalorder %s18, 1
    %p35 = por %p33, %p34
    %p36 = scmp.ne.s32.totalorder %s28, %s31
    %p37 = scmp.eq.s32.totalorder %s18, 0
    %p38 = por %p36, %p37
    %p39 = scmp.ne.s32.totalorder %s28, %s31
    %p40 = scmp.eq.s32.totalorder %s23, 1
    %p41 = por %p39, %p40
    %p42 = scmp.ne.s32.totalorder %s31, %s32
    %p43 = scmp.eq.s32.totalorder %s23, 0
    %p44 = por %p42, %p43
    %p45 = scmp.ne.s32.totalorder %s31, %s32
    %p46 = scmp.eq.s32.totalorder %s24, 1
    %p47 = por %p45, %p46
    %p49 = scmp.ne.s32.totalorder %s32, %s48
    %p50 = scmp.eq.s32.totalorder %s24, 0
    %p51 = por %p49, %p50
    %s53 = sadd.s32 %s52, 1
    %p56 = scmp.eq.s32.totalorder %s18, 1
    %p57 = scmp.ne.s32.totalorder %s52, %s54
    %p58 = scmp.eq.s32.totalorder %s18, 0
    %p59 = por %p57, %p58
    %p60 = scmp.ne.s32.totalorder %s52, %s54
    %p61 = scmp.eq.s32.totalorder %s23, 1
    %p62 = por %p60, %p61
    %p63 = scmp.ne.s32.totalorder %s54, %s55
    %p64 = scmp.eq.s32.totalorder %s23, 0
    %p65 = por %p63, %p64
    %p66 = scmp.ne.s32.totalorder %s54, %s55
    %p67 = scmp.eq.s32.totalorder %s24, 1
    %p68 = por %p66, %p67
    %p70 = scmp.ne.s32.totalorder %s55, %s69
    %p71 = scmp.eq.s32.totalorder %s24, 0
    %p72 = por %p70, %p71
    %s74 = sadd.s32 %s73, 1
    %p77 = scmp.eq.s32.totalorder %s18, 1
    %p78 = scmp.ne.s32.totalorder %s73, %s75
    %p79 = scmp.eq.s32.totalorder %s18, 0
    %p80 = por %p78, %p79
    %p81 = scmp.ne.s32.totalorder %s73, %s75
    %p82 = scmp.eq.s32.totalorder %s23, 1
    %p83 = por %p81, %p82
    %p84 = scmp.ne.s32.totalorder %s75, %s76
    %p85 = scmp.eq.s32.totalorder %s23, 0
    %p86 = por %p84, %p85
    %p87 = scmp.ne.s32.totalorder %s75, %s76
    %p88 = scmp.eq.s32.totalorder %s24, 1
    %p89 = por %p87, %p88
    %p91 = scmp.ne.s32.totalorder %s76, %s90
    %p92 = scmp.eq.s32.totalorder %s24, 0
    %p93 = por %p91, %p92
    %s95 = sadd.s32 %s94, 1
    %p98 = scmp.eq.s32.totalorder %s18, 1
    %p99 = scmp.ne.s32.totalorder %s94, %s96
    %p100 = scmp.eq.s32.totalorder %s18, 0
    %p101 = por %p99, %p100
    %p102 = scmp.ne.s32.totalorder %s94, %s96
    %p103 = scmp.eq.s32.totalorder %s23, 1
    %p104 = por %p102, %p103
    %p105 = scmp.ne.s32.totalorder %s96, %s97
    %p106 = scmp.eq.s32.totalorder %s23, 0
    %p107 = por %p105, %p106
    %p108 = scmp.ne.s32.totalorder %s96, %s97
    %p109 = scmp.eq.s32.totalorder %s24, 1
    %p110 = por %p108, %p109
    %p112 = scmp.ne.s32.totalorder %s97, %s111
    %p113 = scmp.eq.s32.totalorder %s24, 0
    %p114 = por %p112, %p113
    %s116 = sadd.s32 %s115, 1
    %p119 = scmp.eq.s32.totalorder %s18, 1
    %p120 = scmp.ne.s32.totalorder %s115, %s117
    %p121 = scmp.eq.s32.totalorder %s18, 0
    %p122 = por %p120, %p121
    %p123 = scmp.ne.s32.totalorder %s115, %s117
    %p124 = scmp.eq.s32.totalorder %s23, 1
    %p125 = por %p123, %p124
    %p126 = scmp.ne.s32.totalorder %s117, %s118
    %p127 = scmp.eq.s32.totalorder %s23, 0
    %p128 = por %p126, %p127
    %p129 = scmp.ne.s32.totalorder %s117, %s118
    %p130 = scmp.eq.s32.totalorder %s24, 1
    %p131 = por %p129, %p130
    %p133 = scmp.ne.s32.totalorder %s118, %s132
    %p134 = scmp.eq.s32.totalorder %s24, 0
    %p135 = por %p133, %p134
    %s137 = sadd.s32 %s136, 1
    %p140 = scmp.eq.s32.totalorder %s18, 1
    %p141 = scmp.ne.s32.totalorder %s136, %s138
    %p142 = scmp.eq.s32.totalorder %s18, 0
    %p143 = por %p141, %p142
    %p144 = scmp.ne.s32.totalorder %s136, %s138
    %p145 = scmp.eq.s32.totalorder %s23, 1
    %p146 = por %p144, %p145
    %p147 = scmp.ne.s32.totalorder %s138, %s139
    %p148 = scmp.eq.s32.totalorder %s23, 0
    %p149 = por %p147, %p148
    %p150 = scmp.ne.s32.totalorder %s138, %s139
    %p151 = scmp.eq.s32.totalorder %s24, 1
    %p152 = por %p150, %p151
    %p154 = scmp.ne.s32.totalorder %s139, %s153
    %p155 = scmp.eq.s32.totalorder %s24, 0
    %p156 = por %p154, %p155
    %s158 = sadd.s32 %s157, 1
    %p161 = scmp.eq.s32.totalorder %s18, 1
    %p162 = scmp.ne.s32.totalorder %s157, %s159
    %p163 = scmp.eq.s32.totalorder %s18, 0
    %p164 = por %p162, %p163
    %p165 = scmp.ne.s32.totalorder %s157, %s159
    %p166 = scmp.eq.s32.totalorder %s23, 1
    %p167 = por %p165, %p166
    %p168 = scmp.ne.s32.totalorder %s159, %s160
    %p169 = scmp.eq.s32.totalorder %s23, 0
    %p170 = por %p168, %p169
    %p171 = scmp.ne.s32.totalorder %s159, %s160
    %p172 = scmp.eq.s32.totalorder %s24, 1
    %p173 = por %p171, %p172
    %p175 = scmp.ne.s32.totalorder %s160, %s174
    %p176 = scmp.eq.s32.totalorder %s24, 0
    %p177 = por %p175, %p176
    %s179 = sadd.s32 %s178, 1
    %p182 = scmp.eq.s32.totalorder %s18, 1
    %p183 = scmp.ne.s32.totalorder %s178, %s180
    %p184 = scmp.eq.s32.totalorder %s18, 0
    %p185 = por %p183, %p184
    %p186 = scmp.ne.s32.totalorder %s178, %s180
    %p187 = scmp.eq.s32.totalorder %s23, 1
    %p188 = por %p186, %p187
    %p189 = scmp.ne.s32.totalorder %s180, %s181
    %p190 = scmp.eq.s32.totalorder %s23, 0
    %p191 = por %p189, %p190
    %p192 = scmp.ne.s32.totalorder %s180, %s181
    %p193 = scmp.eq.s32.totalorder %s24, 1
    %p194 = por %p192, %p193
    %p196 = scmp.ne.s32.totalorder %s181, %s195
    %p197 = scmp.eq.s32.totalorder %s24, 0
    %p198 = por %p196, %p197
    %s200 = sadd.s32 %s199, 1
    %p203 = scmp.eq.s32.totalorder %s18, 1
    %p204 = scmp.ne.s32.totalorder %s199, %s201
    %p205 = scmp.eq.s32.totalorder %s18, 0
    %p206 = por %p204, %p205
    %p207 = scmp.ne.s32.totalorder %s199, %s201
    %p208 = scmp.eq.s32.totalorder %s23, 1
    %p209 = por %p207, %p208
    %p210 = scmp.ne.s32.totalorder %s201, %s202
    %p211 = scmp.eq.s32.totalorder %s23, 0
    %p212 = por %p210, %p211
    %p213 = scmp.ne.s32.totalorder %s201, %s202
    %p214 = scmp.eq.s32.totalorder %s24, 1
    %p215 = por %p213, %p214
    %p217 = scmp.ne.s32.totalorder %s202, %s216
    %p218 = scmp.eq.s32.totalorder %s24, 0
    %p219 = por %p217, %p218
    %s221 = sadd.s32 %s220, 1
    %p224 = scmp.eq.s32.totalorder %s18, 1
    %p225 = scmp.ne.s32.totalorder %s220, %s222
    %p226 = scmp.eq.s32.totalorder %s18, 0
    %p227 = por %p225, %p226
    %p228 = scmp.ne.s32.totalorder %s220, %s222
    %p229 = scmp.eq.s32.totalorder %s23, 1
    %p230 = por %p228, %p229
    %p231 = scmp.ne.s32.totalorder %s222, %s223
    %p232 = scmp.eq.s32.totalorder %s23, 0
    %p233 = por %p231, %p232
    %p234 = scmp.ne.s32.totalorder %s222, %s223
    %p235 = scmp.eq.s32.totalorder %s24, 1
    %p236 = por %p234, %p235
    %p238 = scmp.ne.s32.totalorder %s223, %s237
    %p239 = scmp.eq.s32.totalorder %s24, 0
    %p240 = por %p238, %p239
    %s242 = sadd.s32 %s241, 1
    %p245 = scmp.eq.s32.totalorder %s18, 1
    %p246 = scmp.ne.s32.totalorder %s241, %s243
    %p247 = scmp.eq.s32.totalorder %s18, 0
    %p248 = por %p246, %p247
    %p249 = scmp.ne.s32.totalorder %s241, %s243
    %p250 = scmp.eq.s32.totalorder %s23, 1
    %p251 = por %p249, %p250
    %p252 = scmp.ne.s32.totalorder %s243, %s244
    %p253 = scmp.eq.s32.totalorder %s23, 0
    %p254 = por %p252, %p253
    %p255 = scmp.ne.s32.totalorder %s243, %s244
    %p256 = scmp.eq.s32.totalorder %s24, 1
    %p257 = por %p255, %p256
    %p259 = scmp.ne.s32.totalorder %s244, %s258
    %p260 = scmp.eq.s32.totalorder %s24, 0
    %p261 = por %p259, %p260
    %s263 = sadd.s32 %s262, 1
    %p266 = scmp.eq.s32.totalorder %s18, 1
    %p267 = scmp.ne.s32.totalorder %s262, %s264
    %p268 = scmp.eq.s32.totalorder %s18, 0
    %p269 = por %p267, %p268
    %p270 = scmp.ne.s32.totalorder %s262, %s264
    %p271 = scmp.eq.s32.totalorder %s23, 1
    %p272 = por %p270, %p271
    %p273 = scmp.ne.s32.totalorder %s264, %s265
    %p274 = scmp.eq.s32.totalorder %s23, 0
    %p275 = por %p273, %p274
    %p276 = scmp.ne.s32.totalorder %s264, %s265
    %p277 = scmp.eq.s32.totalorder %s24, 1
    %p278 = por %p276, %p277
    %p280 = scmp.ne.s32.totalorder %s265, %s279
    %p281 = scmp.eq.s32.totalorder %s24, 0
    %p282 = por %p280, %p281
    %s283 = ssub.s32 %s18, %s25
    %p284 = scmp.eq.s32.totalorder %s283, 0
    %s286 = sadd.s32 %s285, 1
    %s287 = scalar_select %p284, %s285, %s286
    %p290 = pneg %p284
    %p291 = scmp.eq.s32.totalorder %s18, 1
    %p292 = por %p290, %p291
    %p293 = scmp.ne.s32.totalorder %s285, %s288
    %p294 = scmp.eq.s32.totalorder %s18, 0
    %p295 = por %p293, %p294
    %p296 = scmp.ne.s32.totalorder %s285, %s288
    %p297 = scmp.eq.s32.totalorder %s23, 1
    %p298 = por %p296, %p297
    %p299 = scmp.ne.s32.totalorder %s288, %s289
    %p300 = scmp.eq.s32.totalorder %s23, 0
    %p301 = por %p299, %p300
    %p302 = scmp.ne.s32.totalorder %s288, %s289
    %p303 = scmp.eq.s32.totalorder %s24, 1
    %p304 = por %p302, %p303
    %p306 = scmp.ne.s32.totalorder %s289, %s305
    %p307 = scmp.eq.s32.totalorder %s24, 0
    %p308 = por %p306, %p307
    %p309 = scmp.le.s32.totalorder 1, %s18
    %p310 = scmp.lt.s32.totalorder %s18, 3
    %p311 = pnand %p309, %p310
    %p312 = pneg %p311
    // Predicated region
    $region9: #{transformer3d_aux_forward.8} parent=5 // pred_check
      _
    $region10: #{transformer3d_aux_forward.8} parent=5 // pred_check_branch
      %314 = sbr.rel (%p311) target = $region12
    $region11: #{transformer3d_aux_forward.8} parent=5 // pred_region
      %s315 = ssub.s32 %s18, 1
      // Predicated region
      $region13: #{transformer3d_aux_forward.8} parent=11 // pred_check
        %p316 = pneg %p65
      $region14: #{transformer3d_aux_forward.8} parent=11 // pred_check_branch
        %318 = sbr.rel (%p316) target = $region16
      $region15: #{transformer3d_aux_forward.8} parent=11 // pred_region
        _
      $region16: #{transformer3d_aux_forward.8} parent=11 // pred_fallthru
        _
      // Predicated region
      $region17: #{transformer3d_aux_forward.8} parent=11 // pred_check
        %p319 = pneg %p86
      $region18: #{transformer3d_aux_forward.8} parent=11 // pred_check_branch
        %321 = sbr.rel (%p319) target = $region20
      $region19: #{transformer3d_aux_forward.8} parent=11 // pred_region
        _
      $region20: #{transformer3d_aux_forward.8} parent=11 // pred_fallthru
        _
      // Predicated region
      $region21: #{transformer3d_aux_forward.8} parent=11 // pred_check
        %p322 = pneg %p107
      $region22: #{transformer3d_aux_forward.8} parent=11 // pred_check_branch
        %324 = sbr.rel (%p322) target = $region24
      $region23: #{transformer3d_aux_forward.8} parent=11 // pred_region
        _
      $region24: #{transformer3d_aux_forward.8} parent=11 // pred_fallthru
        _
      // Predicated region
      $region25: #{transformer3d_aux_forward.8} parent=11 // pred_check
        %p325 = pneg %p128
      $region26: #{transformer3d_aux_forward.8} parent=11 // pred_check_branch
        %327 = sbr.rel (%p325) target = $region28
      $region27: #{transformer3d_aux_forward.8} parent=11 // pred_region
        _
      $region28: #{transformer3d_aux_forward.8} parent=11 // pred_fallthru
        _
      // Predicated region
      $region29: #{transformer3d_aux_forward.8} parent=11 // pred_check
        %p328 = pneg %p149
      $region30: #{transformer3d_aux_forward.8} parent=11 // pred_check_branch
        %330 = sbr.rel (%p328) target = $region32
      $region31: #{transformer3d_aux_forward.8} parent=11 // pred_region
        _
      $region32: #{transformer3d_aux_forward.8} parent=11 // pred_fallthru
        _
      // Predicated region
      $region33: #{transformer3d_aux_forward.8} parent=11 // pred_check
        %p331 = pneg %p170
      $region34: #{transformer3d_aux_forward.8} parent=11 // pred_check_branch
        %333 = sbr.rel (%p331) target = $region36
      $region35: #{transformer3d_aux_forward.8} parent=11 // pred_region
        _
      $region36: #{transformer3d_aux_forward.8} parent=11 // pred_fallthru
        _
      // Predicated region
      $region37: #{transformer3d_aux_forward.8} parent=11 // pred_check
        %p334 = pneg %p191
      $region38: #{transformer3d_aux_forward.8} parent=11 // pred_check_branch
        %336 = sbr.rel (%p334) target = $region40
      $region39: #{transformer3d_aux_forward.8} parent=11 // pred_region
        _
      $region40: #{transformer3d_aux_forward.8} parent=11 // pred_fallthru
        _
      // Predicated region
      $region41: #{transformer3d_aux_forward.8} parent=11 // pred_check
        %p337 = pneg %p212
      $region42: #{transformer3d_aux_forward.8} parent=11 // pred_check_branch
        %339 = sbr.rel (%p337) target = $region44
      $region43: #{transformer3d_aux_forward.8} parent=11 // pred_region
        _
      $region44: #{transformer3d_aux_forward.8} parent=11 // pred_fallthru
        _
      // Predicated region
      $region45: #{transformer3d_aux_forward.8} parent=11 // pred_check
        %p340 = pneg %p233
      $region46: #{transformer3d_aux_forward.8} parent=11 // pred_check_branch
        %342 = sbr.rel (%p340) target = $region48
      $region47: #{transformer3d_aux_forward.8} parent=11 // pred_region
        _
      $region48: #{transformer3d_aux_forward.8} parent=11 // pred_fallthru
        _
      // Predicated region
      $region49: #{transformer3d_aux_forward.8} parent=11 // pred_check
        %p343 = pneg %p254
      $region50: #{transformer3d_aux_forward.8} parent=11 // pred_check_branch
        %345 = sbr.rel (%p343) target = $region52
      $region51: #{transformer3d_aux_forward.8} parent=11 // pred_region
        _
      $region52: #{transformer3d_aux_forward.8} parent=11 // pred_fallthru
        _
      // Predicated region
      $region53: #{transformer3d_aux_forward.8} parent=11 // pred_check
        %p346 = pneg %p275
      $region54: #{transformer3d_aux_forward.8} parent=11 // pred_check_branch
        %348 = sbr.rel (%p346) target = $region56
      $region55: #{transformer3d_aux_forward.8} parent=11 // pred_region
        _
      $region56: #{transformer3d_aux_forward.8} parent=11 // pred_fallthru
        _
    $region12: #{transformer3d_aux_forward.8} parent=5 // pred_fallthru
      _
    %p349 = scmp.lt.s32.totalorder %s18, 2
    // Predicated region
    $region57: #{transformer3d_aux_forward.8} parent=5 // pred_check
      %p350 = pneg %p349
    $region58: #{transformer3d_aux_forward.8} parent=5 // pred_check_branch
      %352 = sbr.rel (%p350) target = $region60
    $region59: #{transformer3d_aux_forward.8} parent=5 // pred_region
      // Predicated region
      $region61: #{transformer3d_aux_forward.8} parent=59 // pred_check
        %p353 = pneg %p38
      $region62: #{transformer3d_aux_forward.8} parent=59 // pred_check_branch
        %355 = sbr.rel (%p353) target = $region64
      $region63: #{transformer3d_aux_forward.8} parent=59 // pred_region
        %s356 = smul.u32 2, %s18
        %p357 = scmp.lt.s32.totalorder %s356, 3
        %s358 = scalar_select %p357, %s356, 3
        %s359 = smul.addr %s358, 8
        %s360 = smul.addr %s359, 8
        %s361 = scalar_lea.vmem %s0, %s360
        %s362 = smul.u32 2, %s18
      $region64: #{transformer3d_aux_forward.8} parent=59 // pred_fallthru
        _
    $region60: #{transformer3d_aux_forward.8} parent=5 // pred_fallthru
      _
    %p363 = scmp.le.s32.totalorder 1, %s18
    %p364 = scmp.lt.s32.totalorder %s18, 3
    %p365 = pnand %p363, %p364
    %p366 = pneg %p365
    // Predicated region
    $region65: #{transformer3d_aux_forward.8} parent=5 // pred_check
      _
    $region66: #{transformer3d_aux_forward.8} parent=5 // pred_check_branch
      %368 = sbr.rel (%p365) target = $region68
    $region67: #{transformer3d_aux_forward.8} parent=5 // pred_region
      %s369 = ssub.s32 %s18, 1
      %s370 = smul.u32 2, %s23
      %p371 = scmp.lt.s32.totalorder %s370, 3
      %s372 = scalar_select %p371, %s370, 3
      %s373 = smul.addr %s372, 8
      %s374 = smul.addr %s373, 8
      %s375 = scalar_lea.vmem %s0, %s374
      %p376 = pneg %p44
      %p377 = pneg %p41
      %p378 = pneg %p65
      %p379 = pneg %p62
      %p380 = pneg %p86
      %p381 = pneg %p83
      %p382 = pneg %p107
      %p383 = pneg %p104
      %p384 = pneg %p128
      %p385 = pneg %p125
      %p386 = pneg %p149
      %p387 = pneg %p146
      %p388 = pneg %p170
      %p389 = pneg %p167
      %p390 = pneg %p191
      %p391 = pneg %p188
      %p392 = pneg %p212
      %p393 = pneg %p209
      %p394 = pneg %p233
      %p395 = pneg %p230
      %p396 = pneg %p254
      %p397 = pneg %p251
      %p398 = pneg %p275
      %p399 = pneg %p272
      %p400 = pneg %p301
      %p401 = pneg %p298
      %s402 = smul.u32 2, %s23
      %p403 = scmp.lt.s32.totalorder %s402, 3
      %s404 = scalar_select %p403, %s402, 3
      %s405 = smul.addr %s404, 8
      %s406 = smul.addr %s405, 8
      %s407 = scalar_lea.vmem %s12, %s406
      %s408 = smul.u32 2, %s23
      %p409 = scmp.lt.s32.totalorder %s408, 3
      %s410 = scalar_select %p409, %s408, 3
      %s411 = smul.addr %s410, 8
      %s412 = smul.addr %s411, 8
      %s413 = scalar_lea.vmem %s0, %s412
      %s414 = smul.u32 2, %s23
      %s415 = smul.u32 2, %s23
      %p416 = scmp.lt.s32.totalorder %s415, 3
      %s417 = scalar_select %p416, %s415, 3
      %s418 = smul.addr %s417, 8
      %s419 = smul.addr %s418, 8
      %s420 = scalar_lea.vmem %s12, %s419
      %s421 = smul.u32 2, %s23
      %v423 = vld [vmem:[%s413] sm:$0xff]
      %v424 = vld [vmem:[%s413 + $0x8] sm:$0xff]
      %v425 = vld [vmem:[%s413 + $0x10] sm:$0xff]
      %v426 = vld [vmem:[%s413 + $0x18] sm:$0xff]
      %v427 = vld [vmem:[%s413 + $0x20] sm:$0xff]
      %v428 = vld [vmem:[%s413 + $0x28] sm:$0xff]
      %v429 = vld [vmem:[%s413 + $0x30] sm:$0xff]
      %v430 = vld [vmem:[%s413 + $0x38] sm:$0xff]
      %v431 = vld [vmem:[%s413 + $0x40] sm:$0xff]
      %v432 = vld [vmem:[%s413 + $0x48] sm:$0xff]
      %v433 = vld [vmem:[%s413 + $0x50] sm:$0xff]
      %v434 = vld [vmem:[%s413 + $0x58] sm:$0xff]
      %v435 = vld [vmem:[%s413 + $0x60] sm:$0xff]
      %v436 = vld [vmem:[%s413 + $0x68] sm:$0xff]
      %v437 = vld [vmem:[%s413 + $0x70] sm:$0xff]
      %v438 = vld [vmem:[%s413 + $0x78] sm:$0xff]
      %v439 = vld [vmem:[%s1] sm:$0x1]
      %v440 = vld [vmem:[%s2] sm:$0x1]
      %441 = vadd.xlane.f32.xlu0 %v423
      %v442 = vpop.xlane.xlu0 %441
      %443 = vadd.xlane.f32.xlu0 %v424
      %v444 = vpop.xlane.xlu0 %443
      %445 = vadd.xlane.f32.xlu0 %v425
      %v446 = vpop.xlane.xlu0 %445
      %447 = vadd.xlane.f32.xlu0 %v426
      %v448 = vpop.xlane.xlu0 %447
      %449 = vadd.xlane.f32.xlu0 %v427
      %v450 = vpop.xlane.xlu0 %449
      %451 = vadd.xlane.f32.xlu0 %v428
      %v452 = vpop.xlane.xlu0 %451
      %453 = vadd.xlane.f32.xlu0 %v429
      %v454 = vpop.xlane.xlu0 %453
      %455 = vadd.xlane.f32.xlu0 %v430
      %v456 = vpop.xlane.xlu0 %455
      %457 = vadd.xlane.f32.xlu0 %v431
      %v458 = vpop.xlane.xlu0 %457
      %459 = vadd.xlane.f32.xlu0 %v432
      %v460 = vpop.xlane.xlu0 %459
      %461 = vadd.xlane.f32.xlu0 %v433
      %v462 = vpop.xlane.xlu0 %461
      %463 = vadd.xlane.f32.xlu0 %v434
      %v464 = vpop.xlane.xlu0 %463
      %465 = vadd.xlane.f32.xlu0 %v435
      %v466 = vpop.xlane.xlu0 %465
      %467 = vadd.xlane.f32.xlu0 %v436
      %v468 = vpop.xlane.xlu0 %467
      %469 = vadd.xlane.f32.xlu0 %v437
      %v470 = vpop.xlane.xlu0 %469
      %471 = vadd.xlane.f32.xlu0 %v438
      %v472 = vpop.xlane.xlu0 %471
      %v473 = vrcp.pop 128.0
      %v474 = vmul.f32 128.0, %v473
      %v475 = vsub.f32 1.0, %v474
      %v476 = vmul.f32 %v473, %v475
      %v477 = vadd.f32 %v473, %v476
      %vm478 = vweird.f32 %v473
      %v479 = vsel %vm478, %v473, %v477
      %v480 = vmul.f32 %v442, %v479
      %v481 = vmul.f32 %v444, %v479
      %v482 = vmul.f32 %v446, %v479
      %v483 = vmul.f32 %v448, %v479
      %v484 = vmul.f32 %v450, %v479
      %v485 = vmul.f32 %v452, %v479
      %v486 = vmul.f32 %v454, %v479
      %v487 = vmul.f32 %v456, %v479
      %v488 = vmul.f32 %v458, %v479
      %v489 = vmul.f32 %v460, %v479
      %v490 = vmul.f32 %v462, %v479
      %v491 = vmul.f32 %v464, %v479
      %v492 = vmul.f32 %v466, %v479
      %v493 = vmul.f32 %v468, %v479
      %v494 = vmul.f32 %v470, %v479
      %v495 = vmul.f32 %v472, %v479
      %v496 = vsub.f32 %v423, %v480
      %v497 = vsub.f32 %v424, %v481
      %v498 = vsub.f32 %v425, %v482
      %v499 = vsub.f32 %v426, %v483
      %v500 = vsub.f32 %v427, %v484
      %v501 = vsub.f32 %v428, %v485
      %v502 = vsub.f32 %v429, %v486
      %v503 = vsub.f32 %v430, %v487
      %v504 = vsub.f32 %v431, %v488
      %v505 = vsub.f32 %v432, %v489
      %v506 = vsub.f32 %v433, %v490
      %v507 = vsub.f32 %v434, %v491
      %v508 = vsub.f32 %v435, %v492
      %v509 = vsub.f32 %v436, %v493
      %v510 = vsub.f32 %v437, %v494
      %v511 = vsub.f32 %v438, %v495
      %v512 = vmul.f32 %v496, %v496
      %v513 = vmul.f32 %v497, %v497
      %v514 = vmul.f32 %v498, %v498
      %v515 = vmul.f32 %v499, %v499
      %v516 = vmul.f32 %v500, %v500
      %v517 = vmul.f32 %v501, %v501
      %v518 = vmul.f32 %v502, %v502
      %v519 = vmul.f32 %v503, %v503
      %v520 = vmul.f32 %v504, %v504
      %v521 = vmul.f32 %v505, %v505
      %v522 = vmul.f32 %v506, %v506
      %v523 = vmul.f32 %v507, %v507
      %v524 = vmul.f32 %v508, %v508
      %v525 = vmul.f32 %v509, %v509
      %v526 = vmul.f32 %v510, %v510
      %v527 = vmul.f32 %v511, %v511
      %528 = vadd.xlane.f32.xlu0 %v512
      %v529 = vpop.xlane.xlu0 %528
      %530 = vadd.xlane.f32.xlu0 %v513
      %v531 = vpop.xlane.xlu0 %530
      %532 = vadd.xlane.f32.xlu0 %v514
      %v533 = vpop.xlane.xlu0 %532
      %534 = vadd.xlane.f32.xlu0 %v515
      %v535 = vpop.xlane.xlu0 %534
      %536 = vadd.xlane.f32.xlu0 %v516
      %v537 = vpop.xlane.xlu0 %536
      %538 = vadd.xlane.f32.xlu0 %v517
      %v539 = vpop.xlane.xlu0 %538
      %540 = vadd.xlane.f32.xlu0 %v518
      %v541 = vpop.xlane.xlu0 %540
      %542 = vadd.xlane.f32.xlu0 %v519
      %v543 = vpop.xlane.xlu0 %542
      %544 = vadd.xlane.f32.xlu0 %v520
      %v545 = vpop.xlane.xlu0 %544
      %546 = vadd.xlane.f32.xlu0 %v521
      %v547 = vpop.xlane.xlu0 %546
      %548 = vadd.xlane.f32.xlu0 %v522
      %v549 = vpop.xlane.xlu0 %548
      %550 = vadd.xlane.f32.xlu0 %v523
      %v551 = vpop.xlane.xlu0 %550
      %552 = vadd.xlane.f32.xlu0 %v524
      %v553 = vpop.xlane.xlu0 %552
      %554 = vadd.xlane.f32.xlu0 %v525
      %v555 = vpop.xlane.xlu0 %554
      %556 = vadd.xlane.f32.xlu0 %v526
      %v557 = vpop.xlane.xlu0 %556
      %558 = vadd.xlane.f32.xlu0 %v527
      %v559 = vpop.xlane.xlu0 %558
      %v560 = vmul.f32 %v529, %v479
      %v561 = vmul.f32 %v531, %v479
      %v562 = vmul.f32 %v533, %v479
      %v563 = vmul.f32 %v535, %v479
      %v564 = vmul.f32 %v537, %v479
      %v565 = vmul.f32 %v539, %v479
      %v566 = vmul.f32 %v541, %v479
      %v567 = vmul.f32 %v543, %v479
      %v568 = vmul.f32 %v545, %v479
      %v569 = vmul.f32 %v547, %v479
      %v570 = vmul.f32 %v549, %v479
      %v571 = vmul.f32 %v551, %v479
      %v572 = vmul.f32 %v553, %v479
      %v573 = vmul.f32 %v555, %v479
      %v574 = vmul.f32 %v557, %v479
      %v575 = vmul.f32 %v559, %v479
      %v576 = vadd.f32 %v560, 1e-05
      %v577 = vadd.f32 %v561, 1e-05
      %v578 = vadd.f32 %v562, 1e-05
      %v579 = vadd.f32 %v563, 1e-05
      %v580 = vadd.f32 %v564, 1e-05
      %v581 = vadd.f32 %v565, 1e-05
      %v582 = vadd.f32 %v566, 1e-05
      %v583 = vadd.f32 %v567, 1e-05
      %v584 = vadd.f32 %v568, 1e-05
      %v585 = vadd.f32 %v569, 1e-05
      %v586 = vadd.f32 %v570, 1e-05
      %v587 = vadd.f32 %v571, 1e-05
      %v588 = vadd.f32 %v572, 1e-05
      %v589 = vadd.f32 %v573, 1e-05
      %v590 = vadd.f32 %v574, 1e-05
      %v591 = vadd.f32 %v575, 1e-05
      %v592 = vrsqrt.pop %v576
      %v593 = vmul.f32 %v592, %v576
      %v594 = vmul.f32 %v593, %v592
      %v595 = vmul.f32 0.5, %v594
      %v596 = vsub.f32 1.5, %v595
      %v597 = vmul.f32 %v592, %v596
      %vm598 = vweird.f32 %v576
      %vm599 = vweird.f32 %v592
      %vm600 = vmor %vm598, %vm599
      %v601 = vsel %vm600, %v592, %v597
      %v602 = vrsqrt.pop %v577
      %v603 = vmul.f32 %v602, %v577
      %v604 = vmul.f32 %v603, %v602
      %v605 = vmul.f32 0.5, %v604
      %v606 = vsub.f32 1.5, %v605
      %v607 = vmul.f32 %v602, %v606
      %vm608 = vweird.f32 %v577
      %vm609 = vweird.f32 %v602
      %vm610 = vmor %vm608, %vm609
      %v611 = vsel %vm610, %v602, %v607
      %v612 = vrsqrt.pop %v578
      %v613 = vmul.f32 %v612, %v578
      %v614 = vmul.f32 %v613, %v612
      %v615 = vmul.f32 0.5, %v614
      %v616 = vsub.f32 1.5, %v615
      %v617 = vmul.f32 %v612, %v616
      %vm618 = vweird.f32 %v578
      %vm619 = vweird.f32 %v612
      %vm620 = vmor %vm618, %vm619
      %v621 = vsel %vm620, %v612, %v617
      %v622 = vrsqrt.pop %v579
      %v623 = vmul.f32 %v622, %v579
      %v624 = vmul.f32 %v623, %v622
      %v625 = vmul.f32 0.5, %v624
      %v626 = vsub.f32 1.5, %v625
      %v627 = vmul.f32 %v622, %v626
      %vm628 = vweird.f32 %v579
      %vm629 = vweird.f32 %v622
      %vm630 = vmor %vm628, %vm629
      %v631 = vsel %vm630, %v622, %v627
      %v632 = vrsqrt.pop %v580
      %v633 = vmul.f32 %v632, %v580
      %v634 = vmul.f32 %v633, %v632
      %v635 = vmul.f32 0.5, %v634
      %v636 = vsub.f32 1.5, %v635
      %v637 = vmul.f32 %v632, %v636
      %vm638 = vweird.f32 %v580
      %vm639 = vweird.f32 %v632
      %vm640 = vmor %vm638, %vm639
      %v641 = vsel %vm640, %v632, %v637
      %v642 = vrsqrt.pop %v581
      %v643 = vmul.f32 %v642, %v581
      %v644 = vmul.f32 %v643, %v642
      %v645 = vmul.f32 0.5, %v644
      %v646 = vsub.f32 1.5, %v645
      %v647 = vmul.f32 %v642, %v646
      %vm648 = vweird.f32 %v581
      %vm649 = vweird.f32 %v642
      %vm650 = vmor %vm648, %vm649
      %v651 = vsel %vm650, %v642, %v647
      %v652 = vrsqrt.pop %v582
      %v653 = vmul.f32 %v652, %v582
      %v654 = vmul.f32 %v653, %v652
      %v655 = vmul.f32 0.5, %v654
      %v656 = vsub.f32 1.5, %v655
      %v657 = vmul.f32 %v652, %v656
      %vm658 = vweird.f32 %v582
      %vm659 = vweird.f32 %v652
      %vm660 = vmor %vm658, %vm659
      %v661 = vsel %vm660, %v652, %v657
      %v662 = vrsqrt.pop %v583
      %v663 = vmul.f32 %v662, %v583
      %v664 = vmul.f32 %v663, %v662
      %v665 = vmul.f32 0.5, %v664
      %v666 = vsub.f32 1.5, %v665
      %v667 = vmul.f32 %v662, %v666
      %vm668 = vweird.f32 %v583
      %vm669 = vweird.f32 %v662
      %vm670 = vmor %vm668, %vm669
      %v671 = vsel %vm670, %v662, %v667
      %v672 = vrsqrt.pop %v584
      %v673 = vmul.f32 %v672, %v584
      %v674 = vmul.f32 %v673, %v672
      %v675 = vmul.f32 0.5, %v674
      %v676 = vsub.f32 1.5, %v675
      %v677 = vmul.f32 %v672, %v676
      %vm678 = vweird.f32 %v584
      %vm679 = vweird.f32 %v672
      %vm680 = vmor %vm678, %vm679
      %v681 = vsel %vm680, %v672, %v677
      %v682 = vrsqrt.pop %v585
      %v683 = vmul.f32 %v682, %v585
      %v684 = vmul.f32 %v683, %v682
      %v685 = vmul.f32 0.5, %v684
      %v686 = vsub.f32 1.5, %v685
      %v687 = vmul.f32 %v682, %v686
      %vm688 = vweird.f32 %v585
      %vm689 = vweird.f32 %v682
      %vm690 = vmor %vm688, %vm689
      %v691 = vsel %vm690, %v682, %v687
      %v692 = vrsqrt.pop %v586
      %v693 = vmul.f32 %v692, %v586
      %v694 = vmul.f32 %v693, %v692
      %v695 = vmul.f32 0.5, %v694
      %v696 = vsub.f32 1.5, %v695
      %v697 = vmul.f32 %v692, %v696
      %vm698 = vweird.f32 %v586
      %vm699 = vweird.f32 %v692
      %vm700 = vmor %vm698, %vm699
      %v701 = vsel %vm700, %v692, %v697
      %v702 = vrsqrt.pop %v587
      %v703 = vmul.f32 %v702, %v587
      %v704 = vmul.f32 %v703, %v702
      %v705 = vmul.f32 0.5, %v704
      %v706 = vsub.f32 1.5, %v705
      %v707 = vmul.f32 %v702, %v706
      %vm708 = vweird.f32 %v587
      %vm709 = vweird.f32 %v702
      %vm710 = vmor %vm708, %vm709
      %v711 = vsel %vm710, %v702, %v707
      %v712 = vrsqrt.pop %v588
      %v713 = vmul.f32 %v712, %v588
      %v714 = vmul.f32 %v713, %v712
      %v715 = vmul.f32 0.5, %v714
      %v716 = vsub.f32 1.5, %v715
      %v717 = vmul.f32 %v712, %v716
      %vm718 = vweird.f32 %v588
      %vm719 = vweird.f32 %v712
      %vm720 = vmor %vm718, %vm719
      %v721 = vsel %vm720, %v712, %v717
      %v722 = vrsqrt.pop %v589
      %v723 = vmul.f32 %v722, %v589
      %v724 = vmul.f32 %v723, %v722
      %v725 = vmul.f32 0.5, %v724
      %v726 = vsub.f32 1.5, %v725
      %v727 = vmul.f32 %v722, %v726
      %vm728 = vweird.f32 %v589
      %vm729 = vweird.f32 %v722
      %vm730 = vmor %vm728, %vm729
      %v731 = vsel %vm730, %v722, %v727
      %v732 = vrsqrt.pop %v590
      %v733 = vmul.f32 %v732, %v590
      %v734 = vmul.f32 %v733, %v732
      %v735 = vmul.f32 0.5, %v734
      %v736 = vsub.f32 1.5, %v735
      %v737 = vmul.f32 %v732, %v736
      %vm738 = vweird.f32 %v590
      %vm739 = vweird.f32 %v732
      %vm740 = vmor %vm738, %vm739
      %v741 = vsel %vm740, %v732, %v737
      %v742 = vrsqrt.pop %v591
      %v743 = vmul.f32 %v742, %v591
      %v744 = vmul.f32 %v743, %v742
      %v745 = vmul.f32 0.5, %v744
      %v746 = vsub.f32 1.5, %v745
      %v747 = vmul.f32 %v742, %v746
      %vm748 = vweird.f32 %v591
      %vm749 = vweird.f32 %v742
      %vm750 = vmor %vm748, %vm749
      %v751 = vsel %vm750, %v742, %v747
      %v752 = vmul.f32 %v496, %v601
      %v753 = vmul.f32 %v497, %v611
      %v754 = vmul.f32 %v498, %v621
      %v755 = vmul.f32 %v499, %v631
      %v756 = vmul.f32 %v500, %v641
      %v757 = vmul.f32 %v501, %v651
      %v758 = vmul.f32 %v502, %v661
      %v759 = vmul.f32 %v503, %v671
      %v760 = vmul.f32 %v504, %v681
      %v761 = vmul.f32 %v505, %v691
      %v762 = vmul.f32 %v506, %v701
      %v763 = vmul.f32 %v507, %v711
      %v764 = vmul.f32 %v508, %v721
      %v765 = vmul.f32 %v509, %v731
      %v766 = vmul.f32 %v510, %v741
      %v767 = vmul.f32 %v511, %v751
      %v769 = vperm.slane %v439, 0
      %v771 = vmul.f32 %v752, %v769
      %v772 = vmul.f32 %v753, %v769
      %v773 = vmul.f32 %v754, %v769
      %v774 = vmul.f32 %v755, %v769
      %v775 = vmul.f32 %v756, %v769
      %v776 = vmul.f32 %v757, %v769
      %v777 = vmul.f32 %v758, %v769
      %v778 = vmul.f32 %v759, %v769
      %v779 = vmul.f32 %v760, %v769
      %v780 = vmul.f32 %v761, %v769
      %v781 = vmul.f32 %v762, %v769
      %v782 = vmul.f32 %v763, %v769
      %v783 = vmul.f32 %v764, %v769
      %v784 = vmul.f32 %v765, %v769
      %v785 = vmul.f32 %v766, %v769
      %v786 = vmul.f32 %v767, %v769
      %v788 = vperm.slane %v440, 0
      %v790 = vadd.f32 %v771, %v788
      %v791 = vadd.f32 %v772, %v788
      %v792 = vadd.f32 %v773, %v788
      %v793 = vadd.f32 %v774, %v788
      %v794 = vadd.f32 %v775, %v788
      %v795 = vadd.f32 %v776, %v788
      %v796 = vadd.f32 %v777, %v788
      %v797 = vadd.f32 %v778, %v788
      %v798 = vadd.f32 %v779, %v788
      %v799 = vadd.f32 %v780, %v788
      %v800 = vadd.f32 %v781, %v788
      %v801 = vadd.f32 %v782, %v788
      %v802 = vadd.f32 %v783, %v788
      %v803 = vadd.f32 %v784, %v788
      %v804 = vadd.f32 %v785, %v788
      %v805 = vadd.f32 %v786, %v788
      %v806 = vpack.c.bf16 %v791, %v790
      %v807 = vpack.c.bf16 %v793, %v792
      %v808 = vpack.c.bf16 %v795, %v794
      %v809 = vpack.c.bf16 %v797, %v796
      %v810 = vpack.c.bf16 %v799, %v798
      %v811 = vpack.c.bf16 %v801, %v800
      %v812 = vpack.c.bf16 %v803, %v802
      %v813 = vpack.c.bf16 %v805, %v804
      %v814 = vld [vmem:[%s3] sm:$0xff]
      %v815 = vld [vmem:[%s3 + $0x8] sm:$0xf]
      %v816 = vld [vmem:[%s3 + $0xc] sm:$0xff]
      %v817 = vld [vmem:[%s3 + $0x14] sm:$0xf]
      %v818 = vld [vmem:[%s3 + $0x18] sm:$0xff]
      %v819 = vld [vmem:[%s3 + $0x20] sm:$0xf]
      %v820 = vld [vmem:[%s3 + $0x24] sm:$0xff]
      %v821 = vld [vmem:[%s3 + $0x2c] sm:$0xf]
      %v822 = vld [vmem:[%s3 + $0x30] sm:$0xff]
      %v823 = vld [vmem:[%s3 + $0x38] sm:$0xf]
      %v824 = vld [vmem:[%s3 + $0x3c] sm:$0xff]
      %v825 = vld [vmem:[%s3 + $0x44] sm:$0xf]
      %v826 = vld [vmem:[%s3 + $0x48] sm:$0xff]
      %v827 = vld [vmem:[%s3 + $0x50] sm:$0xf]
      %v828 = vld [vmem:[%s3 + $0x54] sm:$0xff]
      %v829 = vld [vmem:[%s3 + $0x5c] sm:$0xf]
      %v830 = vld [vmem:[%s3 + $0x60] sm:$0xff]
      %v831 = vld [vmem:[%s3 + $0x68] sm:$0xf]
      %v832 = vld [vmem:[%s3 + $0x6c] sm:$0xff]
      %v833 = vld [vmem:[%s3 + $0x74] sm:$0xf]
      %v834 = vld [vmem:[%s3 + $0x78] sm:$0xff]
      %v835 = vld [vmem:[%s3 + $0x80] sm:$0xf]
      %v836 = vld [vmem:[%s3 + $0x84] sm:$0xff]
      %v837 = vld [vmem:[%s3 + $0x8c] sm:$0xf]
      %v838 = vld [vmem:[%s3 + $0x90] sm:$0xff]
      %v839 = vld [vmem:[%s3 + $0x98] sm:$0xf]
      %v840 = vld [vmem:[%s3 + $0x9c] sm:$0xff]
      %v841 = vld [vmem:[%s3 + $0xa4] sm:$0xf]
      %v842 = vld [vmem:[%s3 + $0xa8] sm:$0xff]
      %v843 = vld [vmem:[%s3 + $0xb0] sm:$0xf]
      %v844 = vld [vmem:[%s3 + $0xb4] sm:$0xff]
      %v845 = vld [vmem:[%s3 + $0xbc] sm:$0xf]
      %v878 = vunpack.c.l.b16 %v814
      %v879 = vunpack.c.h.b16 %v814
      %v880 = vunpack.c.l.b16 %v815
      %v881 = vunpack.c.l.b16 %v816
      %v882 = vunpack.c.h.b16 %v816
      %v883 = vunpack.c.l.b16 %v817
      %v884 = vunpack.c.l.b16 %v818
      %v885 = vunpack.c.h.b16 %v818
      %v886 = vunpack.c.l.b16 %v819
      %v887 = vunpack.c.l.b16 %v820
      %v888 = vunpack.c.h.b16 %v820
      %v889 = vunpack.c.l.b16 %v821
      %v890 = vunpack.c.l.b16 %v822
      %v891 = vunpack.c.h.b16 %v822
      %v892 = vunpack.c.l.b16 %v823
      %v893 = vunpack.c.l.b16 %v824
      %v894 = vunpack.c.h.b16 %v824
      %v895 = vunpack.c.l.b16 %v825
      %v896 = vunpack.c.l.b16 %v826
      %v897 = vunpack.c.h.b16 %v826
      %v898 = vunpack.c.l.b16 %v827
      %v899 = vunpack.c.l.b16 %v828
      %v900 = vunpack.c.h.b16 %v828
      %v901 = vunpack.c.l.b16 %v829
      %v902 = vunpack.c.l.b16 %v830
      %v903 = vunpack.c.h.b16 %v830
      %v904 = vunpack.c.l.b16 %v831
      %v905 = vunpack.c.l.b16 %v832
      %v906 = vunpack.c.h.b16 %v832
      %v907 = vunpack.c.l.b16 %v833
      %v908 = vunpack.c.l.b16 %v834
      %v909 = vunpack.c.h.b16 %v834
      %v910 = vunpack.c.l.b16 %v835
      %v911 = vunpack.c.l.b16 %v836
      %v912 = vunpack.c.h.b16 %v836
      %v913 = vunpack.c.l.b16 %v837
      %v914 = vunpack.c.l.b16 %v838
      %v915 = vunpack.c.h.b16 %v838
      %v916 = vunpack.c.l.b16 %v839
      %v917 = vunpack.c.l.b16 %v840
      %v918 = vunpack.c.h.b16 %v840
      %v919 = vunpack.c.l.b16 %v841
      %v920 = vunpack.c.l.b16 %v842
      %v921 = vunpack.c.h.b16 %v842
      %v922 = vunpack.c.l.b16 %v843
      %v923 = vunpack.c.l.b16 %v844
      %v924 = vunpack.c.h.b16 %v844
      %v925 = vunpack.c.l.b16 %v845
      %v926 = vpack.c.b16 %v881, %v878
      %v927 = vpack.c.b16 %v882, %v879
      %v928 = vpack.c.b16 %v883, %v880
      %v929 = vpack.c.b16 %v887, %v884
      %v930 = vpack.c.b16 %v888, %v885
      %v931 = vpack.c.b16 %v889, %v886
      %v932 = vpack.c.b16 %v893, %v890
      %v933 = vpack.c.b16 %v894, %v891
      %v934 = vpack.c.b16 %v895, %v892
      %v935 = vpack.c.b16 %v899, %v896
      %v936 = vpack.c.b16 %v900, %v897
      %v937 = vpack.c.b16 %v901, %v898
      %v938 = vpack.c.b16 %v905, %v902
      %v939 = vpack.c.b16 %v906, %v903
      %v940 = vpack.c.b16 %v907, %v904
      %v941 = vpack.c.b16 %v911, %v908
      %v942 = vpack.c.b16 %v912, %v909
      %v943 = vpack.c.b16 %v913, %v910
      %v944 = vpack.c.b16 %v917, %v914
      %v945 = vpack.c.b16 %v918, %v915
      %v946 = vpack.c.b16 %v919, %v916
      %v947 = vpack.c.b16 %v923, %v920
      %v948 = vpack.c.b16 %v924, %v921
      %v949 = vpack.c.b16 %v925, %v922
      %974 = vmatpush.bf16.msra.mxu0 %v947
      %975 = vmatpush.bf16.msra.mxu0 %v944
      %976 = vmatpush.bf16.msra.mxu0 %v941
      %977 = vmatpush.bf16.msra.mxu0 %v938
      %978 = vmatpush.bf16.msra.mxu0 %v935
      %979 = vmatpush.bf16.msra.mxu0 %v932
      %980 = vmatpush.bf16.msra.mxu0 %v929
      %981 = vmatpush.bf16.msra.mxu0 %v926
      %982 = vmatmul.bf16.gmra.mxu0 %v806
      %v983 = vpop.f32.mrf.mxu0
      %v984 = vadd.f32 0.0, %v983
      %v985 = vpop.f32.mrf.mxu0
      %v986 = vadd.f32 0.0, %v985
      %987 = vmatmul.bf16.gmra.mxu0 %v807
      %v988 = vpop.f32.mrf.mxu0
      %v989 = vadd.f32 0.0, %v988
      %v990 = vpop.f32.mrf.mxu0
      %v991 = vadd.f32 0.0, %v990
      %992 = vmatmul.bf16.gmra.mxu0 %v808
      %v993 = vpop.f32.mrf.mxu0
      %v994 = vadd.f32 0.0, %v993
      %v995 = vpop.f32.mrf.mxu0
      %v996 = vadd.f32 0.0, %v995
      %997 = vmatmul.bf16.gmra.mxu0 %v809
      %v998 = vpop.f32.mrf.mxu0
      %v999 = vadd.f32 0.0, %v998
      %v1000 = vpop.f32.mrf.mxu0
      %v1001 = vadd.f32 0.0, %v1000
      %1002 = vmatmul.bf16.gmra.mxu0 %v810
      %v1003 = vpop.f32.mrf.mxu0
      %v1004 = vadd.f32 0.0, %v1003
      %v1005 = vpop.f32.mrf.mxu0
      %v1006 = vadd.f32 0.0, %v1005
      %1007 = vmatmul.bf16.gmra.mxu0 %v811
      %v1008 = vpop.f32.mrf.mxu0
      %v1009 = vadd.f32 0.0, %v1008
      %v1010 = vpop.f32.mrf.mxu0
      %v1011 = vadd.f32 0.0, %v1010
      %1012 = vmatmul.bf16.gmra.mxu0 %v812
      %v1013 = vpop.f32.mrf.mxu0
      %v1014 = vadd.f32 0.0, %v1013
      %v1015 = vpop.f32.mrf.mxu0
      %v1016 = vadd.f32 0.0, %v1015
      %1017 = vmatmul.bf16.gmra.mxu0 %v813
      %v1018 = vpop.f32.mrf.mxu0
      %v1019 = vadd.f32 0.0, %v1018
      %v1020 = vpop.f32.mrf.mxu0
      %v1021 = vadd.f32 0.0, %v1020
      %1022 = vdwg.mxu0
      %1023 = vmatpush.bf16.msra.mxu0 %v948
      %1024 = vmatpush.bf16.msra.mxu0 %v945
      %1025 = vmatpush.bf16.msra.mxu0 %v942
      %1026 = vmatpush.bf16.msra.mxu0 %v939
      %1027 = vmatpush.bf16.msra.mxu0 %v936
      %1028 = vmatpush.bf16.msra.mxu0 %v933
      %1029 = vmatpush.bf16.msra.mxu0 %v930
      %1030 = vmatpush.bf16.msra.mxu0 %v927
      %1031 = vmatmul.bf16.gmra.mxu0 %v806
      %v1032 = vpop.f32.mrf.mxu0
      %v1033 = vadd.f32 0.0, %v1032
      %v1034 = vpop.f32.mrf.mxu0
      %v1035 = vadd.f32 0.0, %v1034
      %1036 = vmatmul.bf16.gmra.mxu0 %v807
      %v1037 = vpop.f32.mrf.mxu0
      %v1038 = vadd.f32 0.0, %v1037
      %v1039 = vpop.f32.mrf.mxu0
      %v1040 = vadd.f32 0.0, %v1039
      %1041 = vmatmul.bf16.gmra.mxu0 %v808
      %v1042 = vpop.f32.mrf.mxu0
      %v1043 = vadd.f32 0.0, %v1042
      %v1044 = vpop.f32.mrf.mxu0
      %v1045 = vadd.f32 0.0, %v1044
      %1046 = vmatmul.bf16.gmra.mxu0 %v809
      %v1047 = vpop.f32.mrf.mxu0
      %v1048 = vadd.f32 0.0, %v1047
      %v1049 = vpop.f32.mrf.mxu0
      %v1050 = vadd.f32 0.0, %v1049
      %1051 = vmatmul.bf16.gmra.mxu0 %v810
      %v1052 = vpop.f32.mrf.mxu0
      %v1053 = vadd.f32 0.0, %v1052
      %v1054 = vpop.f32.mrf.mxu0
      %v1055 = vadd.f32 0.0, %v1054
      %1056 = vmatmul.bf16.gmra.mxu0 %v811
      %v1057 = vpop.f32.mrf.mxu0
      %v1058 = vadd.f32 0.0, %v1057
      %v1059 = vpop.f32.mrf.mxu0
      %v1060 = vadd.f32 0.0, %v1059
      %1061 = vmatmul.bf16.gmra.mxu0 %v812
      %v1062 = vpop.f32.mrf.mxu0
      %v1063 = vadd.f32 0.0, %v1062
      %v1064 = vpop.f32.mrf.mxu0
      %v1065 = vadd.f32 0.0, %v1064
      %1066 = vmatmul.bf16.gmra.mxu0 %v813
      %v1067 = vpop.f32.mrf.mxu0
      %v1068 = vadd.f32 0.0, %v1067
      %v1069 = vpop.f32.mrf.mxu0
      %v1070 = vadd.f32 0.0, %v1069
      %1071 = vdwg.mxu0
      %1072 = vmatpush.bf16.msra.mxu0 %v949
      %1073 = vmatpush.bf16.msra.mxu0 %v946
      %1074 = vmatpush.bf16.msra.mxu0 %v943
      %1075 = vmatpush.bf16.msra.mxu0 %v940
      %1076 = vmatpush.bf16.msra.mxu0 %v937
      %1077 = vmatpush.bf16.msra.mxu0 %v934
      %1078 = vmatpush.bf16.msra.mxu0 %v931
      %1079 = vmatpush.bf16.msra.mxu0 %v928
      %1080 = vmatmul.bf16.gmra.mxu0 %v806
      %v1081 = vpop.f32.mrf.mxu0
      %v1082 = vadd.f32 0.0, %v1081
      %v1083 = vpop.f32.mrf.mxu0
      %v1084 = vadd.f32 0.0, %v1083
      %1085 = vmatmul.bf16.gmra.mxu0 %v807
      %v1086 = vpop.f32.mrf.mxu0
      %v1087 = vadd.f32 0.0, %v1086
      %v1088 = vpop.f32.mrf.mxu0
      %v1089 = vadd.f32 0.0, %v1088
      %1090 = vmatmul.bf16.gmra.mxu0 %v808
      %v1091 = vpop.f32.mrf.mxu0
      %v1092 = vadd.f32 0.0, %v1091
      %v1093 = vpop.f32.mrf.mxu0
      %v1094 = vadd.f32 0.0, %v1093
      %1095 = vmatmul.bf16.gmra.mxu0 %v809
      %v1096 = vpop.f32.mrf.mxu0
      %v1097 = vadd.f32 0.0, %v1096
      %v1098 = vpop.f32.mrf.mxu0
      %v1099 = vadd.f32 0.0, %v1098
      %1100 = vmatmul.bf16.gmra.mxu0 %v810
      %v1101 = vpop.f32.mrf.mxu0
      %v1102 = vadd.f32 0.0, %v1101
      %v1103 = vpop.f32.mrf.mxu0
      %v1104 = vadd.f32 0.0, %v1103
      %1105 = vmatmul.bf16.gmra.mxu0 %v811
      %v1106 = vpop.f32.mrf.mxu0
      %v1107 = vadd.f32 0.0, %v1106
      %v1108 = vpop.f32.mrf.mxu0
      %v1109 = vadd.f32 0.0, %v1108
      %1110 = vmatmul.bf16.gmra.mxu0 %v812
      %v1111 = vpop.f32.mrf.mxu0
      %v1112 = vadd.f32 0.0, %v1111
      %v1113 = vpop.f32.mrf.mxu0
      %v1114 = vadd.f32 0.0, %v1113
      %1115 = vmatmul.bf16.gmra.mxu0 %v813
      %v1116 = vpop.f32.mrf.mxu0
      %v1117 = vadd.f32 0.0, %v1116
      %v1118 = vpop.f32.mrf.mxu0
      %v1119 = vadd.f32 0.0, %v1118
      %1120 = vdwg.mxu0
      %v1121 = vpack.c.bf16 %v1033, %v984
      %v1122 = vpack.c.bf16 %v1082, %v1082
      %v1123 = vpack.c.bf16 %v1035, %v986
      %v1124 = vpack.c.bf16 %v1084, %v1084
      %v1125 = vpack.c.bf16 %v1038, %v989
      %v1126 = vpack.c.bf16 %v1087, %v1087
      %v1127 = vpack.c.bf16 %v1040, %v991
      %v1128 = vpack.c.bf16 %v1089, %v1089
      %v1129 = vpack.c.bf16 %v1043, %v994
      %v1130 = vpack.c.bf16 %v1092, %v1092
      %v1131 = vpack.c.bf16 %v1045, %v996
      %v1132 = vpack.c.bf16 %v1094, %v1094
      %v1133 = vpack.c.bf16 %v1048, %v999
      %v1134 = vpack.c.bf16 %v1097, %v1097
      %v1135 = vpack.c.bf16 %v1050, %v1001
      %v1136 = vpack.c.bf16 %v1099, %v1099
      %v1137 = vpack.c.bf16 %v1053, %v1004
      %v1138 = vpack.c.bf16 %v1102, %v1102
      %v1139 = vpack.c.bf16 %v1055, %v1006
      %v1140 = vpack.c.bf16 %v1104, %v1104
      %v1141 = vpack.c.bf16 %v1058, %v1009
      %v1142 = vpack.c.bf16 %v1107, %v1107
      %v1143 = vpack.c.bf16 %v1060, %v1011
      %v1144 = vpack.c.bf16 %v1109, %v1109
      %v1145 = vpack.c.bf16 %v1063, %v1014
      %v1146 = vpack.c.bf16 %v1112, %v1112
      %v1147 = vpack.c.bf16 %v1065, %v1016
      %v1148 = vpack.c.bf16 %v1114, %v1114
      %v1149 = vpack.c.bf16 %v1068, %v1019
      %v1150 = vpack.c.bf16 %v1117, %v1117
      %v1151 = vpack.c.bf16 %v1070, %v1021
      %v1152 = vpack.c.bf16 %v1119, %v1119
      %1153 = vst [vmem:[#allocation2] sm:$0xff] %v1121
      %1154 = vst [vmem:[#allocation2 + $0x8] sm:$0xf] %v1122
      %1155 = vst [vmem:[#allocation2 + $0xc] sm:$0xff] %v1123
      %1156 = vst [vmem:[#allocation2 + $0x14] sm:$0xf] %v1124
      %1157 = vst [vmem:[#allocation2 + $0x18] sm:$0xff] %v1125
      %1158 = vst [vmem:[#allocation2 + $0x20] sm:$0xf] %v1126
      %1159 = vst [vmem:[#allocation2 + $0x24] sm:$0xff] %v1127
      %1160 = vst [vmem:[#allocation2 + $0x2c] sm:$0xf] %v1128
      %1161 = vst [vmem:[#allocation2 + $0x30] sm:$0xff] %v1129
      %1162 = vst [vmem:[#allocation2 + $0x38] sm:$0xf] %v1130
      %1163 = vst [vmem:[#allocation2 + $0x3c] sm:$0xff] %v1131
      %1164 = vst [vmem:[#allocation2 + $0x44] sm:$0xf] %v1132
      %1165 = vst [vmem:[#allocation2 + $0x48] sm:$0xff] %v1133
      %1166 = vst [vmem:[#allocation2 + $0x50] sm:$0xf] %v1134
      %1167 = vst [vmem:[#allocation2 + $0x54] sm:$0xff] %v1135
      %1168 = vst [vmem:[#allocation2 + $0x5c] sm:$0xf] %v1136
      %1169 = vst [vmem:[#allocation2 + $0x60] sm:$0xff] %v1137
      %1170 = vst [vmem:[#allocation2 + $0x68] sm:$0xf] %v1138
      %1171 = vst [vmem:[#allocation2 + $0x6c] sm:$0xff] %v1139
      %1172 = vst [vmem:[#allocation2 + $0x74] sm:$0xf] %v1140
      %1173 = vst [vmem:[#allocation2 + $0x78] sm:$0xff] %v1141
      %1174 = vst [vmem:[#allocation2 + $0x80] sm:$0xf] %v1142
      %1175 = vst [vmem:[#allocation2 + $0x84] sm:$0xff] %v1143
      %1176 = vst [vmem:[#allocation2 + $0x8c] sm:$0xf] %v1144
      %1177 = vst [vmem:[#allocation2 + $0x90] sm:$0xff] %v1145
      %1178 = vst [vmem:[#allocation2 + $0x98] sm:$0xf] %v1146
      %1179 = vst [vmem:[#allocation2 + $0x9c] sm:$0xff] %v1147
      %1180 = vst [vmem:[#allocation2 + $0xa4] sm:$0xf] %v1148
      %1181 = vst [vmem:[#allocation2 + $0xa8] sm:$0xff] %v1149
      %1182 = vst [vmem:[#allocation2 + $0xb0] sm:$0xf] %v1150
      %1183 = vst [vmem:[#allocation2 + $0xb4] sm:$0xff] %v1151
      %1184 = vst [vmem:[#allocation2 + $0xbc] sm:$0xf] %v1152
      %v1185 = vld [vmem:[#allocation2] sm:$0xf]
      %v1186 = vld [vmem:[#allocation2 + $0xc] sm:$0xf]
      %v1187 = vld [vmem:[#allocation2 + $0x18] sm:$0xf]
      %v1188 = vld [vmem:[#allocation2 + $0x24] sm:$0xf]
      %v1189 = vld [vmem:[#allocation2 + $0x30] sm:$0xf]
      %v1190 = vld [vmem:[#allocation2 + $0x3c] sm:$0xf]
      %v1191 = vld [vmem:[#allocation2 + $0x48] sm:$0xf]
      %v1192 = vld [vmem:[#allocation2 + $0x54] sm:$0xf]
      %v1193 = vld [vmem:[#allocation2 + $0x4] sm:$0xf]
      %v1194 = vld [vmem:[#allocation2 + $0x10] sm:$0xf]
      %v1195 = vld [vmem:[#allocation2 + $0x1c] sm:$0xf]
      %v1196 = vld [vmem:[#allocation2 + $0x28] sm:$0xf]
      %v1197 = vld [vmem:[#allocation2 + $0x34] sm:$0xf]
      %v1198 = vld [vmem:[#allocation2 + $0x40] sm:$0xf]
      %v1199 = vld [vmem:[#allocation2 + $0x4c] sm:$0xf]
      %v1200 = vld [vmem:[#allocation2 + $0x58] sm:$0xf]
      %v1201 = vld [vmem:[#allocation2 + $0x8] sm:$0xf]
      %v1202 = vld [vmem:[#allocation2 + $0x14] sm:$0xf]
      %v1203 = vld [vmem:[#allocation2 + $0x20] sm:$0xf]
      %v1204 = vld [vmem:[#allocation2 + $0x2c] sm:$0xf]
      %v1205 = vld [vmem:[#allocation2 + $0x38] sm:$0xf]
      %v1206 = vld [vmem:[#allocation2 + $0x44] sm:$0xf]
      %v1207 = vld [vmem:[#allocation2 + $0x50] sm:$0xf]
      %v1208 = vld [vmem:[#allocation2 + $0x5c] sm:$0xf]
      %v1217 = vunpack.c.l.b16 %v1185
      %v1218 = vunpack.c.l.b16 %v1186
      %v1219 = vunpack.c.l.b16 %v1187
      %v1220 = vunpack.c.l.b16 %v1188
      %v1221 = vunpack.c.l.b16 %v1189
      %v1222 = vunpack.c.l.b16 %v1190
      %v1223 = vunpack.c.l.b16 %v1191
      %v1224 = vunpack.c.l.b16 %v1192
      %v1225 = vpack.c.b16 %v1218, %v1217
      %v1226 = vpack.c.b16 %v1220, %v1219
      %v1227 = vpack.c.b16 %v1222, %v1221
      %v1228 = vpack.c.b16 %v1224, %v1223
      %v1237 = vunpack.c.l.b16 %v1193
      %v1238 = vunpack.c.l.b16 %v1194
      %v1239 = vunpack.c.l.b16 %v1195
      %v1240 = vunpack.c.l.b16 %v1196
      %v1241 = vunpack.c.l.b16 %v1197
      %v1242 = vunpack.c.l.b16 %v1198
      %v1243 = vunpack.c.l.b16 %v1199
      %v1244 = vunpack.c.l.b16 %v1200
      %v1245 = vpack.c.b16 %v1238, %v1237
      %v1246 = vpack.c.b16 %v1240, %v1239
      %v1247 = vpack.c.b16 %v1242, %v1241
      %v1248 = vpack.c.b16 %v1244, %v1243
      %vm1249 = vcmask 261120
      %v1251 = vsel %vm1249, %v1225, 0
      %v1254 = vsel %vm1249, %v1226, 0
      %v1257 = vsel %vm1249, %v1227, 0
      %v1260 = vsel %vm1249, %v1228, 0
      %v1263 = vsel %vm1249, %v1245, 0
      %v1266 = vsel %vm1249, %v1246, 0
      %v1269 = vsel %vm1249, %v1247, 0
      %v1272 = vsel %vm1249, %v1248, 0
      %1274 = vmatpush.bf16.xpose.msra.mxu0 0
      %1275 = vmatpush.bf16.xpose.msra.mxu0 0
      %1276 = vmatpush.bf16.xpose.msra.mxu0 0
      %1277 = vmatpush.bf16.xpose.msra.mxu0 0
      %1278 = vmatpush.bf16.xpose.msra.mxu0 %v1272
      %1279 = vmatpush.bf16.xpose.msra.mxu0 %v1269
      %1280 = vmatpush.bf16.xpose.msra.mxu0 %v1266
      %1281 = vmatpush.bf16.xpose.msra.mxu0 %v1263
      %1282 = vmatmul.bf16.gmra.mxu0 %v1251
      %v1283 = vpop.f32.mrf.mxu0
      %v1284 = vadd.f32 0.0, %v1283
      %v1285 = vpop.f32.mrf.mxu0
      %v1286 = vadd.f32 0.0, %v1285
      %1287 = vmatmul.bf16.gmra.mxu0 %v1254
      %v1288 = vpop.f32.mrf.mxu0
      %v1289 = vadd.f32 0.0, %v1288
      %v1290 = vpop.f32.mrf.mxu0
      %v1291 = vadd.f32 0.0, %v1290
      %1292 = vmatmul.bf16.gmra.mxu0 %v1257
      %v1293 = vpop.f32.mrf.mxu0
      %v1294 = vadd.f32 0.0, %v1293
      %v1295 = vpop.f32.mrf.mxu0
      %v1296 = vadd.f32 0.0, %v1295
      %1297 = vmatmul.bf16.gmra.mxu0 %v1260
      %v1298 = vpop.f32.mrf.mxu0
      %v1299 = vadd.f32 0.0, %v1298
      %v1300 = vpop.f32.mrf.mxu0
      %v1301 = vadd.f32 0.0, %v1300
      %1302 = vdwg.mxu0
      %vm1303 = vcmask 523264
      %v1304 = vsel %vm1303, %v1284, -inf
      %1305 = vmax.xlane.f32.xlu0 %v1304
      %v1306 = vpop.xlane.xlu0 %1305
      %v1307 = vsel %vm1303, %v1286, -inf
      %1308 = vmax.xlane.f32.xlu0 %v1307
      %v1309 = vpop.xlane.xlu0 %1308
      %v1310 = vsel %vm1303, %v1289, -inf
      %1311 = vmax.xlane.f32.xlu0 %v1310
      %v1312 = vpop.xlane.xlu0 %1311
      %v1313 = vsel %vm1303, %v1291, -inf
      %1314 = vmax.xlane.f32.xlu0 %v1313
      %v1315 = vpop.xlane.xlu0 %1314
      %v1316 = vsel %vm1303, %v1294, -inf
      %1317 = vmax.xlane.f32.xlu0 %v1316
      %v1318 = vpop.xlane.xlu0 %1317
      %v1319 = vsel %vm1303, %v1296, -inf
      %1320 = vmax.xlane.f32.xlu0 %v1319
      %v1321 = vpop.xlane.xlu0 %1320
      %v1322 = vsel %vm1303, %v1299, -inf
      %1323 = vmax.xlane.f32.xlu0 %v1322
      %v1324 = vpop.xlane.xlu0 %1323
      %v1325 = vsel %vm1303, %v1301, -inf
      %1326 = vmax.xlane.f32.xlu0 %v1325
      %v1327 = vpop.xlane.xlu0 %1326
      %v1328 = vsub.f32 %v1284, %v1306
      %v1329 = vsub.f32 %v1286, %v1309
      %v1330 = vsub.f32 %v1289, %v1312
      %v1331 = vsub.f32 %v1291, %v1315
      %v1332 = vsub.f32 %v1294, %v1318
      %v1333 = vsub.f32 %v1296, %v1321
      %v1334 = vsub.f32 %v1299, %v1324
      %v1335 = vsub.f32 %v1301, %v1327
      %v1336 = vmul.f32 %v1328, 1.442695
      %v1337 = vpow.pop %v1336
      %v1338 = vmul.f32 %v1329, 1.442695
      %v1339 = vpow.pop %v1338
      %v1340 = vmul.f32 %v1330, 1.442695
      %v1341 = vpow.pop %v1340
      %v1342 = vmul.f32 %v1331, 1.442695
      %v1343 = vpow.pop %v1342
      %v1344 = vmul.f32 %v1332, 1.442695
      %v1345 = vpow.pop %v1344
      %v1346 = vmul.f32 %v1333, 1.442695
      %v1347 = vpow.pop %v1346
      %v1348 = vmul.f32 %v1334, 1.442695
      %v1349 = vpow.pop %v1348
      %v1350 = vmul.f32 %v1335, 1.442695
      %v1351 = vpow.pop %v1350
      %v1352 = vsel %vm1303, %v1337, 0.0
      %1353 = vadd.xlane.f32.xlu0 %v1352
      %v1354 = vpop.xlane.xlu0 %1353
      %v1355 = vsel %vm1303, %v1339, 0.0
      %1356 = vadd.xlane.f32.xlu0 %v1355
      %v1357 = vpop.xlane.xlu0 %1356
      %v1358 = vsel %vm1303, %v1341, 0.0
      %1359 = vadd.xlane.f32.xlu0 %v1358
      %v1360 = vpop.xlane.xlu0 %1359
      %v1361 = vsel %vm1303, %v1343, 0.0
      %1362 = vadd.xlane.f32.xlu0 %v1361
      %v1363 = vpop.xlane.xlu0 %1362
      %v1364 = vsel %vm1303, %v1345, 0.0
      %1365 = vadd.xlane.f32.xlu0 %v1364
      %v1366 = vpop.xlane.xlu0 %1365
      %v1367 = vsel %vm1303, %v1347, 0.0
      %1368 = vadd.xlane.f32.xlu0 %v1367
      %v1369 = vpop.xlane.xlu0 %1368
      %v1370 = vsel %vm1303, %v1349, 0.0
      %1371 = vadd.xlane.f32.xlu0 %v1370
      %v1372 = vpop.xlane.xlu0 %1371
      %v1373 = vsel %vm1303, %v1351, 0.0
      %1374 = vadd.xlane.f32.xlu0 %v1373
      %v1375 = vpop.xlane.xlu0 %1374
      %v1376 = vrcp.pop %v1354
      %v1377 = vrcp.pop %v1357
      %v1378 = vrcp.pop %v1360
      %v1379 = vrcp.pop %v1363
      %v1380 = vrcp.pop %v1366
      %v1381 = vrcp.pop %v1369
      %v1382 = vrcp.pop %v1372
      %v1383 = vrcp.pop %v1375
      %v1384 = vmul.f32 %v1337, %v1376
      %v1385 = vmul.f32 %v1339, %v1377
      %v1386 = vmul.f32 %v1341, %v1378
      %v1387 = vmul.f32 %v1343, %v1379
      %v1388 = vmul.f32 %v1345, %v1380
      %v1389 = vmul.f32 %v1347, %v1381
      %v1390 = vmul.f32 %v1349, %v1382
      %v1391 = vmul.f32 %v1351, %v1383
      %v1392 = vpack.c.bf16 %v1385, %v1384
      %v1393 = vpack.c.bf16 %v1387, %v1386
      %v1394 = vpack.c.bf16 %v1389, %v1388
      %v1395 = vpack.c.bf16 %v1391, %v1390
      %v1404 = vunpack.c.l.b16 %v1201
      %v1405 = vunpack.c.l.b16 %v1202
      %v1406 = vunpack.c.l.b16 %v1203
      %v1407 = vunpack.c.l.b16 %v1204
      %v1408 = vunpack.c.l.b16 %v1205
      %v1409 = vunpack.c.l.b16 %v1206
      %v1410 = vunpack.c.l.b16 %v1207
      %v1411 = vunpack.c.l.b16 %v1208
      %v1412 = vpack.c.b16 %v1405, %v1404
      %v1413 = vpack.c.b16 %v1407, %v1406
      %v1414 = vpack.c.b16 %v1409, %v1408
      %v1415 = vpack.c.b16 %v1411, %v1410
      %v1421 = vsel %vm1303, %v1392, 0
      %v1424 = vsel %vm1303, %v1393, 0
      %v1427 = vsel %vm1303, %v1394, 0
      %v1430 = vsel %vm1303, %v1395, 0
      %1432 = vmatpush.bf16.msra.mxu0 0
      %1433 = vmatpush.bf16.msra.mxu0 0
      %1434 = vmatpush.bf16.msra.mxu0 0
      %1435 = vmatpush.bf16.msra.mxu0 0
      %1436 = vmatpush.bf16.msra.mxu0 %v1415
      %1437 = vmatpush.bf16.msra.mxu0 %v1414
      %1438 = vmatpush.bf16.msra.mxu0 %v1413
      %1439 = vmatpush.bf16.msra.mxu0 %v1412
      %1440 = vmatmul.bf16.gmra.mxu0 %v1421
      %v1441 = vpop.f32.mrf.mxu0
      %v1442 = vadd.f32 0.0, %v1441
      %v1443 = vpop.f32.mrf.mxu0
      %v1444 = vadd.f32 0.0, %v1443
      %1445 = vmatmul.bf16.gmra.mxu0 %v1424
      %v1446 = vpop.f32.mrf.mxu0
      %v1447 = vadd.f32 0.0, %v1446
      %v1448 = vpop.f32.mrf.mxu0
      %v1449 = vadd.f32 0.0, %v1448
      %1450 = vmatmul.bf16.gmra.mxu0 %v1427
      %v1451 = vpop.f32.mrf.mxu0
      %v1452 = vadd.f32 0.0, %v1451
      %v1453 = vpop.f32.mrf.mxu0
      %v1454 = vadd.f32 0.0, %v1453
      %1455 = vmatmul.bf16.gmra.mxu0 %v1430
      %v1456 = vpop.f32.mrf.mxu0
      %v1457 = vadd.f32 0.0, %v1456
      %v1458 = vpop.f32.mrf.mxu0
      %v1459 = vadd.f32 0.0, %v1458
      %1460 = vdwg.mxu0
      %1461 = vst.msk [vmem:[#allocation3] sm:$0xff] %vm1249, %v1442
      %1462 = vst.msk [vmem:[#allocation3 + $0x8] sm:$0xff] %vm1249, %v1444
      %1463 = vst.msk [vmem:[#allocation3 + $0x10] sm:$0xff] %vm1249, %v1447
      %1464 = vst.msk [vmem:[#allocation3 + $0x18] sm:$0xff] %vm1249, %v1449
      %1465 = vst.msk [vmem:[#allocation3 + $0x20] sm:$0xff] %vm1249, %v1452
      %1466 = vst.msk [vmem:[#allocation3 + $0x28] sm:$0xff] %vm1249, %v1454
      %1467 = vst.msk [vmem:[#allocation3 + $0x30] sm:$0xff] %vm1249, %v1457
      %1468 = vst.msk [vmem:[#allocation3 + $0x38] sm:$0xff] %vm1249, %v1459
      %v1469 = vld [vmem:[#allocation2] sm:$0xf]
      %v1470 = vld [vmem:[#allocation2 + $0xc] sm:$0xf]
      %v1471 = vld [vmem:[#allocation2 + $0x18] sm:$0xf]
      %v1472 = vld [vmem:[#allocation2 + $0x24] sm:$0xf]
      %v1473 = vld [vmem:[#allocation2 + $0x30] sm:$0xf]
      %v1474 = vld [vmem:[#allocation2 + $0x3c] sm:$0xf]
      %v1475 = vld [vmem:[#allocation2 + $0x48] sm:$0xf]
      %v1476 = vld [vmem:[#allocation2 + $0x54] sm:$0xf]
      %v1477 = vld [vmem:[#allocation2 + $0x4] sm:$0xf]
      %v1478 = vld [vmem:[#allocation2 + $0x10] sm:$0xf]
      %v1479 = vld [vmem:[#allocation2 + $0x1c] sm:$0xf]
      %v1480 = vld [vmem:[#allocation2 + $0x28] sm:$0xf]
      %v1481 = vld [vmem:[#allocation2 + $0x34] sm:$0xf]
      %v1482 = vld [vmem:[#allocation2 + $0x40] sm:$0xf]
      %v1483 = vld [vmem:[#allocation2 + $0x4c] sm:$0xf]
      %v1484 = vld [vmem:[#allocation2 + $0x58] sm:$0xf]
      %v1485 = vld [vmem:[#allocation2 + $0x8] sm:$0xf]
      %v1486 = vld [vmem:[#allocation2 + $0x14] sm:$0xf]
      %v1487 = vld [vmem:[#allocation2 + $0x20] sm:$0xf]
      %v1488 = vld [vmem:[#allocation2 + $0x2c] sm:$0xf]
      %v1489 = vld [vmem:[#allocation2 + $0x38] sm:$0xf]
      %v1490 = vld [vmem:[#allocation2 + $0x44] sm:$0xf]
      %v1491 = vld [vmem:[#allocation2 + $0x50] sm:$0xf]
      %v1492 = vld [vmem:[#allocation2 + $0x5c] sm:$0xf]
      %v1501 = vunpack.c.l.b16 %v1469
      %v1502 = vunpack.c.l.b16 %v1470
      %v1503 = vunpack.c.l.b16 %v1471
      %v1504 = vunpack.c.l.b16 %v1472
      %v1505 = vunpack.c.l.b16 %v1473
      %v1506 = vunpack.c.l.b16 %v1474
      %v1507 = vunpack.c.l.b16 %v1475
      %v1508 = vunpack.c.l.b16 %v1476
      %v1509 = vpack.c.b16 %v1502, %v1501
      %v1510 = vpack.c.b16 %v1504, %v1503
      %v1511 = vpack.c.b16 %v1506, %v1505
      %v1512 = vpack.c.b16 %v1508, %v1507
      %1513 = vrot.lane.b32.xlu0 %v1509, 96
      %v1514 = vpop.permute.xlu0 %1513
      %1515 = vrot.lane.b32.xlu0 %v1510, 96
      %v1516 = vpop.permute.xlu0 %1515
      %1517 = vrot.lane.b32.xlu0 %v1511, 96
      %v1518 = vpop.permute.xlu0 %1517
      %1519 = vrot.lane.b32.xlu0 %v1512, 96
      %v1520 = vpop.permute.xlu0 %1519
      %v1529 = vunpack.c.l.b16 %v1477
      %v1530 = vunpack.c.l.b16 %v1478
      %v1531 = vunpack.c.l.b16 %v1479
      %v1532 = vunpack.c.l.b16 %v1480
      %v1533 = vunpack.c.l.b16 %v1481
      %v1534 = vunpack.c.l.b16 %v1482
      %v1535 = vunpack.c.l.b16 %v1483
      %v1536 = vunpack.c.l.b16 %v1484
      %v1537 = vpack.c.b16 %v1530, %v1529
      %v1538 = vpack.c.b16 %v1532, %v1531
      %v1539 = vpack.c.b16 %v1534, %v1533
      %v1540 = vpack.c.b16 %v1536, %v1535
      %1541 = vrot.lane.b32.xlu0 %v1537, 96
      %v1542 = vpop.permute.xlu0 %1541
      %1543 = vrot.lane.b32.xlu0 %v1538, 96
      %v1544 = vpop.permute.xlu0 %1543
      %1545 = vrot.lane.b32.xlu0 %v1539, 96
      %v1546 = vpop.permute.xlu0 %1545
      %1547 = vrot.lane.b32.xlu0 %v1540, 96
      %v1548 = vpop.permute.xlu0 %1547
      %v1550 = vsel %vm1249, %v1514, 0
      %v1553 = vsel %vm1249, %v1516, 0
      %v1556 = vsel %vm1249, %v1518, 0
      %v1559 = vsel %vm1249, %v1520, 0
      %v1562 = vsel %vm1249, %v1542, 0
      %v1565 = vsel %vm1249, %v1544, 0
      %v1568 = vsel %vm1249, %v1546, 0
      %v1571 = vsel %vm1249, %v1548, 0
      %1573 = vmatpush.bf16.xpose.msra.mxu0 0
      %1574 = vmatpush.bf16.xpose.msra.mxu0 0
      %1575 = vmatpush.bf16.xpose.msra.mxu0 0
      %1576 = vmatpush.bf16.xpose.msra.mxu0 0
      %1577 = vmatpush.bf16.xpose.msra.mxu0 %v1571
      %1578 = vmatpush.bf16.xpose.msra.mxu0 %v1568
      %1579 = vmatpush.bf16.xpose.msra.mxu0 %v1565
      %1580 = vmatpush.bf16.xpose.msra.mxu0 %v1562
      %1581 = vmatmul.bf16.gmra.mxu0 %v1550
      %v1582 = vpop.f32.mrf.mxu0
      %v1583 = vadd.f32 0.0, %v1582
      %v1584 = vpop.f32.mrf.mxu0
      %v1585 = vadd.f32 0.0, %v1584
      %1586 = vmatmul.bf16.gmra.mxu0 %v1553
      %v1587 = vpop.f32.mrf.mxu0
      %v1588 = vadd.f32 0.0, %v1587
      %v1589 = vpop.f32.mrf.mxu0
      %v1590 = vadd.f32 0.0, %v1589
      %1591 = vmatmul.bf16.gmra.mxu0 %v1556
      %v1592 = vpop.f32.mrf.mxu0
      %v1593 = vadd.f32 0.0, %v1592
      %v1594 = vpop.f32.mrf.mxu0
      %v1595 = vadd.f32 0.0, %v1594
      %1596 = vmatmul.bf16.gmra.mxu0 %v1559
      %v1597 = vpop.f32.mrf.mxu0
      %v1598 = vadd.f32 0.0, %v1597
      %v1599 = vpop.f32.mrf.mxu0
      %v1600 = vadd.f32 0.0, %v1599
      %1601 = vdwg.mxu0
      %v1602 = vsel %vm1303, %v1583, -inf
      %1603 = vmax.xlane.f32.xlu0 %v1602
      %v1604 = vpop.xlane.xlu0 %1603
      %v1605 = vsel %vm1303, %v1585, -inf
      %1606 = vmax.xlane.f32.xlu0 %v1605
      %v1607 = vpop.xlane.xlu0 %1606
      %v1608 = vsel %vm1303, %v1588, -inf
      %1609 = vmax.xlane.f32.xlu0 %v1608
      %v1610 = vpop.xlane.xlu0 %1609
      %v1611 = vsel %vm1303, %v1590, -inf
      %1612 = vmax.xlane.f32.xlu0 %v1611
      %v1613 = vpop.xlane.xlu0 %1612
      %v1614 = vsel %vm1303, %v1593, -inf
      %1615 = vmax.xlane.f32.xlu0 %v1614
      %v1616 = vpop.xlane.xlu0 %1615
      %v1617 = vsel %vm1303, %v1595, -inf
      %1618 = vmax.xlane.f32.xlu0 %v1617
      %v1619 = vpop.xlane.xlu0 %1618
      %v1620 = vsel %vm1303, %v1598, -inf
      %1621 = vmax.xlane.f32.xlu0 %v1620
      %v1622 = vpop.xlane.xlu0 %1621
      %v1623 = vsel %vm1303, %v1600, -inf
      %1624 = vmax.xlane.f32.xlu0 %v1623
      %v1625 = vpop.xlane.xlu0 %1624
      %v1626 = vsub.f32 %v1583, %v1604
      %v1627 = vsub.f32 %v1585, %v1607
      %v1628 = vsub.f32 %v1588, %v1610
      %v1629 = vsub.f32 %v1590, %v1613
      %v1630 = vsub.f32 %v1593, %v1616
      %v1631 = vsub.f32 %v1595, %v1619
      %v1632 = vsub.f32 %v1598, %v1622
      %v1633 = vsub.f32 %v1600, %v1625
      %v1634 = vmul.f32 %v1626, 1.442695
      %v1635 = vpow.pop %v1634
      %v1636 = vmul.f32 %v1627, 1.442695
      %v1637 = vpow.pop %v1636
      %v1638 = vmul.f32 %v1628, 1.442695
      %v1639 = vpow.pop %v1638
      %v1640 = vmul.f32 %v1629, 1.442695
      %v1641 = vpow.pop %v1640
      %v1642 = vmul.f32 %v1630, 1.442695
      %v1643 = vpow.pop %v1642
      %v1644 = vmul.f32 %v1631, 1.442695
      %v1645 = vpow.pop %v1644
      %v1646 = vmul.f32 %v1632, 1.442695
      %v1647 = vpow.pop %v1646
      %v1648 = vmul.f32 %v1633, 1.442695
      %v1649 = vpow.pop %v1648
      %v1650 = vsel %vm1303, %v1635, 0.0
      %1651 = vadd.xlane.f32.xlu0 %v1650
      %v1652 = vpop.xlane.xlu0 %1651
      %v1653 = vsel %vm1303, %v1637, 0.0
      %1654 = vadd.xlane.f32.xlu0 %v1653
      %v1655 = vpop.xlane.xlu0 %1654
      %v1656 = vsel %vm1303, %v1639, 0.0
      %1657 = vadd.xlane.f32.xlu0 %v1656
      %v1658 = vpop.xlane.xlu0 %1657
      %v1659 = vsel %vm1303, %v1641, 0.0
      %1660 = vadd.xlane.f32.xlu0 %v1659
      %v1661 = vpop.xlane.xlu0 %1660
      %v1662 = vsel %vm1303, %v1643, 0.0
      %1663 = vadd.xlane.f32.xlu0 %v1662
      %v1664 = vpop.xlane.xlu0 %1663
      %v1665 = vsel %vm1303, %v1645, 0.0
      %1666 = vadd.xlane.f32.xlu0 %v1665
      %v1667 = vpop.xlane.xlu0 %1666
      %v1668 = vsel %vm1303, %v1647, 0.0
      %1669 = vadd.xlane.f32.xlu0 %v1668
      %v1670 = vpop.xlane.xlu0 %1669
      %v1671 = vsel %vm1303, %v1649, 0.0
      %1672 = vadd.xlane.f32.xlu0 %v1671
      %v1673 = vpop.xlane.xlu0 %1672
      %v1674 = vrcp.pop %v1652
      %v1675 = vrcp.pop %v1655
      %v1676 = vrcp.pop %v1658
      %v1677 = vrcp.pop %v1661
      %v1678 = vrcp.pop %v1664
      %v1679 = vrcp.pop %v1667
      %v1680 = vrcp.pop %v1670
      %v1681 = vrcp.pop %v1673
      %v1682 = vmul.f32 %v1635, %v1674
      %v1683 = vmul.f32 %v1637, %v1675
      %v1684 = vmul.f32 %v1639, %v1676
      %v1685 = vmul.f32 %v1641, %v1677
      %v1686 = vmul.f32 %v1643, %v1678
      %v1687 = vmul.f32 %v1645, %v1679
      %v1688 = vmul.f32 %v1647, %v1680
      %v1689 = vmul.f32 %v1649, %v1681
      %v1690 = vpack.c.bf16 %v1683, %v1682
      %v1691 = vpack.c.bf16 %v1685, %v1684
      %v1692 = vpack.c.bf16 %v1687, %v1686
      %v1693 = vpack.c.bf16 %v1689, %v1688
      %v1702 = vunpack.c.l.b16 %v1485
      %v1703 = vunpack.c.l.b16 %v1486
      %v1704 = vunpack.c.l.b16 %v1487
      %v1705 = vunpack.c.l.b16 %v1488
      %v1706 = vunpack.c.l.b16 %v1489
      %v1707 = vunpack.c.l.b16 %v1490
      %v1708 = vunpack.c.l.b16 %v1491
      %v1709 = vunpack.c.l.b16 %v1492
      %v1710 = vpack.c.b16 %v1703, %v1702
      %v1711 = vpack.c.b16 %v1705, %v1704
      %v1712 = vpack.c.b16 %v1707, %v1706
      %v1713 = vpack.c.b16 %v1709, %v1708
      %1714 = vrot.lane.b32.xlu0 %v1710, 96
      %v1715 = vpop.permute.xlu0 %1714
      %1716 = vrot.lane.b32.xlu0 %v1711, 96
      %v1717 = vpop.permute.xlu0 %1716
      %1718 = vrot.lane.b32.xlu0 %v1712, 96
      %v1719 = vpop.permute.xlu0 %1718
      %1720 = vrot.lane.b32.xlu0 %v1713, 96
      %v1721 = vpop.permute.xlu0 %1720
      %v1727 = vsel %vm1303, %v1690, 0
      %v1730 = vsel %vm1303, %v1691, 0
      %v1733 = vsel %vm1303, %v1692, 0
      %v1736 = vsel %vm1303, %v1693, 0
      %1738 = vmatpush.bf16.msra.mxu0 0
      %1739 = vmatpush.bf16.msra.mxu0 0
      %1740 = vmatpush.bf16.msra.mxu0 0
      %1741 = vmatpush.bf16.msra.mxu0 0
      %1742 = vmatpush.bf16.msra.mxu0 %v1721
      %1743 = vmatpush.bf16.msra.mxu0 %v1719
      %1744 = vmatpush.bf16.msra.mxu0 %v1717
      %1745 = vmatpush.bf16.msra.mxu0 %v1715
      %1746 = vmatmul.bf16.gmra.mxu0 %v1727
      %v1747 = vpop.f32.mrf.mxu0
      %v1748 = vadd.f32 0.0, %v1747
      %v1749 = vpop.f32.mrf.mxu0
      %v1750 = vadd.f32 0.0, %v1749
      %1751 = vmatmul.bf16.gmra.mxu0 %v1730
      %v1752 = vpop.f32.mrf.mxu0
      %v1753 = vadd.f32 0.0, %v1752
      %v1754 = vpop.f32.mrf.mxu0
      %v1755 = vadd.f32 0.0, %v1754
      %1756 = vmatmul.bf16.gmra.mxu0 %v1733
      %v1757 = vpop.f32.mrf.mxu0
      %v1758 = vadd.f32 0.0, %v1757
      %v1759 = vpop.f32.mrf.mxu0
      %v1760 = vadd.f32 0.0, %v1759
      %1761 = vmatmul.bf16.gmra.mxu0 %v1736
      %v1762 = vpop.f32.mrf.mxu0
      %v1763 = vadd.f32 0.0, %v1762
      %v1764 = vpop.f32.mrf.mxu0
      %v1765 = vadd.f32 0.0, %v1764
      %1766 = vdwg.mxu0
      %1775 = vrot.lane.b32.xlu0 %v1748, 32
      %v1776 = vpop.permute.xlu0 %1775
      %1777 = vrot.lane.b32.xlu0 %v1750, 32
      %v1778 = vpop.permute.xlu0 %1777
      %1779 = vrot.lane.b32.xlu0 %v1753, 32
      %v1780 = vpop.permute.xlu0 %1779
      %1781 = vrot.lane.b32.xlu0 %v1755, 32
      %v1782 = vpop.permute.xlu0 %1781
      %1783 = vrot.lane.b32.xlu0 %v1758, 32
      %v1784 = vpop.permute.xlu0 %1783
      %1785 = vrot.lane.b32.xlu0 %v1760, 32
      %v1786 = vpop.permute.xlu0 %1785
      %1787 = vrot.lane.b32.xlu0 %v1763, 32
      %v1788 = vpop.permute.xlu0 %1787
      %1789 = vrot.lane.b32.xlu0 %v1765, 32
      %v1790 = vpop.permute.xlu0 %1789
      %vm1799 = vcmask 523520
      %1800 = vst.msk [vmem:[#allocation3] sm:$0xff] %vm1799, %v1776
      %1801 = vst.msk [vmem:[#allocation3 + $0x8] sm:$0xff] %vm1799, %v1778
      %1802 = vst.msk [vmem:[#allocation3 + $0x10] sm:$0xff] %vm1799, %v1780
      %1803 = vst.msk [vmem:[#allocation3 + $0x18] sm:$0xff] %vm1799, %v1782
      %1804 = vst.msk [vmem:[#allocation3 + $0x20] sm:$0xff] %vm1799, %v1784
      %1805 = vst.msk [vmem:[#allocation3 + $0x28] sm:$0xff] %vm1799, %v1786
      %1806 = vst.msk [vmem:[#allocation3 + $0x30] sm:$0xff] %vm1799, %v1788
      %1807 = vst.msk [vmem:[#allocation3 + $0x38] sm:$0xff] %vm1799, %v1790
      %v1808 = vld [vmem:[#allocation2] sm:$0xf]
      %v1809 = vld [vmem:[#allocation2 + $0xc] sm:$0xf]
      %v1810 = vld [vmem:[#allocation2 + $0x18] sm:$0xf]
      %v1811 = vld [vmem:[#allocation2 + $0x24] sm:$0xf]
      %v1812 = vld [vmem:[#allocation2 + $0x30] sm:$0xf]
      %v1813 = vld [vmem:[#allocation2 + $0x3c] sm:$0xf]
      %v1814 = vld [vmem:[#allocation2 + $0x48] sm:$0xf]
      %v1815 = vld [vmem:[#allocation2 + $0x54] sm:$0xf]
      %v1816 = vld [vmem:[#allocation2 + $0x4] sm:$0xf]
      %v1817 = vld [vmem:[#allocation2 + $0x10] sm:$0xf]
      %v1818 = vld [vmem:[#allocation2 + $0x1c] sm:$0xf]
      %v1819 = vld [vmem:[#allocation2 + $0x28] sm:$0xf]
      %v1820 = vld [vmem:[#allocation2 + $0x34] sm:$0xf]
      %v1821 = vld [vmem:[#allocation2 + $0x40] sm:$0xf]
      %v1822 = vld [vmem:[#allocation2 + $0x4c] sm:$0xf]
      %v1823 = vld [vmem:[#allocation2 + $0x58] sm:$0xf]
      %v1824 = vld [vmem:[#allocation2 + $0x8] sm:$0xf]
      %v1825 = vld [vmem:[#allocation2 + $0x14] sm:$0xf]
      %v1826 = vld [vmem:[#allocation2 + $0x20] sm:$0xf]
      %v1827 = vld [vmem:[#allocation2 + $0x2c] sm:$0xf]
      %v1828 = vld [vmem:[#allocation2 + $0x38] sm:$0xf]
      %v1829 = vld [vmem:[#allocation2 + $0x44] sm:$0xf]
      %v1830 = vld [vmem:[#allocation2 + $0x50] sm:$0xf]
      %v1831 = vld [vmem:[#allocation2 + $0x5c] sm:$0xf]
      %v1840 = vunpack.c.l.b16 %v1808
      %v1841 = vunpack.c.l.b16 %v1809
      %v1842 = vunpack.c.l.b16 %v1810
      %v1843 = vunpack.c.l.b16 %v1811
      %v1844 = vunpack.c.l.b16 %v1812
      %v1845 = vunpack.c.l.b16 %v1813
      %v1846 = vunpack.c.l.b16 %v1814
      %v1847 = vunpack.c.l.b16 %v1815
      %v1848 = vpack.c.b16 %v1841, %v1840
      %v1849 = vpack.c.b16 %v1843, %v1842
      %v1850 = vpack.c.b16 %v1845, %v1844
      %v1851 = vpack.c.b16 %v1847, %v1846
      %1852 = vrot.lane.b32.xlu0 %v1848, 64
      %v1853 = vpop.permute.xlu0 %1852
      %1854 = vrot.lane.b32.xlu0 %v1849, 64
      %v1855 = vpop.permute.xlu0 %1854
      %1856 = vrot.lane.b32.xlu0 %v1850, 64
      %v1857 = vpop.permute.xlu0 %1856
      %1858 = vrot.lane.b32.xlu0 %v1851, 64
      %v1859 = vpop.permute.xlu0 %1858
      %v1868 = vunpack.c.l.b16 %v1816
      %v1869 = vunpack.c.l.b16 %v1817
      %v1870 = vunpack.c.l.b16 %v1818
      %v1871 = vunpack.c.l.b16 %v1819
      %v1872 = vunpack.c.l.b16 %v1820
      %v1873 = vunpack.c.l.b16 %v1821
      %v1874 = vunpack.c.l.b16 %v1822
      %v1875 = vunpack.c.l.b16 %v1823
      %v1876 = vpack.c.b16 %v1869, %v1868
      %v1877 = vpack.c.b16 %v1871, %v1870
      %v1878 = vpack.c.b16 %v1873, %v1872
      %v1879 = vpack.c.b16 %v1875, %v1874
      %1880 = vrot.lane.b32.xlu0 %v1876, 64
      %v1881 = vpop.permute.xlu0 %1880
      %1882 = vrot.lane.b32.xlu0 %v1877, 64
      %v1883 = vpop.permute.xlu0 %1882
      %1884 = vrot.lane.b32.xlu0 %v1878, 64
      %v1885 = vpop.permute.xlu0 %1884
      %1886 = vrot.lane.b32.xlu0 %v1879, 64
      %v1887 = vpop.permute.xlu0 %1886
      %v1889 = vsel %vm1249, %v1853, 0
      %v1892 = vsel %vm1249, %v1855, 0
      %v1895 = vsel %vm1249, %v1857, 0
      %v1898 = vsel %vm1249, %v1859, 0
      %v1901 = vsel %vm1249, %v1881, 0
      %v1904 = vsel %vm1249, %v1883, 0
      %v1907 = vsel %vm1249, %v1885, 0
      %v1910 = vsel %vm1249, %v1887, 0
      %1912 = vmatpush.bf16.xpose.msra.mxu0 0
      %1913 = vmatpush.bf16.xpose.msra.mxu0 0
      %1914 = vmatpush.bf16.xpose.msra.mxu0 0
      %1915 = vmatpush.bf16.xpose.msra.mxu0 0
      %1916 = vmatpush.bf16.xpose.msra.mxu0 %v1910
      %1917 = vmatpush.bf16.xpose.msra.mxu0 %v1907
      %1918 = vmatpush.bf16.xpose.msra.mxu0 %v1904
      %1919 = vmatpush.bf16.xpose.msra.mxu0 %v1901
      %1920 = vmatmul.bf16.gmra.mxu0 %v1889
      %v1921 = vpop.f32.mrf.mxu0
      %v1922 = vadd.f32 0.0, %v1921
      %v1923 = vpop.f32.mrf.mxu0
      %v1924 = vadd.f32 0.0, %v1923
      %1925 = vmatmul.bf16.gmra.mxu0 %v1892
      %v1926 = vpop.f32.mrf.mxu0
      %v1927 = vadd.f32 0.0, %v1926
      %v1928 = vpop.f32.mrf.mxu0
      %v1929 = vadd.f32 0.0, %v1928
      %1930 = vmatmul.bf16.gmra.mxu0 %v1895
      %v1931 = vpop.f32.mrf.mxu0
      %v1932 = vadd.f32 0.0, %v1931
      %v1933 = vpop.f32.mrf.mxu0
      %v1934 = vadd.f32 0.0, %v1933
      %1935 = vmatmul.bf16.gmra.mxu0 %v1898
      %v1936 = vpop.f32.mrf.mxu0
      %v1937 = vadd.f32 0.0, %v1936
      %v1938 = vpop.f32.mrf.mxu0
      %v1939 = vadd.f32 0.0, %v1938
      %1940 = vdwg.mxu0
      %v1941 = vsel %vm1303, %v1922, -inf
      %1942 = vmax.xlane.f32.xlu0 %v1941
      %v1943 = vpop.xlane.xlu0 %1942
      %v1944 = vsel %vm1303, %v1924, -inf
      %1945 = vmax.xlane.f32.xlu0 %v1944
      %v1946 = vpop.xlane.xlu0 %1945
      %v1947 = vsel %vm1303, %v1927, -inf
      %1948 = vmax.xlane.f32.xlu0 %v1947
      %v1949 = vpop.xlane.xlu0 %1948
      %v1950 = vsel %vm1303, %v1929, -inf
      %1951 = vmax.xlane.f32.xlu0 %v1950
      %v1952 = vpop.xlane.xlu0 %1951
      %v1953 = vsel %vm1303, %v1932, -inf
      %1954 = vmax.xlane.f32.xlu0 %v1953
      %v1955 = vpop.xlane.xlu0 %1954
      %v1956 = vsel %vm1303, %v1934, -inf
      %1957 = vmax.xlane.f32.xlu0 %v1956
      %v1958 = vpop.xlane.xlu0 %1957
      %v1959 = vsel %vm1303, %v1937, -inf
      %1960 = vmax.xlane.f32.xlu0 %v1959
      %v1961 = vpop.xlane.xlu0 %1960
      %v1962 = vsel %vm1303, %v1939, -inf
      %1963 = vmax.xlane.f32.xlu0 %v1962
      %v1964 = vpop.xlane.xlu0 %1963
      %v1965 = vsub.f32 %v1922, %v1943
      %v1966 = vsub.f32 %v1924, %v1946
      %v1967 = vsub.f32 %v1927, %v1949
      %v1968 = vsub.f32 %v1929, %v1952
      %v1969 = vsub.f32 %v1932, %v1955
      %v1970 = vsub.f32 %v1934, %v1958
      %v1971 = vsub.f32 %v1937, %v1961
      %v1972 = vsub.f32 %v1939, %v1964
      %v1973 = vmul.f32 %v1965, 1.442695
      %v1974 = vpow.pop %v1973
      %v1975 = vmul.f32 %v1966, 1.442695
      %v1976 = vpow.pop %v1975
      %v1977 = vmul.f32 %v1967, 1.442695
      %v1978 = vpow.pop %v1977
      %v1979 = vmul.f32 %v1968, 1.442695
      %v1980 = vpow.pop %v1979
      %v1981 = vmul.f32 %v1969, 1.442695
      %v1982 = vpow.pop %v1981
      %v1983 = vmul.f32 %v1970, 1.442695
      %v1984 = vpow.pop %v1983
      %v1985 = vmul.f32 %v1971, 1.442695
      %v1986 = vpow.pop %v1985
      %v1987 = vmul.f32 %v1972, 1.442695
      %v1988 = vpow.pop %v1987
      %v1989 = vsel %vm1303, %v1974, 0.0
      %1990 = vadd.xlane.f32.xlu0 %v1989
      %v1991 = vpop.xlane.xlu0 %1990
      %v1992 = vsel %vm1303, %v1976, 0.0
      %1993 = vadd.xlane.f32.xlu0 %v1992
      %v1994 = vpop.xlane.xlu0 %1993
      %v1995 = vsel %vm1303, %v1978, 0.0
      %1996 = vadd.xlane.f32.xlu0 %v1995
      %v1997 = vpop.xlane.xlu0 %1996
      %v1998 = vsel %vm1303, %v1980, 0.0
      %1999 = vadd.xlane.f32.xlu0 %v1998
      %v2000 = vpop.xlane.xlu0 %1999
      %v2001 = vsel %vm1303, %v1982, 0.0
      %2002 = vadd.xlane.f32.xlu0 %v2001
      %v2003 = vpop.xlane.xlu0 %2002
      %v2004 = vsel %vm1303, %v1984, 0.0
      %2005 = vadd.xlane.f32.xlu0 %v2004
      %v2006 = vpop.xlane.xlu0 %2005
      %v2007 = vsel %vm1303, %v1986, 0.0
      %2008 = vadd.xlane.f32.xlu0 %v2007
      %v2009 = vpop.xlane.xlu0 %2008
      %v2010 = vsel %vm1303, %v1988, 0.0
      %2011 = vadd.xlane.f32.xlu0 %v2010
      %v2012 = vpop.xlane.xlu0 %2011
      %v2013 = vrcp.pop %v1991
      %v2014 = vrcp.pop %v1994
      %v2015 = vrcp.pop %v1997
      %v2016 = vrcp.pop %v2000
      %v2017 = vrcp.pop %v2003
      %v2018 = vrcp.pop %v2006
      %v2019 = vrcp.pop %v2009
      %v2020 = vrcp.pop %v2012
      %v2021 = vmul.f32 %v1974, %v2013
      %v2022 = vmul.f32 %v1976, %v2014
      %v2023 = vmul.f32 %v1978, %v2015
      %v2024 = vmul.f32 %v1980, %v2016
      %v2025 = vmul.f32 %v1982, %v2017
      %v2026 = vmul.f32 %v1984, %v2018
      %v2027 = vmul.f32 %v1986, %v2019
      %v2028 = vmul.f32 %v1988, %v2020
      %v2029 = vpack.c.bf16 %v2022, %v2021
      %v2030 = vpack.c.bf16 %v2024, %v2023
      %v2031 = vpack.c.bf16 %v2026, %v2025
      %v2032 = vpack.c.bf16 %v2028, %v2027
      %v2041 = vunpack.c.l.b16 %v1824
      %v2042 = vunpack.c.l.b16 %v1825
      %v2043 = vunpack.c.l.b16 %v1826
      %v2044 = vunpack.c.l.b16 %v1827
      %v2045 = vunpack.c.l.b16 %v1828
      %v2046 = vunpack.c.l.b16 %v1829
      %v2047 = vunpack.c.l.b16 %v1830
      %v2048 = vunpack.c.l.b16 %v1831
      %v2049 = vpack.c.b16 %v2042, %v2041
      %v2050 = vpack.c.b16 %v2044, %v2043
      %v2051 = vpack.c.b16 %v2046, %v2045
      %v2052 = vpack.c.b16 %v2048, %v2047
      %2053 = vrot.lane.b32.xlu0 %v2049, 64
      %v2054 = vpop.permute.xlu0 %2053
      %2055 = vrot.lane.b32.xlu0 %v2050, 64
      %v2056 = vpop.permute.xlu0 %2055
      %2057 = vrot.lane.b32.xlu0 %v2051, 64
      %v2058 = vpop.permute.xlu0 %2057
      %2059 = vrot.lane.b32.xlu0 %v2052, 64
      %v2060 = vpop.permute.xlu0 %2059
      %v2066 = vsel %vm1303, %v2029, 0
      %v2069 = vsel %vm1303, %v2030, 0
      %v2072 = vsel %vm1303, %v2031, 0
      %v2075 = vsel %vm1303, %v2032, 0
      %2077 = vmatpush.bf16.msra.mxu0 0
      %2078 = vmatpush.bf16.msra.mxu0 0
      %2079 = vmatpush.bf16.msra.mxu0 0
      %2080 = vmatpush.bf16.msra.mxu0 0
      %2081 = vmatpush.bf16.msra.mxu0 %v2060
      %2082 = vmatpush.bf16.msra.mxu0 %v2058
      %2083 = vmatpush.bf16.msra.mxu0 %v2056
      %2084 = vmatpush.bf16.msra.mxu0 %v2054
      %2085 = vmatmul.bf16.gmra.mxu0 %v2066
      %v2086 = vpop.f32.mrf.mxu0
      %v2087 = vadd.f32 0.0, %v2086
      %v2088 = vpop.f32.mrf.mxu0
      %v2089 = vadd.f32 0.0, %v2088
      %2090 = vmatmul.bf16.gmra.mxu0 %v2069
      %v2091 = vpop.f32.mrf.mxu0
      %v2092 = vadd.f32 0.0, %v2091
      %v2093 = vpop.f32.mrf.mxu0
      %v2094 = vadd.f32 0.0, %v2093
      %2095 = vmatmul.bf16.gmra.mxu0 %v2072
      %v2096 = vpop.f32.mrf.mxu0
      %v2097 = vadd.f32 0.0, %v2096
      %v2098 = vpop.f32.mrf.mxu0
      %v2099 = vadd.f32 0.0, %v2098
      %2100 = vmatmul.bf16.gmra.mxu0 %v2075
      %v2101 = vpop.f32.mrf.mxu0
      %v2102 = vadd.f32 0.0, %v2101
      %v2103 = vpop.f32.mrf.mxu0
      %v2104 = vadd.f32 0.0, %v2103
      %2105 = vdwg.mxu0
      %2114 = vrot.lane.b32.xlu0 %v2087, 64
      %v2115 = vpop.permute.xlu0 %2114
      %2116 = vrot.lane.b32.xlu0 %v2089, 64
      %v2117 = vpop.permute.xlu0 %2116
      %2118 = vrot.lane.b32.xlu0 %v2092, 64
      %v2119 = vpop.permute.xlu0 %2118
      %2120 = vrot.lane.b32.xlu0 %v2094, 64
      %v2121 = vpop.permute.xlu0 %2120
      %2122 = vrot.lane.b32.xlu0 %v2097, 64
      %v2123 = vpop.permute.xlu0 %2122
      %2124 = vrot.lane.b32.xlu0 %v2099, 64
      %v2125 = vpop.permute.xlu0 %2124
      %2126 = vrot.lane.b32.xlu0 %v2102, 64
      %v2127 = vpop.permute.xlu0 %2126
      %2128 = vrot.lane.b32.xlu0 %v2104, 64
      %v2129 = vpop.permute.xlu0 %2128
      %vm2138 = vcmask 785920
      %2139 = vst.msk [vmem:[#allocation3] sm:$0xff] %vm2138, %v2115
      %2140 = vst.msk [vmem:[#allocation3 + $0x8] sm:$0xff] %vm2138, %v2117
      %2141 = vst.msk [vmem:[#allocation3 + $0x10] sm:$0xff] %vm2138, %v2119
      %2142 = vst.msk [vmem:[#allocation3 + $0x18] sm:$0xff] %vm2138, %v2121
      %2143 = vst.msk [vmem:[#allocation3 + $0x20] sm:$0xff] %vm2138, %v2123
      %2144 = vst.msk [vmem:[#allocation3 + $0x28] sm:$0xff] %vm2138, %v2125
      %2145 = vst.msk [vmem:[#allocation3 + $0x30] sm:$0xff] %vm2138, %v2127
      %2146 = vst.msk [vmem:[#allocation3 + $0x38] sm:$0xff] %vm2138, %v2129
      %v2147 = vld [vmem:[#allocation2] sm:$0xf]
      %v2148 = vld [vmem:[#allocation2 + $0xc] sm:$0xf]
      %v2149 = vld [vmem:[#allocation2 + $0x18] sm:$0xf]
      %v2150 = vld [vmem:[#allocation2 + $0x24] sm:$0xf]
      %v2151 = vld [vmem:[#allocation2 + $0x30] sm:$0xf]
      %v2152 = vld [vmem:[#allocation2 + $0x3c] sm:$0xf]
      %v2153 = vld [vmem:[#allocation2 + $0x48] sm:$0xf]
      %v2154 = vld [vmem:[#allocation2 + $0x54] sm:$0xf]
      %v2155 = vld [vmem:[#allocation2 + $0x4] sm:$0xf]
      %v2156 = vld [vmem:[#allocation2 + $0x10] sm:$0xf]
      %v2157 = vld [vmem:[#allocation2 + $0x1c] sm:$0xf]
      %v2158 = vld [vmem:[#allocation2 + $0x28] sm:$0xf]
      %v2159 = vld [vmem:[#allocation2 + $0x34] sm:$0xf]
      %v2160 = vld [vmem:[#allocation2 + $0x40] sm:$0xf]
      %v2161 = vld [vmem:[#allocation2 + $0x4c] sm:$0xf]
      %v2162 = vld [vmem:[#allocation2 + $0x58] sm:$0xf]
      %v2163 = vld [vmem:[#allocation2 + $0x8] sm:$0xf]
      %v2164 = vld [vmem:[#allocation2 + $0x14] sm:$0xf]
      %v2165 = vld [vmem:[#allocation2 + $0x20] sm:$0xf]
      %v2166 = vld [vmem:[#allocation2 + $0x2c] sm:$0xf]
      %v2167 = vld [vmem:[#allocation2 + $0x38] sm:$0xf]
      %v2168 = vld [vmem:[#allocation2 + $0x44] sm:$0xf]
      %v2169 = vld [vmem:[#allocation2 + $0x50] sm:$0xf]
      %v2170 = vld [vmem:[#allocation2 + $0x5c] sm:$0xf]
      %v2179 = vunpack.c.l.b16 %v2147
      %v2180 = vunpack.c.l.b16 %v2148
      %v2181 = vunpack.c.l.b16 %v2149
      %v2182 = vunpack.c.l.b16 %v2150
      %v2183 = vunpack.c.l.b16 %v2151
      %v2184 = vunpack.c.l.b16 %v2152
      %v2185 = vunpack.c.l.b16 %v2153
      %v2186 = vunpack.c.l.b16 %v2154
      %v2187 = vpack.c.b16 %v2180, %v2179
      %v2188 = vpack.c.b16 %v2182, %v2181
      %v2189 = vpack.c.b16 %v2184, %v2183
      %v2190 = vpack.c.b16 %v2186, %v2185
      %2191 = vrot.lane.b32.xlu0 %v2187, 32
      %v2192 = vpop.permute.xlu0 %2191
      %2193 = vrot.lane.b32.xlu0 %v2188, 32
      %v2194 = vpop.permute.xlu0 %2193
      %2195 = vrot.lane.b32.xlu0 %v2189, 32
      %v2196 = vpop.permute.xlu0 %2195
      %2197 = vrot.lane.b32.xlu0 %v2190, 32
      %v2198 = vpop.permute.xlu0 %2197
      %v2207 = vunpack.c.l.b16 %v2155
      %v2208 = vunpack.c.l.b16 %v2156
      %v2209 = vunpack.c.l.b16 %v2157
      %v2210 = vunpack.c.l.b16 %v2158
      %v2211 = vunpack.c.l.b16 %v2159
      %v2212 = vunpack.c.l.b16 %v2160
      %v2213 = vunpack.c.l.b16 %v2161
      %v2214 = vunpack.c.l.b16 %v2162
      %v2215 = vpack.c.b16 %v2208, %v2207
      %v2216 = vpack.c.b16 %v2210, %v2209
      %v2217 = vpack.c.b16 %v2212, %v2211
      %v2218 = vpack.c.b16 %v2214, %v2213
      %2219 = vrot.lane.b32.xlu0 %v2215, 32
      %v2220 = vpop.permute.xlu0 %2219
      %2221 = vrot.lane.b32.xlu0 %v2216, 32
      %v2222 = vpop.permute.xlu0 %2221
      %2223 = vrot.lane.b32.xlu0 %v2217, 32
      %v2224 = vpop.permute.xlu0 %2223
      %2225 = vrot.lane.b32.xlu0 %v2218, 32
      %v2226 = vpop.permute.xlu0 %2225
      %v2228 = vsel %vm1249, %v2192, 0
      %v2231 = vsel %vm1249, %v2194, 0
      %v2234 = vsel %vm1249, %v2196, 0
      %v2237 = vsel %vm1249, %v2198, 0
      %v2240 = vsel %vm1249, %v2220, 0
      %v2243 = vsel %vm1249, %v2222, 0
      %v2246 = vsel %vm1249, %v2224, 0
      %v2249 = vsel %vm1249, %v2226, 0
      %2251 = vmatpush.bf16.xpose.msra.mxu0 0
      %2252 = vmatpush.bf16.xpose.msra.mxu0 0
      %2253 = vmatpush.bf16.xpose.msra.mxu0 0
      %2254 = vmatpush.bf16.xpose.msra.mxu0 0
      %2255 = vmatpush.bf16.xpose.msra.mxu0 %v2249
      %2256 = vmatpush.bf16.xpose.msra.mxu0 %v2246
      %2257 = vmatpush.bf16.xpose.msra.mxu0 %v2243
      %2258 = vmatpush.bf16.xpose.msra.mxu0 %v2240
      %2259 = vmatmul.bf16.gmra.mxu0 %v2228
      %v2260 = vpop.f32.mrf.mxu0
      %v2261 = vadd.f32 0.0, %v2260
      %v2262 = vpop.f32.mrf.mxu0
      %v2263 = vadd.f32 0.0, %v2262
      %2264 = vmatmul.bf16.gmra.mxu0 %v2231
      %v2265 = vpop.f32.mrf.mxu0
      %v2266 = vadd.f32 0.0, %v2265
      %v2267 = vpop.f32.mrf.mxu0
      %v2268 = vadd.f32 0.0, %v2267
      %2269 = vmatmul.bf16.gmra.mxu0 %v2234
      %v2270 = vpop.f32.mrf.mxu0
      %v2271 = vadd.f32 0.0, %v2270
      %v2272 = vpop.f32.mrf.mxu0
      %v2273 = vadd.f32 0.0, %v2272
      %2274 = vmatmul.bf16.gmra.mxu0 %v2237
      %v2275 = vpop.f32.mrf.mxu0
      %v2276 = vadd.f32 0.0, %v2275
      %v2277 = vpop.f32.mrf.mxu0
      %v2278 = vadd.f32 0.0, %v2277
      %2279 = vdwg.mxu0
      %v2280 = vsel %vm1303, %v2261, -inf
      %2281 = vmax.xlane.f32.xlu0 %v2280
      %v2282 = vpop.xlane.xlu0 %2281
      %v2283 = vsel %vm1303, %v2263, -inf
      %2284 = vmax.xlane.f32.xlu0 %v2283
      %v2285 = vpop.xlane.xlu0 %2284
      %v2286 = vsel %vm1303, %v2266, -inf
      %2287 = vmax.xlane.f32.xlu0 %v2286
      %v2288 = vpop.xlane.xlu0 %2287
      %v2289 = vsel %vm1303, %v2268, -inf
      %2290 = vmax.xlane.f32.xlu0 %v2289
      %v2291 = vpop.xlane.xlu0 %2290
      %v2292 = vsel %vm1303, %v2271, -inf
      %2293 = vmax.xlane.f32.xlu0 %v2292
      %v2294 = vpop.xlane.xlu0 %2293
      %v2295 = vsel %vm1303, %v2273, -inf
      %2296 = vmax.xlane.f32.xlu0 %v2295
      %v2297 = vpop.xlane.xlu0 %2296
      %v2298 = vsel %vm1303, %v2276, -inf
      %2299 = vmax.xlane.f32.xlu0 %v2298
      %v2300 = vpop.xlane.xlu0 %2299
      %v2301 = vsel %vm1303, %v2278, -inf
      %2302 = vmax.xlane.f32.xlu0 %v2301
      %v2303 = vpop.xlane.xlu0 %2302
      %v2304 = vsub.f32 %v2261, %v2282
      %v2305 = vsub.f32 %v2263, %v2285
      %v2306 = vsub.f32 %v2266, %v2288
      %v2307 = vsub.f32 %v2268, %v2291
      %v2308 = vsub.f32 %v2271, %v2294
      %v2309 = vsub.f32 %v2273, %v2297
      %v2310 = vsub.f32 %v2276, %v2300
      %v2311 = vsub.f32 %v2278, %v2303
      %v2312 = vmul.f32 %v2304, 1.442695
      %v2313 = vpow.pop %v2312
      %v2314 = vmul.f32 %v2305, 1.442695
      %v2315 = vpow.pop %v2314
      %v2316 = vmul.f32 %v2306, 1.442695
      %v2317 = vpow.pop %v2316
      %v2318 = vmul.f32 %v2307, 1.442695
      %v2319 = vpow.pop %v2318
      %v2320 = vmul.f32 %v2308, 1.442695
      %v2321 = vpow.pop %v2320
      %v2322 = vmul.f32 %v2309, 1.442695
      %v2323 = vpow.pop %v2322
      %v2324 = vmul.f32 %v2310, 1.442695
      %v2325 = vpow.pop %v2324
      %v2326 = vmul.f32 %v2311, 1.442695
      %v2327 = vpow.pop %v2326
      %v2328 = vsel %vm1303, %v2313, 0.0
      %2329 = vadd.xlane.f32.xlu0 %v2328
      %v2330 = vpop.xlane.xlu0 %2329
      %v2331 = vsel %vm1303, %v2315, 0.0
      %2332 = vadd.xlane.f32.xlu0 %v2331
      %v2333 = vpop.xlane.xlu0 %2332
      %v2334 = vsel %vm1303, %v2317, 0.0
      %2335 = vadd.xlane.f32.xlu0 %v2334
      %v2336 = vpop.xlane.xlu0 %2335
      %v2337 = vsel %vm1303, %v2319, 0.0
      %2338 = vadd.xlane.f32.xlu0 %v2337
      %v2339 = vpop.xlane.xlu0 %2338
      %v2340 = vsel %vm1303, %v2321, 0.0
      %2341 = vadd.xlane.f32.xlu0 %v2340
      %v2342 = vpop.xlane.xlu0 %2341
      %v2343 = vsel %vm1303, %v2323, 0.0
      %2344 = vadd.xlane.f32.xlu0 %v2343
      %v2345 = vpop.xlane.xlu0 %2344
      %v2346 = vsel %vm1303, %v2325, 0.0
      %2347 = vadd.xlane.f32.xlu0 %v2346
      %v2348 = vpop.xlane.xlu0 %2347
      %v2349 = vsel %vm1303, %v2327, 0.0
      %2350 = vadd.xlane.f32.xlu0 %v2349
      %v2351 = vpop.xlane.xlu0 %2350
      %v2352 = vrcp.pop %v2330
      %v2353 = vrcp.pop %v2333
      %v2354 = vrcp.pop %v2336
      %v2355 = vrcp.pop %v2339
      %v2356 = vrcp.pop %v2342
      %v2357 = vrcp.pop %v2345
      %v2358 = vrcp.pop %v2348
      %v2359 = vrcp.pop %v2351
      %v2360 = vmul.f32 %v2313, %v2352
      %v2361 = vmul.f32 %v2315, %v2353
      %v2362 = vmul.f32 %v2317, %v2354
      %v2363 = vmul.f32 %v2319, %v2355
      %v2364 = vmul.f32 %v2321, %v2356
      %v2365 = vmul.f32 %v2323, %v2357
      %v2366 = vmul.f32 %v2325, %v2358
      %v2367 = vmul.f32 %v2327, %v2359
      %v2368 = vpack.c.bf16 %v2361, %v2360
      %v2369 = vpack.c.bf16 %v2363, %v2362
      %v2370 = vpack.c.bf16 %v2365, %v2364
      %v2371 = vpack.c.bf16 %v2367, %v2366
      %v2380 = vunpack.c.l.b16 %v2163
      %v2381 = vunpack.c.l.b16 %v2164
      %v2382 = vunpack.c.l.b16 %v2165
      %v2383 = vunpack.c.l.b16 %v2166
      %v2384 = vunpack.c.l.b16 %v2167
      %v2385 = vunpack.c.l.b16 %v2168
      %v2386 = vunpack.c.l.b16 %v2169
      %v2387 = vunpack.c.l.b16 %v2170
      %v2388 = vpack.c.b16 %v2381, %v2380
      %v2389 = vpack.c.b16 %v2383, %v2382
      %v2390 = vpack.c.b16 %v2385, %v2384
      %v2391 = vpack.c.b16 %v2387, %v2386
      %2392 = vrot.lane.b32.xlu0 %v2388, 32
      %v2393 = vpop.permute.xlu0 %2392
      %2394 = vrot.lane.b32.xlu0 %v2389, 32
      %v2395 = vpop.permute.xlu0 %2394
      %2396 = vrot.lane.b32.xlu0 %v2390, 32
      %v2397 = vpop.permute.xlu0 %2396
      %2398 = vrot.lane.b32.xlu0 %v2391, 32
      %v2399 = vpop.permute.xlu0 %2398
      %v2405 = vsel %vm1303, %v2368, 0
      %v2408 = vsel %vm1303, %v2369, 0
      %v2411 = vsel %vm1303, %v2370, 0
      %v2414 = vsel %vm1303, %v2371, 0
      %2416 = vmatpush.bf16.msra.mxu0 0
      %2417 = vmatpush.bf16.msra.mxu0 0
      %2418 = vmatpush.bf16.msra.mxu0 0
      %2419 = vmatpush.bf16.msra.mxu0 0
      %2420 = vmatpush.bf16.msra.mxu0 %v2399
      %2421 = vmatpush.bf16.msra.mxu0 %v2397
      %2422 = vmatpush.bf16.msra.mxu0 %v2395
      %2423 = vmatpush.bf16.msra.mxu0 %v2393
      %2424 = vmatmul.bf16.gmra.mxu0 %v2405
      %v2425 = vpop.f32.mrf.mxu0
      %v2426 = vadd.f32 0.0, %v2425
      %v2427 = vpop.f32.mrf.mxu0
      %v2428 = vadd.f32 0.0, %v2427
      %2429 = vmatmul.bf16.gmra.mxu0 %v2408
      %v2430 = vpop.f32.mrf.mxu0
      %v2431 = vadd.f32 0.0, %v2430
      %v2432 = vpop.f32.mrf.mxu0
      %v2433 = vadd.f32 0.0, %v2432
      %2434 = vmatmul.bf16.gmra.mxu0 %v2411
      %v2435 = vpop.f32.mrf.mxu0
      %v2436 = vadd.f32 0.0, %v2435
      %v2437 = vpop.f32.mrf.mxu0
      %v2438 = vadd.f32 0.0, %v2437
      %2439 = vmatmul.bf16.gmra.mxu0 %v2414
      %v2440 = vpop.f32.mrf.mxu0
      %v2441 = vadd.f32 0.0, %v2440
      %v2442 = vpop.f32.mrf.mxu0
      %v2443 = vadd.f32 0.0, %v2442
      %2444 = vdwg.mxu0
      %2453 = vrot.lane.b32.xlu0 %v2426, 96
      %v2454 = vpop.permute.xlu0 %2453
      %2455 = vrot.lane.b32.xlu0 %v2428, 96
      %v2456 = vpop.permute.xlu0 %2455
      %2457 = vrot.lane.b32.xlu0 %v2431, 96
      %v2458 = vpop.permute.xlu0 %2457
      %2459 = vrot.lane.b32.xlu0 %v2433, 96
      %v2460 = vpop.permute.xlu0 %2459
      %2461 = vrot.lane.b32.xlu0 %v2436, 96
      %v2462 = vpop.permute.xlu0 %2461
      %2463 = vrot.lane.b32.xlu0 %v2438, 96
      %v2464 = vpop.permute.xlu0 %2463
      %2465 = vrot.lane.b32.xlu0 %v2441, 96
      %v2466 = vpop.permute.xlu0 %2465
      %2467 = vrot.lane.b32.xlu0 %v2443, 96
      %v2468 = vpop.permute.xlu0 %2467
      %vm2477 = vcmask 1048320
      %2478 = vst.msk [vmem:[#allocation3] sm:$0xff] %vm2477, %v2454
      %2479 = vst.msk [vmem:[#allocation3 + $0x8] sm:$0xff] %vm2477, %v2456
      %2480 = vst.msk [vmem:[#allocation3 + $0x10] sm:$0xff] %vm2477, %v2458
      %2481 = vst.msk [vmem:[#allocation3 + $0x18] sm:$0xff] %vm2477, %v2460
      %2482 = vst.msk [vmem:[#allocation3 + $0x20] sm:$0xff] %vm2477, %v2462
      %2483 = vst.msk [vmem:[#allocation3 + $0x28] sm:$0xff] %vm2477, %v2464
      %2484 = vst.msk [vmem:[#allocation3 + $0x30] sm:$0xff] %vm2477, %v2466
      %2485 = vst.msk [vmem:[#allocation3 + $0x38] sm:$0xff] %vm2477, %v2468
      %v2486 = vld [vmem:[#allocation2 + $0x60] sm:$0xf]
      %v2487 = vld [vmem:[#allocation2 + $0x6c] sm:$0xf]
      %v2488 = vld [vmem:[#allocation2 + $0x78] sm:$0xf]
      %v2489 = vld [vmem:[#allocation2 + $0x84] sm:$0xf]
      %v2490 = vld [vmem:[#allocation2 + $0x90] sm:$0xf]
      %v2491 = vld [vmem:[#allocation2 + $0x9c] sm:$0xf]
      %v2492 = vld [vmem:[#allocation2 + $0xa8] sm:$0xf]
      %v2493 = vld [vmem:[#allocation2 + $0xb4] sm:$0xf]
      %v2494 = vld [vmem:[#allocation2 + $0x64] sm:$0xf]
      %v2495 = vld [vmem:[#allocation2 + $0x70] sm:$0xf]
      %v2496 = vld [vmem:[#allocation2 + $0x7c] sm:$0xf]
      %v2497 = vld [vmem:[#allocation2 + $0x88] sm:$0xf]
      %v2498 = vld [vmem:[#allocation2 + $0x94] sm:$0xf]
      %v2499 = vld [vmem:[#allocation2 + $0xa0] sm:$0xf]
      %v2500 = vld [vmem:[#allocation2 + $0xac] sm:$0xf]
      %v2501 = vld [vmem:[#allocation2 + $0xb8] sm:$0xf]
      %v2502 = vld [vmem:[#allocation2 + $0x68] sm:$0xf]
      %v2503 = vld [vmem:[#allocation2 + $0x74] sm:$0xf]
      %v2504 = vld [vmem:[#allocation2 + $0x80] sm:$0xf]
      %v2505 = vld [vmem:[#allocation2 + $0x8c] sm:$0xf]
      %v2506 = vld [vmem:[#allocation2 + $0x98] sm:$0xf]
      %v2507 = vld [vmem:[#allocation2 + $0xa4] sm:$0xf]
      %v2508 = vld [vmem:[#allocation2 + $0xb0] sm:$0xf]
      %v2509 = vld [vmem:[#allocation2 + $0xbc] sm:$0xf]
      %v2518 = vunpack.c.l.b16 %v2486
      %v2519 = vunpack.c.l.b16 %v2487
      %v2520 = vunpack.c.l.b16 %v2488
      %v2521 = vunpack.c.l.b16 %v2489
      %v2522 = vunpack.c.l.b16 %v2490
      %v2523 = vunpack.c.l.b16 %v2491
      %v2524 = vunpack.c.l.b16 %v2492
      %v2525 = vunpack.c.l.b16 %v2493
      %v2526 = vpack.c.b16 %v2519, %v2518
      %v2527 = vpack.c.b16 %v2521, %v2520
      %v2528 = vpack.c.b16 %v2523, %v2522
      %v2529 = vpack.c.b16 %v2525, %v2524
      %v2538 = vunpack.c.l.b16 %v2494
      %v2539 = vunpack.c.l.b16 %v2495
      %v2540 = vunpack.c.l.b16 %v2496
      %v2541 = vunpack.c.l.b16 %v2497
      %v2542 = vunpack.c.l.b16 %v2498
      %v2543 = vunpack.c.l.b16 %v2499
      %v2544 = vunpack.c.l.b16 %v2500
      %v2545 = vunpack.c.l.b16 %v2501
      %v2546 = vpack.c.b16 %v2539, %v2538
      %v2547 = vpack.c.b16 %v2541, %v2540
      %v2548 = vpack.c.b16 %v2543, %v2542
      %v2549 = vpack.c.b16 %v2545, %v2544
      %v2551 = vsel %vm1249, %v2526, 0
      %v2554 = vsel %vm1249, %v2527, 0
      %v2557 = vsel %vm1249, %v2528, 0
      %v2560 = vsel %vm1249, %v2529, 0
      %v2563 = vsel %vm1249, %v2546, 0
      %v2566 = vsel %vm1249, %v2547, 0
      %v2569 = vsel %vm1249, %v2548, 0
      %v2572 = vsel %vm1249, %v2549, 0
      %2574 = vmatpush.bf16.xpose.msra.mxu0 0
      %2575 = vmatpush.bf16.xpose.msra.mxu0 0
      %2576 = vmatpush.bf16.xpose.msra.mxu0 0
      %2577 = vmatpush.bf16.xpose.msra.mxu0 0
      %2578 = vmatpush.bf16.xpose.msra.mxu0 %v2572
      %2579 = vmatpush.bf16.xpose.msra.mxu0 %v2569
      %2580 = vmatpush.bf16.xpose.msra.mxu0 %v2566
      %2581 = vmatpush.bf16.xpose.msra.mxu0 %v2563
      %2582 = vmatmul.bf16.gmra.mxu0 %v2551
      %v2583 = vpop.f32.mrf.mxu0
      %v2584 = vadd.f32 0.0, %v2583
      %v2585 = vpop.f32.mrf.mxu0
      %v2586 = vadd.f32 0.0, %v2585
      %2587 = vmatmul.bf16.gmra.mxu0 %v2554
      %v2588 = vpop.f32.mrf.mxu0
      %v2589 = vadd.f32 0.0, %v2588
      %v2590 = vpop.f32.mrf.mxu0
      %v2591 = vadd.f32 0.0, %v2590
      %2592 = vmatmul.bf16.gmra.mxu0 %v2557
      %v2593 = vpop.f32.mrf.mxu0
      %v2594 = vadd.f32 0.0, %v2593
      %v2595 = vpop.f32.mrf.mxu0
      %v2596 = vadd.f32 0.0, %v2595
      %2597 = vmatmul.bf16.gmra.mxu0 %v2560
      %v2598 = vpop.f32.mrf.mxu0
      %v2599 = vadd.f32 0.0, %v2598
      %v2600 = vpop.f32.mrf.mxu0
      %v2601 = vadd.f32 0.0, %v2600
      %2602 = vdwg.mxu0
      %v2603 = vsel %vm1303, %v2584, -inf
      %2604 = vmax.xlane.f32.xlu0 %v2603
      %v2605 = vpop.xlane.xlu0 %2604
      %v2606 = vsel %vm1303, %v2586, -inf
      %2607 = vmax.xlane.f32.xlu0 %v2606
      %v2608 = vpop.xlane.xlu0 %2607
      %v2609 = vsel %vm1303, %v2589, -inf
      %2610 = vmax.xlane.f32.xlu0 %v2609
      %v2611 = vpop.xlane.xlu0 %2610
      %v2612 = vsel %vm1303, %v2591, -inf
      %2613 = vmax.xlane.f32.xlu0 %v2612
      %v2614 = vpop.xlane.xlu0 %2613
      %v2615 = vsel %vm1303, %v2594, -inf
      %2616 = vmax.xlane.f32.xlu0 %v2615
      %v2617 = vpop.xlane.xlu0 %2616
      %v2618 = vsel %vm1303, %v2596, -inf
      %2619 = vmax.xlane.f32.xlu0 %v2618
      %v2620 = vpop.xlane.xlu0 %2619
      %v2621 = vsel %vm1303, %v2599, -inf
      %2622 = vmax.xlane.f32.xlu0 %v2621
      %v2623 = vpop.xlane.xlu0 %2622
      %v2624 = vsel %vm1303, %v2601, -inf
      %2625 = vmax.xlane.f32.xlu0 %v2624
      %v2626 = vpop.xlane.xlu0 %2625
      %v2627 = vsub.f32 %v2584, %v2605
      %v2628 = vsub.f32 %v2586, %v2608
      %v2629 = vsub.f32 %v2589, %v2611
      %v2630 = vsub.f32 %v2591, %v2614
      %v2631 = vsub.f32 %v2594, %v2617
      %v2632 = vsub.f32 %v2596, %v2620
      %v2633 = vsub.f32 %v2599, %v2623
      %v2634 = vsub.f32 %v2601, %v2626
      %v2635 = vmul.f32 %v2627, 1.442695
      %v2636 = vpow.pop %v2635
      %v2637 = vmul.f32 %v2628, 1.442695
      %v2638 = vpow.pop %v2637
      %v2639 = vmul.f32 %v2629, 1.442695
      %v2640 = vpow.pop %v2639
      %v2641 = vmul.f32 %v2630, 1.442695
      %v2642 = vpow.pop %v2641
      %v2643 = vmul.f32 %v2631, 1.442695
      %v2644 = vpow.pop %v2643
      %v2645 = vmul.f32 %v2632, 1.442695
      %v2646 = vpow.pop %v2645
      %v2647 = vmul.f32 %v2633, 1.442695
      %v2648 = vpow.pop %v2647
      %v2649 = vmul.f32 %v2634, 1.442695
      %v2650 = vpow.pop %v2649
      %v2651 = vsel %vm1303, %v2636, 0.0
      %2652 = vadd.xlane.f32.xlu0 %v2651
      %v2653 = vpop.xlane.xlu0 %2652
      %v2654 = vsel %vm1303, %v2638, 0.0
      %2655 = vadd.xlane.f32.xlu0 %v2654
      %v2656 = vpop.xlane.xlu0 %2655
      %v2657 = vsel %vm1303, %v2640, 0.0
      %2658 = vadd.xlane.f32.xlu0 %v2657
      %v2659 = vpop.xlane.xlu0 %2658
      %v2660 = vsel %vm1303, %v2642, 0.0
      %2661 = vadd.xlane.f32.xlu0 %v2660
      %v2662 = vpop.xlane.xlu0 %2661
      %v2663 = vsel %vm1303, %v2644, 0.0
      %2664 = vadd.xlane.f32.xlu0 %v2663
      %v2665 = vpop.xlane.xlu0 %2664
      %v2666 = vsel %vm1303, %v2646, 0.0
      %2667 = vadd.xlane.f32.xlu0 %v2666
      %v2668 = vpop.xlane.xlu0 %2667
      %v2669 = vsel %vm1303, %v2648, 0.0
      %2670 = vadd.xlane.f32.xlu0 %v2669
      %v2671 = vpop.xlane.xlu0 %2670
      %v2672 = vsel %vm1303, %v2650, 0.0
      %2673 = vadd.xlane.f32.xlu0 %v2672
      %v2674 = vpop.xlane.xlu0 %2673
      %v2675 = vrcp.pop %v2653
      %v2676 = vrcp.pop %v2656
      %v2677 = vrcp.pop %v2659
      %v2678 = vrcp.pop %v2662
      %v2679 = vrcp.pop %v2665
      %v2680 = vrcp.pop %v2668
      %v2681 = vrcp.pop %v2671
      %v2682 = vrcp.pop %v2674
      %v2683 = vmul.f32 %v2636, %v2675
      %v2684 = vmul.f32 %v2638, %v2676
      %v2685 = vmul.f32 %v2640, %v2677
      %v2686 = vmul.f32 %v2642, %v2678
      %v2687 = vmul.f32 %v2644, %v2679
      %v2688 = vmul.f32 %v2646, %v2680
      %v2689 = vmul.f32 %v2648, %v2681
      %v2690 = vmul.f32 %v2650, %v2682
      %v2691 = vpack.c.bf16 %v2684, %v2683
      %v2692 = vpack.c.bf16 %v2686, %v2685
      %v2693 = vpack.c.bf16 %v2688, %v2687
      %v2694 = vpack.c.bf16 %v2690, %v2689
      %v2703 = vunpack.c.l.b16 %v2502
      %v2704 = vunpack.c.l.b16 %v2503
      %v2705 = vunpack.c.l.b16 %v2504
      %v2706 = vunpack.c.l.b16 %v2505
      %v2707 = vunpack.c.l.b16 %v2506
      %v2708 = vunpack.c.l.b16 %v2507
      %v2709 = vunpack.c.l.b16 %v2508
      %v2710 = vunpack.c.l.b16 %v2509
      %v2711 = vpack.c.b16 %v2704, %v2703
      %v2712 = vpack.c.b16 %v2706, %v2705
      %v2713 = vpack.c.b16 %v2708, %v2707
      %v2714 = vpack.c.b16 %v2710, %v2709
      %v2720 = vsel %vm1303, %v2691, 0
      %v2723 = vsel %vm1303, %v2692, 0
      %v2726 = vsel %vm1303, %v2693, 0
      %v2729 = vsel %vm1303, %v2694, 0
      %2731 = vmatpush.bf16.msra.mxu0 0
      %2732 = vmatpush.bf16.msra.mxu0 0
      %2733 = vmatpush.bf16.msra.mxu0 0
      %2734 = vmatpush.bf16.msra.mxu0 0
      %2735 = vmatpush.bf16.msra.mxu0 %v2714
      %2736 = vmatpush.bf16.msra.mxu0 %v2713
      %2737 = vmatpush.bf16.msra.mxu0 %v2712
      %2738 = vmatpush.bf16.msra.mxu0 %v2711
      %2739 = vmatmul.bf16.gmra.mxu0 %v2720
      %v2740 = vpop.f32.mrf.mxu0
      %v2741 = vadd.f32 0.0, %v2740
      %v2742 = vpop.f32.mrf.mxu0
      %v2743 = vadd.f32 0.0, %v2742
      %2744 = vmatmul.bf16.gmra.mxu0 %v2723
      %v2745 = vpop.f32.mrf.mxu0
      %v2746 = vadd.f32 0.0, %v2745
      %v2747 = vpop.f32.mrf.mxu0
      %v2748 = vadd.f32 0.0, %v2747
      %2749 = vmatmul.bf16.gmra.mxu0 %v2726
      %v2750 = vpop.f32.mrf.mxu0
      %v2751 = vadd.f32 0.0, %v2750
      %v2752 = vpop.f32.mrf.mxu0
      %v2753 = vadd.f32 0.0, %v2752
      %2754 = vmatmul.bf16.gmra.mxu0 %v2729
      %v2755 = vpop.f32.mrf.mxu0
      %v2756 = vadd.f32 0.0, %v2755
      %v2757 = vpop.f32.mrf.mxu0
      %v2758 = vadd.f32 0.0, %v2757
      %2759 = vdwg.mxu0
      %2760 = vst.msk [vmem:[#allocation3 + $0x40] sm:$0xff] %vm1249, %v2741
      %2761 = vst.msk [vmem:[#allocation3 + $0x48] sm:$0xff] %vm1249, %v2743
      %2762 = vst.msk [vmem:[#allocation3 + $0x50] sm:$0xff] %vm1249, %v2746
      %2763 = vst.msk [vmem:[#allocation3 + $0x58] sm:$0xff] %vm1249, %v2748
      %2764 = vst.msk [vmem:[#allocation3 + $0x60] sm:$0xff] %vm1249, %v2751
      %2765 = vst.msk [vmem:[#allocation3 + $0x68] sm:$0xff] %vm1249, %v2753
      %2766 = vst.msk [vmem:[#allocation3 + $0x70] sm:$0xff] %vm1249, %v2756
      %2767 = vst.msk [vmem:[#allocation3 + $0x78] sm:$0xff] %vm1249, %v2758
      %v2768 = vld [vmem:[#allocation2 + $0x60] sm:$0xf]
      %v2769 = vld [vmem:[#allocation2 + $0x6c] sm:$0xf]
      %v2770 = vld [vmem:[#allocation2 + $0x78] sm:$0xf]
      %v2771 = vld [vmem:[#allocation2 + $0x84] sm:$0xf]
      %v2772 = vld [vmem:[#allocation2 + $0x90] sm:$0xf]
      %v2773 = vld [vmem:[#allocation2 + $0x9c] sm:$0xf]
      %v2774 = vld [vmem:[#allocation2 + $0xa8] sm:$0xf]
      %v2775 = vld [vmem:[#allocation2 + $0xb4] sm:$0xf]
      %v2776 = vld [vmem:[#allocation2 + $0x64] sm:$0xf]
      %v2777 = vld [vmem:[#allocation2 + $0x70] sm:$0xf]
      %v2778 = vld [vmem:[#allocation2 + $0x7c] sm:$0xf]
      %v2779 = vld [vmem:[#allocation2 + $0x88] sm:$0xf]
      %v2780 = vld [vmem:[#allocation2 + $0x94] sm:$0xf]
      %v2781 = vld [vmem:[#allocation2 + $0xa0] sm:$0xf]
      %v2782 = vld [vmem:[#allocation2 + $0xac] sm:$0xf]
      %v2783 = vld [vmem:[#allocation2 + $0xb8] sm:$0xf]
      %v2784 = vld [vmem:[#allocation2 + $0x68] sm:$0xf]
      %v2785 = vld [vmem:[#allocation2 + $0x74] sm:$0xf]
      %v2786 = vld [vmem:[#allocation2 + $0x80] sm:$0xf]
      %v2787 = vld [vmem:[#allocation2 + $0x8c] sm:$0xf]
      %v2788 = vld [vmem:[#allocation2 + $0x98] sm:$0xf]
      %v2789 = vld [vmem:[#allocation2 + $0xa4] sm:$0xf]
      %v2790 = vld [vmem:[#allocation2 + $0xb0] sm:$0xf]
      %v2791 = vld [vmem:[#allocation2 + $0xbc] sm:$0xf]
      %v2800 = vunpack.c.l.b16 %v2768
      %v2801 = vunpack.c.l.b16 %v2769
      %v2802 = vunpack.c.l.b16 %v2770
      %v2803 = vunpack.c.l.b16 %v2771
      %v2804 = vunpack.c.l.b16 %v2772
      %v2805 = vunpack.c.l.b16 %v2773
      %v2806 = vunpack.c.l.b16 %v2774
      %v2807 = vunpack.c.l.b16 %v2775
      %v2808 = vpack.c.b16 %v2801, %v2800
      %v2809 = vpack.c.b16 %v2803, %v2802
      %v2810 = vpack.c.b16 %v2805, %v2804
      %v2811 = vpack.c.b16 %v2807, %v2806
      %2812 = vrot.lane.b32.xlu0 %v2808, 96
      %v2813 = vpop.permute.xlu0 %2812
      %2814 = vrot.lane.b32.xlu0 %v2809, 96
      %v2815 = vpop.permute.xlu0 %2814
      %2816 = vrot.lane.b32.xlu0 %v2810, 96
      %v2817 = vpop.permute.xlu0 %2816
      %2818 = vrot.lane.b32.xlu0 %v2811, 96
      %v2819 = vpop.permute.xlu0 %2818
      %v2828 = vunpack.c.l.b16 %v2776
      %v2829 = vunpack.c.l.b16 %v2777
      %v2830 = vunpack.c.l.b16 %v2778
      %v2831 = vunpack.c.l.b16 %v2779
      %v2832 = vunpack.c.l.b16 %v2780
      %v2833 = vunpack.c.l.b16 %v2781
      %v2834 = vunpack.c.l.b16 %v2782
      %v2835 = vunpack.c.l.b16 %v2783
      %v2836 = vpack.c.b16 %v2829, %v2828
      %v2837 = vpack.c.b16 %v2831, %v2830
      %v2838 = vpack.c.b16 %v2833, %v2832
      %v2839 = vpack.c.b16 %v2835, %v2834
      %2840 = vrot.lane.b32.xlu0 %v2836, 96
      %v2841 = vpop.permute.xlu0 %2840
      %2842 = vrot.lane.b32.xlu0 %v2837, 96
      %v2843 = vpop.permute.xlu0 %2842
      %2844 = vrot.lane.b32.xlu0 %v2838, 96
      %v2845 = vpop.permute.xlu0 %2844
      %2846 = vrot.lane.b32.xlu0 %v2839, 96
      %v2847 = vpop.permute.xlu0 %2846
      %v2849 = vsel %vm1249, %v2813, 0
      %v2852 = vsel %vm1249, %v2815, 0
      %v2855 = vsel %vm1249, %v2817, 0
      %v2858 = vsel %vm1249, %v2819, 0
      %v2861 = vsel %vm1249, %v2841, 0
      %v2864 = vsel %vm1249, %v2843, 0
      %v2867 = vsel %vm1249, %v2845, 0
      %v2870 = vsel %vm1249, %v2847, 0
      %2872 = vmatpush.bf16.xpose.msra.mxu0 0
      %2873 = vmatpush.bf16.xpose.msra.mxu0 0
      %2874 = vmatpush.bf16.xpose.msra.mxu0 0
      %2875 = vmatpush.bf16.xpose.msra.mxu0 0
      %2876 = vmatpush.bf16.xpose.msra.mxu0 %v2870
      %2877 = vmatpush.bf16.xpose.msra.mxu0 %v2867
      %2878 = vmatpush.bf16.xpose.msra.mxu0 %v2864
      %2879 = vmatpush.bf16.xpose.msra.mxu0 %v2861
      %2880 = vmatmul.bf16.gmra.mxu0 %v2849
      %v2881 = vpop.f32.mrf.mxu0
      %v2882 = vadd.f32 0.0, %v2881
      %v2883 = vpop.f32.mrf.mxu0
      %v2884 = vadd.f32 0.0, %v2883
      %2885 = vmatmul.bf16.gmra.mxu0 %v2852
      %v2886 = vpop.f32.mrf.mxu0
      %v2887 = vadd.f32 0.0, %v2886
      %v2888 = vpop.f32.mrf.mxu0
      %v2889 = vadd.f32 0.0, %v2888
      %2890 = vmatmul.bf16.gmra.mxu0 %v2855
      %v2891 = vpop.f32.mrf.mxu0
      %v2892 = vadd.f32 0.0, %v2891
      %v2893 = vpop.f32.mrf.mxu0
      %v2894 = vadd.f32 0.0, %v2893
      %2895 = vmatmul.bf16.gmra.mxu0 %v2858
      %v2896 = vpop.f32.mrf.mxu0
      %v2897 = vadd.f32 0.0, %v2896
      %v2898 = vpop.f32.mrf.mxu0
      %v2899 = vadd.f32 0.0, %v2898
      %2900 = vdwg.mxu0
      %v2901 = vsel %vm1303, %v2882, -inf
      %2902 = vmax.xlane.f32.xlu0 %v2901
      %v2903 = vpop.xlane.xlu0 %2902
      %v2904 = vsel %vm1303, %v2884, -inf
      %2905 = vmax.xlane.f32.xlu0 %v2904
      %v2906 = vpop.xlane.xlu0 %2905
      %v2907 = vsel %vm1303, %v2887, -inf
      %2908 = vmax.xlane.f32.xlu0 %v2907
      %v2909 = vpop.xlane.xlu0 %2908
      %v2910 = vsel %vm1303, %v2889, -inf
      %2911 = vmax.xlane.f32.xlu0 %v2910
      %v2912 = vpop.xlane.xlu0 %2911
      %v2913 = vsel %vm1303, %v2892, -inf
      %2914 = vmax.xlane.f32.xlu0 %v2913
      %v2915 = vpop.xlane.xlu0 %2914
      %v2916 = vsel %vm1303, %v2894, -inf
      %2917 = vmax.xlane.f32.xlu0 %v2916
      %v2918 = vpop.xlane.xlu0 %2917
      %v2919 = vsel %vm1303, %v2897, -inf
      %2920 = vmax.xlane.f32.xlu0 %v2919
      %v2921 = vpop.xlane.xlu0 %2920
      %v2922 = vsel %vm1303, %v2899, -inf
      %2923 = vmax.xlane.f32.xlu0 %v2922
      %v2924 = vpop.xlane.xlu0 %2923
      %v2925 = vsub.f32 %v2882, %v2903
      %v2926 = vsub.f32 %v2884, %v2906
      %v2927 = vsub.f32 %v2887, %v2909
      %v2928 = vsub.f32 %v2889, %v2912
      %v2929 = vsub.f32 %v2892, %v2915
      %v2930 = vsub.f32 %v2894, %v2918
      %v2931 = vsub.f32 %v2897, %v2921
      %v2932 = vsub.f32 %v2899, %v2924
      %v2933 = vmul.f32 %v2925, 1.442695
      %v2934 = vpow.pop %v2933
      %v2935 = vmul.f32 %v2926, 1.442695
      %v2936 = vpow.pop %v2935
      %v2937 = vmul.f32 %v2927, 1.442695
      %v2938 = vpow.pop %v2937
      %v2939 = vmul.f32 %v2928, 1.442695
      %v2940 = vpow.pop %v2939
      %v2941 = vmul.f32 %v2929, 1.442695
      %v2942 = vpow.pop %v2941
      %v2943 = vmul.f32 %v2930, 1.442695
      %v2944 = vpow.pop %v2943
      %v2945 = vmul.f32 %v2931, 1.442695
      %v2946 = vpow.pop %v2945
      %v2947 = vmul.f32 %v2932, 1.442695
      %v2948 = vpow.pop %v2947
      %v2949 = vsel %vm1303, %v2934, 0.0
      %2950 = vadd.xlane.f32.xlu0 %v2949
      %v2951 = vpop.xlane.xlu0 %2950
      %v2952 = vsel %vm1303, %v2936, 0.0
      %2953 = vadd.xlane.f32.xlu0 %v2952
      %v2954 = vpop.xlane.xlu0 %2953
      %v2955 = vsel %vm1303, %v2938, 0.0
      %2956 = vadd.xlane.f32.xlu0 %v2955
      %v2957 = vpop.xlane.xlu0 %2956
      %v2958 = vsel %vm1303, %v2940, 0.0
      %2959 = vadd.xlane.f32.xlu0 %v2958
      %v2960 = vpop.xlane.xlu0 %2959
      %v2961 = vsel %vm1303, %v2942, 0.0
      %2962 = vadd.xlane.f32.xlu0 %v2961
      %v2963 = vpop.xlane.xlu0 %2962
      %v2964 = vsel %vm1303, %v2944, 0.0
      %2965 = vadd.xlane.f32.xlu0 %v2964
      %v2966 = vpop.xlane.xlu0 %2965
      %v2967 = vsel %vm1303, %v2946, 0.0
      %2968 = vadd.xlane.f32.xlu0 %v2967
      %v2969 = vpop.xlane.xlu0 %2968
      %v2970 = vsel %vm1303, %v2948, 0.0
      %2971 = vadd.xlane.f32.xlu0 %v2970
      %v2972 = vpop.xlane.xlu0 %2971
      %v2973 = vrcp.pop %v2951
      %v2974 = vrcp.pop %v2954
      %v2975 = vrcp.pop %v2957
      %v2976 = vrcp.pop %v2960
      %v2977 = vrcp.pop %v2963
      %v2978 = vrcp.pop %v2966
      %v2979 = vrcp.pop %v2969
      %v2980 = vrcp.pop %v2972
      %v2981 = vmul.f32 %v2934, %v2973
      %v2982 = vmul.f32 %v2936, %v2974
      %v2983 = vmul.f32 %v2938, %v2975
      %v2984 = vmul.f32 %v2940, %v2976
      %v2985 = vmul.f32 %v2942, %v2977
      %v2986 = vmul.f32 %v2944, %v2978
      %v2987 = vmul.f32 %v2946, %v2979
      %v2988 = vmul.f32 %v2948, %v2980
      %v2989 = vpack.c.bf16 %v2982, %v2981
      %v2990 = vpack.c.bf16 %v2984, %v2983
      %v2991 = vpack.c.bf16 %v2986, %v2985
      %v2992 = vpack.c.bf16 %v2988, %v2987
      %v3001 = vunpack.c.l.b16 %v2784
      %v3002 = vunpack.c.l.b16 %v2785
      %v3003 = vunpack.c.l.b16 %v2786
      %v3004 = vunpack.c.l.b16 %v2787
      %v3005 = vunpack.c.l.b16 %v2788
      %v3006 = vunpack.c.l.b16 %v2789
      %v3007 = vunpack.c.l.b16 %v2790
      %v3008 = vunpack.c.l.b16 %v2791
      %v3009 = vpack.c.b16 %v3002, %v3001
      %v3010 = vpack.c.b16 %v3004, %v3003
      %v3011 = vpack.c.b16 %v3006, %v3005
      %v3012 = vpack.c.b16 %v3008, %v3007
      %3013 = vrot.lane.b32.xlu0 %v3009, 96
      %v3014 = vpop.permute.xlu0 %3013
      %3015 = vrot.lane.b32.xlu0 %v3010, 96
      %v3016 = vpop.permute.xlu0 %3015
      %3017 = vrot.lane.b32.xlu0 %v3011, 96
      %v3018 = vpop.permute.xlu0 %3017
      %3019 = vrot.lane.b32.xlu0 %v3012, 96
      %v3020 = vpop.permute.xlu0 %3019
      %v3026 = vsel %vm1303, %v2989, 0
      %v3029 = vsel %vm1303, %v2990, 0
      %v3032 = vsel %vm1303, %v2991, 0
      %v3035 = vsel %vm1303, %v2992, 0
      %3037 = vmatpush.bf16.msra.mxu0 0
      %3038 = vmatpush.bf16.msra.mxu0 0
      %3039 = vmatpush.bf16.msra.mxu0 0
      %3040 = vmatpush.bf16.msra.mxu0 0
      %3041 = vmatpush.bf16.msra.mxu0 %v3020
      %3042 = vmatpush.bf16.msra.mxu0 %v3018
      %3043 = vmatpush.bf16.msra.mxu0 %v3016
      %3044 = vmatpush.bf16.msra.mxu0 %v3014
      %3045 = vmatmul.bf16.gmra.mxu0 %v3026
      %v3046 = vpop.f32.mrf.mxu0
      %v3047 = vadd.f32 0.0, %v3046
      %v3048 = vpop.f32.mrf.mxu0
      %v3049 = vadd.f32 0.0, %v3048
      %3050 = vmatmul.bf16.gmra.mxu0 %v3029
      %v3051 = vpop.f32.mrf.mxu0
      %v3052 = vadd.f32 0.0, %v3051
      %v3053 = vpop.f32.mrf.mxu0
      %v3054 = vadd.f32 0.0, %v3053
      %3055 = vmatmul.bf16.gmra.mxu0 %v3032
      %v3056 = vpop.f32.mrf.mxu0
      %v3057 = vadd.f32 0.0, %v3056
      %v3058 = vpop.f32.mrf.mxu0
      %v3059 = vadd.f32 0.0, %v3058
      %3060 = vmatmul.bf16.gmra.mxu0 %v3035
      %v3061 = vpop.f32.mrf.mxu0
      %v3062 = vadd.f32 0.0, %v3061
      %v3063 = vpop.f32.mrf.mxu0
      %v3064 = vadd.f32 0.0, %v3063
      %3065 = vdwg.mxu0
      %3074 = vrot.lane.b32.xlu0 %v3047, 32
      %v3075 = vpop.permute.xlu0 %3074
      %3076 = vrot.lane.b32.xlu0 %v3049, 32
      %v3077 = vpop.permute.xlu0 %3076
      %3078 = vrot.lane.b32.xlu0 %v3052, 32
      %v3079 = vpop.permute.xlu0 %3078
      %3080 = vrot.lane.b32.xlu0 %v3054, 32
      %v3081 = vpop.permute.xlu0 %3080
      %3082 = vrot.lane.b32.xlu0 %v3057, 32
      %v3083 = vpop.permute.xlu0 %3082
      %3084 = vrot.lane.b32.xlu0 %v3059, 32
      %v3085 = vpop.permute.xlu0 %3084
      %3086 = vrot.lane.b32.xlu0 %v3062, 32
      %v3087 = vpop.permute.xlu0 %3086
      %3088 = vrot.lane.b32.xlu0 %v3064, 32
      %v3089 = vpop.permute.xlu0 %3088
      %3098 = vst.msk [vmem:[#allocation3 + $0x40] sm:$0xff] %vm1799, %v3075
      %3099 = vst.msk [vmem:[#allocation3 + $0x48] sm:$0xff] %vm1799, %v3077
      %3100 = vst.msk [vmem:[#allocation3 + $0x50] sm:$0xff] %vm1799, %v3079
      %3101 = vst.msk [vmem:[#allocation3 + $0x58] sm:$0xff] %vm1799, %v3081
      %3102 = vst.msk [vmem:[#allocation3 + $0x60] sm:$0xff] %vm1799, %v3083
      %3103 = vst.msk [vmem:[#allocation3 + $0x68] sm:$0xff] %vm1799, %v3085
      %3104 = vst.msk [vmem:[#allocation3 + $0x70] sm:$0xff] %vm1799, %v3087
      %3105 = vst.msk [vmem:[#allocation3 + $0x78] sm:$0xff] %vm1799, %v3089
      %v3106 = vld [vmem:[#allocation2 + $0x60] sm:$0xf]
      %v3107 = vld [vmem:[#allocation2 + $0x6c] sm:$0xf]
      %v3108 = vld [vmem:[#allocation2 + $0x78] sm:$0xf]
      %v3109 = vld [vmem:[#allocation2 + $0x84] sm:$0xf]
      %v3110 = vld [vmem:[#allocation2 + $0x90] sm:$0xf]
      %v3111 = vld [vmem:[#allocation2 + $0x9c] sm:$0xf]
      %v3112 = vld [vmem:[#allocation2 + $0xa8] sm:$0xf]
      %v3113 = vld [vmem:[#allocation2 + $0xb4] sm:$0xf]
      %v3114 = vld [vmem:[#allocation2 + $0x64] sm:$0xf]
      %v3115 = vld [vmem:[#allocation2 + $0x70] sm:$0xf]
      %v3116 = vld [vmem:[#allocation2 + $0x7c] sm:$0xf]
      %v3117 = vld [vmem:[#allocation2 + $0x88] sm:$0xf]
      %v3118 = vld [vmem:[#allocation2 + $0x94] sm:$0xf]
      %v3119 = vld [vmem:[#allocation2 + $0xa0] sm:$0xf]
      %v3120 = vld [vmem:[#allocation2 + $0xac] sm:$0xf]
      %v3121 = vld [vmem:[#allocation2 + $0xb8] sm:$0xf]
      %v3122 = vld [vmem:[#allocation2 + $0x68] sm:$0xf]
      %v3123 = vld [vmem:[#allocation2 + $0x74] sm:$0xf]
      %v3124 = vld [vmem:[#allocation2 + $0x80] sm:$0xf]
      %v3125 = vld [vmem:[#allocation2 + $0x8c] sm:$0xf]
      %v3126 = vld [vmem:[#allocation2 + $0x98] sm:$0xf]
      %v3127 = vld [vmem:[#allocation2 + $0xa4] sm:$0xf]
      %v3128 = vld [vmem:[#allocation2 + $0xb0] sm:$0xf]
      %v3129 = vld [vmem:[#allocation2 + $0xbc] sm:$0xf]
      %v3138 = vunpack.c.l.b16 %v3106
      %v3139 = vunpack.c.l.b16 %v3107
      %v3140 = vunpack.c.l.b16 %v3108
      %v3141 = vunpack.c.l.b16 %v3109
      %v3142 = vunpack.c.l.b16 %v3110
      %v3143 = vunpack.c.l.b16 %v3111
      %v3144 = vunpack.c.l.b16 %v3112
      %v3145 = vunpack.c.l.b16 %v3113
      %v3146 = vpack.c.b16 %v3139, %v3138
      %v3147 = vpack.c.b16 %v3141, %v3140
      %v3148 = vpack.c.b16 %v3143, %v3142
      %v3149 = vpack.c.b16 %v3145, %v3144
      %3150 = vrot.lane.b32.xlu0 %v3146, 64
      %v3151 = vpop.permute.xlu0 %3150
      %3152 = vrot.lane.b32.xlu0 %v3147, 64
      %v3153 = vpop.permute.xlu0 %3152
      %3154 = vrot.lane.b32.xlu0 %v3148, 64
      %v3155 = vpop.permute.xlu0 %3154
      %3156 = vrot.lane.b32.xlu0 %v3149, 64
      %v3157 = vpop.permute.xlu0 %3156
      %v3166 = vunpack.c.l.b16 %v3114
      %v3167 = vunpack.c.l.b16 %v3115
      %v3168 = vunpack.c.l.b16 %v3116
      %v3169 = vunpack.c.l.b16 %v3117
      %v3170 = vunpack.c.l.b16 %v3118
      %v3171 = vunpack.c.l.b16 %v3119
      %v3172 = vunpack.c.l.b16 %v3120
      %v3173 = vunpack.c.l.b16 %v3121
      %v3174 = vpack.c.b16 %v3167, %v3166
      %v3175 = vpack.c.b16 %v3169, %v3168
      %v3176 = vpack.c.b16 %v3171, %v3170
      %v3177 = vpack.c.b16 %v3173, %v3172
      %3178 = vrot.lane.b32.xlu0 %v3174, 64
      %v3179 = vpop.permute.xlu0 %3178
      %3180 = vrot.lane.b32.xlu0 %v3175, 64
      %v3181 = vpop.permute.xlu0 %3180
      %3182 = vrot.lane.b32.xlu0 %v3176, 64
      %v3183 = vpop.permute.xlu0 %3182
      %3184 = vrot.lane.b32.xlu0 %v3177, 64
      %v3185 = vpop.permute.xlu0 %3184
      %v3187 = vsel %vm1249, %v3151, 0
      %v3190 = vsel %vm1249, %v3153, 0
      %v3193 = vsel %vm1249, %v3155, 0
      %v3196 = vsel %vm1249, %v3157, 0
      %v3199 = vsel %vm1249, %v3179, 0
      %v3202 = vsel %vm1249, %v3181, 0
      %v3205 = vsel %vm1249, %v3183, 0
      %v3208 = vsel %vm1249, %v3185, 0
      %3210 = vmatpush.bf16.xpose.msra.mxu0 0
      %3211 = vmatpush.bf16.xpose.msra.mxu0 0
      %3212 = vmatpush.bf16.xpose.msra.mxu0 0
      %3213 = vmatpush.bf16.xpose.msra.mxu0 0
      %3214 = vmatpush.bf16.xpose.msra.mxu0 %v3208
      %3215 = vmatpush.bf16.xpose.msra.mxu0 %v3205
      %3216 = vmatpush.bf16.xpose.msra.mxu0 %v3202
      %3217 = vmatpush.bf16.xpose.msra.mxu0 %v3199
      %3218 = vmatmul.bf16.gmra.mxu0 %v3187
      %v3219 = vpop.f32.mrf.mxu0
      %v3220 = vadd.f32 0.0, %v3219
      %v3221 = vpop.f32.mrf.mxu0
      %v3222 = vadd.f32 0.0, %v3221
      %3223 = vmatmul.bf16.gmra.mxu0 %v3190
      %v3224 = vpop.f32.mrf.mxu0
      %v3225 = vadd.f32 0.0, %v3224
      %v3226 = vpop.f32.mrf.mxu0
      %v3227 = vadd.f32 0.0, %v3226
      %3228 = vmatmul.bf16.gmra.mxu0 %v3193
      %v3229 = vpop.f32.mrf.mxu0
      %v3230 = vadd.f32 0.0, %v3229
      %v3231 = vpop.f32.mrf.mxu0
      %v3232 = vadd.f32 0.0, %v3231
      %3233 = vmatmul.bf16.gmra.mxu0 %v3196
      %v3234 = vpop.f32.mrf.mxu0
      %v3235 = vadd.f32 0.0, %v3234
      %v3236 = vpop.f32.mrf.mxu0
      %v3237 = vadd.f32 0.0, %v3236
      %3238 = vdwg.mxu0
      %v3239 = vsel %vm1303, %v3220, -inf
      %3240 = vmax.xlane.f32.xlu0 %v3239
      %v3241 = vpop.xlane.xlu0 %3240
      %v3242 = vsel %vm1303, %v3222, -inf
      %3243 = vmax.xlane.f32.xlu0 %v3242
      %v3244 = vpop.xlane.xlu0 %3243
      %v3245 = vsel %vm1303, %v3225, -inf
      %3246 = vmax.xlane.f32.xlu0 %v3245
      %v3247 = vpop.xlane.xlu0 %3246
      %v3248 = vsel %vm1303, %v3227, -inf
      %3249 = vmax.xlane.f32.xlu0 %v3248
      %v3250 = vpop.xlane.xlu0 %3249
      %v3251 = vsel %vm1303, %v3230, -inf
      %3252 = vmax.xlane.f32.xlu0 %v3251
      %v3253 = vpop.xlane.xlu0 %3252
      %v3254 = vsel %vm1303, %v3232, -inf
      %3255 = vmax.xlane.f32.xlu0 %v3254
      %v3256 = vpop.xlane.xlu0 %3255
      %v3257 = vsel %vm1303, %v3235, -inf
      %3258 = vmax.xlane.f32.xlu0 %v3257
      %v3259 = vpop.xlane.xlu0 %3258
      %v3260 = vsel %vm1303, %v3237, -inf
      %3261 = vmax.xlane.f32.xlu0 %v3260
      %v3262 = vpop.xlane.xlu0 %3261
      %v3263 = vsub.f32 %v3220, %v3241
      %v3264 = vsub.f32 %v3222, %v3244
      %v3265 = vsub.f32 %v3225, %v3247
      %v3266 = vsub.f32 %v3227, %v3250
      %v3267 = vsub.f32 %v3230, %v3253
      %v3268 = vsub.f32 %v3232, %v3256
      %v3269 = vsub.f32 %v3235, %v3259
      %v3270 = vsub.f32 %v3237, %v3262
      %v3271 = vmul.f32 %v3263, 1.442695
      %v3272 = vpow.pop %v3271
      %v3273 = vmul.f32 %v3264, 1.442695
      %v3274 = vpow.pop %v3273
      %v3275 = vmul.f32 %v3265, 1.442695
      %v3276 = vpow.pop %v3275
      %v3277 = vmul.f32 %v3266, 1.442695
      %v3278 = vpow.pop %v3277
      %v3279 = vmul.f32 %v3267, 1.442695
      %v3280 = vpow.pop %v3279
      %v3281 = vmul.f32 %v3268, 1.442695
      %v3282 = vpow.pop %v3281
      %v3283 = vmul.f32 %v3269, 1.442695
      %v3284 = vpow.pop %v3283
      %v3285 = vmul.f32 %v3270, 1.442695
      %v3286 = vpow.pop %v3285
      %v3287 = vsel %vm1303, %v3272, 0.0
      %3288 = vadd.xlane.f32.xlu0 %v3287
      %v3289 = vpop.xlane.xlu0 %3288
      %v3290 = vsel %vm1303, %v3274, 0.0
      %3291 = vadd.xlane.f32.xlu0 %v3290
      %v3292 = vpop.xlane.xlu0 %3291
      %v3293 = vsel %vm1303, %v3276, 0.0
      %3294 = vadd.xlane.f32.xlu0 %v3293
      %v3295 = vpop.xlane.xlu0 %3294
      %v3296 = vsel %vm1303, %v3278, 0.0
      %3297 = vadd.xlane.f32.xlu0 %v3296
      %v3298 = vpop.xlane.xlu0 %3297
      %v3299 = vsel %vm1303, %v3280, 0.0
      %3300 = vadd.xlane.f32.xlu0 %v3299
      %v3301 = vpop.xlane.xlu0 %3300
      %v3302 = vsel %vm1303, %v3282, 0.0
      %3303 = vadd.xlane.f32.xlu0 %v3302
      %v3304 = vpop.xlane.xlu0 %3303
      %v3305 = vsel %vm1303, %v3284, 0.0
      %3306 = vadd.xlane.f32.xlu0 %v3305
      %v3307 = vpop.xlane.xlu0 %3306
      %v3308 = vsel %vm1303, %v3286, 0.0
      %3309 = vadd.xlane.f32.xlu0 %v3308
      %v3310 = vpop.xlane.xlu0 %3309
      %v3311 = vrcp.pop %v3289
      %v3312 = vrcp.pop %v3292
      %v3313 = vrcp.pop %v3295
      %v3314 = vrcp.pop %v3298
      %v3315 = vrcp.pop %v3301
      %v3316 = vrcp.pop %v3304
      %v3317 = vrcp.pop %v3307
      %v3318 = vrcp.pop %v3310
      %v3319 = vmul.f32 %v3272, %v3311
      %v3320 = vmul.f32 %v3274, %v3312
      %v3321 = vmul.f32 %v3276, %v3313
      %v3322 = vmul.f32 %v3278, %v3314
      %v3323 = vmul.f32 %v3280, %v3315
      %v3324 = vmul.f32 %v3282, %v3316
      %v3325 = vmul.f32 %v3284, %v3317
      %v3326 = vmul.f32 %v3286, %v3318
      %v3327 = vpack.c.bf16 %v3320, %v3319
      %v3328 = vpack.c.bf16 %v3322, %v3321
      %v3329 = vpack.c.bf16 %v3324, %v3323
      %v3330 = vpack.c.bf16 %v3326, %v3325
      %v3339 = vunpack.c.l.b16 %v3122
      %v3340 = vunpack.c.l.b16 %v3123
      %v3341 = vunpack.c.l.b16 %v3124
      %v3342 = vunpack.c.l.b16 %v3125
      %v3343 = vunpack.c.l.b16 %v3126
      %v3344 = vunpack.c.l.b16 %v3127
      %v3345 = vunpack.c.l.b16 %v3128
      %v3346 = vunpack.c.l.b16 %v3129
      %v3347 = vpack.c.b16 %v3340, %v3339
      %v3348 = vpack.c.b16 %v3342, %v3341
      %v3349 = vpack.c.b16 %v3344, %v3343
      %v3350 = vpack.c.b16 %v3346, %v3345
      %3351 = vrot.lane.b32.xlu0 %v3347, 64
      %v3352 = vpop.permute.xlu0 %3351
      %3353 = vrot.lane.b32.xlu0 %v3348, 64
      %v3354 = vpop.permute.xlu0 %3353
      %3355 = vrot.lane.b32.xlu0 %v3349, 64
      %v3356 = vpop.permute.xlu0 %3355
      %3357 = vrot.lane.b32.xlu0 %v3350, 64
      %v3358 = vpop.permute.xlu0 %3357
      %v3364 = vsel %vm1303, %v3327, 0
      %v3367 = vsel %vm1303, %v3328, 0
      %v3370 = vsel %vm1303, %v3329, 0
      %v3373 = vsel %vm1303, %v3330, 0
      %3375 = vmatpush.bf16.msra.mxu0 0
      %3376 = vmatpush.bf16.msra.mxu0 0
      %3377 = vmatpush.bf16.msra.mxu0 0
      %3378 = vmatpush.bf16.msra.mxu0 0
      %3379 = vmatpush.bf16.msra.mxu0 %v3358
      %3380 = vmatpush.bf16.msra.mxu0 %v3356
      %3381 = vmatpush.bf16.msra.mxu0 %v3354
      %3382 = vmatpush.bf16.msra.mxu0 %v3352
      %3383 = vmatmul.bf16.gmra.mxu0 %v3364
      %v3384 = vpop.f32.mrf.mxu0
      %v3385 = vadd.f32 0.0, %v3384
      %v3386 = vpop.f32.mrf.mxu0
      %v3387 = vadd.f32 0.0, %v3386
      %3388 = vmatmul.bf16.gmra.mxu0 %v3367
      %v3389 = vpop.f32.mrf.mxu0
      %v3390 = vadd.f32 0.0, %v3389
      %v3391 = vpop.f32.mrf.mxu0
      %v3392 = vadd.f32 0.0, %v3391
      %3393 = vmatmul.bf16.gmra.mxu0 %v3370
      %v3394 = vpop.f32.mrf.mxu0
      %v3395 = vadd.f32 0.0, %v3394
      %v3396 = vpop.f32.mrf.mxu0
      %v3397 = vadd.f32 0.0, %v3396
      %3398 = vmatmul.bf16.gmra.mxu0 %v3373
      %v3399 = vpop.f32.mrf.mxu0
      %v3400 = vadd.f32 0.0, %v3399
      %v3401 = vpop.f32.mrf.mxu0
      %v3402 = vadd.f32 0.0, %v3401
      %3403 = vdwg.mxu0
      %3412 = vrot.lane.b32.xlu0 %v3385, 64
      %v3413 = vpop.permute.xlu0 %3412
      %3414 = vrot.lane.b32.xlu0 %v3387, 64
      %v3415 = vpop.permute.xlu0 %3414
      %3416 = vrot.lane.b32.xlu0 %v3390, 64
      %v3417 = vpop.permute.xlu0 %3416
      %3418 = vrot.lane.b32.xlu0 %v3392, 64
      %v3419 = vpop.permute.xlu0 %3418
      %3420 = vrot.lane.b32.xlu0 %v3395, 64
      %v3421 = vpop.permute.xlu0 %3420
      %3422 = vrot.lane.b32.xlu0 %v3397, 64
      %v3423 = vpop.permute.xlu0 %3422
      %3424 = vrot.lane.b32.xlu0 %v3400, 64
      %v3425 = vpop.permute.xlu0 %3424
      %3426 = vrot.lane.b32.xlu0 %v3402, 64
      %v3427 = vpop.permute.xlu0 %3426
      %3436 = vst.msk [vmem:[#allocation3 + $0x40] sm:$0xff] %vm2138, %v3413
      %3437 = vst.msk [vmem:[#allocation3 + $0x48] sm:$0xff] %vm2138, %v3415
      %3438 = vst.msk [vmem:[#allocation3 + $0x50] sm:$0xff] %vm2138, %v3417
      %3439 = vst.msk [vmem:[#allocation3 + $0x58] sm:$0xff] %vm2138, %v3419
      %3440 = vst.msk [vmem:[#allocation3 + $0x60] sm:$0xff] %vm2138, %v3421
      %3441 = vst.msk [vmem:[#allocation3 + $0x68] sm:$0xff] %vm2138, %v3423
      %3442 = vst.msk [vmem:[#allocation3 + $0x70] sm:$0xff] %vm2138, %v3425
      %3443 = vst.msk [vmem:[#allocation3 + $0x78] sm:$0xff] %vm2138, %v3427
      %v3444 = vld [vmem:[#allocation2 + $0x60] sm:$0xf]
      %v3445 = vld [vmem:[#allocation2 + $0x6c] sm:$0xf]
      %v3446 = vld [vmem:[#allocation2 + $0x78] sm:$0xf]
      %v3447 = vld [vmem:[#allocation2 + $0x84] sm:$0xf]
      %v3448 = vld [vmem:[#allocation2 + $0x90] sm:$0xf]
      %v3449 = vld [vmem:[#allocation2 + $0x9c] sm:$0xf]
      %v3450 = vld [vmem:[#allocation2 + $0xa8] sm:$0xf]
      %v3451 = vld [vmem:[#allocation2 + $0xb4] sm:$0xf]
      %v3452 = vld [vmem:[#allocation2 + $0x64] sm:$0xf]
      %v3453 = vld [vmem:[#allocation2 + $0x70] sm:$0xf]
      %v3454 = vld [vmem:[#allocation2 + $0x7c] sm:$0xf]
      %v3455 = vld [vmem:[#allocation2 + $0x88] sm:$0xf]
      %v3456 = vld [vmem:[#allocation2 + $0x94] sm:$0xf]
      %v3457 = vld [vmem:[#allocation2 + $0xa0] sm:$0xf]
      %v3458 = vld [vmem:[#allocation2 + $0xac] sm:$0xf]
      %v3459 = vld [vmem:[#allocation2 + $0xb8] sm:$0xf]
      %v3460 = vld [vmem:[#allocation2 + $0x68] sm:$0xf]
      %v3461 = vld [vmem:[#allocation2 + $0x74] sm:$0xf]
      %v3462 = vld [vmem:[#allocation2 + $0x80] sm:$0xf]
      %v3463 = vld [vmem:[#allocation2 + $0x8c] sm:$0xf]
      %v3464 = vld [vmem:[#allocation2 + $0x98] sm:$0xf]
      %v3465 = vld [vmem:[#allocation2 + $0xa4] sm:$0xf]
      %v3466 = vld [vmem:[#allocation2 + $0xb0] sm:$0xf]
      %v3467 = vld [vmem:[#allocation2 + $0xbc] sm:$0xf]
      %v3476 = vunpack.c.l.b16 %v3444
      %v3477 = vunpack.c.l.b16 %v3445
      %v3478 = vunpack.c.l.b16 %v3446
      %v3479 = vunpack.c.l.b16 %v3447
      %v3480 = vunpack.c.l.b16 %v3448
      %v3481 = vunpack.c.l.b16 %v3449
      %v3482 = vunpack.c.l.b16 %v3450
      %v3483 = vunpack.c.l.b16 %v3451
      %v3484 = vpack.c.b16 %v3477, %v3476
      %v3485 = vpack.c.b16 %v3479, %v3478
      %v3486 = vpack.c.b16 %v3481, %v3480
      %v3487 = vpack.c.b16 %v3483, %v3482
      %3488 = vrot.lane.b32.xlu0 %v3484, 32
      %v3489 = vpop.permute.xlu0 %3488
      %3490 = vrot.lane.b32.xlu0 %v3485, 32
      %v3491 = vpop.permute.xlu0 %3490
      %3492 = vrot.lane.b32.xlu0 %v3486, 32
      %v3493 = vpop.permute.xlu0 %3492
      %3494 = vrot.lane.b32.xlu0 %v3487, 32
      %v3495 = vpop.permute.xlu0 %3494
      %v3504 = vunpack.c.l.b16 %v3452
      %v3505 = vunpack.c.l.b16 %v3453
      %v3506 = vunpack.c.l.b16 %v3454
      %v3507 = vunpack.c.l.b16 %v3455
      %v3508 = vunpack.c.l.b16 %v3456
      %v3509 = vunpack.c.l.b16 %v3457
      %v3510 = vunpack.c.l.b16 %v3458
      %v3511 = vunpack.c.l.b16 %v3459
      %v3512 = vpack.c.b16 %v3505, %v3504
      %v3513 = vpack.c.b16 %v3507, %v3506
      %v3514 = vpack.c.b16 %v3509, %v3508
      %v3515 = vpack.c.b16 %v3511, %v3510
      %3516 = vrot.lane.b32.xlu0 %v3512, 32
      %v3517 = vpop.permute.xlu0 %3516
      %3518 = vrot.lane.b32.xlu0 %v3513, 32
      %v3519 = vpop.permute.xlu0 %3518
      %3520 = vrot.lane.b32.xlu0 %v3514, 32
      %v3521 = vpop.permute.xlu0 %3520
      %3522 = vrot.lane.b32.xlu0 %v3515, 32
      %v3523 = vpop.permute.xlu0 %3522
      %v3525 = vsel %vm1249, %v3489, 0
      %v3528 = vsel %vm1249, %v3491, 0
      %v3531 = vsel %vm1249, %v3493, 0
      %v3534 = vsel %vm1249, %v3495, 0
      %v3537 = vsel %vm1249, %v3517, 0
      %v3540 = vsel %vm1249, %v3519, 0
      %v3543 = vsel %vm1249, %v3521, 0
      %v3546 = vsel %vm1249, %v3523, 0
      %3548 = vmatpush.bf16.xpose.msra.mxu0 0
      %3549 = vmatpush.bf16.xpose.msra.mxu0 0
      %3550 = vmatpush.bf16.xpose.msra.mxu0 0
      %3551 = vmatpush.bf16.xpose.msra.mxu0 0
      %3552 = vmatpush.bf16.xpose.msra.mxu0 %v3546
      %3553 = vmatpush.bf16.xpose.msra.mxu0 %v3543
      %3554 = vmatpush.bf16.xpose.msra.mxu0 %v3540
      %3555 = vmatpush.bf16.xpose.msra.mxu0 %v3537
      %3556 = vmatmul.bf16.gmra.mxu0 %v3525
      %v3557 = vpop.f32.mrf.mxu0
      %v3558 = vadd.f32 0.0, %v3557
      %v3559 = vpop.f32.mrf.mxu0
      %v3560 = vadd.f32 0.0, %v3559
      %3561 = vmatmul.bf16.gmra.mxu0 %v3528
      %v3562 = vpop.f32.mrf.mxu0
      %v3563 = vadd.f32 0.0, %v3562
      %v3564 = vpop.f32.mrf.mxu0
      %v3565 = vadd.f32 0.0, %v3564
      %3566 = vmatmul.bf16.gmra.mxu0 %v3531
      %v3567 = vpop.f32.mrf.mxu0
      %v3568 = vadd.f32 0.0, %v3567
      %v3569 = vpop.f32.mrf.mxu0
      %v3570 = vadd.f32 0.0, %v3569
      %3571 = vmatmul.bf16.gmra.mxu0 %v3534
      %v3572 = vpop.f32.mrf.mxu0
      %v3573 = vadd.f32 0.0, %v3572
      %v3574 = vpop.f32.mrf.mxu0
      %v3575 = vadd.f32 0.0, %v3574
      %3576 = vdwg.mxu0
      %v3577 = vsel %vm1303, %v3558, -inf
      %3578 = vmax.xlane.f32.xlu0 %v3577
      %v3579 = vpop.xlane.xlu0 %3578
      %v3580 = vsel %vm1303, %v3560, -inf
      %3581 = vmax.xlane.f32.xlu0 %v3580
      %v3582 = vpop.xlane.xlu0 %3581
      %v3583 = vsel %vm1303, %v3563, -inf
      %3584 = vmax.xlane.f32.xlu0 %v3583
      %v3585 = vpop.xlane.xlu0 %3584
      %v3586 = vsel %vm1303, %v3565, -inf
      %3587 = vmax.xlane.f32.xlu0 %v3586
      %v3588 = vpop.xlane.xlu0 %3587
      %v3589 = vsel %vm1303, %v3568, -inf
      %3590 = vmax.xlane.f32.xlu0 %v3589
      %v3591 = vpop.xlane.xlu0 %3590
      %v3592 = vsel %vm1303, %v3570, -inf
      %3593 = vmax.xlane.f32.xlu0 %v3592
      %v3594 = vpop.xlane.xlu0 %3593
      %v3595 = vsel %vm1303, %v3573, -inf
      %3596 = vmax.xlane.f32.xlu0 %v3595
      %v3597 = vpop.xlane.xlu0 %3596
      %v3598 = vsel %vm1303, %v3575, -inf
      %3599 = vmax.xlane.f32.xlu0 %v3598
      %v3600 = vpop.xlane.xlu0 %3599
      %v3601 = vsub.f32 %v3558, %v3579
      %v3602 = vsub.f32 %v3560, %v3582
      %v3603 = vsub.f32 %v3563, %v3585
      %v3604 = vsub.f32 %v3565, %v3588
      %v3605 = vsub.f32 %v3568, %v3591
      %v3606 = vsub.f32 %v3570, %v3594
      %v3607 = vsub.f32 %v3573, %v3597
      %v3608 = vsub.f32 %v3575, %v3600
      %v3609 = vmul.f32 %v3601, 1.442695
      %v3610 = vpow.pop %v3609
      %v3611 = vmul.f32 %v3602, 1.442695
      %v3612 = vpow.pop %v3611
      %v3613 = vmul.f32 %v3603, 1.442695
      %v3614 = vpow.pop %v3613
      %v3615 = vmul.f32 %v3604, 1.442695
      %v3616 = vpow.pop %v3615
      %v3617 = vmul.f32 %v3605, 1.442695
      %v3618 = vpow.pop %v3617
      %v3619 = vmul.f32 %v3606, 1.442695
      %v3620 = vpow.pop %v3619
      %v3621 = vmul.f32 %v3607, 1.442695
      %v3622 = vpow.pop %v3621
      %v3623 = vmul.f32 %v3608, 1.442695
      %v3624 = vpow.pop %v3623
      %v3625 = vsel %vm1303, %v3610, 0.0
      %3626 = vadd.xlane.f32.xlu0 %v3625
      %v3627 = vpop.xlane.xlu0 %3626
      %v3628 = vsel %vm1303, %v3612, 0.0
      %3629 = vadd.xlane.f32.xlu0 %v3628
      %v3630 = vpop.xlane.xlu0 %3629
      %v3631 = vsel %vm1303, %v3614, 0.0
      %3632 = vadd.xlane.f32.xlu0 %v3631
      %v3633 = vpop.xlane.xlu0 %3632
      %v3634 = vsel %vm1303, %v3616, 0.0
      %3635 = vadd.xlane.f32.xlu0 %v3634
      %v3636 = vpop.xlane.xlu0 %3635
      %v3637 = vsel %vm1303, %v3618, 0.0
      %3638 = vadd.xlane.f32.xlu0 %v3637
      %v3639 = vpop.xlane.xlu0 %3638
      %v3640 = vsel %vm1303, %v3620, 0.0
      %3641 = vadd.xlane.f32.xlu0 %v3640
      %v3642 = vpop.xlane.xlu0 %3641
      %v3643 = vsel %vm1303, %v3622, 0.0
      %3644 = vadd.xlane.f32.xlu0 %v3643
      %v3645 = vpop.xlane.xlu0 %3644
      %v3646 = vsel %vm1303, %v3624, 0.0
      %3647 = vadd.xlane.f32.xlu0 %v3646
      %v3648 = vpop.xlane.xlu0 %3647
      %v3649 = vrcp.pop %v3627
      %v3650 = vrcp.pop %v3630
      %v3651 = vrcp.pop %v3633
      %v3652 = vrcp.pop %v3636
      %v3653 = vrcp.pop %v3639
      %v3654 = vrcp.pop %v3642
      %v3655 = vrcp.pop %v3645
      %v3656 = vrcp.pop %v3648
      %v3657 = vmul.f32 %v3610, %v3649
      %v3658 = vmul.f32 %v3612, %v3650
      %v3659 = vmul.f32 %v3614, %v3651
      %v3660 = vmul.f32 %v3616, %v3652
      %v3661 = vmul.f32 %v3618, %v3653
      %v3662 = vmul.f32 %v3620, %v3654
      %v3663 = vmul.f32 %v3622, %v3655
      %v3664 = vmul.f32 %v3624, %v3656
      %v3665 = vpack.c.bf16 %v3658, %v3657
      %v3666 = vpack.c.bf16 %v3660, %v3659
      %v3667 = vpack.c.bf16 %v3662, %v3661
      %v3668 = vpack.c.bf16 %v3664, %v3663
      %v3677 = vunpack.c.l.b16 %v3460
      %v3678 = vunpack.c.l.b16 %v3461
      %v3679 = vunpack.c.l.b16 %v3462
      %v3680 = vunpack.c.l.b16 %v3463
      %v3681 = vunpack.c.l.b16 %v3464
      %v3682 = vunpack.c.l.b16 %v3465
      %v3683 = vunpack.c.l.b16 %v3466
      %v3684 = vunpack.c.l.b16 %v3467
      %v3685 = vpack.c.b16 %v3678, %v3677
      %v3686 = vpack.c.b16 %v3680, %v3679
      %v3687 = vpack.c.b16 %v3682, %v3681
      %v3688 = vpack.c.b16 %v3684, %v3683
      %3689 = vrot.lane.b32.xlu0 %v3685, 32
      %v3690 = vpop.permute.xlu0 %3689
      %3691 = vrot.lane.b32.xlu0 %v3686, 32
      %v3692 = vpop.permute.xlu0 %3691
      %3693 = vrot.lane.b32.xlu0 %v3687, 32
      %v3694 = vpop.permute.xlu0 %3693
      %3695 = vrot.lane.b32.xlu0 %v3688, 32
      %v3696 = vpop.permute.xlu0 %3695
      %v3702 = vsel %vm1303, %v3665, 0
      %v3705 = vsel %vm1303, %v3666, 0
      %v3708 = vsel %vm1303, %v3667, 0
      %v3711 = vsel %vm1303, %v3668, 0
      %3713 = vmatpush.bf16.msra.mxu0 0
      %3714 = vmatpush.bf16.msra.mxu0 0
      %3715 = vmatpush.bf16.msra.mxu0 0
      %3716 = vmatpush.bf16.msra.mxu0 0
      %3717 = vmatpush.bf16.msra.mxu0 %v3696
      %3718 = vmatpush.bf16.msra.mxu0 %v3694
      %3719 = vmatpush.bf16.msra.mxu0 %v3692
      %3720 = vmatpush.bf16.msra.mxu0 %v3690
      %3721 = vmatmul.bf16.gmra.mxu0 %v3702
      %v3722 = vpop.f32.mrf.mxu0
      %v3723 = vadd.f32 0.0, %v3722
      %v3724 = vpop.f32.mrf.mxu0
      %v3725 = vadd.f32 0.0, %v3724
      %3726 = vmatmul.bf16.gmra.mxu0 %v3705
      %v3727 = vpop.f32.mrf.mxu0
      %v3728 = vadd.f32 0.0, %v3727
      %v3729 = vpop.f32.mrf.mxu0
      %v3730 = vadd.f32 0.0, %v3729
      %3731 = vmatmul.bf16.gmra.mxu0 %v3708
      %v3732 = vpop.f32.mrf.mxu0
      %v3733 = vadd.f32 0.0, %v3732
      %v3734 = vpop.f32.mrf.mxu0
      %v3735 = vadd.f32 0.0, %v3734
      %3736 = vmatmul.bf16.gmra.mxu0 %v3711
      %v3737 = vpop.f32.mrf.mxu0
      %v3738 = vadd.f32 0.0, %v3737
      %v3739 = vpop.f32.mrf.mxu0
      %v3740 = vadd.f32 0.0, %v3739
      %3741 = vdwg.mxu0
      %3750 = vrot.lane.b32.xlu0 %v3723, 96
      %v3751 = vpop.permute.xlu0 %3750
      %3752 = vrot.lane.b32.xlu0 %v3725, 96
      %v3753 = vpop.permute.xlu0 %3752
      %3754 = vrot.lane.b32.xlu0 %v3728, 96
      %v3755 = vpop.permute.xlu0 %3754
      %3756 = vrot.lane.b32.xlu0 %v3730, 96
      %v3757 = vpop.permute.xlu0 %3756
      %3758 = vrot.lane.b32.xlu0 %v3733, 96
      %v3759 = vpop.permute.xlu0 %3758
      %3760 = vrot.lane.b32.xlu0 %v3735, 96
      %v3761 = vpop.permute.xlu0 %3760
      %3762 = vrot.lane.b32.xlu0 %v3738, 96
      %v3763 = vpop.permute.xlu0 %3762
      %3764 = vrot.lane.b32.xlu0 %v3740, 96
      %v3765 = vpop.permute.xlu0 %3764
      %3774 = vst.msk [vmem:[#allocation3 + $0x40] sm:$0xff] %vm2477, %v3751
      %3775 = vst.msk [vmem:[#allocation3 + $0x48] sm:$0xff] %vm2477, %v3753
      %3776 = vst.msk [vmem:[#allocation3 + $0x50] sm:$0xff] %vm2477, %v3755
      %3777 = vst.msk [vmem:[#allocation3 + $0x58] sm:$0xff] %vm2477, %v3757
      %3778 = vst.msk [vmem:[#allocation3 + $0x60] sm:$0xff] %vm2477, %v3759
      %3779 = vst.msk [vmem:[#allocation3 + $0x68] sm:$0xff] %vm2477, %v3761
      %3780 = vst.msk [vmem:[#allocation3 + $0x70] sm:$0xff] %vm2477, %v3763
      %3781 = vst.msk [vmem:[#allocation3 + $0x78] sm:$0xff] %vm2477, %v3765
      %v3782 = vld [vmem:[#allocation3] sm:$0xff]
      %v3783 = vld [vmem:[#allocation3 + $0x8] sm:$0xff]
      %v3784 = vld [vmem:[#allocation3 + $0x10] sm:$0xff]
      %v3785 = vld [vmem:[#allocation3 + $0x18] sm:$0xff]
      %v3786 = vld [vmem:[#allocation3 + $0x20] sm:$0xff]
      %v3787 = vld [vmem:[#allocation3 + $0x28] sm:$0xff]
      %v3788 = vld [vmem:[#allocation3 + $0x30] sm:$0xff]
      %v3789 = vld [vmem:[#allocation3 + $0x38] sm:$0xff]
      %v3790 = vld [vmem:[#allocation3 + $0x40] sm:$0xff]
      %v3791 = vld [vmem:[#allocation3 + $0x48] sm:$0xff]
      %v3792 = vld [vmem:[#allocation3 + $0x50] sm:$0xff]
      %v3793 = vld [vmem:[#allocation3 + $0x58] sm:$0xff]
      %v3794 = vld [vmem:[#allocation3 + $0x60] sm:$0xff]
      %v3795 = vld [vmem:[#allocation3 + $0x68] sm:$0xff]
      %v3796 = vld [vmem:[#allocation3 + $0x70] sm:$0xff]
      %v3797 = vld [vmem:[#allocation3 + $0x78] sm:$0xff]
      %v3798 = vpack.c.bf16 %v3783, %v3782
      %v3799 = vpack.c.bf16 %v3785, %v3784
      %v3800 = vpack.c.bf16 %v3787, %v3786
      %v3801 = vpack.c.bf16 %v3789, %v3788
      %v3802 = vpack.c.bf16 %v3791, %v3790
      %v3803 = vpack.c.bf16 %v3793, %v3792
      %v3804 = vpack.c.bf16 %v3795, %v3794
      %v3805 = vpack.c.bf16 %v3797, %v3796
      %v3806 = vld [vmem:[%s4] sm:$0xf]
      %v3807 = vld [vmem:[%s4 + $0x4] sm:$0xf]
      %v3808 = vld [vmem:[%s4 + $0x8] sm:$0xf]
      %v3809 = vld [vmem:[%s4 + $0xc] sm:$0xf]
      %v3810 = vld [vmem:[%s4 + $0x10] sm:$0xf]
      %v3811 = vld [vmem:[%s4 + $0x14] sm:$0xf]
      %v3812 = vld [vmem:[%s4 + $0x18] sm:$0xf]
      %v3813 = vld [vmem:[%s4 + $0x1c] sm:$0xf]
      %v3814 = vld [vmem:[%s4 + $0x20] sm:$0xf]
      %v3815 = vld [vmem:[%s4 + $0x24] sm:$0xf]
      %v3816 = vld [vmem:[%s4 + $0x28] sm:$0xf]
      %v3817 = vld [vmem:[%s4 + $0x2c] sm:$0xf]
      %v3818 = vld [vmem:[%s4 + $0x30] sm:$0xf]
      %v3819 = vld [vmem:[%s4 + $0x34] sm:$0xf]
      %v3820 = vld [vmem:[%s4 + $0x38] sm:$0xf]
      %v3821 = vld [vmem:[%s4 + $0x3c] sm:$0xf]
      %v3822 = vld [vmem:[%s5] sm:$0x1]
      %v3824 = vperm.slane %v3822, 0
      %v3842 = vunpack.c.l.b16 %v3806
      %v3843 = vunpack.c.l.b16 %v3807
      %v3844 = vunpack.c.l.b16 %v3808
      %v3845 = vunpack.c.l.b16 %v3809
      %v3846 = vunpack.c.l.b16 %v3810
      %v3847 = vunpack.c.l.b16 %v3811
      %v3848 = vunpack.c.l.b16 %v3812
      %v3849 = vunpack.c.l.b16 %v3813
      %v3850 = vunpack.c.l.b16 %v3814
      %v3851 = vunpack.c.l.b16 %v3815
      %v3852 = vunpack.c.l.b16 %v3816
      %v3853 = vunpack.c.l.b16 %v3817
      %v3854 = vunpack.c.l.b16 %v3818
      %v3855 = vunpack.c.l.b16 %v3819
      %v3856 = vunpack.c.l.b16 %v3820
      %v3857 = vunpack.c.l.b16 %v3821
      %v3858 = vpack.c.b16 %v3843, %v3842
      %v3859 = vpack.c.b16 %v3845, %v3844
      %v3860 = vpack.c.b16 %v3847, %v3846
      %v3861 = vpack.c.b16 %v3849, %v3848
      %v3862 = vpack.c.b16 %v3851, %v3850
      %v3863 = vpack.c.b16 %v3853, %v3852
      %v3864 = vpack.c.b16 %v3855, %v3854
      %v3865 = vpack.c.b16 %v3857, %v3856
      %3874 = vmatpush.bf16.msra.mxu0 %v3865
      %3875 = vmatpush.bf16.msra.mxu0 %v3864
      %3876 = vmatpush.bf16.msra.mxu0 %v3863
      %3877 = vmatpush.bf16.msra.mxu0 %v3862
      %3878 = vmatpush.bf16.msra.mxu0 %v3861
      %3879 = vmatpush.bf16.msra.mxu0 %v3860
      %3880 = vmatpush.bf16.msra.mxu0 %v3859
      %3881 = vmatpush.bf16.msra.mxu0 %v3858
      %3882 = vmatmul.bf16.gmra.mxu0 %v3798
      %v3883 = vpop.f32.mrf.mxu0
      %v3884 = vadd.f32 %v3824, %v3883
      %v3885 = vpop.f32.mrf.mxu0
      %v3886 = vadd.f32 %v3824, %v3885
      %3887 = vmatmul.bf16.gmra.mxu0 %v3799
      %v3888 = vpop.f32.mrf.mxu0
      %v3889 = vadd.f32 %v3824, %v3888
      %v3890 = vpop.f32.mrf.mxu0
      %v3891 = vadd.f32 %v3824, %v3890
      %3892 = vmatmul.bf16.gmra.mxu0 %v3800
      %v3893 = vpop.f32.mrf.mxu0
      %v3894 = vadd.f32 %v3824, %v3893
      %v3895 = vpop.f32.mrf.mxu0
      %v3896 = vadd.f32 %v3824, %v3895
      %3897 = vmatmul.bf16.gmra.mxu0 %v3801
      %v3898 = vpop.f32.mrf.mxu0
      %v3899 = vadd.f32 %v3824, %v3898
      %v3900 = vpop.f32.mrf.mxu0
      %v3901 = vadd.f32 %v3824, %v3900
      %3902 = vmatmul.bf16.gmra.mxu0 %v3802
      %v3903 = vpop.f32.mrf.mxu0
      %v3904 = vadd.f32 %v3824, %v3903
      %v3905 = vpop.f32.mrf.mxu0
      %v3906 = vadd.f32 %v3824, %v3905
      %3907 = vmatmul.bf16.gmra.mxu0 %v3803
      %v3908 = vpop.f32.mrf.mxu0
      %v3909 = vadd.f32 %v3824, %v3908
      %v3910 = vpop.f32.mrf.mxu0
      %v3911 = vadd.f32 %v3824, %v3910
      %3912 = vmatmul.bf16.gmra.mxu0 %v3804
      %v3913 = vpop.f32.mrf.mxu0
      %v3914 = vadd.f32 %v3824, %v3913
      %v3915 = vpop.f32.mrf.mxu0
      %v3916 = vadd.f32 %v3824, %v3915
      %3917 = vmatmul.bf16.gmra.mxu0 %v3805
      %v3918 = vpop.f32.mrf.mxu0
      %v3919 = vadd.f32 %v3824, %v3918
      %v3920 = vpop.f32.mrf.mxu0
      %v3921 = vadd.f32 %v3824, %v3920
      %3922 = vdwg.mxu0
      %v3923 = vadd.f32 %v423, %v3884
      %v3924 = vadd.f32 %v424, %v3886
      %v3925 = vadd.f32 %v425, %v3889
      %v3926 = vadd.f32 %v426, %v3891
      %v3927 = vadd.f32 %v427, %v3894
      %v3928 = vadd.f32 %v428, %v3896
      %v3929 = vadd.f32 %v429, %v3899
      %v3930 = vadd.f32 %v430, %v3901
      %v3931 = vadd.f32 %v431, %v3904
      %v3932 = vadd.f32 %v432, %v3906
      %v3933 = vadd.f32 %v433, %v3909
      %v3934 = vadd.f32 %v434, %v3911
      %v3935 = vadd.f32 %v435, %v3914
      %v3936 = vadd.f32 %v436, %v3916
      %v3937 = vadd.f32 %v437, %v3919
      %v3938 = vadd.f32 %v438, %v3921
      %v3939 = vld [vmem:[%s6] sm:$0x1]
      %v3940 = vld [vmem:[%s7] sm:$0x1]
      %3941 = vadd.xlane.f32.xlu0 %v3923
      %v3942 = vpop.xlane.xlu0 %3941
      %3943 = vadd.xlane.f32.xlu0 %v3924
      %v3944 = vpop.xlane.xlu0 %3943
      %3945 = vadd.xlane.f32.xlu0 %v3925
      %v3946 = vpop.xlane.xlu0 %3945
      %3947 = vadd.xlane.f32.xlu0 %v3926
      %v3948 = vpop.xlane.xlu0 %3947
      %3949 = vadd.xlane.f32.xlu0 %v3927
      %v3950 = vpop.xlane.xlu0 %3949
      %3951 = vadd.xlane.f32.xlu0 %v3928
      %v3952 = vpop.xlane.xlu0 %3951
      %3953 = vadd.xlane.f32.xlu0 %v3929
      %v3954 = vpop.xlane.xlu0 %3953
      %3955 = vadd.xlane.f32.xlu0 %v3930
      %v3956 = vpop.xlane.xlu0 %3955
      %3957 = vadd.xlane.f32.xlu0 %v3931
      %v3958 = vpop.xlane.xlu0 %3957
      %3959 = vadd.xlane.f32.xlu0 %v3932
      %v3960 = vpop.xlane.xlu0 %3959
      %3961 = vadd.xlane.f32.xlu0 %v3933
      %v3962 = vpop.xlane.xlu0 %3961
      %3963 = vadd.xlane.f32.xlu0 %v3934
      %v3964 = vpop.xlane.xlu0 %3963
      %3965 = vadd.xlane.f32.xlu0 %v3935
      %v3966 = vpop.xlane.xlu0 %3965
      %3967 = vadd.xlane.f32.xlu0 %v3936
      %v3968 = vpop.xlane.xlu0 %3967
      %3969 = vadd.xlane.f32.xlu0 %v3937
      %v3970 = vpop.xlane.xlu0 %3969
      %3971 = vadd.xlane.f32.xlu0 %v3938
      %v3972 = vpop.xlane.xlu0 %3971
      %v3973 = vmul.f32 %v3942, %v479
      %v3974 = vmul.f32 %v3944, %v479
      %v3975 = vmul.f32 %v3946, %v479
      %v3976 = vmul.f32 %v3948, %v479
      %v3977 = vmul.f32 %v3950, %v479
      %v3978 = vmul.f32 %v3952, %v479
      %v3979 = vmul.f32 %v3954, %v479
      %v3980 = vmul.f32 %v3956, %v479
      %v3981 = vmul.f32 %v3958, %v479
      %v3982 = vmul.f32 %v3960, %v479
      %v3983 = vmul.f32 %v3962, %v479
      %v3984 = vmul.f32 %v3964, %v479
      %v3985 = vmul.f32 %v3966, %v479
      %v3986 = vmul.f32 %v3968, %v479
      %v3987 = vmul.f32 %v3970, %v479
      %v3988 = vmul.f32 %v3972, %v479
      %v3989 = vsub.f32 %v3923, %v3973
      %v3990 = vsub.f32 %v3924, %v3974
      %v3991 = vsub.f32 %v3925, %v3975
      %v3992 = vsub.f32 %v3926, %v3976
      %v3993 = vsub.f32 %v3927, %v3977
      %v3994 = vsub.f32 %v3928, %v3978
      %v3995 = vsub.f32 %v3929, %v3979
      %v3996 = vsub.f32 %v3930, %v3980
      %v3997 = vsub.f32 %v3931, %v3981
      %v3998 = vsub.f32 %v3932, %v3982
      %v3999 = vsub.f32 %v3933, %v3983
      %v4000 = vsub.f32 %v3934, %v3984
      %v4001 = vsub.f32 %v3935, %v3985
      %v4002 = vsub.f32 %v3936, %v3986
      %v4003 = vsub.f32 %v3937, %v3987
      %v4004 = vsub.f32 %v3938, %v3988
      %v4005 = vmul.f32 %v3989, %v3989
      %v4006 = vmul.f32 %v3990, %v3990
      %v4007 = vmul.f32 %v3991, %v3991
      %v4008 = vmul.f32 %v3992, %v3992
      %v4009 = vmul.f32 %v3993, %v3993
      %v4010 = vmul.f32 %v3994, %v3994
      %v4011 = vmul.f32 %v3995, %v3995
      %v4012 = vmul.f32 %v3996, %v3996
      %v4013 = vmul.f32 %v3997, %v3997
      %v4014 = vmul.f32 %v3998, %v3998
      %v4015 = vmul.f32 %v3999, %v3999
      %v4016 = vmul.f32 %v4000, %v4000
      %v4017 = vmul.f32 %v4001, %v4001
      %v4018 = vmul.f32 %v4002, %v4002
      %v4019 = vmul.f32 %v4003, %v4003
      %v4020 = vmul.f32 %v4004, %v4004
      %4021 = vadd.xlane.f32.xlu0 %v4005
      %v4022 = vpop.xlane.xlu0 %4021
      %4023 = vadd.xlane.f32.xlu0 %v4006
      %v4024 = vpop.xlane.xlu0 %4023
      %4025 = vadd.xlane.f32.xlu0 %v4007
      %v4026 = vpop.xlane.xlu0 %4025
      %4027 = vadd.xlane.f32.xlu0 %v4008
      %v4028 = vpop.xlane.xlu0 %4027
      %4029 = vadd.xlane.f32.xlu0 %v4009
      %v4030 = vpop.xlane.xlu0 %4029
      %4031 = vadd.xlane.f32.xlu0 %v4010
      %v4032 = vpop.xlane.xlu0 %4031
      %4033 = vadd.xlane.f32.xlu0 %v4011
      %v4034 = vpop.xlane.xlu0 %4033
      %4035 = vadd.xlane.f32.xlu0 %v4012
      %v4036 = vpop.xlane.xlu0 %4035
      %4037 = vadd.xlane.f32.xlu0 %v4013
      %v4038 = vpop.xlane.xlu0 %4037
      %4039 = vadd.xlane.f32.xlu0 %v4014
      %v4040 = vpop.xlane.xlu0 %4039
      %4041 = vadd.xlane.f32.xlu0 %v4015
      %v4042 = vpop.xlane.xlu0 %4041
      %4043 = vadd.xlane.f32.xlu0 %v4016
      %v4044 = vpop.xlane.xlu0 %4043
      %4045 = vadd.xlane.f32.xlu0 %v4017
      %v4046 = vpop.xlane.xlu0 %4045
      %4047 = vadd.xlane.f32.xlu0 %v4018
      %v4048 = vpop.xlane.xlu0 %4047
      %4049 = vadd.xlane.f32.xlu0 %v4019
      %v4050 = vpop.xlane.xlu0 %4049
      %4051 = vadd.xlane.f32.xlu0 %v4020
      %v4052 = vpop.xlane.xlu0 %4051
      %v4053 = vmul.f32 %v4022, %v479
      %v4054 = vmul.f32 %v4024, %v479
      %v4055 = vmul.f32 %v4026, %v479
      %v4056 = vmul.f32 %v4028, %v479
      %v4057 = vmul.f32 %v4030, %v479
      %v4058 = vmul.f32 %v4032, %v479
      %v4059 = vmul.f32 %v4034, %v479
      %v4060 = vmul.f32 %v4036, %v479
      %v4061 = vmul.f32 %v4038, %v479
      %v4062 = vmul.f32 %v4040, %v479
      %v4063 = vmul.f32 %v4042, %v479
      %v4064 = vmul.f32 %v4044, %v479
      %v4065 = vmul.f32 %v4046, %v479
      %v4066 = vmul.f32 %v4048, %v479
      %v4067 = vmul.f32 %v4050, %v479
      %v4068 = vmul.f32 %v4052, %v479
      %v4069 = vadd.f32 %v4053, 1e-05
      %v4070 = vadd.f32 %v4054, 1e-05
      %v4071 = vadd.f32 %v4055, 1e-05
      %v4072 = vadd.f32 %v4056, 1e-05
      %v4073 = vadd.f32 %v4057, 1e-05
      %v4074 = vadd.f32 %v4058, 1e-05
      %v4075 = vadd.f32 %v4059, 1e-05
      %v4076 = vadd.f32 %v4060, 1e-05
      %v4077 = vadd.f32 %v4061, 1e-05
      %v4078 = vadd.f32 %v4062, 1e-05
      %v4079 = vadd.f32 %v4063, 1e-05
      %v4080 = vadd.f32 %v4064, 1e-05
      %v4081 = vadd.f32 %v4065, 1e-05
      %v4082 = vadd.f32 %v4066, 1e-05
      %v4083 = vadd.f32 %v4067, 1e-05
      %v4084 = vadd.f32 %v4068, 1e-05
      %v4085 = vrsqrt.pop %v4069
      %v4086 = vmul.f32 %v4085, %v4069
      %v4087 = vmul.f32 %v4086, %v4085
      %v4088 = vmul.f32 0.5, %v4087
      %v4089 = vsub.f32 1.5, %v4088
      %v4090 = vmul.f32 %v4085, %v4089
      %vm4091 = vweird.f32 %v4069
      %vm4092 = vweird.f32 %v4085
      %vm4093 = vmor %vm4091, %vm4092
      %v4094 = vsel %vm4093, %v4085, %v4090
      %v4095 = vrsqrt.pop %v4070
      %v4096 = vmul.f32 %v4095, %v4070
      %v4097 = vmul.f32 %v4096, %v4095
      %v4098 = vmul.f32 0.5, %v4097
      %v4099 = vsub.f32 1.5, %v4098
      %v4100 = vmul.f32 %v4095, %v4099
      %vm4101 = vweird.f32 %v4070
      %vm4102 = vweird.f32 %v4095
      %vm4103 = vmor %vm4101, %vm4102
      %v4104 = vsel %vm4103, %v4095, %v4100
      %v4105 = vrsqrt.pop %v4071
      %v4106 = vmul.f32 %v4105, %v4071
      %v4107 = vmul.f32 %v4106, %v4105
      %v4108 = vmul.f32 0.5, %v4107
      %v4109 = vsub.f32 1.5, %v4108
      %v4110 = vmul.f32 %v4105, %v4109
      %vm4111 = vweird.f32 %v4071
      %vm4112 = vweird.f32 %v4105
      %vm4113 = vmor %vm4111, %vm4112
      %v4114 = vsel %vm4113, %v4105, %v4110
      %v4115 = vrsqrt.pop %v4072
      %v4116 = vmul.f32 %v4115, %v4072
      %v4117 = vmul.f32 %v4116, %v4115
      %v4118 = vmul.f32 0.5, %v4117
      %v4119 = vsub.f32 1.5, %v4118
      %v4120 = vmul.f32 %v4115, %v4119
      %vm4121 = vweird.f32 %v4072
      %vm4122 = vweird.f32 %v4115
      %vm4123 = vmor %vm4121, %vm4122
      %v4124 = vsel %vm4123, %v4115, %v4120
      %v4125 = vrsqrt.pop %v4073
      %v4126 = vmul.f32 %v4125, %v4073
      %v4127 = vmul.f32 %v4126, %v4125
      %v4128 = vmul.f32 0.5, %v4127
      %v4129 = vsub.f32 1.5, %v4128
      %v4130 = vmul.f32 %v4125, %v4129
      %vm4131 = vweird.f32 %v4073
      %vm4132 = vweird.f32 %v4125
      %vm4133 = vmor %vm4131, %vm4132
      %v4134 = vsel %vm4133, %v4125, %v4130
      %v4135 = vrsqrt.pop %v4074
      %v4136 = vmul.f32 %v4135, %v4074
      %v4137 = vmul.f32 %v4136, %v4135
      %v4138 = vmul.f32 0.5, %v4137
      %v4139 = vsub.f32 1.5, %v4138
      %v4140 = vmul.f32 %v4135, %v4139
      %vm4141 = vweird.f32 %v4074
      %vm4142 = vweird.f32 %v4135
      %vm4143 = vmor %vm4141, %vm4142
      %v4144 = vsel %vm4143, %v4135, %v4140
      %v4145 = vrsqrt.pop %v4075
      %v4146 = vmul.f32 %v4145, %v4075
      %v4147 = vmul.f32 %v4146, %v4145
      %v4148 = vmul.f32 0.5, %v4147
      %v4149 = vsub.f32 1.5, %v4148
      %v4150 = vmul.f32 %v4145, %v4149
      %vm4151 = vweird.f32 %v4075
      %vm4152 = vweird.f32 %v4145
      %vm4153 = vmor %vm4151, %vm4152
      %v4154 = vsel %vm4153, %v4145, %v4150
      %v4155 = vrsqrt.pop %v4076
      %v4156 = vmul.f32 %v4155, %v4076
      %v4157 = vmul.f32 %v4156, %v4155
      %v4158 = vmul.f32 0.5, %v4157
      %v4159 = vsub.f32 1.5, %v4158
      %v4160 = vmul.f32 %v4155, %v4159
      %vm4161 = vweird.f32 %v4076
      %vm4162 = vweird.f32 %v4155
      %vm4163 = vmor %vm4161, %vm4162
      %v4164 = vsel %vm4163, %v4155, %v4160
      %v4165 = vrsqrt.pop %v4077
      %v4166 = vmul.f32 %v4165, %v4077
      %v4167 = vmul.f32 %v4166, %v4165
      %v4168 = vmul.f32 0.5, %v4167
      %v4169 = vsub.f32 1.5, %v4168
      %v4170 = vmul.f32 %v4165, %v4169
      %vm4171 = vweird.f32 %v4077
      %vm4172 = vweird.f32 %v4165
      %vm4173 = vmor %vm4171, %vm4172
      %v4174 = vsel %vm4173, %v4165, %v4170
      %v4175 = vrsqrt.pop %v4078
      %v4176 = vmul.f32 %v4175, %v4078
      %v4177 = vmul.f32 %v4176, %v4175
      %v4178 = vmul.f32 0.5, %v4177
      %v4179 = vsub.f32 1.5, %v4178
      %v4180 = vmul.f32 %v4175, %v4179
      %vm4181 = vweird.f32 %v4078
      %vm4182 = vweird.f32 %v4175
      %vm4183 = vmor %vm4181, %vm4182
      %v4184 = vsel %vm4183, %v4175, %v4180
      %v4185 = vrsqrt.pop %v4079
      %v4186 = vmul.f32 %v4185, %v4079
      %v4187 = vmul.f32 %v4186, %v4185
      %v4188 = vmul.f32 0.5, %v4187
      %v4189 = vsub.f32 1.5, %v4188
      %v4190 = vmul.f32 %v4185, %v4189
      %vm4191 = vweird.f32 %v4079
      %vm4192 = vweird.f32 %v4185
      %vm4193 = vmor %vm4191, %vm4192
      %v4194 = vsel %vm4193, %v4185, %v4190
      %v4195 = vrsqrt.pop %v4080
      %v4196 = vmul.f32 %v4195, %v4080
      %v4197 = vmul.f32 %v4196, %v4195
      %v4198 = vmul.f32 0.5, %v4197
      %v4199 = vsub.f32 1.5, %v4198
      %v4200 = vmul.f32 %v4195, %v4199
      %vm4201 = vweird.f32 %v4080
      %vm4202 = vweird.f32 %v4195
      %vm4203 = vmor %vm4201, %vm4202
      %v4204 = vsel %vm4203, %v4195, %v4200
      %v4205 = vrsqrt.pop %v4081
      %v4206 = vmul.f32 %v4205, %v4081
      %v4207 = vmul.f32 %v4206, %v4205
      %v4208 = vmul.f32 0.5, %v4207
      %v4209 = vsub.f32 1.5, %v4208
      %v4210 = vmul.f32 %v4205, %v4209
      %vm4211 = vweird.f32 %v4081
      %vm4212 = vweird.f32 %v4205
      %vm4213 = vmor %vm4211, %vm4212
      %v4214 = vsel %vm4213, %v4205, %v4210
      %v4215 = vrsqrt.pop %v4082
      %v4216 = vmul.f32 %v4215, %v4082
      %v4217 = vmul.f32 %v4216, %v4215
      %v4218 = vmul.f32 0.5, %v4217
      %v4219 = vsub.f32 1.5, %v4218
      %v4220 = vmul.f32 %v4215, %v4219
      %vm4221 = vweird.f32 %v4082
      %vm4222 = vweird.f32 %v4215
      %vm4223 = vmor %vm4221, %vm4222
      %v4224 = vsel %vm4223, %v4215, %v4220
      %v4225 = vrsqrt.pop %v4083
      %v4226 = vmul.f32 %v4225, %v4083
      %v4227 = vmul.f32 %v4226, %v4225
      %v4228 = vmul.f32 0.5, %v4227
      %v4229 = vsub.f32 1.5, %v4228
      %v4230 = vmul.f32 %v4225, %v4229
      %vm4231 = vweird.f32 %v4083
      %vm4232 = vweird.f32 %v4225
      %vm4233 = vmor %vm4231, %vm4232
      %v4234 = vsel %vm4233, %v4225, %v4230
      %v4235 = vrsqrt.pop %v4084
      %v4236 = vmul.f32 %v4235, %v4084
      %v4237 = vmul.f32 %v4236, %v4235
      %v4238 = vmul.f32 0.5, %v4237
      %v4239 = vsub.f32 1.5, %v4238
      %v4240 = vmul.f32 %v4235, %v4239
      %vm4241 = vweird.f32 %v4084
      %vm4242 = vweird.f32 %v4235
      %vm4243 = vmor %vm4241, %vm4242
      %v4244 = vsel %vm4243, %v4235, %v4240
      %v4245 = vmul.f32 %v3989, %v4094
      %v4246 = vmul.f32 %v3990, %v4104
      %v4247 = vmul.f32 %v3991, %v4114
      %v4248 = vmul.f32 %v3992, %v4124
      %v4249 = vmul.f32 %v3993, %v4134
      %v4250 = vmul.f32 %v3994, %v4144
      %v4251 = vmul.f32 %v3995, %v4154
      %v4252 = vmul.f32 %v3996, %v4164
      %v4253 = vmul.f32 %v3997, %v4174
      %v4254 = vmul.f32 %v3998, %v4184
      %v4255 = vmul.f32 %v3999, %v4194
      %v4256 = vmul.f32 %v4000, %v4204
      %v4257 = vmul.f32 %v4001, %v4214
      %v4258 = vmul.f32 %v4002, %v4224
      %v4259 = vmul.f32 %v4003, %v4234
      %v4260 = vmul.f32 %v4004, %v4244
      %v4262 = vperm.slane %v3939, 0
      %v4264 = vmul.f32 %v4245, %v4262
      %v4265 = vmul.f32 %v4246, %v4262
      %v4266 = vmul.f32 %v4247, %v4262
      %v4267 = vmul.f32 %v4248, %v4262
      %v4268 = vmul.f32 %v4249, %v4262
      %v4269 = vmul.f32 %v4250, %v4262
      %v4270 = vmul.f32 %v4251, %v4262
      %v4271 = vmul.f32 %v4252, %v4262
      %v4272 = vmul.f32 %v4253, %v4262
      %v4273 = vmul.f32 %v4254, %v4262
      %v4274 = vmul.f32 %v4255, %v4262
      %v4275 = vmul.f32 %v4256, %v4262
      %v4276 = vmul.f32 %v4257, %v4262
      %v4277 = vmul.f32 %v4258, %v4262
      %v4278 = vmul.f32 %v4259, %v4262
      %v4279 = vmul.f32 %v4260, %v4262
      %v4281 = vperm.slane %v3940, 0
      %v4283 = vadd.f32 %v4264, %v4281
      %v4284 = vadd.f32 %v4265, %v4281
      %v4285 = vadd.f32 %v4266, %v4281
      %v4286 = vadd.f32 %v4267, %v4281
      %v4287 = vadd.f32 %v4268, %v4281
      %v4288 = vadd.f32 %v4269, %v4281
      %v4289 = vadd.f32 %v4270, %v4281
      %v4290 = vadd.f32 %v4271, %v4281
      %v4291 = vadd.f32 %v4272, %v4281
      %v4292 = vadd.f32 %v4273, %v4281
      %v4293 = vadd.f32 %v4274, %v4281
      %v4294 = vadd.f32 %v4275, %v4281
      %v4295 = vadd.f32 %v4276, %v4281
      %v4296 = vadd.f32 %v4277, %v4281
      %v4297 = vadd.f32 %v4278, %v4281
      %v4298 = vadd.f32 %v4279, %v4281
      %v4299 = vpack.c.bf16 %v4284, %v4283
      %v4300 = vpack.c.bf16 %v4286, %v4285
      %v4301 = vpack.c.bf16 %v4288, %v4287
      %v4302 = vpack.c.bf16 %v4290, %v4289
      %v4303 = vpack.c.bf16 %v4292, %v4291
      %v4304 = vpack.c.bf16 %v4294, %v4293
      %v4305 = vpack.c.bf16 %v4296, %v4295
      %v4306 = vpack.c.bf16 %v4298, %v4297
      %v4307 = vld [vmem:[%s8] sm:$0xff]
      %v4308 = vld [vmem:[%s8 + $0x8] sm:$0xff]
      %v4309 = vld [vmem:[%s8 + $0x10] sm:$0xff]
      %v4310 = vld [vmem:[%s8 + $0x18] sm:$0xff]
      %v4311 = vld [vmem:[%s8 + $0x20] sm:$0xff]
      %v4312 = vld [vmem:[%s8 + $0x28] sm:$0xff]
      %v4313 = vld [vmem:[%s8 + $0x30] sm:$0xff]
      %v4314 = vld [vmem:[%s8 + $0x38] sm:$0xff]
      %v4315 = vld [vmem:[%s8 + $0x40] sm:$0xff]
      %v4316 = vld [vmem:[%s8 + $0x48] sm:$0xff]
      %v4317 = vld [vmem:[%s8 + $0x50] sm:$0xff]
      %v4318 = vld [vmem:[%s8 + $0x58] sm:$0xff]
      %v4319 = vld [vmem:[%s8 + $0x60] sm:$0xff]
      %v4320 = vld [vmem:[%s8 + $0x68] sm:$0xff]
      %v4321 = vld [vmem:[%s8 + $0x70] sm:$0xff]
      %v4322 = vld [vmem:[%s8 + $0x78] sm:$0xff]
      %v4323 = vld [vmem:[%s8 + $0x80] sm:$0xff]
      %v4324 = vld [vmem:[%s8 + $0x88] sm:$0xff]
      %v4325 = vld [vmem:[%s8 + $0x90] sm:$0xff]
      %v4326 = vld [vmem:[%s8 + $0x98] sm:$0xff]
      %v4327 = vld [vmem:[%s8 + $0xa0] sm:$0xff]
      %v4328 = vld [vmem:[%s8 + $0xa8] sm:$0xff]
      %v4329 = vld [vmem:[%s8 + $0xb0] sm:$0xff]
      %v4330 = vld [vmem:[%s8 + $0xb8] sm:$0xff]
      %v4331 = vld [vmem:[%s8 + $0xc0] sm:$0xff]
      %v4332 = vld [vmem:[%s8 + $0xc8] sm:$0xff]
      %v4333 = vld [vmem:[%s8 + $0xd0] sm:$0xff]
      %v4334 = vld [vmem:[%s8 + $0xd8] sm:$0xff]
      %v4335 = vld [vmem:[%s8 + $0xe0] sm:$0xff]
      %v4336 = vld [vmem:[%s8 + $0xe8] sm:$0xff]
      %v4337 = vld [vmem:[%s8 + $0xf0] sm:$0xff]
      %v4338 = vld [vmem:[%s8 + $0xf8] sm:$0xff]
      %v4339 = vld [vmem:[%s9] sm:$0xf]
      %v4341 = vperm.slane %v4339, 0
      %v4342 = vperm.slane %v4339, 1
      %v4343 = vperm.slane %v4339, 2
      %v4344 = vperm.slane %v4339, 3
      %v4381 = vunpack.c.l.b16 %v4307
      %v4382 = vunpack.c.h.b16 %v4307
      %v4383 = vunpack.c.l.b16 %v4308
      %v4384 = vunpack.c.h.b16 %v4308
      %v4385 = vunpack.c.l.b16 %v4309
      %v4386 = vunpack.c.h.b16 %v4309
      %v4387 = vunpack.c.l.b16 %v4310
      %v4388 = vunpack.c.h.b16 %v4310
      %v4389 = vunpack.c.l.b16 %v4311
      %v4390 = vunpack.c.h.b16 %v4311
      %v4391 = vunpack.c.l.b16 %v4312
      %v4392 = vunpack.c.h.b16 %v4312
      %v4393 = vunpack.c.l.b16 %v4313
      %v4394 = vunpack.c.h.b16 %v4313
      %v4395 = vunpack.c.l.b16 %v4314
      %v4396 = vunpack.c.h.b16 %v4314
      %v4397 = vunpack.c.l.b16 %v4315
      %v4398 = vunpack.c.h.b16 %v4315
      %v4399 = vunpack.c.l.b16 %v4316
      %v4400 = vunpack.c.h.b16 %v4316
      %v4401 = vunpack.c.l.b16 %v4317
      %v4402 = vunpack.c.h.b16 %v4317
      %v4403 = vunpack.c.l.b16 %v4318
      %v4404 = vunpack.c.h.b16 %v4318
      %v4405 = vunpack.c.l.b16 %v4319
      %v4406 = vunpack.c.h.b16 %v4319
      %v4407 = vunpack.c.l.b16 %v4320
      %v4408 = vunpack.c.h.b16 %v4320
      %v4409 = vunpack.c.l.b16 %v4321
      %v4410 = vunpack.c.h.b16 %v4321
      %v4411 = vunpack.c.l.b16 %v4322
      %v4412 = vunpack.c.h.b16 %v4322
      %v4413 = vunpack.c.l.b16 %v4323
      %v4414 = vunpack.c.h.b16 %v4323
      %v4415 = vunpack.c.l.b16 %v4324
      %v4416 = vunpack.c.h.b16 %v4324
      %v4417 = vunpack.c.l.b16 %v4325
      %v4418 = vunpack.c.h.b16 %v4325
      %v4419 = vunpack.c.l.b16 %v4326
      %v4420 = vunpack.c.h.b16 %v4326
      %v4421 = vunpack.c.l.b16 %v4327
      %v4422 = vunpack.c.h.b16 %v4327
      %v4423 = vunpack.c.l.b16 %v4328
      %v4424 = vunpack.c.h.b16 %v4328
      %v4425 = vunpack.c.l.b16 %v4329
      %v4426 = vunpack.c.h.b16 %v4329
      %v4427 = vunpack.c.l.b16 %v4330
      %v4428 = vunpack.c.h.b16 %v4330
      %v4429 = vunpack.c.l.b16 %v4331
      %v4430 = vunpack.c.h.b16 %v4331
      %v4431 = vunpack.c.l.b16 %v4332
      %v4432 = vunpack.c.h.b16 %v4332
      %v4433 = vunpack.c.l.b16 %v4333
      %v4434 = vunpack.c.h.b16 %v4333
      %v4435 = vunpack.c.l.b16 %v4334
      %v4436 = vunpack.c.h.b16 %v4334
      %v4437 = vunpack.c.l.b16 %v4335
      %v4438 = vunpack.c.h.b16 %v4335
      %v4439 = vunpack.c.l.b16 %v4336
      %v4440 = vunpack.c.h.b16 %v4336
      %v4441 = vunpack.c.l.b16 %v4337
      %v4442 = vunpack.c.h.b16 %v4337
      %v4443 = vunpack.c.l.b16 %v4338
      %v4444 = vunpack.c.h.b16 %v4338
      %v4445 = vpack.c.b16 %v4385, %v4381
      %v4446 = vpack.c.b16 %v4386, %v4382
      %v4447 = vpack.c.b16 %v4387, %v4383
      %v4448 = vpack.c.b16 %v4388, %v4384
      %v4449 = vpack.c.b16 %v4393, %v4389
      %v4450 = vpack.c.b16 %v4394, %v4390
      %v4451 = vpack.c.b16 %v4395, %v4391
      %v4452 = vpack.c.b16 %v4396, %v4392
      %v4453 = vpack.c.b16 %v4401, %v4397
      %v4454 = vpack.c.b16 %v4402, %v4398
      %v4455 = vpack.c.b16 %v4403, %v4399
      %v4456 = vpack.c.b16 %v4404, %v4400
      %v4457 = vpack.c.b16 %v4409, %v4405
      %v4458 = vpack.c.b16 %v4410, %v4406
      %v4459 = vpack.c.b16 %v4411, %v4407
      %v4460 = vpack.c.b16 %v4412, %v4408
      %v4461 = vpack.c.b16 %v4417, %v4413
      %v4462 = vpack.c.b16 %v4418, %v4414
      %v4463 = vpack.c.b16 %v4419, %v4415
      %v4464 = vpack.c.b16 %v4420, %v4416
      %v4465 = vpack.c.b16 %v4425, %v4421
      %v4466 = vpack.c.b16 %v4426, %v4422
      %v4467 = vpack.c.b16 %v4427, %v4423
      %v4468 = vpack.c.b16 %v4428, %v4424
      %v4469 = vpack.c.b16 %v4433, %v4429
      %v4470 = vpack.c.b16 %v4434, %v4430
      %v4471 = vpack.c.b16 %v4435, %v4431
      %v4472 = vpack.c.b16 %v4436, %v4432
      %v4473 = vpack.c.b16 %v4441, %v4437
      %v4474 = vpack.c.b16 %v4442, %v4438
      %v4475 = vpack.c.b16 %v4443, %v4439
      %v4476 = vpack.c.b16 %v4444, %v4440
      %4509 = vmatpush.bf16.msra.mxu0 %v4473
      %4510 = vmatpush.bf16.msra.mxu0 %v4469
      %4511 = vmatpush.bf16.msra.mxu0 %v4465
      %4512 = vmatpush.bf16.msra.mxu0 %v4461
      %4513 = vmatpush.bf16.msra.mxu0 %v4457
      %4514 = vmatpush.bf16.msra.mxu0 %v4453
      %4515 = vmatpush.bf16.msra.mxu0 %v4449
      %4516 = vmatpush.bf16.msra.mxu0 %v4445
      %4517 = vmatmul.bf16.gmra.mxu0 %v4299
      %v4518 = vpop.f32.mrf.mxu0
      %v4519 = vadd.f32 %v4341, %v4518
      %v4520 = vpop.f32.mrf.mxu0
      %v4521 = vadd.f32 %v4341, %v4520
      %4522 = vmatmul.bf16.gmra.mxu0 %v4300
      %v4523 = vpop.f32.mrf.mxu0
      %v4524 = vadd.f32 %v4341, %v4523
      %v4525 = vpop.f32.mrf.mxu0
      %v4526 = vadd.f32 %v4341, %v4525
      %4527 = vmatmul.bf16.gmra.mxu0 %v4301
      %v4528 = vpop.f32.mrf.mxu0
      %v4529 = vadd.f32 %v4341, %v4528
      %v4530 = vpop.f32.mrf.mxu0
      %v4531 = vadd.f32 %v4341, %v4530
      %4532 = vmatmul.bf16.gmra.mxu0 %v4302
      %v4533 = vpop.f32.mrf.mxu0
      %v4534 = vadd.f32 %v4341, %v4533
      %v4535 = vpop.f32.mrf.mxu0
      %v4536 = vadd.f32 %v4341, %v4535
      %4537 = vmatmul.bf16.gmra.mxu0 %v4303
      %v4538 = vpop.f32.mrf.mxu0
      %v4539 = vadd.f32 %v4341, %v4538
      %v4540 = vpop.f32.mrf.mxu0
      %v4541 = vadd.f32 %v4341, %v4540
      %4542 = vmatmul.bf16.gmra.mxu0 %v4304
      %v4543 = vpop.f32.mrf.mxu0
      %v4544 = vadd.f32 %v4341, %v4543
      %v4545 = vpop.f32.mrf.mxu0
      %v4546 = vadd.f32 %v4341, %v4545
      %4547 = vmatmul.bf16.gmra.mxu0 %v4305
      %v4548 = vpop.f32.mrf.mxu0
      %v4549 = vadd.f32 %v4341, %v4548
      %v4550 = vpop.f32.mrf.mxu0
      %v4551 = vadd.f32 %v4341, %v4550
      %4552 = vmatmul.bf16.gmra.mxu0 %v4306
      %v4553 = vpop.f32.mrf.mxu0
      %v4554 = vadd.f32 %v4341, %v4553
      %v4555 = vpop.f32.mrf.mxu0
      %v4556 = vadd.f32 %v4341, %v4555
      %4557 = vdwg.mxu0
      %4558 = vmatpush.bf16.msra.mxu0 %v4474
      %4559 = vmatpush.bf16.msra.mxu0 %v4470
      %4560 = vmatpush.bf16.msra.mxu0 %v4466
      %4561 = vmatpush.bf16.msra.mxu0 %v4462
      %4562 = vmatpush.bf16.msra.mxu0 %v4458
      %4563 = vmatpush.bf16.msra.mxu0 %v4454
      %4564 = vmatpush.bf16.msra.mxu0 %v4450
      %4565 = vmatpush.bf16.msra.mxu0 %v4446
      %4566 = vmatmul.bf16.gmra.mxu0 %v4299
      %v4567 = vpop.f32.mrf.mxu0
      %v4568 = vadd.f32 %v4342, %v4567
      %v4569 = vpop.f32.mrf.mxu0
      %v4570 = vadd.f32 %v4342, %v4569
      %4571 = vmatmul.bf16.gmra.mxu0 %v4300
      %v4572 = vpop.f32.mrf.mxu0
      %v4573 = vadd.f32 %v4342, %v4572
      %v4574 = vpop.f32.mrf.mxu0
      %v4575 = vadd.f32 %v4342, %v4574
      %4576 = vmatmul.bf16.gmra.mxu0 %v4301
      %v4577 = vpop.f32.mrf.mxu0
      %v4578 = vadd.f32 %v4342, %v4577
      %v4579 = vpop.f32.mrf.mxu0
      %v4580 = vadd.f32 %v4342, %v4579
      %4581 = vmatmul.bf16.gmra.mxu0 %v4302
      %v4582 = vpop.f32.mrf.mxu0
      %v4583 = vadd.f32 %v4342, %v4582
      %v4584 = vpop.f32.mrf.mxu0
      %v4585 = vadd.f32 %v4342, %v4584
      %4586 = vmatmul.bf16.gmra.mxu0 %v4303
      %v4587 = vpop.f32.mrf.mxu0
      %v4588 = vadd.f32 %v4342, %v4587
      %v4589 = vpop.f32.mrf.mxu0
      %v4590 = vadd.f32 %v4342, %v4589
      %4591 = vmatmul.bf16.gmra.mxu0 %v4304
      %v4592 = vpop.f32.mrf.mxu0
      %v4593 = vadd.f32 %v4342, %v4592
      %v4594 = vpop.f32.mrf.mxu0
      %v4595 = vadd.f32 %v4342, %v4594
      %4596 = vmatmul.bf16.gmra.mxu0 %v4305
      %v4597 = vpop.f32.mrf.mxu0
      %v4598 = vadd.f32 %v4342, %v4597
      %v4599 = vpop.f32.mrf.mxu0
      %v4600 = vadd.f32 %v4342, %v4599
      %4601 = vmatmul.bf16.gmra.mxu0 %v4306
      %v4602 = vpop.f32.mrf.mxu0
      %v4603 = vadd.f32 %v4342, %v4602
      %v4604 = vpop.f32.mrf.mxu0
      %v4605 = vadd.f32 %v4342, %v4604
      %4606 = vdwg.mxu0
      %4607 = vmatpush.bf16.msra.mxu0 %v4475
      %4608 = vmatpush.bf16.msra.mxu0 %v4471
      %4609 = vmatpush.bf16.msra.mxu0 %v4467
      %4610 = vmatpush.bf16.msra.mxu0 %v4463
      %4611 = vmatpush.bf16.msra.mxu0 %v4459
      %4612 = vmatpush.bf16.msra.mxu0 %v4455
      %4613 = vmatpush.bf16.msra.mxu0 %v4451
      %4614 = vmatpush.bf16.msra.mxu0 %v4447
      %4615 = vmatmul.bf16.gmra.mxu0 %v4299
      %v4616 = vpop.f32.mrf.mxu0
      %v4617 = vadd.f32 %v4343, %v4616
      %v4618 = vpop.f32.mrf.mxu0
      %v4619 = vadd.f32 %v4343, %v4618
      %4620 = vmatmul.bf16.gmra.mxu0 %v4300
      %v4621 = vpop.f32.mrf.mxu0
      %v4622 = vadd.f32 %v4343, %v4621
      %v4623 = vpop.f32.mrf.mxu0
      %v4624 = vadd.f32 %v4343, %v4623
      %4625 = vmatmul.bf16.gmra.mxu0 %v4301
      %v4626 = vpop.f32.mrf.mxu0
      %v4627 = vadd.f32 %v4343, %v4626
      %v4628 = vpop.f32.mrf.mxu0
      %v4629 = vadd.f32 %v4343, %v4628
      %4630 = vmatmul.bf16.gmra.mxu0 %v4302
      %v4631 = vpop.f32.mrf.mxu0
      %v4632 = vadd.f32 %v4343, %v4631
      %v4633 = vpop.f32.mrf.mxu0
      %v4634 = vadd.f32 %v4343, %v4633
      %4635 = vmatmul.bf16.gmra.mxu0 %v4303
      %v4636 = vpop.f32.mrf.mxu0
      %v4637 = vadd.f32 %v4343, %v4636
      %v4638 = vpop.f32.mrf.mxu0
      %v4639 = vadd.f32 %v4343, %v4638
      %4640 = vmatmul.bf16.gmra.mxu0 %v4304
      %v4641 = vpop.f32.mrf.mxu0
      %v4642 = vadd.f32 %v4343, %v4641
      %v4643 = vpop.f32.mrf.mxu0
      %v4644 = vadd.f32 %v4343, %v4643
      %4645 = vmatmul.bf16.gmra.mxu0 %v4305
      %v4646 = vpop.f32.mrf.mxu0
      %v4647 = vadd.f32 %v4343, %v4646
      %v4648 = vpop.f32.mrf.mxu0
      %v4649 = vadd.f32 %v4343, %v4648
      %4650 = vmatmul.bf16.gmra.mxu0 %v4306
      %v4651 = vpop.f32.mrf.mxu0
      %v4652 = vadd.f32 %v4343, %v4651
      %v4653 = vpop.f32.mrf.mxu0
      %v4654 = vadd.f32 %v4343, %v4653
      %4655 = vdwg.mxu0
      %4656 = vmatpush.bf16.msra.mxu0 %v4476
      %4657 = vmatpush.bf16.msra.mxu0 %v4472
      %4658 = vmatpush.bf16.msra.mxu0 %v4468
      %4659 = vmatpush.bf16.msra.mxu0 %v4464
      %4660 = vmatpush.bf16.msra.mxu0 %v4460
      %4661 = vmatpush.bf16.msra.mxu0 %v4456
      %4662 = vmatpush.bf16.msra.mxu0 %v4452
      %4663 = vmatpush.bf16.msra.mxu0 %v4448
      %4664 = vmatmul.bf16.gmra.mxu0 %v4299
      %v4665 = vpop.f32.mrf.mxu0
      %v4666 = vadd.f32 %v4344, %v4665
      %v4667 = vpop.f32.mrf.mxu0
      %v4668 = vadd.f32 %v4344, %v4667
      %4669 = vmatmul.bf16.gmra.mxu0 %v4300
      %v4670 = vpop.f32.mrf.mxu0
      %v4671 = vadd.f32 %v4344, %v4670
      %v4672 = vpop.f32.mrf.mxu0
      %v4673 = vadd.f32 %v4344, %v4672
      %4674 = vmatmul.bf16.gmra.mxu0 %v4301
      %v4675 = vpop.f32.mrf.mxu0
      %v4676 = vadd.f32 %v4344, %v4675
      %v4677 = vpop.f32.mrf.mxu0
      %v4678 = vadd.f32 %v4344, %v4677
      %4679 = vmatmul.bf16.gmra.mxu0 %v4302
      %v4680 = vpop.f32.mrf.mxu0
      %v4681 = vadd.f32 %v4344, %v4680
      %v4682 = vpop.f32.mrf.mxu0
      %v4683 = vadd.f32 %v4344, %v4682
      %4684 = vmatmul.bf16.gmra.mxu0 %v4303
      %v4685 = vpop.f32.mrf.mxu0
      %v4686 = vadd.f32 %v4344, %v4685
      %v4687 = vpop.f32.mrf.mxu0
      %v4688 = vadd.f32 %v4344, %v4687
      %4689 = vmatmul.bf16.gmra.mxu0 %v4304
      %v4690 = vpop.f32.mrf.mxu0
      %v4691 = vadd.f32 %v4344, %v4690
      %v4692 = vpop.f32.mrf.mxu0
      %v4693 = vadd.f32 %v4344, %v4692
      %4694 = vmatmul.bf16.gmra.mxu0 %v4305
      %v4695 = vpop.f32.mrf.mxu0
      %v4696 = vadd.f32 %v4344, %v4695
      %v4697 = vpop.f32.mrf.mxu0
      %v4698 = vadd.f32 %v4344, %v4697
      %4699 = vmatmul.bf16.gmra.mxu0 %v4306
      %v4700 = vpop.f32.mrf.mxu0
      %v4701 = vadd.f32 %v4344, %v4700
      %v4702 = vpop.f32.mrf.mxu0
      %v4703 = vadd.f32 %v4344, %v4702
      %4704 = vdwg.mxu0
      %v4705 = vmul.f32 %v4519, 0.5
      %v4706 = vmul.f32 %v4568, 0.5
      %v4707 = vmul.f32 %v4617, 0.5
      %v4708 = vmul.f32 %v4666, 0.5
      %v4709 = vmul.f32 %v4521, 0.5
      %v4710 = vmul.f32 %v4570, 0.5
      %v4711 = vmul.f32 %v4619, 0.5
      %v4712 = vmul.f32 %v4668, 0.5
      %v4713 = vmul.f32 %v4524, 0.5
      %v4714 = vmul.f32 %v4573, 0.5
      %v4715 = vmul.f32 %v4622, 0.5
      %v4716 = vmul.f32 %v4671, 0.5
      %v4717 = vmul.f32 %v4526, 0.5
      %v4718 = vmul.f32 %v4575, 0.5
      %v4719 = vmul.f32 %v4624, 0.5
      %v4720 = vmul.f32 %v4673, 0.5
      %v4721 = vmul.f32 %v4529, 0.5
      %v4722 = vmul.f32 %v4578, 0.5
      %v4723 = vmul.f32 %v4627, 0.5
      %v4724 = vmul.f32 %v4676, 0.5
      %v4725 = vmul.f32 %v4531, 0.5
      %v4726 = vmul.f32 %v4580, 0.5
      %v4727 = vmul.f32 %v4629, 0.5
      %v4728 = vmul.f32 %v4678, 0.5
      %v4729 = vmul.f32 %v4534, 0.5
      %v4730 = vmul.f32 %v4583, 0.5
      %v4731 = vmul.f32 %v4632, 0.5
      %v4732 = vmul.f32 %v4681, 0.5
      %v4733 = vmul.f32 %v4536, 0.5
      %v4734 = vmul.f32 %v4585, 0.5
      %v4735 = vmul.f32 %v4634, 0.5
      %v4736 = vmul.f32 %v4683, 0.5
      %v4737 = vmul.f32 %v4539, 0.5
      %v4738 = vmul.f32 %v4588, 0.5
      %v4739 = vmul.f32 %v4637, 0.5
      %v4740 = vmul.f32 %v4686, 0.5
      %v4741 = vmul.f32 %v4541, 0.5
      %v4742 = vmul.f32 %v4590, 0.5
      %v4743 = vmul.f32 %v4639, 0.5
      %v4744 = vmul.f32 %v4688, 0.5
      %v4745 = vmul.f32 %v4544, 0.5
      %v4746 = vmul.f32 %v4593, 0.5
      %v4747 = vmul.f32 %v4642, 0.5
      %v4748 = vmul.f32 %v4691, 0.5
      %v4749 = vmul.f32 %v4546, 0.5
      %v4750 = vmul.f32 %v4595, 0.5
      %v4751 = vmul.f32 %v4644, 0.5
      %v4752 = vmul.f32 %v4693, 0.5
      %v4753 = vmul.f32 %v4549, 0.5
      %v4754 = vmul.f32 %v4598, 0.5
      %v4755 = vmul.f32 %v4647, 0.5
      %v4756 = vmul.f32 %v4696, 0.5
      %v4757 = vmul.f32 %v4551, 0.5
      %v4758 = vmul.f32 %v4600, 0.5
      %v4759 = vmul.f32 %v4649, 0.5
      %v4760 = vmul.f32 %v4698, 0.5
      %v4761 = vmul.f32 %v4554, 0.5
      %v4762 = vmul.f32 %v4603, 0.5
      %v4763 = vmul.f32 %v4652, 0.5
      %v4764 = vmul.f32 %v4701, 0.5
      %v4765 = vmul.f32 %v4556, 0.5
      %v4766 = vmul.f32 %v4605, 0.5
      %v4767 = vmul.f32 %v4654, 0.5
      %v4768 = vmul.f32 %v4703, 0.5
      %v4769 = vmul.f32 %v4519, 0.70710677
      %v4770 = vmul.f32 %v4568, 0.70710677
      %v4771 = vmul.f32 %v4617, 0.70710677
      %v4772 = vmul.f32 %v4666, 0.70710677
      %v4773 = vmul.f32 %v4521, 0.70710677
      %v4774 = vmul.f32 %v4570, 0.70710677
      %v4775 = vmul.f32 %v4619, 0.70710677
      %v4776 = vmul.f32 %v4668, 0.70710677
      %v4777 = vmul.f32 %v4524, 0.70710677
      %v4778 = vmul.f32 %v4573, 0.70710677
      %v4779 = vmul.f32 %v4622, 0.70710677
      %v4780 = vmul.f32 %v4671, 0.70710677
      %v4781 = vmul.f32 %v4526, 0.70710677
      %v4782 = vmul.f32 %v4575, 0.70710677
      %v4783 = vmul.f32 %v4624, 0.70710677
      %v4784 = vmul.f32 %v4673, 0.70710677
      %v4785 = vmul.f32 %v4529, 0.70710677
      %v4786 = vmul.f32 %v4578, 0.70710677
      %v4787 = vmul.f32 %v4627, 0.70710677
      %v4788 = vmul.f32 %v4676, 0.70710677
      %v4789 = vmul.f32 %v4531, 0.70710677
      %v4790 = vmul.f32 %v4580, 0.70710677
      %v4791 = vmul.f32 %v4629, 0.70710677
      %v4792 = vmul.f32 %v4678, 0.70710677
      %v4793 = vmul.f32 %v4534, 0.70710677
      %v4794 = vmul.f32 %v4583, 0.70710677
      %v4795 = vmul.f32 %v4632, 0.70710677
      %v4796 = vmul.f32 %v4681, 0.70710677
      %v4797 = vmul.f32 %v4536, 0.70710677
      %v4798 = vmul.f32 %v4585, 0.70710677
      %v4799 = vmul.f32 %v4634, 0.70710677
      %v4800 = vmul.f32 %v4683, 0.70710677
      %v4801 = vmul.f32 %v4539, 0.70710677
      %v4802 = vmul.f32 %v4588, 0.70710677
      %v4803 = vmul.f32 %v4637, 0.70710677
      %v4804 = vmul.f32 %v4686, 0.70710677
      %v4805 = vmul.f32 %v4541, 0.70710677
      %v4806 = vmul.f32 %v4590, 0.70710677
      %v4807 = vmul.f32 %v4639, 0.70710677
      %v4808 = vmul.f32 %v4688, 0.70710677
      %v4809 = vmul.f32 %v4544, 0.70710677
      %v4810 = vmul.f32 %v4593, 0.70710677
      %v4811 = vmul.f32 %v4642, 0.70710677
      %v4812 = vmul.f32 %v4691, 0.70710677
      %v4813 = vmul.f32 %v4546, 0.70710677
      %v4814 = vmul.f32 %v4595, 0.70710677
      %v4815 = vmul.f32 %v4644, 0.70710677
      %v4816 = vmul.f32 %v4693, 0.70710677
      %v4817 = vmul.f32 %v4549, 0.70710677
      %v4818 = vmul.f32 %v4598, 0.70710677
      %v4819 = vmul.f32 %v4647, 0.70710677
      %v4820 = vmul.f32 %v4696, 0.70710677
      %v4821 = vmul.f32 %v4551, 0.70710677
      %v4822 = vmul.f32 %v4600, 0.70710677
      %v4823 = vmul.f32 %v4649, 0.70710677
      %v4824 = vmul.f32 %v4698, 0.70710677
      %v4825 = vmul.f32 %v4554, 0.70710677
      %v4826 = vmul.f32 %v4603, 0.70710677
      %v4827 = vmul.f32 %v4652, 0.70710677
      %v4828 = vmul.f32 %v4701, 0.70710677
      %v4829 = vmul.f32 %v4556, 0.70710677
      %v4830 = vmul.f32 %v4605, 0.70710677
      %v4831 = vmul.f32 %v4654, 0.70710677
      %v4832 = vmul.f32 %v4703, 0.70710677
      %v4833 = vmax.f32 %v4769, -4.0
      %v4834 = vmax.f32 %v4770, -4.0
      %v4835 = vmax.f32 %v4771, -4.0
      %v4836 = vmax.f32 %v4772, -4.0
      %v4837 = vmax.f32 %v4773, -4.0
      %v4838 = vmax.f32 %v4774, -4.0
      %v4839 = vmax.f32 %v4775, -4.0
      %v4840 = vmax.f32 %v4776, -4.0
      %v4841 = vmax.f32 %v4777, -4.0
      %v4842 = vmax.f32 %v4778, -4.0
      %v4843 = vmax.f32 %v4779, -4.0
      %v4844 = vmax.f32 %v4780, -4.0
      %v4845 = vmax.f32 %v4781, -4.0
      %v4846 = vmax.f32 %v4782, -4.0
      %v4847 = vmax.f32 %v4783, -4.0
      %v4848 = vmax.f32 %v4784, -4.0
      %v4849 = vmax.f32 %v4785, -4.0
      %v4850 = vmax.f32 %v4786, -4.0
      %v4851 = vmax.f32 %v4787, -4.0
      %v4852 = vmax.f32 %v4788, -4.0
      %v4853 = vmax.f32 %v4789, -4.0
      %v4854 = vmax.f32 %v4790, -4.0
      %v4855 = vmax.f32 %v4791, -4.0
      %v4856 = vmax.f32 %v4792, -4.0
      %v4857 = vmax.f32 %v4793, -4.0
      %v4858 = vmax.f32 %v4794, -4.0
      %v4859 = vmax.f32 %v4795, -4.0
      %v4860 = vmax.f32 %v4796, -4.0
      %v4861 = vmax.f32 %v4797, -4.0
      %v4862 = vmax.f32 %v4798, -4.0
      %v4863 = vmax.f32 %v4799, -4.0
      %v4864 = vmax.f32 %v4800, -4.0
      %v4865 = vmax.f32 %v4801, -4.0
      %v4866 = vmax.f32 %v4802, -4.0
      %v4867 = vmax.f32 %v4803, -4.0
      %v4868 = vmax.f32 %v4804, -4.0
      %v4869 = vmax.f32 %v4805, -4.0
      %v4870 = vmax.f32 %v4806, -4.0
      %v4871 = vmax.f32 %v4807, -4.0
      %v4872 = vmax.f32 %v4808, -4.0
      %v4873 = vmax.f32 %v4809, -4.0
      %v4874 = vmax.f32 %v4810, -4.0
      %v4875 = vmax.f32 %v4811, -4.0
      %v4876 = vmax.f32 %v4812, -4.0
      %v4877 = vmax.f32 %v4813, -4.0
      %v4878 = vmax.f32 %v4814, -4.0
      %v4879 = vmax.f32 %v4815, -4.0
      %v4880 = vmax.f32 %v4816, -4.0
      %v4881 = vmax.f32 %v4817, -4.0
      %v4882 = vmax.f32 %v4818, -4.0
      %v4883 = vmax.f32 %v4819, -4.0
      %v4884 = vmax.f32 %v4820, -4.0
      %v4885 = vmax.f32 %v4821, -4.0
      %v4886 = vmax.f32 %v4822, -4.0
      %v4887 = vmax.f32 %v4823, -4.0
      %v4888 = vmax.f32 %v4824, -4.0
      %v4889 = vmax.f32 %v4825, -4.0
      %v4890 = vmax.f32 %v4826, -4.0
      %v4891 = vmax.f32 %v4827, -4.0
      %v4892 = vmax.f32 %v4828, -4.0
      %v4893 = vmax.f32 %v4829, -4.0
      %v4894 = vmax.f32 %v4830, -4.0
      %v4895 = vmax.f32 %v4831, -4.0
      %v4896 = vmax.f32 %v4832, -4.0
      %v4897 = vmin.f32 %v4833, 4.0
      %v4898 = vmin.f32 %v4834, 4.0
      %v4899 = vmin.f32 %v4835, 4.0
      %v4900 = vmin.f32 %v4836, 4.0
      %v4901 = vmin.f32 %v4837, 4.0
      %v4902 = vmin.f32 %v4838, 4.0
      %v4903 = vmin.f32 %v4839, 4.0
      %v4904 = vmin.f32 %v4840, 4.0
      %v4905 = vmin.f32 %v4841, 4.0
      %v4906 = vmin.f32 %v4842, 4.0
      %v4907 = vmin.f32 %v4843, 4.0
      %v4908 = vmin.f32 %v4844, 4.0
      %v4909 = vmin.f32 %v4845, 4.0
      %v4910 = vmin.f32 %v4846, 4.0
      %v4911 = vmin.f32 %v4847, 4.0
      %v4912 = vmin.f32 %v4848, 4.0
      %v4913 = vmin.f32 %v4849, 4.0
      %v4914 = vmin.f32 %v4850, 4.0
      %v4915 = vmin.f32 %v4851, 4.0
      %v4916 = vmin.f32 %v4852, 4.0
      %v4917 = vmin.f32 %v4853, 4.0
      %v4918 = vmin.f32 %v4854, 4.0
      %v4919 = vmin.f32 %v4855, 4.0
      %v4920 = vmin.f32 %v4856, 4.0
      %v4921 = vmin.f32 %v4857, 4.0
      %v4922 = vmin.f32 %v4858, 4.0
      %v4923 = vmin.f32 %v4859, 4.0
      %v4924 = vmin.f32 %v4860, 4.0
      %v4925 = vmin.f32 %v4861, 4.0
      %v4926 = vmin.f32 %v4862, 4.0
      %v4927 = vmin.f32 %v4863, 4.0
      %v4928 = vmin.f32 %v4864, 4.0
      %v4929 = vmin.f32 %v4865, 4.0
      %v4930 = vmin.f32 %v4866, 4.0
      %v4931 = vmin.f32 %v4867, 4.0
      %v4932 = vmin.f32 %v4868, 4.0
      %v4933 = vmin.f32 %v4869, 4.0
      %v4934 = vmin.f32 %v4870, 4.0
      %v4935 = vmin.f32 %v4871, 4.0
      %v4936 = vmin.f32 %v4872, 4.0
      %v4937 = vmin.f32 %v4873, 4.0
      %v4938 = vmin.f32 %v4874, 4.0
      %v4939 = vmin.f32 %v4875, 4.0
      %v4940 = vmin.f32 %v4876, 4.0
      %v4941 = vmin.f32 %v4877, 4.0
      %v4942 = vmin.f32 %v4878, 4.0
      %v4943 = vmin.f32 %v4879, 4.0
      %v4944 = vmin.f32 %v4880, 4.0
      %v4945 = vmin.f32 %v4881, 4.0
      %v4946 = vmin.f32 %v4882, 4.0
      %v4947 = vmin.f32 %v4883, 4.0
      %v4948 = vmin.f32 %v4884, 4.0
      %v4949 = vmin.f32 %v4885, 4.0
      %v4950 = vmin.f32 %v4886, 4.0
      %v4951 = vmin.f32 %v4887, 4.0
      %v4952 = vmin.f32 %v4888, 4.0
      %v4953 = vmin.f32 %v4889, 4.0
      %v4954 = vmin.f32 %v4890, 4.0
      %v4955 = vmin.f32 %v4891, 4.0
      %v4956 = vmin.f32 %v4892, 4.0
      %v4957 = vmin.f32 %v4893, 4.0
      %v4958 = vmin.f32 %v4894, 4.0
      %v4959 = vmin.f32 %v4895, 4.0
      %v4960 = vmin.f32 %v4896, 4.0
      %v4961 = vmul.f32 %v4897, %v4897
      %v4962 = vmul.f32 %v4898, %v4898
      %v4963 = vmul.f32 %v4899, %v4899
      %v4964 = vmul.f32 %v4900, %v4900
      %v4965 = vmul.f32 %v4901, %v4901
      %v4966 = vmul.f32 %v4902, %v4902
      %v4967 = vmul.f32 %v4903, %v4903
      %v4968 = vmul.f32 %v4904, %v4904
      %v4969 = vmul.f32 %v4905, %v4905
      %v4970 = vmul.f32 %v4906, %v4906
      %v4971 = vmul.f32 %v4907, %v4907
      %v4972 = vmul.f32 %v4908, %v4908
      %v4973 = vmul.f32 %v4909, %v4909
      %v4974 = vmul.f32 %v4910, %v4910
      %v4975 = vmul.f32 %v4911, %v4911
      %v4976 = vmul.f32 %v4912, %v4912
      %v4977 = vmul.f32 %v4913, %v4913
      %v4978 = vmul.f32 %v4914, %v4914
      %v4979 = vmul.f32 %v4915, %v4915
      %v4980 = vmul.f32 %v4916, %v4916
      %v4981 = vmul.f32 %v4917, %v4917
      %v4982 = vmul.f32 %v4918, %v4918
      %v4983 = vmul.f32 %v4919, %v4919
      %v4984 = vmul.f32 %v4920, %v4920
      %v4985 = vmul.f32 %v4921, %v4921
      %v4986 = vmul.f32 %v4922, %v4922
      %v4987 = vmul.f32 %v4923, %v4923
      %v4988 = vmul.f32 %v4924, %v4924
      %v4989 = vmul.f32 %v4925, %v4925
      %v4990 = vmul.f32 %v4926, %v4926
      %v4991 = vmul.f32 %v4927, %v4927
      %v4992 = vmul.f32 %v4928, %v4928
      %v4993 = vmul.f32 %v4929, %v4929
      %v4994 = vmul.f32 %v4930, %v4930
      %v4995 = vmul.f32 %v4931, %v4931
      %v4996 = vmul.f32 %v4932, %v4932
      %v4997 = vmul.f32 %v4933, %v4933
      %v4998 = vmul.f32 %v4934, %v4934
      %v4999 = vmul.f32 %v4935, %v4935
      %v5000 = vmul.f32 %v4936, %v4936
      %v5001 = vmul.f32 %v4937, %v4937
      %v5002 = vmul.f32 %v4938, %v4938
      %v5003 = vmul.f32 %v4939, %v4939
      %v5004 = vmul.f32 %v4940, %v4940
      %v5005 = vmul.f32 %v4941, %v4941
      %v5006 = vmul.f32 %v4942, %v4942
      %v5007 = vmul.f32 %v4943, %v4943
      %v5008 = vmul.f32 %v4944, %v4944
      %v5009 = vmul.f32 %v4945, %v4945
      %v5010 = vmul.f32 %v4946, %v4946
      %v5011 = vmul.f32 %v4947, %v4947
      %v5012 = vmul.f32 %v4948, %v4948
      %v5013 = vmul.f32 %v4949, %v4949
      %v5014 = vmul.f32 %v4950, %v4950
      %v5015 = vmul.f32 %v4951, %v4951
      %v5016 = vmul.f32 %v4952, %v4952
      %v5017 = vmul.f32 %v4953, %v4953
      %v5018 = vmul.f32 %v4954, %v4954
      %v5019 = vmul.f32 %v4955, %v4955
      %v5020 = vmul.f32 %v4956, %v4956
      %v5021 = vmul.f32 %v4957, %v4957
      %v5022 = vmul.f32 %v4958, %v4958
      %v5023 = vmul.f32 %v4959, %v4959
      %v5024 = vmul.f32 %v4960, %v4960
      %v5025 = vmul.f32 %v4961, -2.7261424e-10
      %v5026 = vmul.f32 %v4962, -2.7261424e-10
      %v5027 = vmul.f32 %v4963, -2.7261424e-10
      %v5028 = vmul.f32 %v4964, -2.7261424e-10
      %v5029 = vmul.f32 %v4965, -2.7261424e-10
      %v5030 = vmul.f32 %v4966, -2.7261424e-10
      %v5031 = vmul.f32 %v4967, -2.7261424e-10
      %v5032 = vmul.f32 %v4968, -2.7261424e-10
      %v5033 = vmul.f32 %v4969, -2.7261424e-10
      %v5034 = vmul.f32 %v4970, -2.7261424e-10
      %v5035 = vmul.f32 %v4971, -2.7261424e-10
      %v5036 = vmul.f32 %v4972, -2.7261424e-10
      %v5037 = vmul.f32 %v4973, -2.7261424e-10
      %v5038 = vmul.f32 %v4974, -2.7261424e-10
      %v5039 = vmul.f32 %v4975, -2.7261424e-10
      %v5040 = vmul.f32 %v4976, -2.7261424e-10
      %v5041 = vmul.f32 %v4977, -2.7261424e-10
      %v5042 = vmul.f32 %v4978, -2.7261424e-10
      %v5043 = vmul.f32 %v4979, -2.7261424e-10
      %v5044 = vmul.f32 %v4980, -2.7261424e-10
      %v5045 = vmul.f32 %v4981, -2.7261424e-10
      %v5046 = vmul.f32 %v4982, -2.7261424e-10
      %v5047 = vmul.f32 %v4983, -2.7261424e-10
      %v5048 = vmul.f32 %v4984, -2.7261424e-10
      %v5049 = vmul.f32 %v4985, -2.7261424e-10
      %v5050 = vmul.f32 %v4986, -2.7261424e-10
      %v5051 = vmul.f32 %v4987, -2.7261424e-10
      %v5052 = vmul.f32 %v4988, -2.7261424e-10
      %v5053 = vmul.f32 %v4989, -2.7261424e-10
      %v5054 = vmul.f32 %v4990, -2.7261424e-10
      %v5055 = vmul.f32 %v4991, -2.7261424e-10
      %v5056 = vmul.f32 %v4992, -2.7261424e-10
      %v5057 = vmul.f32 %v4993, -2.7261424e-10
      %v5058 = vmul.f32 %v4994, -2.7261424e-10
      %v5059 = vmul.f32 %v4995, -2.7261424e-10
      %v5060 = vmul.f32 %v4996, -2.7261424e-10
      %v5061 = vmul.f32 %v4997, -2.7261424e-10
      %v5062 = vmul.f32 %v4998, -2.7261424e-10
      %v5063 = vmul.f32 %v4999, -2.7261424e-10
      %v5064 = vmul.f32 %v5000, -2.7261424e-10
      %v5065 = vmul.f32 %v5001, -2.7261424e-10
      %v5066 = vmul.f32 %v5002, -2.7261424e-10
      %v5067 = vmul.f32 %v5003, -2.7261424e-10
      %v5068 = vmul.f32 %v5004, -2.7261424e-10
      %v5069 = vmul.f32 %v5005, -2.7261424e-10
      %v5070 = vmul.f32 %v5006, -2.7261424e-10
      %v5071 = vmul.f32 %v5007, -2.7261424e-10
      %v5072 = vmul.f32 %v5008, -2.7261424e-10
      %v5073 = vmul.f32 %v5009, -2.7261424e-10
      %v5074 = vmul.f32 %v5010, -2.7261424e-10
      %v5075 = vmul.f32 %v5011, -2.7261424e-10
      %v5076 = vmul.f32 %v5012, -2.7261424e-10
      %v5077 = vmul.f32 %v5013, -2.7261424e-10
      %v5078 = vmul.f32 %v5014, -2.7261424e-10
      %v5079 = vmul.f32 %v5015, -2.7261424e-10
      %v5080 = vmul.f32 %v5016, -2.7261424e-10
      %v5081 = vmul.f32 %v5017, -2.7261424e-10
      %v5082 = vmul.f32 %v5018, -2.7261424e-10
      %v5083 = vmul.f32 %v5019, -2.7261424e-10
      %v5084 = vmul.f32 %v5020, -2.7261424e-10
      %v5085 = vmul.f32 %v5021, -2.7261424e-10
      %v5086 = vmul.f32 %v5022, -2.7261424e-10
      %v5087 = vmul.f32 %v5023, -2.7261424e-10
      %v5088 = vmul.f32 %v5024, -2.7261424e-10
      %v5089 = vadd.f32 %v5025, 2.7706815e-08
      %v5090 = vadd.f32 %v5026, 2.7706815e-08
      %v5091 = vadd.f32 %v5027, 2.7706815e-08
      %v5092 = vadd.f32 %v5028, 2.7706815e-08
      %v5093 = vadd.f32 %v5029, 2.7706815e-08
      %v5094 = vadd.f32 %v5030, 2.7706815e-08
      %v5095 = vadd.f32 %v5031, 2.7706815e-08
      %v5096 = vadd.f32 %v5032, 2.7706815e-08
      %v5097 = vadd.f32 %v5033, 2.7706815e-08
      %v5098 = vadd.f32 %v5034, 2.7706815e-08
      %v5099 = vadd.f32 %v5035, 2.7706815e-08
      %v5100 = vadd.f32 %v5036, 2.7706815e-08
      %v5101 = vadd.f32 %v5037, 2.7706815e-08
      %v5102 = vadd.f32 %v5038, 2.7706815e-08
      %v5103 = vadd.f32 %v5039, 2.7706815e-08
      %v5104 = vadd.f32 %v5040, 2.7706815e-08
      %v5105 = vadd.f32 %v5041, 2.7706815e-08
      %v5106 = vadd.f32 %v5042, 2.7706815e-08
      %v5107 = vadd.f32 %v5043, 2.7706815e-08
      %v5108 = vadd.f32 %v5044, 2.7706815e-08
      %v5109 = vadd.f32 %v5045, 2.7706815e-08
      %v5110 = vadd.f32 %v5046, 2.7706815e-08
      %v5111 = vadd.f32 %v5047, 2.7706815e-08
      %v5112 = vadd.f32 %v5048, 2.7706815e-08
      %v5113 = vadd.f32 %v5049, 2.7706815e-08
      %v5114 = vadd.f32 %v5050, 2.7706815e-08
      %v5115 = vadd.f32 %v5051, 2.7706815e-08
      %v5116 = vadd.f32 %v5052, 2.7706815e-08
      %v5117 = vadd.f32 %v5053, 2.7706815e-08
      %v5118 = vadd.f32 %v5054, 2.7706815e-08
      %v5119 = vadd.f32 %v5055, 2.7706815e-08
      %v5120 = vadd.f32 %v5056, 2.7706815e-08
      %v5121 = vadd.f32 %v5057, 2.7706815e-08
      %v5122 = vadd.f32 %v5058, 2.7706815e-08
      %v5123 = vadd.f32 %v5059, 2.7706815e-08
      %v5124 = vadd.f32 %v5060, 2.7706815e-08
      %v5125 = vadd.f32 %v5061, 2.7706815e-08
      %v5126 = vadd.f32 %v5062, 2.7706815e-08
      %v5127 = vadd.f32 %v5063, 2.7706815e-08
      %v5128 = vadd.f32 %v5064, 2.7706815e-08
      %v5129 = vadd.f32 %v5065, 2.7706815e-08
      %v5130 = vadd.f32 %v5066, 2.7706815e-08
      %v5131 = vadd.f32 %v5067, 2.7706815e-08
      %v5132 = vadd.f32 %v5068, 2.7706815e-08
      %v5133 = vadd.f32 %v5069, 2.7706815e-08
      %v5134 = vadd.f32 %v5070, 2.7706815e-08
      %v5135 = vadd.f32 %v5071, 2.7706815e-08
      %v5136 = vadd.f32 %v5072, 2.7706815e-08
      %v5137 = vadd.f32 %v5073, 2.7706815e-08
      %v5138 = vadd.f32 %v5074, 2.7706815e-08
      %v5139 = vadd.f32 %v5075, 2.7706815e-08
      %v5140 = vadd.f32 %v5076, 2.7706815e-08
      %v5141 = vadd.f32 %v5077, 2.7706815e-08
      %v5142 = vadd.f32 %v5078, 2.7706815e-08
      %v5143 = vadd.f32 %v5079, 2.7706815e-08
      %v5144 = vadd.f32 %v5080, 2.7706815e-08
      %v5145 = vadd.f32 %v5081, 2.7706815e-08
      %v5146 = vadd.f32 %v5082, 2.7706815e-08
      %v5147 = vadd.f32 %v5083, 2.7706815e-08
      %v5148 = vadd.f32 %v5084, 2.7706815e-08
      %v5149 = vadd.f32 %v5085, 2.7706815e-08
      %v5150 = vadd.f32 %v5086, 2.7706815e-08
      %v5151 = vadd.f32 %v5087, 2.7706815e-08
      %v5152 = vadd.f32 %v5088, 2.7706815e-08
      %v5153 = vmul.f32 %v5089, %v4961
      %v5154 = vmul.f32 %v5090, %v4962
      %v5155 = vmul.f32 %v5091, %v4963
      %v5156 = vmul.f32 %v5092, %v4964
      %v5157 = vmul.f32 %v5093, %v4965
      %v5158 = vmul.f32 %v5094, %v4966
      %v5159 = vmul.f32 %v5095, %v4967
      %v5160 = vmul.f32 %v5096, %v4968
      %v5161 = vmul.f32 %v5097, %v4969
      %v5162 = vmul.f32 %v5098, %v4970
      %v5163 = vmul.f32 %v5099, %v4971
      %v5164 = vmul.f32 %v5100, %v4972
      %v5165 = vmul.f32 %v5101, %v4973
      %v5166 = vmul.f32 %v5102, %v4974
      %v5167 = vmul.f32 %v5103, %v4975
      %v5168 = vmul.f32 %v5104, %v4976
      %v5169 = vmul.f32 %v5105, %v4977
      %v5170 = vmul.f32 %v5106, %v4978
      %v5171 = vmul.f32 %v5107, %v4979
      %v5172 = vmul.f32 %v5108, %v4980
      %v5173 = vmul.f32 %v5109, %v4981
      %v5174 = vmul.f32 %v5110, %v4982
      %v5175 = vmul.f32 %v5111, %v4983
      %v5176 = vmul.f32 %v5112, %v4984
      %v5177 = vmul.f32 %v5113, %v4985
      %v5178 = vmul.f32 %v5114, %v4986
      %v5179 = vmul.f32 %v5115, %v4987
      %v5180 = vmul.f32 %v5116, %v4988
      %v5181 = vmul.f32 %v5117, %v4989
      %v5182 = vmul.f32 %v5118, %v4990
      %v5183 = vmul.f32 %v5119, %v4991
      %v5184 = vmul.f32 %v5120, %v4992
      %v5185 = vmul.f32 %v5121, %v4993
      %v5186 = vmul.f32 %v5122, %v4994
      %v5187 = vmul.f32 %v5123, %v4995
      %v5188 = vmul.f32 %v5124, %v4996
      %v5189 = vmul.f32 %v5125, %v4997
      %v5190 = vmul.f32 %v5126, %v4998
      %v5191 = vmul.f32 %v5127, %v4999
      %v5192 = vmul.f32 %v5128, %v5000
      %v5193 = vmul.f32 %v5129, %v5001
      %v5194 = vmul.f32 %v5130, %v5002
      %v5195 = vmul.f32 %v5131, %v5003
      %v5196 = vmul.f32 %v5132, %v5004
      %v5197 = vmul.f32 %v5133, %v5005
      %v5198 = vmul.f32 %v5134, %v5006
      %v5199 = vmul.f32 %v5135, %v5007
      %v5200 = vmul.f32 %v5136, %v5008
      %v5201 = vmul.f32 %v5137, %v5009
      %v5202 = vmul.f32 %v5138, %v5010
      %v5203 = vmul.f32 %v5139, %v5011
      %v5204 = vmul.f32 %v5140, %v5012
      %v5205 = vmul.f32 %v5141, %v5013
      %v5206 = vmul.f32 %v5142, %v5014
      %v5207 = vmul.f32 %v5143, %v5015
      %v5208 = vmul.f32 %v5144, %v5016
      %v5209 = vmul.f32 %v5145, %v5017
      %v5210 = vmul.f32 %v5146, %v5018
      %v5211 = vmul.f32 %v5147, %v5019
      %v5212 = vmul.f32 %v5148, %v5020
      %v5213 = vmul.f32 %v5149, %v5021
      %v5214 = vmul.f32 %v5150, %v5022
      %v5215 = vmul.f32 %v5151, %v5023
      %v5216 = vmul.f32 %v5152, %v5024
      %v5217 = vadd.f32 %v5153, -2.101024e-06
      %v5218 = vadd.f32 %v5154, -2.101024e-06
      %v5219 = vadd.f32 %v5155, -2.101024e-06
      %v5220 = vadd.f32 %v5156, -2.101024e-06
      %v5221 = vadd.f32 %v5157, -2.101024e-06
      %v5222 = vadd.f32 %v5158, -2.101024e-06
      %v5223 = vadd.f32 %v5159, -2.101024e-06
      %v5224 = vadd.f32 %v5160, -2.101024e-06
      %v5225 = vadd.f32 %v5161, -2.101024e-06
      %v5226 = vadd.f32 %v5162, -2.101024e-06
      %v5227 = vadd.f32 %v5163, -2.101024e-06
      %v5228 = vadd.f32 %v5164, -2.101024e-06
      %v5229 = vadd.f32 %v5165, -2.101024e-06
      %v5230 = vadd.f32 %v5166, -2.101024e-06
      %v5231 = vadd.f32 %v5167, -2.101024e-06
      %v5232 = vadd.f32 %v5168, -2.101024e-06
      %v5233 = vadd.f32 %v5169, -2.101024e-06
      %v5234 = vadd.f32 %v5170, -2.101024e-06
      %v5235 = vadd.f32 %v5171, -2.101024e-06
      %v5236 = vadd.f32 %v5172, -2.101024e-06
      %v5237 = vadd.f32 %v5173, -2.101024e-06
      %v5238 = vadd.f32 %v5174, -2.101024e-06
      %v5239 = vadd.f32 %v5175, -2.101024e-06
      %v5240 = vadd.f32 %v5176, -2.101024e-06
      %v5241 = vadd.f32 %v5177, -2.101024e-06
      %v5242 = vadd.f32 %v5178, -2.101024e-06
      %v5243 = vadd.f32 %v5179, -2.101024e-06
      %v5244 = vadd.f32 %v5180, -2.101024e-06
      %v5245 = vadd.f32 %v5181, -2.101024e-06
      %v5246 = vadd.f32 %v5182, -2.101024e-06
      %v5247 = vadd.f32 %v5183, -2.101024e-06
      %v5248 = vadd.f32 %v5184, -2.101024e-06
      %v5249 = vadd.f32 %v5185, -2.101024e-06
      %v5250 = vadd.f32 %v5186, -2.101024e-06
      %v5251 = vadd.f32 %v5187, -2.101024e-06
      %v5252 = vadd.f32 %v5188, -2.101024e-06
      %v5253 = vadd.f32 %v5189, -2.101024e-06
      %v5254 = vadd.f32 %v5190, -2.101024e-06
      %v5255 = vadd.f32 %v5191, -2.101024e-06
      %v5256 = vadd.f32 %v5192, -2.101024e-06
      %v5257 = vadd.f32 %v5193, -2.101024e-06
      %v5258 = vadd.f32 %v5194, -2.101024e-06
      %v5259 = vadd.f32 %v5195, -2.101024e-06
      %v5260 = vadd.f32 %v5196, -2.101024e-06
      %v5261 = vadd.f32 %v5197, -2.101024e-06
      %v5262 = vadd.f32 %v5198, -2.101024e-06
      %v5263 = vadd.f32 %v5199, -2.101024e-06
      %v5264 = vadd.f32 %v5200, -2.101024e-06
      %v5265 = vadd.f32 %v5201, -2.101024e-06
      %v5266 = vadd.f32 %v5202, -2.101024e-06
      %v5267 = vadd.f32 %v5203, -2.101024e-06
      %v5268 = vadd.f32 %v5204, -2.101024e-06
      %v5269 = vadd.f32 %v5205, -2.101024e-06
      %v5270 = vadd.f32 %v5206, -2.101024e-06
      %v5271 = vadd.f32 %v5207, -2.101024e-06
      %v5272 = vadd.f32 %v5208, -2.101024e-06
      %v5273 = vadd.f32 %v5209, -2.101024e-06
      %v5274 = vadd.f32 %v5210, -2.101024e-06
      %v5275 = vadd.f32 %v5211, -2.101024e-06
      %v5276 = vadd.f32 %v5212, -2.101024e-06
      %v5277 = vadd.f32 %v5213, -2.101024e-06
      %v5278 = vadd.f32 %v5214, -2.101024e-06
      %v5279 = vadd.f32 %v5215, -2.101024e-06
      %v5280 = vadd.f32 %v5216, -2.101024e-06
      %v5281 = vmul.f32 %v5217, %v4961
      %v5282 = vmul.f32 %v5218, %v4962
      %v5283 = vmul.f32 %v5219, %v4963
      %v5284 = vmul.f32 %v5220, %v4964
      %v5285 = vmul.f32 %v5221, %v4965
      %v5286 = vmul.f32 %v5222, %v4966
      %v5287 = vmul.f32 %v5223, %v4967
      %v5288 = vmul.f32 %v5224, %v4968
      %v5289 = vmul.f32 %v5225, %v4969
      %v5290 = vmul.f32 %v5226, %v4970
      %v5291 = vmul.f32 %v5227, %v4971
      %v5292 = vmul.f32 %v5228, %v4972
      %v5293 = vmul.f32 %v5229, %v4973
      %v5294 = vmul.f32 %v5230, %v4974
      %v5295 = vmul.f32 %v5231, %v4975
      %v5296 = vmul.f32 %v5232, %v4976
      %v5297 = vmul.f32 %v5233, %v4977
      %v5298 = vmul.f32 %v5234, %v4978
      %v5299 = vmul.f32 %v5235, %v4979
      %v5300 = vmul.f32 %v5236, %v4980
      %v5301 = vmul.f32 %v5237, %v4981
      %v5302 = vmul.f32 %v5238, %v4982
      %v5303 = vmul.f32 %v5239, %v4983
      %v5304 = vmul.f32 %v5240, %v4984
      %v5305 = vmul.f32 %v5241, %v4985
      %v5306 = vmul.f32 %v5242, %v4986
      %v5307 = vmul.f32 %v5243, %v4987
      %v5308 = vmul.f32 %v5244, %v4988
      %v5309 = vmul.f32 %v5245, %v4989
      %v5310 = vmul.f32 %v5246, %v4990
      %v5311 = vmul.f32 %v5247, %v4991
      %v5312 = vmul.f32 %v5248, %v4992
      %v5313 = vmul.f32 %v5249, %v4993
      %v5314 = vmul.f32 %v5250, %v4994
      %v5315 = vmul.f32 %v5251, %v4995
      %v5316 = vmul.f32 %v5252, %v4996
      %v5317 = vmul.f32 %v5253, %v4997
      %v5318 = vmul.f32 %v5254, %v4998
      %v5319 = vmul.f32 %v5255, %v4999
      %v5320 = vmul.f32 %v5256, %v5000
      %v5321 = vmul.f32 %v5257, %v5001
      %v5322 = vmul.f32 %v5258, %v5002
      %v5323 = vmul.f32 %v5259, %v5003
      %v5324 = vmul.f32 %v5260, %v5004
      %v5325 = vmul.f32 %v5261, %v5005
      %v5326 = vmul.f32 %v5262, %v5006
      %v5327 = vmul.f32 %v5263, %v5007
      %v5328 = vmul.f32 %v5264, %v5008
      %v5329 = vmul.f32 %v5265, %v5009
      %v5330 = vmul.f32 %v5266, %v5010
      %v5331 = vmul.f32 %v5267, %v5011
      %v5332 = vmul.f32 %v5268, %v5012
      %v5333 = vmul.f32 %v5269, %v5013
      %v5334 = vmul.f32 %v5270, %v5014
      %v5335 = vmul.f32 %v5271, %v5015
      %v5336 = vmul.f32 %v5272, %v5016
      %v5337 = vmul.f32 %v5273, %v5017
      %v5338 = vmul.f32 %v5274, %v5018
      %v5339 = vmul.f32 %v5275, %v5019
      %v5340 = vmul.f32 %v5276, %v5020
      %v5341 = vmul.f32 %v5277, %v5021
      %v5342 = vmul.f32 %v5278, %v5022
      %v5343 = vmul.f32 %v5279, %v5023
      %v5344 = vmul.f32 %v5280, %v5024
      %v5345 = vadd.f32 %v5281, -5.6925062e-05
      %v5346 = vadd.f32 %v5282, -5.6925062e-05
      %v5347 = vadd.f32 %v5283, -5.6925062e-05
      %v5348 = vadd.f32 %v5284, -5.6925062e-05
      %v5349 = vadd.f32 %v5285, -5.6925062e-05
      %v5350 = vadd.f32 %v5286, -5.6925062e-05
      %v5351 = vadd.f32 %v5287, -5.6925062e-05
      %v5352 = vadd.f32 %v5288, -5.6925062e-05
      %v5353 = vadd.f32 %v5289, -5.6925062e-05
      %v5354 = vadd.f32 %v5290, -5.6925062e-05
      %v5355 = vadd.f32 %v5291, -5.6925062e-05
      %v5356 = vadd.f32 %v5292, -5.6925062e-05
      %v5357 = vadd.f32 %v5293, -5.6925062e-05
      %v5358 = vadd.f32 %v5294, -5.6925062e-05
      %v5359 = vadd.f32 %v5295, -5.6925062e-05
      %v5360 = vadd.f32 %v5296, -5.6925062e-05
      %v5361 = vadd.f32 %v5297, -5.6925062e-05
      %v5362 = vadd.f32 %v5298, -5.6925062e-05
      %v5363 = vadd.f32 %v5299, -5.6925062e-05
      %v5364 = vadd.f32 %v5300, -5.6925062e-05
      %v5365 = vadd.f32 %v5301, -5.6925062e-05
      %v5366 = vadd.f32 %v5302, -5.6925062e-05
      %v5367 = vadd.f32 %v5303, -5.6925062e-05
      %v5368 = vadd.f32 %v5304, -5.6925062e-05
      %v5369 = vadd.f32 %v5305, -5.6925062e-05
      %v5370 = vadd.f32 %v5306, -5.6925062e-05
      %v5371 = vadd.f32 %v5307, -5.6925062e-05
      %v5372 = vadd.f32 %v5308, -5.6925062e-05
      %v5373 = vadd.f32 %v5309, -5.6925062e-05
      %v5374 = vadd.f32 %v5310, -5.6925062e-05
      %v5375 = vadd.f32 %v5311, -5.6925062e-05
      %v5376 = vadd.f32 %v5312, -5.6925062e-05
      %v5377 = vadd.f32 %v5313, -5.6925062e-05
      %v5378 = vadd.f32 %v5314, -5.6925062e-05
      %v5379 = vadd.f32 %v5315, -5.6925062e-05
      %v5380 = vadd.f32 %v5316, -5.6925062e-05
      %v5381 = vadd.f32 %v5317, -5.6925062e-05
      %v5382 = vadd.f32 %v5318, -5.6925062e-05
      %v5383 = vadd.f32 %v5319, -5.6925062e-05
      %v5384 = vadd.f32 %v5320, -5.6925062e-05
      %v5385 = vadd.f32 %v5321, -5.6925062e-05
      %v5386 = vadd.f32 %v5322, -5.6925062e-05
      %v5387 = vadd.f32 %v5323, -5.6925062e-05
      %v5388 = vadd.f32 %v5324, -5.6925062e-05
      %v5389 = vadd.f32 %v5325, -5.6925062e-05
      %v5390 = vadd.f32 %v5326, -5.6925062e-05
      %v5391 = vadd.f32 %v5327, -5.6925062e-05
      %v5392 = vadd.f32 %v5328, -5.6925062e-05
      %v5393 = vadd.f32 %v5329, -5.6925062e-05
      %v5394 = vadd.f32 %v5330, -5.6925062e-05
      %v5395 = vadd.f32 %v5331, -5.6925062e-05
      %v5396 = vadd.f32 %v5332, -5.6925062e-05
      %v5397 = vadd.f32 %v5333, -5.6925062e-05
      %v5398 = vadd.f32 %v5334, -5.6925062e-05
      %v5399 = vadd.f32 %v5335, -5.6925062e-05
      %v5400 = vadd.f32 %v5336, -5.6925062e-05
      %v5401 = vadd.f32 %v5337, -5.6925062e-05
      %v5402 = vadd.f32 %v5338, -5.6925062e-05
      %v5403 = vadd.f32 %v5339, -5.6925062e-05
      %v5404 = vadd.f32 %v5340, -5.6925062e-05
      %v5405 = vadd.f32 %v5341, -5.6925062e-05
      %v5406 = vadd.f32 %v5342, -5.6925062e-05
      %v5407 = vadd.f32 %v5343, -5.6925062e-05
      %v5408 = vadd.f32 %v5344, -5.6925062e-05
      %v5409 = vmul.f32 %v5345, %v4961
      %v5410 = vmul.f32 %v5346, %v4962
      %v5411 = vmul.f32 %v5347, %v4963
      %v5412 = vmul.f32 %v5348, %v4964
      %v5413 = vmul.f32 %v5349, %v4965
      %v5414 = vmul.f32 %v5350, %v4966
      %v5415 = vmul.f32 %v5351, %v4967
      %v5416 = vmul.f32 %v5352, %v4968
      %v5417 = vmul.f32 %v5353, %v4969
      %v5418 = vmul.f32 %v5354, %v4970
      %v5419 = vmul.f32 %v5355, %v4971
      %v5420 = vmul.f32 %v5356, %v4972
      %v5421 = vmul.f32 %v5357, %v4973
      %v5422 = vmul.f32 %v5358, %v4974
      %v5423 = vmul.f32 %v5359, %v4975
      %v5424 = vmul.f32 %v5360, %v4976
      %v5425 = vmul.f32 %v5361, %v4977
      %v5426 = vmul.f32 %v5362, %v4978
      %v5427 = vmul.f32 %v5363, %v4979
      %v5428 = vmul.f32 %v5364, %v4980
      %v5429 = vmul.f32 %v5365, %v4981
      %v5430 = vmul.f32 %v5366, %v4982
      %v5431 = vmul.f32 %v5367, %v4983
      %v5432 = vmul.f32 %v5368, %v4984
      %v5433 = vmul.f32 %v5369, %v4985
      %v5434 = vmul.f32 %v5370, %v4986
      %v5435 = vmul.f32 %v5371, %v4987
      %v5436 = vmul.f32 %v5372, %v4988
      %v5437 = vmul.f32 %v5373, %v4989
      %v5438 = vmul.f32 %v5374, %v4990
      %v5439 = vmul.f32 %v5375, %v4991
      %v5440 = vmul.f32 %v5376, %v4992
      %v5441 = vmul.f32 %v5377, %v4993
      %v5442 = vmul.f32 %v5378, %v4994
      %v5443 = vmul.f32 %v5379, %v4995
      %v5444 = vmul.f32 %v5380, %v4996
      %v5445 = vmul.f32 %v5381, %v4997
      %v5446 = vmul.f32 %v5382, %v4998
      %v5447 = vmul.f32 %v5383, %v4999
      %v5448 = vmul.f32 %v5384, %v5000
      %v5449 = vmul.f32 %v5385, %v5001
      %v5450 = vmul.f32 %v5386, %v5002
      %v5451 = vmul.f32 %v5387, %v5003
      %v5452 = vmul.f32 %v5388, %v5004
      %v5453 = vmul.f32 %v5389, %v5005
      %v5454 = vmul.f32 %v5390, %v5006
      %v5455 = vmul.f32 %v5391, %v5007
      %v5456 = vmul.f32 %v5392, %v5008
      %v5457 = vmul.f32 %v5393, %v5009
      %v5458 = vmul.f32 %v5394, %v5010
      %v5459 = vmul.f32 %v5395, %v5011
      %v5460 = vmul.f32 %v5396, %v5012
      %v5461 = vmul.f32 %v5397, %v5013
      %v5462 = vmul.f32 %v5398, %v5014
      %v5463 = vmul.f32 %v5399, %v5015
      %v5464 = vmul.f32 %v5400, %v5016
      %v5465 = vmul.f32 %v5401, %v5017
      %v5466 = vmul.f32 %v5402, %v5018
      %v5467 = vmul.f32 %v5403, %v5019
      %v5468 = vmul.f32 %v5404, %v5020
      %v5469 = vmul.f32 %v5405, %v5021
      %v5470 = vmul.f32 %v5406, %v5022
      %v5471 = vmul.f32 %v5407, %v5023
      %v5472 = vmul.f32 %v5408, %v5024
      %v5473 = vadd.f32 %v5409, -0.00073499064
      %v5474 = vadd.f32 %v5410, -0.00073499064
      %v5475 = vadd.f32 %v5411, -0.00073499064
      %v5476 = vadd.f32 %v5412, -0.00073499064
      %v5477 = vadd.f32 %v5413, -0.00073499064
      %v5478 = vadd.f32 %v5414, -0.00073499064
      %v5479 = vadd.f32 %v5415, -0.00073499064
      %v5480 = vadd.f32 %v5416, -0.00073499064
      %v5481 = vadd.f32 %v5417, -0.00073499064
      %v5482 = vadd.f32 %v5418, -0.00073499064
      %v5483 = vadd.f32 %v5419, -0.00073499064
      %v5484 = vadd.f32 %v5420, -0.00073499064
      %v5485 = vadd.f32 %v5421, -0.00073499064
      %v5486 = vadd.f32 %v5422, -0.00073499064
      %v5487 = vadd.f32 %v5423, -0.00073499064
      %v5488 = vadd.f32 %v5424, -0.00073499064
      %v5489 = vadd.f32 %v5425, -0.00073499064
      %v5490 = vadd.f32 %v5426, -0.00073499064
      %v5491 = vadd.f32 %v5427, -0.00073499064
      %v5492 = vadd.f32 %v5428, -0.00073499064
      %v5493 = vadd.f32 %v5429, -0.00073499064
      %v5494 = vadd.f32 %v5430, -0.00073499064
      %v5495 = vadd.f32 %v5431, -0.00073499064
      %v5496 = vadd.f32 %v5432, -0.00073499064
      %v5497 = vadd.f32 %v5433, -0.00073499064
      %v5498 = vadd.f32 %v5434, -0.00073499064
      %v5499 = vadd.f32 %v5435, -0.00073499064
      %v5500 = vadd.f32 %v5436, -0.00073499064
      %v5501 = vadd.f32 %v5437, -0.00073499064
      %v5502 = vadd.f32 %v5438, -0.00073499064
      %v5503 = vadd.f32 %v5439, -0.00073499064
      %v5504 = vadd.f32 %v5440, -0.00073499064
      %v5505 = vadd.f32 %v5441, -0.00073499064
      %v5506 = vadd.f32 %v5442, -0.00073499064
      %v5507 = vadd.f32 %v5443, -0.00073499064
      %v5508 = vadd.f32 %v5444, -0.00073499064
      %v5509 = vadd.f32 %v5445, -0.00073499064
      %v5510 = vadd.f32 %v5446, -0.00073499064
      %v5511 = vadd.f32 %v5447, -0.00073499064
      %v5512 = vadd.f32 %v5448, -0.00073499064
      %v5513 = vadd.f32 %v5449, -0.00073499064
      %v5514 = vadd.f32 %v5450, -0.00073499064
      %v5515 = vadd.f32 %v5451, -0.00073499064
      %v5516 = vadd.f32 %v5452, -0.00073499064
      %v5517 = vadd.f32 %v5453, -0.00073499064
      %v5518 = vadd.f32 %v5454, -0.00073499064
      %v5519 = vadd.f32 %v5455, -0.00073499064
      %v5520 = vadd.f32 %v5456, -0.00073499064
      %v5521 = vadd.f32 %v5457, -0.00073499064
      %v5522 = vadd.f32 %v5458, -0.00073499064
      %v5523 = vadd.f32 %v5459, -0.00073499064
      %v5524 = vadd.f32 %v5460, -0.00073499064
      %v5525 = vadd.f32 %v5461, -0.00073499064
      %v5526 = vadd.f32 %v5462, -0.00073499064
      %v5527 = vadd.f32 %v5463, -0.00073499064
      %v5528 = vadd.f32 %v5464, -0.00073499064
      %v5529 = vadd.f32 %v5465, -0.00073499064
      %v5530 = vadd.f32 %v5466, -0.00073499064
      %v5531 = vadd.f32 %v5467, -0.00073499064
      %v5532 = vadd.f32 %v5468, -0.00073499064
      %v5533 = vadd.f32 %v5469, -0.00073499064
      %v5534 = vadd.f32 %v5470, -0.00073499064
      %v5535 = vadd.f32 %v5471, -0.00073499064
      %v5536 = vadd.f32 %v5472, -0.00073499064
      %v5537 = vmul.f32 %v5473, %v4961
      %v5538 = vmul.f32 %v5474, %v4962
      %v5539 = vmul.f32 %v5475, %v4963
      %v5540 = vmul.f32 %v5476, %v4964
      %v5541 = vmul.f32 %v5477, %v4965
      %v5542 = vmul.f32 %v5478, %v4966
      %v5543 = vmul.f32 %v5479, %v4967
      %v5544 = vmul.f32 %v5480, %v4968
      %v5545 = vmul.f32 %v5481, %v4969
      %v5546 = vmul.f32 %v5482, %v4970
      %v5547 = vmul.f32 %v5483, %v4971
      %v5548 = vmul.f32 %v5484, %v4972
      %v5549 = vmul.f32 %v5485, %v4973
      %v5550 = vmul.f32 %v5486, %v4974
      %v5551 = vmul.f32 %v5487, %v4975
      %v5552 = vmul.f32 %v5488, %v4976
      %v5553 = vmul.f32 %v5489, %v4977
      %v5554 = vmul.f32 %v5490, %v4978
      %v5555 = vmul.f32 %v5491, %v4979
      %v5556 = vmul.f32 %v5492, %v4980
      %v5557 = vmul.f32 %v5493, %v4981
      %v5558 = vmul.f32 %v5494, %v4982
      %v5559 = vmul.f32 %v5495, %v4983
      %v5560 = vmul.f32 %v5496, %v4984
      %v5561 = vmul.f32 %v5497, %v4985
      %v5562 = vmul.f32 %v5498, %v4986
      %v5563 = vmul.f32 %v5499, %v4987
      %v5564 = vmul.f32 %v5500, %v4988
      %v5565 = vmul.f32 %v5501, %v4989
      %v5566 = vmul.f32 %v5502, %v4990
      %v5567 = vmul.f32 %v5503, %v4991
      %v5568 = vmul.f32 %v5504, %v4992
      %v5569 = vmul.f32 %v5505, %v4993
      %v5570 = vmul.f32 %v5506, %v4994
      %v5571 = vmul.f32 %v5507, %v4995
      %v5572 = vmul.f32 %v5508, %v4996
      %v5573 = vmul.f32 %v5509, %v4997
      %v5574 = vmul.f32 %v5510, %v4998
      %v5575 = vmul.f32 %v5511, %v4999
      %v5576 = vmul.f32 %v5512, %v5000
      %v5577 = vmul.f32 %v5513, %v5001
      %v5578 = vmul.f32 %v5514, %v5002
      %v5579 = vmul.f32 %v5515, %v5003
      %v5580 = vmul.f32 %v5516, %v5004
      %v5581 = vmul.f32 %v5517, %v5005
      %v5582 = vmul.f32 %v5518, %v5006
      %v5583 = vmul.f32 %v5519, %v5007
      %v5584 = vmul.f32 %v5520, %v5008
      %v5585 = vmul.f32 %v5521, %v5009
      %v5586 = vmul.f32 %v5522, %v5010
      %v5587 = vmul.f32 %v5523, %v5011
      %v5588 = vmul.f32 %v5524, %v5012
      %v5589 = vmul.f32 %v5525, %v5013
      %v5590 = vmul.f32 %v5526, %v5014
      %v5591 = vmul.f32 %v5527, %v5015
      %v5592 = vmul.f32 %v5528, %v5016
      %v5593 = vmul.f32 %v5529, %v5017
      %v5594 = vmul.f32 %v5530, %v5018
      %v5595 = vmul.f32 %v5531, %v5019
      %v5596 = vmul.f32 %v5532, %v5020
      %v5597 = vmul.f32 %v5533, %v5021
      %v5598 = vmul.f32 %v5534, %v5022
      %v5599 = vmul.f32 %v5535, %v5023
      %v5600 = vmul.f32 %v5536, %v5024
      %v5601 = vadd.f32 %v5537, -0.0029546
      %v5602 = vadd.f32 %v5538, -0.0029546
      %v5603 = vadd.f32 %v5539, -0.0029546
      %v5604 = vadd.f32 %v5540, -0.0029546
      %v5605 = vadd.f32 %v5541, -0.0029546
      %v5606 = vadd.f32 %v5542, -0.0029546
      %v5607 = vadd.f32 %v5543, -0.0029546
      %v5608 = vadd.f32 %v5544, -0.0029546
      %v5609 = vadd.f32 %v5545, -0.0029546
      %v5610 = vadd.f32 %v5546, -0.0029546
      %v5611 = vadd.f32 %v5547, -0.0029546
      %v5612 = vadd.f32 %v5548, -0.0029546
      %v5613 = vadd.f32 %v5549, -0.0029546
      %v5614 = vadd.f32 %v5550, -0.0029546
      %v5615 = vadd.f32 %v5551, -0.0029546
      %v5616 = vadd.f32 %v5552, -0.0029546
      %v5617 = vadd.f32 %v5553, -0.0029546
      %v5618 = vadd.f32 %v5554, -0.0029546
      %v5619 = vadd.f32 %v5555, -0.0029546
      %v5620 = vadd.f32 %v5556, -0.0029546
      %v5621 = vadd.f32 %v5557, -0.0029546
      %v5622 = vadd.f32 %v5558, -0.0029546
      %v5623 = vadd.f32 %v5559, -0.0029546
      %v5624 = vadd.f32 %v5560, -0.0029546
      %v5625 = vadd.f32 %v5561, -0.0029546
      %v5626 = vadd.f32 %v5562, -0.0029546
      %v5627 = vadd.f32 %v5563, -0.0029546
      %v5628 = vadd.f32 %v5564, -0.0029546
      %v5629 = vadd.f32 %v5565, -0.0029546
      %v5630 = vadd.f32 %v5566, -0.0029546
      %v5631 = vadd.f32 %v5567, -0.0029546
      %v5632 = vadd.f32 %v5568, -0.0029546
      %v5633 = vadd.f32 %v5569, -0.0029546
      %v5634 = vadd.f32 %v5570, -0.0029546
      %v5635 = vadd.f32 %v5571, -0.0029546
      %v5636 = vadd.f32 %v5572, -0.0029546
      %v5637 = vadd.f32 %v5573, -0.0029546
      %v5638 = vadd.f32 %v5574, -0.0029546
      %v5639 = vadd.f32 %v5575, -0.0029546
      %v5640 = vadd.f32 %v5576, -0.0029546
      %v5641 = vadd.f32 %v5577, -0.0029546
      %v5642 = vadd.f32 %v5578, -0.0029546
      %v5643 = vadd.f32 %v5579, -0.0029546
      %v5644 = vadd.f32 %v5580, -0.0029546
      %v5645 = vadd.f32 %v5581, -0.0029546
      %v5646 = vadd.f32 %v5582, -0.0029546
      %v5647 = vadd.f32 %v5583, -0.0029546
      %v5648 = vadd.f32 %v5584, -0.0029546
      %v5649 = vadd.f32 %v5585, -0.0029546
      %v5650 = vadd.f32 %v5586, -0.0029546
      %v5651 = vadd.f32 %v5587, -0.0029546
      %v5652 = vadd.f32 %v5588, -0.0029546
      %v5653 = vadd.f32 %v5589, -0.0029546
      %v5654 = vadd.f32 %v5590, -0.0029546
      %v5655 = vadd.f32 %v5591, -0.0029546
      %v5656 = vadd.f32 %v5592, -0.0029546
      %v5657 = vadd.f32 %v5593, -0.0029546
      %v5658 = vadd.f32 %v5594, -0.0029546
      %v5659 = vadd.f32 %v5595, -0.0029546
      %v5660 = vadd.f32 %v5596, -0.0029546
      %v5661 = vadd.f32 %v5597, -0.0029546
      %v5662 = vadd.f32 %v5598, -0.0029546
      %v5663 = vadd.f32 %v5599, -0.0029546
      %v5664 = vadd.f32 %v5600, -0.0029546
      %v5665 = vmul.f32 %v5601, %v4961
      %v5666 = vmul.f32 %v5602, %v4962
      %v5667 = vmul.f32 %v5603, %v4963
      %v5668 = vmul.f32 %v5604, %v4964
      %v5669 = vmul.f32 %v5605, %v4965
      %v5670 = vmul.f32 %v5606, %v4966
      %v5671 = vmul.f32 %v5607, %v4967
      %v5672 = vmul.f32 %v5608, %v4968
      %v5673 = vmul.f32 %v5609, %v4969
      %v5674 = vmul.f32 %v5610, %v4970
      %v5675 = vmul.f32 %v5611, %v4971
      %v5676 = vmul.f32 %v5612, %v4972
      %v5677 = vmul.f32 %v5613, %v4973
      %v5678 = vmul.f32 %v5614, %v4974
      %v5679 = vmul.f32 %v5615, %v4975
      %v5680 = vmul.f32 %v5616, %v4976
      %v5681 = vmul.f32 %v5617, %v4977
      %v5682 = vmul.f32 %v5618, %v4978
      %v5683 = vmul.f32 %v5619, %v4979
      %v5684 = vmul.f32 %v5620, %v4980
      %v5685 = vmul.f32 %v5621, %v4981
      %v5686 = vmul.f32 %v5622, %v4982
      %v5687 = vmul.f32 %v5623, %v4983
      %v5688 = vmul.f32 %v5624, %v4984
      %v5689 = vmul.f32 %v5625, %v4985
      %v5690 = vmul.f32 %v5626, %v4986
      %v5691 = vmul.f32 %v5627, %v4987
      %v5692 = vmul.f32 %v5628, %v4988
      %v5693 = vmul.f32 %v5629, %v4989
      %v5694 = vmul.f32 %v5630, %v4990
      %v5695 = vmul.f32 %v5631, %v4991
      %v5696 = vmul.f32 %v5632, %v4992
      %v5697 = vmul.f32 %v5633, %v4993
      %v5698 = vmul.f32 %v5634, %v4994
      %v5699 = vmul.f32 %v5635, %v4995
      %v5700 = vmul.f32 %v5636, %v4996
      %v5701 = vmul.f32 %v5637, %v4997
      %v5702 = vmul.f32 %v5638, %v4998
      %v5703 = vmul.f32 %v5639, %v4999
      %v5704 = vmul.f32 %v5640, %v5000
      %v5705 = vmul.f32 %v5641, %v5001
      %v5706 = vmul.f32 %v5642, %v5002
      %v5707 = vmul.f32 %v5643, %v5003
      %v5708 = vmul.f32 %v5644, %v5004
      %v5709 = vmul.f32 %v5645, %v5005
      %v5710 = vmul.f32 %v5646, %v5006
      %v5711 = vmul.f32 %v5647, %v5007
      %v5712 = vmul.f32 %v5648, %v5008
      %v5713 = vmul.f32 %v5649, %v5009
      %v5714 = vmul.f32 %v5650, %v5010
      %v5715 = vmul.f32 %v5651, %v5011
      %v5716 = vmul.f32 %v5652, %v5012
      %v5717 = vmul.f32 %v5653, %v5013
      %v5718 = vmul.f32 %v5654, %v5014
      %v5719 = vmul.f32 %v5655, %v5015
      %v5720 = vmul.f32 %v5656, %v5016
      %v5721 = vmul.f32 %v5657, %v5017
      %v5722 = vmul.f32 %v5658, %v5018
      %v5723 = vmul.f32 %v5659, %v5019
      %v5724 = vmul.f32 %v5660, %v5020
      %v5725 = vmul.f32 %v5661, %v5021
      %v5726 = vmul.f32 %v5662, %v5022
      %v5727 = vmul.f32 %v5663, %v5023
      %v5728 = vmul.f32 %v5664, %v5024
      %v5729 = vadd.f32 %v5665, -0.016096033
      %v5730 = vadd.f32 %v5666, -0.016096033
      %v5731 = vadd.f32 %v5667, -0.016096033
      %v5732 = vadd.f32 %v5668, -0.016096033
      %v5733 = vadd.f32 %v5669, -0.016096033
      %v5734 = vadd.f32 %v5670, -0.016096033
      %v5735 = vadd.f32 %v5671, -0.016096033
      %v5736 = vadd.f32 %v5672, -0.016096033
      %v5737 = vadd.f32 %v5673, -0.016096033
      %v5738 = vadd.f32 %v5674, -0.016096033
      %v5739 = vadd.f32 %v5675, -0.016096033
      %v5740 = vadd.f32 %v5676, -0.016096033
      %v5741 = vadd.f32 %v5677, -0.016096033
      %v5742 = vadd.f32 %v5678, -0.016096033
      %v5743 = vadd.f32 %v5679, -0.016096033
      %v5744 = vadd.f32 %v5680, -0.016096033
      %v5745 = vadd.f32 %v5681, -0.016096033
      %v5746 = vadd.f32 %v5682, -0.016096033
      %v5747 = vadd.f32 %v5683, -0.016096033
      %v5748 = vadd.f32 %v5684, -0.016096033
      %v5749 = vadd.f32 %v5685, -0.016096033
      %v5750 = vadd.f32 %v5686, -0.016096033
      %v5751 = vadd.f32 %v5687, -0.016096033
      %v5752 = vadd.f32 %v5688, -0.016096033
      %v5753 = vadd.f32 %v5689, -0.016096033
      %v5754 = vadd.f32 %v5690, -0.016096033
      %v5755 = vadd.f32 %v5691, -0.016096033
      %v5756 = vadd.f32 %v5692, -0.016096033
      %v5757 = vadd.f32 %v5693, -0.016096033
      %v5758 = vadd.f32 %v5694, -0.016096033
      %v5759 = vadd.f32 %v5695, -0.016096033
      %v5760 = vadd.f32 %v5696, -0.016096033
      %v5761 = vadd.f32 %v5697, -0.016096033
      %v5762 = vadd.f32 %v5698, -0.016096033
      %v5763 = vadd.f32 %v5699, -0.016096033
      %v5764 = vadd.f32 %v5700, -0.016096033
      %v5765 = vadd.f32 %v5701, -0.016096033
      %v5766 = vadd.f32 %v5702, -0.016096033
      %v5767 = vadd.f32 %v5703, -0.016096033
      %v5768 = vadd.f32 %v5704, -0.016096033
      %v5769 = vadd.f32 %v5705, -0.016096033
      %v5770 = vadd.f32 %v5706, -0.016096033
      %v5771 = vadd.f32 %v5707, -0.016096033
      %v5772 = vadd.f32 %v5708, -0.016096033
      %v5773 = vadd.f32 %v5709, -0.016096033
      %v5774 = vadd.f32 %v5710, -0.016096033
      %v5775 = vadd.f32 %v5711, -0.016096033
      %v5776 = vadd.f32 %v5712, -0.016096033
      %v5777 = vadd.f32 %v5713, -0.016096033
      %v5778 = vadd.f32 %v5714, -0.016096033
      %v5779 = vadd.f32 %v5715, -0.016096033
      %v5780 = vadd.f32 %v5716, -0.016096033
      %v5781 = vadd.f32 %v5717, -0.016096033
      %v5782 = vadd.f32 %v5718, -0.016096033
      %v5783 = vadd.f32 %v5719, -0.016096033
      %v5784 = vadd.f32 %v5720, -0.016096033
      %v5785 = vadd.f32 %v5721, -0.016096033
      %v5786 = vadd.f32 %v5722, -0.016096033
      %v5787 = vadd.f32 %v5723, -0.016096033
      %v5788 = vadd.f32 %v5724, -0.016096033
      %v5789 = vadd.f32 %v5725, -0.016096033
      %v5790 = vadd.f32 %v5726, -0.016096033
      %v5791 = vadd.f32 %v5727, -0.016096033
      %v5792 = vadd.f32 %v5728, -0.016096033
      %v5793 = vmul.f32 %v5729, %v4897
      %v5794 = vmul.f32 %v5730, %v4898
      %v5795 = vmul.f32 %v5731, %v4899
      %v5796 = vmul.f32 %v5732, %v4900
      %v5797 = vmul.f32 %v5733, %v4901
      %v5798 = vmul.f32 %v5734, %v4902
      %v5799 = vmul.f32 %v5735, %v4903
      %v5800 = vmul.f32 %v5736, %v4904
      %v5801 = vmul.f32 %v5737, %v4905
      %v5802 = vmul.f32 %v5738, %v4906
      %v5803 = vmul.f32 %v5739, %v4907
      %v5804 = vmul.f32 %v5740, %v4908
      %v5805 = vmul.f32 %v5741, %v4909
      %v5806 = vmul.f32 %v5742, %v4910
      %v5807 = vmul.f32 %v5743, %v4911
      %v5808 = vmul.f32 %v5744, %v4912
      %v5809 = vmul.f32 %v5745, %v4913
      %v5810 = vmul.f32 %v5746, %v4914
      %v5811 = vmul.f32 %v5747, %v4915
      %v5812 = vmul.f32 %v5748, %v4916
      %v5813 = vmul.f32 %v5749, %v4917
      %v5814 = vmul.f32 %v5750, %v4918
      %v5815 = vmul.f32 %v5751, %v4919
      %v5816 = vmul.f32 %v5752, %v4920
      %v5817 = vmul.f32 %v5753, %v4921
      %v5818 = vmul.f32 %v5754, %v4922
      %v5819 = vmul.f32 %v5755, %v4923
      %v5820 = vmul.f32 %v5756, %v4924
      %v5821 = vmul.f32 %v5757, %v4925
      %v5822 = vmul.f32 %v5758, %v4926
      %v5823 = vmul.f32 %v5759, %v4927
      %v5824 = vmul.f32 %v5760, %v4928
      %v5825 = vmul.f32 %v5761, %v4929
      %v5826 = vmul.f32 %v5762, %v4930
      %v5827 = vmul.f32 %v5763, %v4931
      %v5828 = vmul.f32 %v5764, %v4932
      %v5829 = vmul.f32 %v5765, %v4933
      %v5830 = vmul.f32 %v5766, %v4934
      %v5831 = vmul.f32 %v5767, %v4935
      %v5832 = vmul.f32 %v5768, %v4936
      %v5833 = vmul.f32 %v5769, %v4937
      %v5834 = vmul.f32 %v5770, %v4938
      %v5835 = vmul.f32 %v5771, %v4939
      %v5836 = vmul.f32 %v5772, %v4940
      %v5837 = vmul.f32 %v5773, %v4941
      %v5838 = vmul.f32 %v5774, %v4942
      %v5839 = vmul.f32 %v5775, %v4943
      %v5840 = vmul.f32 %v5776, %v4944
      %v5841 = vmul.f32 %v5777, %v4945
      %v5842 = vmul.f32 %v5778, %v4946
      %v5843 = vmul.f32 %v5779, %v4947
      %v5844 = vmul.f32 %v5780, %v4948
      %v5845 = vmul.f32 %v5781, %v4949
      %v5846 = vmul.f32 %v5782, %v4950
      %v5847 = vmul.f32 %v5783, %v4951
      %v5848 = vmul.f32 %v5784, %v4952
      %v5849 = vmul.f32 %v5785, %v4953
      %v5850 = vmul.f32 %v5786, %v4954
      %v5851 = vmul.f32 %v5787, %v4955
      %v5852 = vmul.f32 %v5788, %v4956
      %v5853 = vmul.f32 %v5789, %v4957
      %v5854 = vmul.f32 %v5790, %v4958
      %v5855 = vmul.f32 %v5791, %v4959
      %v5856 = vmul.f32 %v5792, %v4960
      %v5857 = vmul.f32 %v4961, -1.45660715e-05
      %v5858 = vmul.f32 %v4962, -1.45660715e-05
      %v5859 = vmul.f32 %v4963, -1.45660715e-05
      %v5860 = vmul.f32 %v4964, -1.45660715e-05
      %v5861 = vmul.f32 %v4965, -1.45660715e-05
      %v5862 = vmul.f32 %v4966, -1.45660715e-05
      %v5863 = vmul.f32 %v4967, -1.45660715e-05
      %v5864 = vmul.f32 %v4968, -1.45660715e-05
      %v5865 = vmul.f32 %v4969, -1.45660715e-05
      %v5866 = vmul.f32 %v4970, -1.45660715e-05
      %v5867 = vmul.f32 %v4971, -1.45660715e-05
      %v5868 = vmul.f32 %v4972, -1.45660715e-05
      %v5869 = vmul.f32 %v4973, -1.45660715e-05
      %v5870 = vmul.f32 %v4974, -1.45660715e-05
      %v5871 = vmul.f32 %v4975, -1.45660715e-05
      %v5872 = vmul.f32 %v4976, -1.45660715e-05
      %v5873 = vmul.f32 %v4977, -1.45660715e-05
      %v5874 = vmul.f32 %v4978, -1.45660715e-05
      %v5875 = vmul.f32 %v4979, -1.45660715e-05
      %v5876 = vmul.f32 %v4980, -1.45660715e-05
      %v5877 = vmul.f32 %v4981, -1.45660715e-05
      %v5878 = vmul.f32 %v4982, -1.45660715e-05
      %v5879 = vmul.f32 %v4983, -1.45660715e-05
      %v5880 = vmul.f32 %v4984, -1.45660715e-05
      %v5881 = vmul.f32 %v4985, -1.45660715e-05
      %v5882 = vmul.f32 %v4986, -1.45660715e-05
      %v5883 = vmul.f32 %v4987, -1.45660715e-05
      %v5884 = vmul.f32 %v4988, -1.45660715e-05
      %v5885 = vmul.f32 %v4989, -1.45660715e-05
      %v5886 = vmul.f32 %v4990, -1.45660715e-05
      %v5887 = vmul.f32 %v4991, -1.45660715e-05
      %v5888 = vmul.f32 %v4992, -1.45660715e-05
      %v5889 = vmul.f32 %v4993, -1.45660715e-05
      %v5890 = vmul.f32 %v4994, -1.45660715e-05
      %v5891 = vmul.f32 %v4995, -1.45660715e-05
      %v5892 = vmul.f32 %v4996, -1.45660715e-05
      %v5893 = vmul.f32 %v4997, -1.45660715e-05
      %v5894 = vmul.f32 %v4998, -1.45660715e-05
      %v5895 = vmul.f32 %v4999, -1.45660715e-05
      %v5896 = vmul.f32 %v5000, -1.45660715e-05
      %v5897 = vmul.f32 %v5001, -1.45660715e-05
      %v5898 = vmul.f32 %v5002, -1.45660715e-05
      %v5899 = vmul.f32 %v5003, -1.45660715e-05
      %v5900 = vmul.f32 %v5004, -1.45660715e-05
      %v5901 = vmul.f32 %v5005, -1.45660715e-05
      %v5902 = vmul.f32 %v5006, -1.45660715e-05
      %v5903 = vmul.f32 %v5007, -1.45660715e-05
      %v5904 = vmul.f32 %v5008, -1.45660715e-05
      %v5905 = vmul.f32 %v5009, -1.45660715e-05
      %v5906 = vmul.f32 %v5010, -1.45660715e-05
      %v5907 = vmul.f32 %v5011, -1.45660715e-05
      %v5908 = vmul.f32 %v5012, -1.45660715e-05
      %v5909 = vmul.f32 %v5013, -1.45660715e-05
      %v5910 = vmul.f32 %v5014, -1.45660715e-05
      %v5911 = vmul.f32 %v5015, -1.45660715e-05
      %v5912 = vmul.f32 %v5016, -1.45660715e-05
      %v5913 = vmul.f32 %v5017, -1.45660715e-05
      %v5914 = vmul.f32 %v5018, -1.45660715e-05
      %v5915 = vmul.f32 %v5019, -1.45660715e-05
      %v5916 = vmul.f32 %v5020, -1.45660715e-05
      %v5917 = vmul.f32 %v5021, -1.45660715e-05
      %v5918 = vmul.f32 %v5022, -1.45660715e-05
      %v5919 = vmul.f32 %v5023, -1.45660715e-05
      %v5920 = vmul.f32 %v5024, -1.45660715e-05
      %v5921 = vadd.f32 %v5857, -0.00021337405
      %v5922 = vadd.f32 %v5858, -0.00021337405
      %v5923 = vadd.f32 %v5859, -0.00021337405
      %v5924 = vadd.f32 %v5860, -0.00021337405
      %v5925 = vadd.f32 %v5861, -0.00021337405
      %v5926 = vadd.f32 %v5862, -0.00021337405
      %v5927 = vadd.f32 %v5863, -0.00021337405
      %v5928 = vadd.f32 %v5864, -0.00021337405
      %v5929 = vadd.f32 %v5865, -0.00021337405
      %v5930 = vadd.f32 %v5866, -0.00021337405
      %v5931 = vadd.f32 %v5867, -0.00021337405
      %v5932 = vadd.f32 %v5868, -0.00021337405
      %v5933 = vadd.f32 %v5869, -0.00021337405
      %v5934 = vadd.f32 %v5870, -0.00021337405
      %v5935 = vadd.f32 %v5871, -0.00021337405
      %v5936 = vadd.f32 %v5872, -0.00021337405
      %v5937 = vadd.f32 %v5873, -0.00021337405
      %v5938 = vadd.f32 %v5874, -0.00021337405
      %v5939 = vadd.f32 %v5875, -0.00021337405
      %v5940 = vadd.f32 %v5876, -0.00021337405
      %v5941 = vadd.f32 %v5877, -0.00021337405
      %v5942 = vadd.f32 %v5878, -0.00021337405
      %v5943 = vadd.f32 %v5879, -0.00021337405
      %v5944 = vadd.f32 %v5880, -0.00021337405
      %v5945 = vadd.f32 %v5881, -0.00021337405
      %v5946 = vadd.f32 %v5882, -0.00021337405
      %v5947 = vadd.f32 %v5883, -0.00021337405
      %v5948 = vadd.f32 %v5884, -0.00021337405
      %v5949 = vadd.f32 %v5885, -0.00021337405
      %v5950 = vadd.f32 %v5886, -0.00021337405
      %v5951 = vadd.f32 %v5887, -0.00021337405
      %v5952 = vadd.f32 %v5888, -0.00021337405
      %v5953 = vadd.f32 %v5889, -0.00021337405
      %v5954 = vadd.f32 %v5890, -0.00021337405
      %v5955 = vadd.f32 %v5891, -0.00021337405
      %v5956 = vadd.f32 %v5892, -0.00021337405
      %v5957 = vadd.f32 %v5893, -0.00021337405
      %v5958 = vadd.f32 %v5894, -0.00021337405
      %v5959 = vadd.f32 %v5895, -0.00021337405
      %v5960 = vadd.f32 %v5896, -0.00021337405
      %v5961 = vadd.f32 %v5897, -0.00021337405
      %v5962 = vadd.f32 %v5898, -0.00021337405
      %v5963 = vadd.f32 %v5899, -0.00021337405
      %v5964 = vadd.f32 %v5900, -0.00021337405
      %v5965 = vadd.f32 %v5901, -0.00021337405
      %v5966 = vadd.f32 %v5902, -0.00021337405
      %v5967 = vadd.f32 %v5903, -0.00021337405
      %v5968 = vadd.f32 %v5904, -0.00021337405
      %v5969 = vadd.f32 %v5905, -0.00021337405
      %v5970 = vadd.f32 %v5906, -0.00021337405
      %v5971 = vadd.f32 %v5907, -0.00021337405
      %v5972 = vadd.f32 %v5908, -0.00021337405
      %v5973 = vadd.f32 %v5909, -0.00021337405
      %v5974 = vadd.f32 %v5910, -0.00021337405
      %v5975 = vadd.f32 %v5911, -0.00021337405
      %v5976 = vadd.f32 %v5912, -0.00021337405
      %v5977 = vadd.f32 %v5913, -0.00021337405
      %v5978 = vadd.f32 %v5914, -0.00021337405
      %v5979 = vadd.f32 %v5915, -0.00021337405
      %v5980 = vadd.f32 %v5916, -0.00021337405
      %v5981 = vadd.f32 %v5917, -0.00021337405
      %v5982 = vadd.f32 %v5918, -0.00021337405
      %v5983 = vadd.f32 %v5919, -0.00021337405
      %v5984 = vadd.f32 %v5920, -0.00021337405
      %v5985 = vmul.f32 %v5921, %v4961
      %v5986 = vmul.f32 %v5922, %v4962
      %v5987 = vmul.f32 %v5923, %v4963
      %v5988 = vmul.f32 %v5924, %v4964
      %v5989 = vmul.f32 %v5925, %v4965
      %v5990 = vmul.f32 %v5926, %v4966
      %v5991 = vmul.f32 %v5927, %v4967
      %v5992 = vmul.f32 %v5928, %v4968
      %v5993 = vmul.f32 %v5929, %v4969
      %v5994 = vmul.f32 %v5930, %v4970
      %v5995 = vmul.f32 %v5931, %v4971
      %v5996 = vmul.f32 %v5932, %v4972
      %v5997 = vmul.f32 %v5933, %v4973
      %v5998 = vmul.f32 %v5934, %v4974
      %v5999 = vmul.f32 %v5935, %v4975
      %v6000 = vmul.f32 %v5936, %v4976
      %v6001 = vmul.f32 %v5937, %v4977
      %v6002 = vmul.f32 %v5938, %v4978
      %v6003 = vmul.f32 %v5939, %v4979
      %v6004 = vmul.f32 %v5940, %v4980
      %v6005 = vmul.f32 %v5941, %v4981
      %v6006 = vmul.f32 %v5942, %v4982
      %v6007 = vmul.f32 %v5943, %v4983
      %v6008 = vmul.f32 %v5944, %v4984
      %v6009 = vmul.f32 %v5945, %v4985
      %v6010 = vmul.f32 %v5946, %v4986
      %v6011 = vmul.f32 %v5947, %v4987
      %v6012 = vmul.f32 %v5948, %v4988
      %v6013 = vmul.f32 %v5949, %v4989
      %v6014 = vmul.f32 %v5950, %v4990
      %v6015 = vmul.f32 %v5951, %v4991
      %v6016 = vmul.f32 %v5952, %v4992
      %v6017 = vmul.f32 %v5953, %v4993
      %v6018 = vmul.f32 %v5954, %v4994
      %v6019 = vmul.f32 %v5955, %v4995
      %v6020 = vmul.f32 %v5956, %v4996
      %v6021 = vmul.f32 %v5957, %v4997
      %v6022 = vmul.f32 %v5958, %v4998
      %v6023 = vmul.f32 %v5959, %v4999
      %v6024 = vmul.f32 %v5960, %v5000
      %v6025 = vmul.f32 %v5961, %v5001
      %v6026 = vmul.f32 %v5962, %v5002
      %v6027 = vmul.f32 %v5963, %v5003
      %v6028 = vmul.f32 %v5964, %v5004
      %v6029 = vmul.f32 %v5965, %v5005
      %v6030 = vmul.f32 %v5966, %v5006
      %v6031 = vmul.f32 %v5967, %v5007
      %v6032 = vmul.f32 %v5968, %v5008
      %v6033 = vmul.f32 %v5969, %v5009
      %v6034 = vmul.f32 %v5970, %v5010
      %v6035 = vmul.f32 %v5971, %v5011
      %v6036 = vmul.f32 %v5972, %v5012
      %v6037 = vmul.f32 %v5973, %v5013
      %v6038 = vmul.f32 %v5974, %v5014
      %v6039 = vmul.f32 %v5975, %v5015
      %v6040 = vmul.f32 %v5976, %v5016
      %v6041 = vmul.f32 %v5977, %v5017
      %v6042 = vmul.f32 %v5978, %v5018
      %v6043 = vmul.f32 %v5979, %v5019
      %v6044 = vmul.f32 %v5980, %v5020
      %v6045 = vmul.f32 %v5981, %v5021
      %v6046 = vmul.f32 %v5982, %v5022
      %v6047 = vmul.f32 %v5983, %v5023
      %v6048 = vmul.f32 %v5984, %v5024
      %v6049 = vadd.f32 %v5985, -0.001682827
      %v6050 = vadd.f32 %v5986, -0.001682827
      %v6051 = vadd.f32 %v5987, -0.001682827
      %v6052 = vadd.f32 %v5988, -0.001682827
      %v6053 = vadd.f32 %v5989, -0.001682827
      %v6054 = vadd.f32 %v5990, -0.001682827
      %v6055 = vadd.f32 %v5991, -0.001682827
      %v6056 = vadd.f32 %v5992, -0.001682827
      %v6057 = vadd.f32 %v5993, -0.001682827
      %v6058 = vadd.f32 %v5994, -0.001682827
      %v6059 = vadd.f32 %v5995, -0.001682827
      %v6060 = vadd.f32 %v5996, -0.001682827
      %v6061 = vadd.f32 %v5997, -0.001682827
      %v6062 = vadd.f32 %v5998, -0.001682827
      %v6063 = vadd.f32 %v5999, -0.001682827
      %v6064 = vadd.f32 %v6000, -0.001682827
      %v6065 = vadd.f32 %v6001, -0.001682827
      %v6066 = vadd.f32 %v6002, -0.001682827
      %v6067 = vadd.f32 %v6003, -0.001682827
      %v6068 = vadd.f32 %v6004, -0.001682827
      %v6069 = vadd.f32 %v6005, -0.001682827
      %v6070 = vadd.f32 %v6006, -0.001682827
      %v6071 = vadd.f32 %v6007, -0.001682827
      %v6072 = vadd.f32 %v6008, -0.001682827
      %v6073 = vadd.f32 %v6009, -0.001682827
      %v6074 = vadd.f32 %v6010, -0.001682827
      %v6075 = vadd.f32 %v6011, -0.001682827
      %v6076 = vadd.f32 %v6012, -0.001682827
      %v6077 = vadd.f32 %v6013, -0.001682827
      %v6078 = vadd.f32 %v6014, -0.001682827
      %v6079 = vadd.f32 %v6015, -0.001682827
      %v6080 = vadd.f32 %v6016, -0.001682827
      %v6081 = vadd.f32 %v6017, -0.001682827
      %v6082 = vadd.f32 %v6018, -0.001682827
      %v6083 = vadd.f32 %v6019, -0.001682827
      %v6084 = vadd.f32 %v6020, -0.001682827
      %v6085 = vadd.f32 %v6021, -0.001682827
      %v6086 = vadd.f32 %v6022, -0.001682827
      %v6087 = vadd.f32 %v6023, -0.001682827
      %v6088 = vadd.f32 %v6024, -0.001682827
      %v6089 = vadd.f32 %v6025, -0.001682827
      %v6090 = vadd.f32 %v6026, -0.001682827
      %v6091 = vadd.f32 %v6027, -0.001682827
      %v6092 = vadd.f32 %v6028, -0.001682827
      %v6093 = vadd.f32 %v6029, -0.001682827
      %v6094 = vadd.f32 %v6030, -0.001682827
      %v6095 = vadd.f32 %v6031, -0.001682827
      %v6096 = vadd.f32 %v6032, -0.001682827
      %v6097 = vadd.f32 %v6033, -0.001682827
      %v6098 = vadd.f32 %v6034, -0.001682827
      %v6099 = vadd.f32 %v6035, -0.001682827
      %v6100 = vadd.f32 %v6036, -0.001682827
      %v6101 = vadd.f32 %v6037, -0.001682827
      %v6102 = vadd.f32 %v6038, -0.001682827
      %v6103 = vadd.f32 %v6039, -0.001682827
      %v6104 = vadd.f32 %v6040, -0.001682827
      %v6105 = vadd.f32 %v6041, -0.001682827
      %v6106 = vadd.f32 %v6042, -0.001682827
      %v6107 = vadd.f32 %v6043, -0.001682827
      %v6108 = vadd.f32 %v6044, -0.001682827
      %v6109 = vadd.f32 %v6045, -0.001682827
      %v6110 = vadd.f32 %v6046, -0.001682827
      %v6111 = vadd.f32 %v6047, -0.001682827
      %v6112 = vadd.f32 %v6048, -0.001682827
      %v6113 = vmul.f32 %v6049, %v4961
      %v6114 = vmul.f32 %v6050, %v4962
      %v6115 = vmul.f32 %v6051, %v4963
      %v6116 = vmul.f32 %v6052, %v4964
      %v6117 = vmul.f32 %v6053, %v4965
      %v6118 = vmul.f32 %v6054, %v4966
      %v6119 = vmul.f32 %v6055, %v4967
      %v6120 = vmul.f32 %v6056, %v4968
      %v6121 = vmul.f32 %v6057, %v4969
      %v6122 = vmul.f32 %v6058, %v4970
      %v6123 = vmul.f32 %v6059, %v4971
      %v6124 = vmul.f32 %v6060, %v4972
      %v6125 = vmul.f32 %v6061, %v4973
      %v6126 = vmul.f32 %v6062, %v4974
      %v6127 = vmul.f32 %v6063, %v4975
      %v6128 = vmul.f32 %v6064, %v4976
      %v6129 = vmul.f32 %v6065, %v4977
      %v6130 = vmul.f32 %v6066, %v4978
      %v6131 = vmul.f32 %v6067, %v4979
      %v6132 = vmul.f32 %v6068, %v4980
      %v6133 = vmul.f32 %v6069, %v4981
      %v6134 = vmul.f32 %v6070, %v4982
      %v6135 = vmul.f32 %v6071, %v4983
      %v6136 = vmul.f32 %v6072, %v4984
      %v6137 = vmul.f32 %v6073, %v4985
      %v6138 = vmul.f32 %v6074, %v4986
      %v6139 = vmul.f32 %v6075, %v4987
      %v6140 = vmul.f32 %v6076, %v4988
      %v6141 = vmul.f32 %v6077, %v4989
      %v6142 = vmul.f32 %v6078, %v4990
      %v6143 = vmul.f32 %v6079, %v4991
      %v6144 = vmul.f32 %v6080, %v4992
      %v6145 = vmul.f32 %v6081, %v4993
      %v6146 = vmul.f32 %v6082, %v4994
      %v6147 = vmul.f32 %v6083, %v4995
      %v6148 = vmul.f32 %v6084, %v4996
      %v6149 = vmul.f32 %v6085, %v4997
      %v6150 = vmul.f32 %v6086, %v4998
      %v6151 = vmul.f32 %v6087, %v4999
      %v6152 = vmul.f32 %v6088, %v5000
      %v6153 = vmul.f32 %v6089, %v5001
      %v6154 = vmul.f32 %v6090, %v5002
      %v6155 = vmul.f32 %v6091, %v5003
      %v6156 = vmul.f32 %v6092, %v5004
      %v6157 = vmul.f32 %v6093, %v5005
      %v6158 = vmul.f32 %v6094, %v5006
      %v6159 = vmul.f32 %v6095, %v5007
      %v6160 = vmul.f32 %v6096, %v5008
      %v6161 = vmul.f32 %v6097, %v5009
      %v6162 = vmul.f32 %v6098, %v5010
      %v6163 = vmul.f32 %v6099, %v5011
      %v6164 = vmul.f32 %v6100, %v5012
      %v6165 = vmul.f32 %v6101, %v5013
      %v6166 = vmul.f32 %v6102, %v5014
      %v6167 = vmul.f32 %v6103, %v5015
      %v6168 = vmul.f32 %v6104, %v5016
      %v6169 = vmul.f32 %v6105, %v5017
      %v6170 = vmul.f32 %v6106, %v5018
      %v6171 = vmul.f32 %v6107, %v5019
      %v6172 = vmul.f32 %v6108, %v5020
      %v6173 = vmul.f32 %v6109, %v5021
      %v6174 = vmul.f32 %v6110, %v5022
      %v6175 = vmul.f32 %v6111, %v5023
      %v6176 = vmul.f32 %v6112, %v5024
      %v6177 = vadd.f32 %v6113, -0.0073733293
      %v6178 = vadd.f32 %v6114, -0.0073733293
      %v6179 = vadd.f32 %v6115, -0.0073733293
      %v6180 = vadd.f32 %v6116, -0.0073733293
      %v6181 = vadd.f32 %v6117, -0.0073733293
      %v6182 = vadd.f32 %v6118, -0.0073733293
      %v6183 = vadd.f32 %v6119, -0.0073733293
      %v6184 = vadd.f32 %v6120, -0.0073733293
      %v6185 = vadd.f32 %v6121, -0.0073733293
      %v6186 = vadd.f32 %v6122, -0.0073733293
      %v6187 = vadd.f32 %v6123, -0.0073733293
      %v6188 = vadd.f32 %v6124, -0.0073733293
      %v6189 = vadd.f32 %v6125, -0.0073733293
      %v6190 = vadd.f32 %v6126, -0.0073733293
      %v6191 = vadd.f32 %v6127, -0.0073733293
      %v6192 = vadd.f32 %v6128, -0.0073733293
      %v6193 = vadd.f32 %v6129, -0.0073733293
      %v6194 = vadd.f32 %v6130, -0.0073733293
      %v6195 = vadd.f32 %v6131, -0.0073733293
      %v6196 = vadd.f32 %v6132, -0.0073733293
      %v6197 = vadd.f32 %v6133, -0.0073733293
      %v6198 = vadd.f32 %v6134, -0.0073733293
      %v6199 = vadd.f32 %v6135, -0.0073733293
      %v6200 = vadd.f32 %v6136, -0.0073733293
      %v6201 = vadd.f32 %v6137, -0.0073733293
      %v6202 = vadd.f32 %v6138, -0.0073733293
      %v6203 = vadd.f32 %v6139, -0.0073733293
      %v6204 = vadd.f32 %v6140, -0.0073733293
      %v6205 = vadd.f32 %v6141, -0.0073733293
      %v6206 = vadd.f32 %v6142, -0.0073733293
      %v6207 = vadd.f32 %v6143, -0.0073733293
      %v6208 = vadd.f32 %v6144, -0.0073733293
      %v6209 = vadd.f32 %v6145, -0.0073733293
      %v6210 = vadd.f32 %v6146, -0.0073733293
      %v6211 = vadd.f32 %v6147, -0.0073733293
      %v6212 = vadd.f32 %v6148, -0.0073733293
      %v6213 = vadd.f32 %v6149, -0.0073733293
      %v6214 = vadd.f32 %v6150, -0.0073733293
      %v6215 = vadd.f32 %v6151, -0.0073733293
      %v6216 = vadd.f32 %v6152, -0.0073733293
      %v6217 = vadd.f32 %v6153, -0.0073733293
      %v6218 = vadd.f32 %v6154, -0.0073733293
      %v6219 = vadd.f32 %v6155, -0.0073733293
      %v6220 = vadd.f32 %v6156, -0.0073733293
      %v6221 = vadd.f32 %v6157, -0.0073733293
      %v6222 = vadd.f32 %v6158, -0.0073733293
      %v6223 = vadd.f32 %v6159, -0.0073733293
      %v6224 = vadd.f32 %v6160, -0.0073733293
      %v6225 = vadd.f32 %v6161, -0.0073733293
      %v6226 = vadd.f32 %v6162, -0.0073733293
      %v6227 = vadd.f32 %v6163, -0.0073733293
      %v6228 = vadd.f32 %v6164, -0.0073733293
      %v6229 = vadd.f32 %v6165, -0.0073733293
      %v6230 = vadd.f32 %v6166, -0.0073733293
      %v6231 = vadd.f32 %v6167, -0.0073733293
      %v6232 = vadd.f32 %v6168, -0.0073733293
      %v6233 = vadd.f32 %v6169, -0.0073733293
      %v6234 = vadd.f32 %v6170, -0.0073733293
      %v6235 = vadd.f32 %v6171, -0.0073733293
      %v6236 = vadd.f32 %v6172, -0.0073733293
      %v6237 = vadd.f32 %v6173, -0.0073733293
      %v6238 = vadd.f32 %v6174, -0.0073733293
      %v6239 = vadd.f32 %v6175, -0.0073733293
      %v6240 = vadd.f32 %v6176, -0.0073733293
      %v6241 = vmul.f32 %v6177, %v4961
      %v6242 = vmul.f32 %v6178, %v4962
      %v6243 = vmul.f32 %v6179, %v4963
      %v6244 = vmul.f32 %v6180, %v4964
      %v6245 = vmul.f32 %v6181, %v4965
      %v6246 = vmul.f32 %v6182, %v4966
      %v6247 = vmul.f32 %v6183, %v4967
      %v6248 = vmul.f32 %v6184, %v4968
      %v6249 = vmul.f32 %v6185, %v4969
      %v6250 = vmul.f32 %v6186, %v4970
      %v6251 = vmul.f32 %v6187, %v4971
      %v6252 = vmul.f32 %v6188, %v4972
      %v6253 = vmul.f32 %v6189, %v4973
      %v6254 = vmul.f32 %v6190, %v4974
      %v6255 = vmul.f32 %v6191, %v4975
      %v6256 = vmul.f32 %v6192, %v4976
      %v6257 = vmul.f32 %v6193, %v4977
      %v6258 = vmul.f32 %v6194, %v4978
      %v6259 = vmul.f32 %v6195, %v4979
      %v6260 = vmul.f32 %v6196, %v4980
      %v6261 = vmul.f32 %v6197, %v4981
      %v6262 = vmul.f32 %v6198, %v4982
      %v6263 = vmul.f32 %v6199, %v4983
      %v6264 = vmul.f32 %v6200, %v4984
      %v6265 = vmul.f32 %v6201, %v4985
      %v6266 = vmul.f32 %v6202, %v4986
      %v6267 = vmul.f32 %v6203, %v4987
      %v6268 = vmul.f32 %v6204, %v4988
      %v6269 = vmul.f32 %v6205, %v4989
      %v6270 = vmul.f32 %v6206, %v4990
      %v6271 = vmul.f32 %v6207, %v4991
      %v6272 = vmul.f32 %v6208, %v4992
      %v6273 = vmul.f32 %v6209, %v4993
      %v6274 = vmul.f32 %v6210, %v4994
      %v6275 = vmul.f32 %v6211, %v4995
      %v6276 = vmul.f32 %v6212, %v4996
      %v6277 = vmul.f32 %v6213, %v4997
      %v6278 = vmul.f32 %v6214, %v4998
      %v6279 = vmul.f32 %v6215, %v4999
      %v6280 = vmul.f32 %v6216, %v5000
      %v6281 = vmul.f32 %v6217, %v5001
      %v6282 = vmul.f32 %v6218, %v5002
      %v6283 = vmul.f32 %v6219, %v5003
      %v6284 = vmul.f32 %v6220, %v5004
      %v6285 = vmul.f32 %v6221, %v5005
      %v6286 = vmul.f32 %v6222, %v5006
      %v6287 = vmul.f32 %v6223, %v5007
      %v6288 = vmul.f32 %v6224, %v5008
      %v6289 = vmul.f32 %v6225, %v5009
      %v6290 = vmul.f32 %v6226, %v5010
      %v6291 = vmul.f32 %v6227, %v5011
      %v6292 = vmul.f32 %v6228, %v5012
      %v6293 = vmul.f32 %v6229, %v5013
      %v6294 = vmul.f32 %v6230, %v5014
      %v6295 = vmul.f32 %v6231, %v5015
      %v6296 = vmul.f32 %v6232, %v5016
      %v6297 = vmul.f32 %v6233, %v5017
      %v6298 = vmul.f32 %v6234, %v5018
      %v6299 = vmul.f32 %v6235, %v5019
      %v6300 = vmul.f32 %v6236, %v5020
      %v6301 = vmul.f32 %v6237, %v5021
      %v6302 = vmul.f32 %v6238, %v5022
      %v6303 = vmul.f32 %v6239, %v5023
      %v6304 = vmul.f32 %v6240, %v5024
      %v6305 = vadd.f32 %v6241, -0.014264739
      %v6306 = vadd.f32 %v6242, -0.014264739
      %v6307 = vadd.f32 %v6243, -0.014264739
      %v6308 = vadd.f32 %v6244, -0.014264739
      %v6309 = vadd.f32 %v6245, -0.014264739
      %v6310 = vadd.f32 %v6246, -0.014264739
      %v6311 = vadd.f32 %v6247, -0.014264739
      %v6312 = vadd.f32 %v6248, -0.014264739
      %v6313 = vadd.f32 %v6249, -0.014264739
      %v6314 = vadd.f32 %v6250, -0.014264739
      %v6315 = vadd.f32 %v6251, -0.014264739
      %v6316 = vadd.f32 %v6252, -0.014264739
      %v6317 = vadd.f32 %v6253, -0.014264739
      %v6318 = vadd.f32 %v6254, -0.014264739
      %v6319 = vadd.f32 %v6255, -0.014264739
      %v6320 = vadd.f32 %v6256, -0.014264739
      %v6321 = vadd.f32 %v6257, -0.014264739
      %v6322 = vadd.f32 %v6258, -0.014264739
      %v6323 = vadd.f32 %v6259, -0.014264739
      %v6324 = vadd.f32 %v6260, -0.014264739
      %v6325 = vadd.f32 %v6261, -0.014264739
      %v6326 = vadd.f32 %v6262, -0.014264739
      %v6327 = vadd.f32 %v6263, -0.014264739
      %v6328 = vadd.f32 %v6264, -0.014264739
      %v6329 = vadd.f32 %v6265, -0.014264739
      %v6330 = vadd.f32 %v6266, -0.014264739
      %v6331 = vadd.f32 %v6267, -0.014264739
      %v6332 = vadd.f32 %v6268, -0.014264739
      %v6333 = vadd.f32 %v6269, -0.014264739
      %v6334 = vadd.f32 %v6270, -0.014264739
      %v6335 = vadd.f32 %v6271, -0.014264739
      %v6336 = vadd.f32 %v6272, -0.014264739
      %v6337 = vadd.f32 %v6273, -0.014264739
      %v6338 = vadd.f32 %v6274, -0.014264739
      %v6339 = vadd.f32 %v6275, -0.014264739
      %v6340 = vadd.f32 %v6276, -0.014264739
      %v6341 = vadd.f32 %v6277, -0.014264739
      %v6342 = vadd.f32 %v6278, -0.014264739
      %v6343 = vadd.f32 %v6279, -0.014264739
      %v6344 = vadd.f32 %v6280, -0.014264739
      %v6345 = vadd.f32 %v6281, -0.014264739
      %v6346 = vadd.f32 %v6282, -0.014264739
      %v6347 = vadd.f32 %v6283, -0.014264739
      %v6348 = vadd.f32 %v6284, -0.014264739
      %v6349 = vadd.f32 %v6285, -0.014264739
      %v6350 = vadd.f32 %v6286, -0.014264739
      %v6351 = vadd.f32 %v6287, -0.014264739
      %v6352 = vadd.f32 %v6288, -0.014264739
      %v6353 = vadd.f32 %v6289, -0.014264739
      %v6354 = vadd.f32 %v6290, -0.014264739
      %v6355 = vadd.f32 %v6291, -0.014264739
      %v6356 = vadd.f32 %v6292, -0.014264739
      %v6357 = vadd.f32 %v6293, -0.014264739
      %v6358 = vadd.f32 %v6294, -0.014264739
      %v6359 = vadd.f32 %v6295, -0.014264739
      %v6360 = vadd.f32 %v6296, -0.014264739
      %v6361 = vadd.f32 %v6297, -0.014264739
      %v6362 = vadd.f32 %v6298, -0.014264739
      %v6363 = vadd.f32 %v6299, -0.014264739
      %v6364 = vadd.f32 %v6300, -0.014264739
      %v6365 = vadd.f32 %v6301, -0.014264739
      %v6366 = vadd.f32 %v6302, -0.014264739
      %v6367 = vadd.f32 %v6303, -0.014264739
      %v6368 = vadd.f32 %v6304, -0.014264739
      %v6369 = vrcp.pop %v6305
      %v6370 = vrcp.pop %v6306
      %v6371 = vrcp.pop %v6307
      %v6372 = vrcp.pop %v6308
      %v6373 = vrcp.pop %v6309
      %v6374 = vrcp.pop %v6310
      %v6375 = vrcp.pop %v6311
      %v6376 = vrcp.pop %v6312
      %v6377 = vrcp.pop %v6313
      %v6378 = vrcp.pop %v6314
      %v6379 = vrcp.pop %v6315
      %v6380 = vrcp.pop %v6316
      %v6381 = vrcp.pop %v6317
      %v6382 = vrcp.pop %v6318
      %v6383 = vrcp.pop %v6319
      %v6384 = vrcp.pop %v6320
      %v6385 = vrcp.pop %v6321
      %v6386 = vrcp.pop %v6322
      %v6387 = vrcp.pop %v6323
      %v6388 = vrcp.pop %v6324
      %v6389 = vrcp.pop %v6325
      %v6390 = vrcp.pop %v6326
      %v6391 = vrcp.pop %v6327
      %v6392 = vrcp.pop %v6328
      %v6393 = vrcp.pop %v6329
      %v6394 = vrcp.pop %v6330
      %v6395 = vrcp.pop %v6331
      %v6396 = vrcp.pop %v6332
      %v6397 = vrcp.pop %v6333
      %v6398 = vrcp.pop %v6334
      %v6399 = vrcp.pop %v6335
      %v6400 = vrcp.pop %v6336
      %v6401 = vrcp.pop %v6337
      %v6402 = vrcp.pop %v6338
      %v6403 = vrcp.pop %v6339
      %v6404 = vrcp.pop %v6340
      %v6405 = vrcp.pop %v6341
      %v6406 = vrcp.pop %v6342
      %v6407 = vrcp.pop %v6343
      %v6408 = vrcp.pop %v6344
      %v6409 = vrcp.pop %v6345
      %v6410 = vrcp.pop %v6346
      %v6411 = vrcp.pop %v6347
      %v6412 = vrcp.pop %v6348
      %v6413 = vrcp.pop %v6349
      %v6414 = vrcp.pop %v6350
      %v6415 = vrcp.pop %v6351
      %v6416 = vrcp.pop %v6352
      %v6417 = vrcp.pop %v6353
      %v6418 = vrcp.pop %v6354
      %v6419 = vrcp.pop %v6355
      %v6420 = vrcp.pop %v6356
      %v6421 = vrcp.pop %v6357
      %v6422 = vrcp.pop %v6358
      %v6423 = vrcp.pop %v6359
      %v6424 = vrcp.pop %v6360
      %v6425 = vrcp.pop %v6361
      %v6426 = vrcp.pop %v6362
      %v6427 = vrcp.pop %v6363
      %v6428 = vrcp.pop %v6364
      %v6429 = vrcp.pop %v6365
      %v6430 = vrcp.pop %v6366
      %v6431 = vrcp.pop %v6367
      %v6432 = vrcp.pop %v6368
      %v6433 = vmul.f32 %v5793, %v6369
      %v6434 = vmul.f32 %v5794, %v6370
      %v6435 = vmul.f32 %v5795, %v6371
      %v6436 = vmul.f32 %v5796, %v6372
      %v6437 = vmul.f32 %v5797, %v6373
      %v6438 = vmul.f32 %v5798, %v6374
      %v6439 = vmul.f32 %v5799, %v6375
      %v6440 = vmul.f32 %v5800, %v6376
      %v6441 = vmul.f32 %v5801, %v6377
      %v6442 = vmul.f32 %v5802, %v6378
      %v6443 = vmul.f32 %v5803, %v6379
      %v6444 = vmul.f32 %v5804, %v6380
      %v6445 = vmul.f32 %v5805, %v6381
      %v6446 = vmul.f32 %v5806, %v6382
      %v6447 = vmul.f32 %v5807, %v6383
      %v6448 = vmul.f32 %v5808, %v6384
      %v6449 = vmul.f32 %v5809, %v6385
      %v6450 = vmul.f32 %v5810, %v6386
      %v6451 = vmul.f32 %v5811, %v6387
      %v6452 = vmul.f32 %v5812, %v6388
      %v6453 = vmul.f32 %v5813, %v6389
      %v6454 = vmul.f32 %v5814, %v6390
      %v6455 = vmul.f32 %v5815, %v6391
      %v6456 = vmul.f32 %v5816, %v6392
      %v6457 = vmul.f32 %v5817, %v6393
      %v6458 = vmul.f32 %v5818, %v6394
      %v6459 = vmul.f32 %v5819, %v6395
      %v6460 = vmul.f32 %v5820, %v6396
      %v6461 = vmul.f32 %v5821, %v6397
      %v6462 = vmul.f32 %v5822, %v6398
      %v6463 = vmul.f32 %v5823, %v6399
      %v6464 = vmul.f32 %v5824, %v6400
      %v6465 = vmul.f32 %v5825, %v6401
      %v6466 = vmul.f32 %v5826, %v6402
      %v6467 = vmul.f32 %v5827, %v6403
      %v6468 = vmul.f32 %v5828, %v6404
      %v6469 = vmul.f32 %v5829, %v6405
      %v6470 = vmul.f32 %v5830, %v6406
      %v6471 = vmul.f32 %v5831, %v6407
      %v6472 = vmul.f32 %v5832, %v6408
      %v6473 = vmul.f32 %v5833, %v6409
      %v6474 = vmul.f32 %v5834, %v6410
      %v6475 = vmul.f32 %v5835, %v6411
      %v6476 = vmul.f32 %v5836, %v6412
      %v6477 = vmul.f32 %v5837, %v6413
      %v6478 = vmul.f32 %v5838, %v6414
      %v6479 = vmul.f32 %v5839, %v6415
      %v6480 = vmul.f32 %v5840, %v6416
      %v6481 = vmul.f32 %v5841, %v6417
      %v6482 = vmul.f32 %v5842, %v6418
      %v6483 = vmul.f32 %v5843, %v6419
      %v6484 = vmul.f32 %v5844, %v6420
      %v6485 = vmul.f32 %v5845, %v6421
      %v6486 = vmul.f32 %v5846, %v6422
      %v6487 = vmul.f32 %v5847, %v6423
      %v6488 = vmul.f32 %v5848, %v6424
      %v6489 = vmul.f32 %v5849, %v6425
      %v6490 = vmul.f32 %v5850, %v6426
      %v6491 = vmul.f32 %v5851, %v6427
      %v6492 = vmul.f32 %v5852, %v6428
      %v6493 = vmul.f32 %v5853, %v6429
      %v6494 = vmul.f32 %v5854, %v6430
      %v6495 = vmul.f32 %v5855, %v6431
      %v6496 = vmul.f32 %v5856, %v6432
      %v6497 = vadd.f32 %v6433, 1.0
      %v6498 = vadd.f32 %v6434, 1.0
      %v6499 = vadd.f32 %v6435, 1.0
      %v6500 = vadd.f32 %v6436, 1.0
      %v6501 = vadd.f32 %v6437, 1.0
      %v6502 = vadd.f32 %v6438, 1.0
      %v6503 = vadd.f32 %v6439, 1.0
      %v6504 = vadd.f32 %v6440, 1.0
      %v6505 = vadd.f32 %v6441, 1.0
      %v6506 = vadd.f32 %v6442, 1.0
      %v6507 = vadd.f32 %v6443, 1.0
      %v6508 = vadd.f32 %v6444, 1.0
      %v6509 = vadd.f32 %v6445, 1.0
      %v6510 = vadd.f32 %v6446, 1.0
      %v6511 = vadd.f32 %v6447, 1.0
      %v6512 = vadd.f32 %v6448, 1.0
      %v6513 = vadd.f32 %v6449, 1.0
      %v6514 = vadd.f32 %v6450, 1.0
      %v6515 = vadd.f32 %v6451, 1.0
      %v6516 = vadd.f32 %v6452, 1.0
      %v6517 = vadd.f32 %v6453, 1.0
      %v6518 = vadd.f32 %v6454, 1.0
      %v6519 = vadd.f32 %v6455, 1.0
      %v6520 = vadd.f32 %v6456, 1.0
      %v6521 = vadd.f32 %v6457, 1.0
      %v6522 = vadd.f32 %v6458, 1.0
      %v6523 = vadd.f32 %v6459, 1.0
      %v6524 = vadd.f32 %v6460, 1.0
      %v6525 = vadd.f32 %v6461, 1.0
      %v6526 = vadd.f32 %v6462, 1.0
      %v6527 = vadd.f32 %v6463, 1.0
      %v6528 = vadd.f32 %v6464, 1.0
      %v6529 = vadd.f32 %v6465, 1.0
      %v6530 = vadd.f32 %v6466, 1.0
      %v6531 = vadd.f32 %v6467, 1.0
      %v6532 = vadd.f32 %v6468, 1.0
      %v6533 = vadd.f32 %v6469, 1.0
      %v6534 = vadd.f32 %v6470, 1.0
      %v6535 = vadd.f32 %v6471, 1.0
      %v6536 = vadd.f32 %v6472, 1.0
      %v6537 = vadd.f32 %v6473, 1.0
      %v6538 = vadd.f32 %v6474, 1.0
      %v6539 = vadd.f32 %v6475, 1.0
      %v6540 = vadd.f32 %v6476, 1.0
      %v6541 = vadd.f32 %v6477, 1.0
      %v6542 = vadd.f32 %v6478, 1.0
      %v6543 = vadd.f32 %v6479, 1.0
      %v6544 = vadd.f32 %v6480, 1.0
      %v6545 = vadd.f32 %v6481, 1.0
      %v6546 = vadd.f32 %v6482, 1.0
      %v6547 = vadd.f32 %v6483, 1.0
      %v6548 = vadd.f32 %v6484, 1.0
      %v6549 = vadd.f32 %v6485, 1.0
      %v6550 = vadd.f32 %v6486, 1.0
      %v6551 = vadd.f32 %v6487, 1.0
      %v6552 = vadd.f32 %v6488, 1.0
      %v6553 = vadd.f32 %v6489, 1.0
      %v6554 = vadd.f32 %v6490, 1.0
      %v6555 = vadd.f32 %v6491, 1.0
      %v6556 = vadd.f32 %v6492, 1.0
      %v6557 = vadd.f32 %v6493, 1.0
      %v6558 = vadd.f32 %v6494, 1.0
      %v6559 = vadd.f32 %v6495, 1.0
      %v6560 = vadd.f32 %v6496, 1.0
      %v6561 = vmul.f32 %v4705, %v6497
      %v6562 = vmul.f32 %v4706, %v6498
      %v6563 = vmul.f32 %v4707, %v6499
      %v6564 = vmul.f32 %v4708, %v6500
      %v6565 = vmul.f32 %v4709, %v6501
      %v6566 = vmul.f32 %v4710, %v6502
      %v6567 = vmul.f32 %v4711, %v6503
      %v6568 = vmul.f32 %v4712, %v6504
      %v6569 = vmul.f32 %v4713, %v6505
      %v6570 = vmul.f32 %v4714, %v6506
      %v6571 = vmul.f32 %v4715, %v6507
      %v6572 = vmul.f32 %v4716, %v6508
      %v6573 = vmul.f32 %v4717, %v6509
      %v6574 = vmul.f32 %v4718, %v6510
      %v6575 = vmul.f32 %v4719, %v6511
      %v6576 = vmul.f32 %v4720, %v6512
      %v6577 = vmul.f32 %v4721, %v6513
      %v6578 = vmul.f32 %v4722, %v6514
      %v6579 = vmul.f32 %v4723, %v6515
      %v6580 = vmul.f32 %v4724, %v6516
      %v6581 = vmul.f32 %v4725, %v6517
      %v6582 = vmul.f32 %v4726, %v6518
      %v6583 = vmul.f32 %v4727, %v6519
      %v6584 = vmul.f32 %v4728, %v6520
      %v6585 = vmul.f32 %v4729, %v6521
      %v6586 = vmul.f32 %v4730, %v6522
      %v6587 = vmul.f32 %v4731, %v6523
      %v6588 = vmul.f32 %v4732, %v6524
      %v6589 = vmul.f32 %v4733, %v6525
      %v6590 = vmul.f32 %v4734, %v6526
      %v6591 = vmul.f32 %v4735, %v6527
      %v6592 = vmul.f32 %v4736, %v6528
      %v6593 = vmul.f32 %v4737, %v6529
      %v6594 = vmul.f32 %v4738, %v6530
      %v6595 = vmul.f32 %v4739, %v6531
      %v6596 = vmul.f32 %v4740, %v6532
      %v6597 = vmul.f32 %v4741, %v6533
      %v6598 = vmul.f32 %v4742, %v6534
      %v6599 = vmul.f32 %v4743, %v6535
      %v6600 = vmul.f32 %v4744, %v6536
      %v6601 = vmul.f32 %v4745, %v6537
      %v6602 = vmul.f32 %v4746, %v6538
      %v6603 = vmul.f32 %v4747, %v6539
      %v6604 = vmul.f32 %v4748, %v6540
      %v6605 = vmul.f32 %v4749, %v6541
      %v6606 = vmul.f32 %v4750, %v6542
      %v6607 = vmul.f32 %v4751, %v6543
      %v6608 = vmul.f32 %v4752, %v6544
      %v6609 = vmul.f32 %v4753, %v6545
      %v6610 = vmul.f32 %v4754, %v6546
      %v6611 = vmul.f32 %v4755, %v6547
      %v6612 = vmul.f32 %v4756, %v6548
      %v6613 = vmul.f32 %v4757, %v6549
      %v6614 = vmul.f32 %v4758, %v6550
      %v6615 = vmul.f32 %v4759, %v6551
      %v6616 = vmul.f32 %v4760, %v6552
      %v6617 = vmul.f32 %v4761, %v6553
      %v6618 = vmul.f32 %v4762, %v6554
      %v6619 = vmul.f32 %v4763, %v6555
      %v6620 = vmul.f32 %v4764, %v6556
      %v6621 = vmul.f32 %v4765, %v6557
      %v6622 = vmul.f32 %v4766, %v6558
      %v6623 = vmul.f32 %v4767, %v6559
      %v6624 = vmul.f32 %v4768, %v6560
      %v6625 = vpack.c.bf16 %v6565, %v6561
      %v6626 = vpack.c.bf16 %v6566, %v6562
      %v6627 = vpack.c.bf16 %v6567, %v6563
      %v6628 = vpack.c.bf16 %v6568, %v6564
      %v6629 = vpack.c.bf16 %v6573, %v6569
      %v6630 = vpack.c.bf16 %v6574, %v6570
      %v6631 = vpack.c.bf16 %v6575, %v6571
      %v6632 = vpack.c.bf16 %v6576, %v6572
      %v6633 = vpack.c.bf16 %v6581, %v6577
      %v6634 = vpack.c.bf16 %v6582, %v6578
      %v6635 = vpack.c.bf16 %v6583, %v6579
      %v6636 = vpack.c.bf16 %v6584, %v6580
      %v6637 = vpack.c.bf16 %v6589, %v6585
      %v6638 = vpack.c.bf16 %v6590, %v6586
      %v6639 = vpack.c.bf16 %v6591, %v6587
      %v6640 = vpack.c.bf16 %v6592, %v6588
      %v6641 = vpack.c.bf16 %v6597, %v6593
      %v6642 = vpack.c.bf16 %v6598, %v6594
      %v6643 = vpack.c.bf16 %v6599, %v6595
      %v6644 = vpack.c.bf16 %v6600, %v6596
      %v6645 = vpack.c.bf16 %v6605, %v6601
      %v6646 = vpack.c.bf16 %v6606, %v6602
      %v6647 = vpack.c.bf16 %v6607, %v6603
      %v6648 = vpack.c.bf16 %v6608, %v6604
      %v6649 = vpack.c.bf16 %v6613, %v6609
      %v6650 = vpack.c.bf16 %v6614, %v6610
      %v6651 = vpack.c.bf16 %v6615, %v6611
      %v6652 = vpack.c.bf16 %v6616, %v6612
      %v6653 = vpack.c.bf16 %v6621, %v6617
      %v6654 = vpack.c.bf16 %v6622, %v6618
      %v6655 = vpack.c.bf16 %v6623, %v6619
      %v6656 = vpack.c.bf16 %v6624, %v6620
      %v6657 = vld [vmem:[%s10] sm:$0xf]
      %v6658 = vld [vmem:[%s10 + $0x4] sm:$0xf]
      %v6659 = vld [vmem:[%s10 + $0x8] sm:$0xf]
      %v6660 = vld [vmem:[%s10 + $0xc] sm:$0xf]
      %v6661 = vld [vmem:[%s10 + $0x10] sm:$0xf]
      %v6662 = vld [vmem:[%s10 + $0x14] sm:$0xf]
      %v6663 = vld [vmem:[%s10 + $0x18] sm:$0xf]
      %v6664 = vld [vmem:[%s10 + $0x1c] sm:$0xf]
      %v6665 = vld [vmem:[%s10 + $0x20] sm:$0xf]
      %v6666 = vld [vmem:[%s10 + $0x24] sm:$0xf]
      %v6667 = vld [vmem:[%s10 + $0x28] sm:$0xf]
      %v6668 = vld [vmem:[%s10 + $0x2c] sm:$0xf]
      %v6669 = vld [vmem:[%s10 + $0x30] sm:$0xf]
      %v6670 = vld [vmem:[%s10 + $0x34] sm:$0xf]
      %v6671 = vld [vmem:[%s10 + $0x38] sm:$0xf]
      %v6672 = vld [vmem:[%s10 + $0x3c] sm:$0xf]
      %v6673 = vld [vmem:[%s10 + $0x40] sm:$0xf]
      %v6674 = vld [vmem:[%s10 + $0x44] sm:$0xf]
      %v6675 = vld [vmem:[%s10 + $0x48] sm:$0xf]
      %v6676 = vld [vmem:[%s10 + $0x4c] sm:$0xf]
      %v6677 = vld [vmem:[%s10 + $0x50] sm:$0xf]
      %v6678 = vld [vmem:[%s10 + $0x54] sm:$0xf]
      %v6679 = vld [vmem:[%s10 + $0x58] sm:$0xf]
      %v6680 = vld [vmem:[%s10 + $0x5c] sm:$0xf]
      %v6681 = vld [vmem:[%s10 + $0x60] sm:$0xf]
      %v6682 = vld [vmem:[%s10 + $0x64] sm:$0xf]
      %v6683 = vld [vmem:[%s10 + $0x68] sm:$0xf]
      %v6684 = vld [vmem:[%s10 + $0x6c] sm:$0xf]
      %v6685 = vld [vmem:[%s10 + $0x70] sm:$0xf]
      %v6686 = vld [vmem:[%s10 + $0x74] sm:$0xf]
      %v6687 = vld [vmem:[%s10 + $0x78] sm:$0xf]
      %v6688 = vld [vmem:[%s10 + $0x7c] sm:$0xf]
      %v6689 = vld [vmem:[%s10 + $0x80] sm:$0xf]
      %v6690 = vld [vmem:[%s10 + $0x84] sm:$0xf]
      %v6691 = vld [vmem:[%s10 + $0x88] sm:$0xf]
      %v6692 = vld [vmem:[%s10 + $0x8c] sm:$0xf]
      %v6693 = vld [vmem:[%s10 + $0x90] sm:$0xf]
      %v6694 = vld [vmem:[%s10 + $0x94] sm:$0xf]
      %v6695 = vld [vmem:[%s10 + $0x98] sm:$0xf]
      %v6696 = vld [vmem:[%s10 + $0x9c] sm:$0xf]
      %v6697 = vld [vmem:[%s10 + $0xa0] sm:$0xf]
      %v6698 = vld [vmem:[%s10 + $0xa4] sm:$0xf]
      %v6699 = vld [vmem:[%s10 + $0xa8] sm:$0xf]
      %v6700 = vld [vmem:[%s10 + $0xac] sm:$0xf]
      %v6701 = vld [vmem:[%s10 + $0xb0] sm:$0xf]
      %v6702 = vld [vmem:[%s10 + $0xb4] sm:$0xf]
      %v6703 = vld [vmem:[%s10 + $0xb8] sm:$0xf]
      %v6704 = vld [vmem:[%s10 + $0xbc] sm:$0xf]
      %v6705 = vld [vmem:[%s10 + $0xc0] sm:$0xf]
      %v6706 = vld [vmem:[%s10 + $0xc4] sm:$0xf]
      %v6707 = vld [vmem:[%s10 + $0xc8] sm:$0xf]
      %v6708 = vld [vmem:[%s10 + $0xcc] sm:$0xf]
      %v6709 = vld [vmem:[%s10 + $0xd0] sm:$0xf]
      %v6710 = vld [vmem:[%s10 + $0xd4] sm:$0xf]
      %v6711 = vld [vmem:[%s10 + $0xd8] sm:$0xf]
      %v6712 = vld [vmem:[%s10 + $0xdc] sm:$0xf]
      %v6713 = vld [vmem:[%s10 + $0xe0] sm:$0xf]
      %v6714 = vld [vmem:[%s10 + $0xe4] sm:$0xf]
      %v6715 = vld [vmem:[%s10 + $0xe8] sm:$0xf]
      %v6716 = vld [vmem:[%s10 + $0xec] sm:$0xf]
      %v6717 = vld [vmem:[%s10 + $0xf0] sm:$0xf]
      %v6718 = vld [vmem:[%s10 + $0xf4] sm:$0xf]
      %v6719 = vld [vmem:[%s10 + $0xf8] sm:$0xf]
      %v6720 = vld [vmem:[%s10 + $0xfc] sm:$0xf]
      %v6721 = vld [vmem:[%s11] sm:$0x1]
      %v6723 = vperm.slane %v6721, 0
      %v6789 = vunpack.c.l.b16 %v6657
      %v6790 = vunpack.c.l.b16 %v6658
      %v6791 = vunpack.c.l.b16 %v6659
      %v6792 = vunpack.c.l.b16 %v6660
      %v6793 = vunpack.c.l.b16 %v6661
      %v6794 = vunpack.c.l.b16 %v6662
      %v6795 = vunpack.c.l.b16 %v6663
      %v6796 = vunpack.c.l.b16 %v6664
      %v6797 = vunpack.c.l.b16 %v6665
      %v6798 = vunpack.c.l.b16 %v6666
      %v6799 = vunpack.c.l.b16 %v6667
      %v6800 = vunpack.c.l.b16 %v6668
      %v6801 = vunpack.c.l.b16 %v6669
      %v6802 = vunpack.c.l.b16 %v6670
      %v6803 = vunpack.c.l.b16 %v6671
      %v6804 = vunpack.c.l.b16 %v6672
      %v6805 = vunpack.c.l.b16 %v6673
      %v6806 = vunpack.c.l.b16 %v6674
      %v6807 = vunpack.c.l.b16 %v6675
      %v6808 = vunpack.c.l.b16 %v6676
      %v6809 = vunpack.c.l.b16 %v6677
      %v6810 = vunpack.c.l.b16 %v6678
      %v6811 = vunpack.c.l.b16 %v6679
      %v6812 = vunpack.c.l.b16 %v6680
      %v6813 = vunpack.c.l.b16 %v6681
      %v6814 = vunpack.c.l.b16 %v6682
      %v6815 = vunpack.c.l.b16 %v6683
      %v6816 = vunpack.c.l.b16 %v6684
      %v6817 = vunpack.c.l.b16 %v6685
      %v6818 = vunpack.c.l.b16 %v6686
      %v6819 = vunpack.c.l.b16 %v6687
      %v6820 = vunpack.c.l.b16 %v6688
      %v6821 = vunpack.c.l.b16 %v6689
      %v6822 = vunpack.c.l.b16 %v6690
      %v6823 = vunpack.c.l.b16 %v6691
      %v6824 = vunpack.c.l.b16 %v6692
      %v6825 = vunpack.c.l.b16 %v6693
      %v6826 = vunpack.c.l.b16 %v6694
      %v6827 = vunpack.c.l.b16 %v6695
      %v6828 = vunpack.c.l.b16 %v6696
      %v6829 = vunpack.c.l.b16 %v6697
      %v6830 = vunpack.c.l.b16 %v6698
      %v6831 = vunpack.c.l.b16 %v6699
      %v6832 = vunpack.c.l.b16 %v6700
      %v6833 = vunpack.c.l.b16 %v6701
      %v6834 = vunpack.c.l.b16 %v6702
      %v6835 = vunpack.c.l.b16 %v6703
      %v6836 = vunpack.c.l.b16 %v6704
      %v6837 = vunpack.c.l.b16 %v6705
      %v6838 = vunpack.c.l.b16 %v6706
      %v6839 = vunpack.c.l.b16 %v6707
      %v6840 = vunpack.c.l.b16 %v6708
      %v6841 = vunpack.c.l.b16 %v6709
      %v6842 = vunpack.c.l.b16 %v6710
      %v6843 = vunpack.c.l.b16 %v6711
      %v6844 = vunpack.c.l.b16 %v6712
      %v6845 = vunpack.c.l.b16 %v6713
      %v6846 = vunpack.c.l.b16 %v6714
      %v6847 = vunpack.c.l.b16 %v6715
      %v6848 = vunpack.c.l.b16 %v6716
      %v6849 = vunpack.c.l.b16 %v6717
      %v6850 = vunpack.c.l.b16 %v6718
      %v6851 = vunpack.c.l.b16 %v6719
      %v6852 = vunpack.c.l.b16 %v6720
      %v6853 = vpack.c.b16 %v6790, %v6789
      %v6854 = vpack.c.b16 %v6792, %v6791
      %v6855 = vpack.c.b16 %v6794, %v6793
      %v6856 = vpack.c.b16 %v6796, %v6795
      %v6857 = vpack.c.b16 %v6798, %v6797
      %v6858 = vpack.c.b16 %v6800, %v6799
      %v6859 = vpack.c.b16 %v6802, %v6801
      %v6860 = vpack.c.b16 %v6804, %v6803
      %v6861 = vpack.c.b16 %v6806, %v6805
      %v6862 = vpack.c.b16 %v6808, %v6807
      %v6863 = vpack.c.b16 %v6810, %v6809
      %v6864 = vpack.c.b16 %v6812, %v6811
      %v6865 = vpack.c.b16 %v6814, %v6813
      %v6866 = vpack.c.b16 %v6816, %v6815
      %v6867 = vpack.c.b16 %v6818, %v6817
      %v6868 = vpack.c.b16 %v6820, %v6819
      %v6869 = vpack.c.b16 %v6822, %v6821
      %v6870 = vpack.c.b16 %v6824, %v6823
      %v6871 = vpack.c.b16 %v6826, %v6825
      %v6872 = vpack.c.b16 %v6828, %v6827
      %v6873 = vpack.c.b16 %v6830, %v6829
      %v6874 = vpack.c.b16 %v6832, %v6831
      %v6875 = vpack.c.b16 %v6834, %v6833
      %v6876 = vpack.c.b16 %v6836, %v6835
      %v6877 = vpack.c.b16 %v6838, %v6837
      %v6878 = vpack.c.b16 %v6840, %v6839
      %v6879 = vpack.c.b16 %v6842, %v6841
      %v6880 = vpack.c.b16 %v6844, %v6843
      %v6881 = vpack.c.b16 %v6846, %v6845
      %v6882 = vpack.c.b16 %v6848, %v6847
      %v6883 = vpack.c.b16 %v6850, %v6849
      %v6884 = vpack.c.b16 %v6852, %v6851
      %6917 = vmatpush.bf16.msra.mxu0 %v6860
      %6918 = vmatpush.bf16.msra.mxu0 %v6859
      %6919 = vmatpush.bf16.msra.mxu0 %v6858
      %6920 = vmatpush.bf16.msra.mxu0 %v6857
      %6921 = vmatpush.bf16.msra.mxu0 %v6856
      %6922 = vmatpush.bf16.msra.mxu0 %v6855
      %6923 = vmatpush.bf16.msra.mxu0 %v6854
      %6924 = vmatpush.bf16.msra.mxu0 %v6853
      %6925 = vmatmul.bf16.gmra.mxu0 %v6625
      %v6926 = vpop.f32.mrf.mxu0
      %v6927 = vadd.f32 %v6723, %v6926
      %v6928 = vpop.f32.mrf.mxu0
      %v6929 = vadd.f32 %v6723, %v6928
      %6930 = vmatmul.bf16.gmra.mxu0 %v6629
      %v6931 = vpop.f32.mrf.mxu0
      %v6932 = vadd.f32 %v6723, %v6931
      %v6933 = vpop.f32.mrf.mxu0
      %v6934 = vadd.f32 %v6723, %v6933
      %6935 = vmatmul.bf16.gmra.mxu0 %v6633
      %v6936 = vpop.f32.mrf.mxu0
      %v6937 = vadd.f32 %v6723, %v6936
      %v6938 = vpop.f32.mrf.mxu0
      %v6939 = vadd.f32 %v6723, %v6938
      %6940 = vmatmul.bf16.gmra.mxu0 %v6637
      %v6941 = vpop.f32.mrf.mxu0
      %v6942 = vadd.f32 %v6723, %v6941
      %v6943 = vpop.f32.mrf.mxu0
      %v6944 = vadd.f32 %v6723, %v6943
      %6945 = vmatmul.bf16.gmra.mxu0 %v6641
      %v6946 = vpop.f32.mrf.mxu0
      %v6947 = vadd.f32 %v6723, %v6946
      %v6948 = vpop.f32.mrf.mxu0
      %v6949 = vadd.f32 %v6723, %v6948
      %6950 = vmatmul.bf16.gmra.mxu0 %v6645
      %v6951 = vpop.f32.mrf.mxu0
      %v6952 = vadd.f32 %v6723, %v6951
      %v6953 = vpop.f32.mrf.mxu0
      %v6954 = vadd.f32 %v6723, %v6953
      %6955 = vmatmul.bf16.gmra.mxu0 %v6649
      %v6956 = vpop.f32.mrf.mxu0
      %v6957 = vadd.f32 %v6723, %v6956
      %v6958 = vpop.f32.mrf.mxu0
      %v6959 = vadd.f32 %v6723, %v6958
      %6960 = vmatmul.bf16.gmra.mxu0 %v6653
      %v6961 = vpop.f32.mrf.mxu0
      %v6962 = vadd.f32 %v6723, %v6961
      %v6963 = vpop.f32.mrf.mxu0
      %v6964 = vadd.f32 %v6723, %v6963
      %6965 = vdwg.mxu0
      %6966 = vmatpush.bf16.msra.mxu0 %v6868
      %6967 = vmatpush.bf16.msra.mxu0 %v6867
      %6968 = vmatpush.bf16.msra.mxu0 %v6866
      %6969 = vmatpush.bf16.msra.mxu0 %v6865
      %6970 = vmatpush.bf16.msra.mxu0 %v6864
      %6971 = vmatpush.bf16.msra.mxu0 %v6863
      %6972 = vmatpush.bf16.msra.mxu0 %v6862
      %6973 = vmatpush.bf16.msra.mxu0 %v6861
      %6974 = vmatmul.bf16.gmra.mxu0 %v6626
      %v6975 = vpop.f32.mrf.mxu0
      %v6976 = vadd.f32 %v6927, %v6975
      %v6977 = vpop.f32.mrf.mxu0
      %v6978 = vadd.f32 %v6929, %v6977
      %6979 = vmatmul.bf16.gmra.mxu0 %v6630
      %v6980 = vpop.f32.mrf.mxu0
      %v6981 = vadd.f32 %v6932, %v6980
      %v6982 = vpop.f32.mrf.mxu0
      %v6983 = vadd.f32 %v6934, %v6982
      %6984 = vmatmul.bf16.gmra.mxu0 %v6634
      %v6985 = vpop.f32.mrf.mxu0
      %v6986 = vadd.f32 %v6937, %v6985
      %v6987 = vpop.f32.mrf.mxu0
      %v6988 = vadd.f32 %v6939, %v6987
      %6989 = vmatmul.bf16.gmra.mxu0 %v6638
      %v6990 = vpop.f32.mrf.mxu0
      %v6991 = vadd.f32 %v6942, %v6990
      %v6992 = vpop.f32.mrf.mxu0
      %v6993 = vadd.f32 %v6944, %v6992
      %6994 = vmatmul.bf16.gmra.mxu0 %v6642
      %v6995 = vpop.f32.mrf.mxu0
      %v6996 = vadd.f32 %v6947, %v6995
      %v6997 = vpop.f32.mrf.mxu0
      %v6998 = vadd.f32 %v6949, %v6997
      %6999 = vmatmul.bf16.gmra.mxu0 %v6646
      %v7000 = vpop.f32.mrf.mxu0
      %v7001 = vadd.f32 %v6952, %v7000
      %v7002 = vpop.f32.mrf.mxu0
      %v7003 = vadd.f32 %v6954, %v7002
      %7004 = vmatmul.bf16.gmra.mxu0 %v6650
      %v7005 = vpop.f32.mrf.mxu0
      %v7006 = vadd.f32 %v6957, %v7005
      %v7007 = vpop.f32.mrf.mxu0
      %v7008 = vadd.f32 %v6959, %v7007
      %7009 = vmatmul.bf16.gmra.mxu0 %v6654
      %v7010 = vpop.f32.mrf.mxu0
      %v7011 = vadd.f32 %v6962, %v7010
      %v7012 = vpop.f32.mrf.mxu0
      %v7013 = vadd.f32 %v6964, %v7012
      %7014 = vdwg.mxu0
      %7015 = vmatpush.bf16.msra.mxu0 %v6876
      %7016 = vmatpush.bf16.msra.mxu0 %v6875
      %7017 = vmatpush.bf16.msra.mxu0 %v6874
      %7018 = vmatpush.bf16.msra.mxu0 %v6873
      %7019 = vmatpush.bf16.msra.mxu0 %v6872
      %7020 = vmatpush.bf16.msra.mxu0 %v6871
      %7021 = vmatpush.bf16.msra.mxu0 %v6870
      %7022 = vmatpush.bf16.msra.mxu0 %v6869
      %7023 = vmatmul.bf16.gmra.mxu0 %v6627
      %v7024 = vpop.f32.mrf.mxu0
      %v7025 = vadd.f32 %v6976, %v7024
      %v7026 = vpop.f32.mrf.mxu0
      %v7027 = vadd.f32 %v6978, %v7026
      %7028 = vmatmul.bf16.gmra.mxu0 %v6631
      %v7029 = vpop.f32.mrf.mxu0
      %v7030 = vadd.f32 %v6981, %v7029
      %v7031 = vpop.f32.mrf.mxu0
      %v7032 = vadd.f32 %v6983, %v7031
      %7033 = vmatmul.bf16.gmra.mxu0 %v6635
      %v7034 = vpop.f32.mrf.mxu0
      %v7035 = vadd.f32 %v6986, %v7034
      %v7036 = vpop.f32.mrf.mxu0
      %v7037 = vadd.f32 %v6988, %v7036
      %7038 = vmatmul.bf16.gmra.mxu0 %v6639
      %v7039 = vpop.f32.mrf.mxu0
      %v7040 = vadd.f32 %v6991, %v7039
      %v7041 = vpop.f32.mrf.mxu0
      %v7042 = vadd.f32 %v6993, %v7041
      %7043 = vmatmul.bf16.gmra.mxu0 %v6643
      %v7044 = vpop.f32.mrf.mxu0
      %v7045 = vadd.f32 %v6996, %v7044
      %v7046 = vpop.f32.mrf.mxu0
      %v7047 = vadd.f32 %v6998, %v7046
      %7048 = vmatmul.bf16.gmra.mxu0 %v6647
      %v7049 = vpop.f32.mrf.mxu0
      %v7050 = vadd.f32 %v7001, %v7049
      %v7051 = vpop.f32.mrf.mxu0
      %v7052 = vadd.f32 %v7003, %v7051
      %7053 = vmatmul.bf16.gmra.mxu0 %v6651
      %v7054 = vpop.f32.mrf.mxu0
      %v7055 = vadd.f32 %v7006, %v7054
      %v7056 = vpop.f32.mrf.mxu0
      %v7057 = vadd.f32 %v7008, %v7056
      %7058 = vmatmul.bf16.gmra.mxu0 %v6655
      %v7059 = vpop.f32.mrf.mxu0
      %v7060 = vadd.f32 %v7011, %v7059
      %v7061 = vpop.f32.mrf.mxu0
      %v7062 = vadd.f32 %v7013, %v7061
      %7063 = vdwg.mxu0
      %7064 = vmatpush.bf16.msra.mxu0 %v6884
      %7065 = vmatpush.bf16.msra.mxu0 %v6883
      %7066 = vmatpush.bf16.msra.mxu0 %v6882
      %7067 = vmatpush.bf16.msra.mxu0 %v6881
      %7068 = vmatpush.bf16.msra.mxu0 %v6880
      %7069 = vmatpush.bf16.msra.mxu0 %v6879
      %7070 = vmatpush.bf16.msra.mxu0 %v6878
      %7071 = vmatpush.bf16.msra.mxu0 %v6877
      %7072 = vmatmul.bf16.gmra.mxu0 %v6628
      %v7073 = vpop.f32.mrf.mxu0
      %v7074 = vadd.f32 %v7025, %v7073
      %v7075 = vpop.f32.mrf.mxu0
      %v7076 = vadd.f32 %v7027, %v7075
      %7077 = vmatmul.bf16.gmra.mxu0 %v6632
      %v7078 = vpop.f32.mrf.mxu0
      %v7079 = vadd.f32 %v7030, %v7078
      %v7080 = vpop.f32.mrf.mxu0
      %v7081 = vadd.f32 %v7032, %v7080
      %7082 = vmatmul.bf16.gmra.mxu0 %v6636
      %v7083 = vpop.f32.mrf.mxu0
      %v7084 = vadd.f32 %v7035, %v7083
      %v7085 = vpop.f32.mrf.mxu0
      %v7086 = vadd.f32 %v7037, %v7085
      %7087 = vmatmul.bf16.gmra.mxu0 %v6640
      %v7088 = vpop.f32.mrf.mxu0
      %v7089 = vadd.f32 %v7040, %v7088
      %v7090 = vpop.f32.mrf.mxu0
      %v7091 = vadd.f32 %v7042, %v7090
      %7092 = vmatmul.bf16.gmra.mxu0 %v6644
      %v7093 = vpop.f32.mrf.mxu0
      %v7094 = vadd.f32 %v7045, %v7093
      %v7095 = vpop.f32.mrf.mxu0
      %v7096 = vadd.f32 %v7047, %v7095
      %7097 = vmatmul.bf16.gmra.mxu0 %v6648
      %v7098 = vpop.f32.mrf.mxu0
      %v7099 = vadd.f32 %v7050, %v7098
      %v7100 = vpop.f32.mrf.mxu0
      %v7101 = vadd.f32 %v7052, %v7100
      %7102 = vmatmul.bf16.gmra.mxu0 %v6652
      %v7103 = vpop.f32.mrf.mxu0
      %v7104 = vadd.f32 %v7055, %v7103
      %v7105 = vpop.f32.mrf.mxu0
      %v7106 = vadd.f32 %v7057, %v7105
      %7107 = vmatmul.bf16.gmra.mxu0 %v6656
      %v7108 = vpop.f32.mrf.mxu0
      %v7109 = vadd.f32 %v7060, %v7108
      %v7110 = vpop.f32.mrf.mxu0
      %v7111 = vadd.f32 %v7062, %v7110
      %7112 = vdwg.mxu0
      %v7113 = vadd.f32 %v3923, %v7074
      %v7114 = vadd.f32 %v3924, %v7076
      %v7115 = vadd.f32 %v3925, %v7079
      %v7116 = vadd.f32 %v3926, %v7081
      %v7117 = vadd.f32 %v3927, %v7084
      %v7118 = vadd.f32 %v3928, %v7086
      %v7119 = vadd.f32 %v3929, %v7089
      %v7120 = vadd.f32 %v3930, %v7091
      %v7121 = vadd.f32 %v3931, %v7094
      %v7122 = vadd.f32 %v3932, %v7096
      %v7123 = vadd.f32 %v3933, %v7099
      %v7124 = vadd.f32 %v3934, %v7101
      %v7125 = vadd.f32 %v3935, %v7104
      %v7126 = vadd.f32 %v3936, %v7106
      %v7127 = vadd.f32 %v3937, %v7109
      %v7128 = vadd.f32 %v3938, %v7111
      %7129 = vst [vmem:[%s420] sm:$0xff] %v7113
      %7130 = vst [vmem:[%s420 + $0x8] sm:$0xff] %v7114
      %7131 = vst [vmem:[%s420 + $0x10] sm:$0xff] %v7115
      %7132 = vst [vmem:[%s420 + $0x18] sm:$0xff] %v7116
      %7133 = vst [vmem:[%s420 + $0x20] sm:$0xff] %v7117
      %7134 = vst [vmem:[%s420 + $0x28] sm:$0xff] %v7118
      %7135 = vst [vmem:[%s420 + $0x30] sm:$0xff] %v7119
      %7136 = vst [vmem:[%s420 + $0x38] sm:$0xff] %v7120
      %7137 = vst [vmem:[%s420 + $0x40] sm:$0xff] %v7121
      %7138 = vst [vmem:[%s420 + $0x48] sm:$0xff] %v7122
      %7139 = vst [vmem:[%s420 + $0x50] sm:$0xff] %v7123
      %7140 = vst [vmem:[%s420 + $0x58] sm:$0xff] %v7124
      %7141 = vst [vmem:[%s420 + $0x60] sm:$0xff] %v7125
      %7142 = vst [vmem:[%s420 + $0x68] sm:$0xff] %v7126
      %7143 = vst [vmem:[%s420 + $0x70] sm:$0xff] %v7127
      %7144 = vst [vmem:[%s420 + $0x78] sm:$0xff] %v7128
      %s7145 = smul.u32 2, %s23
      %p7146 = scmp.lt.s32.totalorder %s7145, 3
      %s7147 = scalar_select %p7146, %s7145, 3
      %s7148 = smul.addr %s7147, 8
      %s7149 = smul.addr %s7148, 8
      %s7150 = scalar_lea.vmem %s12, %s7149
      // Predicated region
      $region69: #{transformer3d_aux_forward.8} parent=67 // pred_check
        %p7151 = pneg %p298
      $region70: #{transformer3d_aux_forward.8} parent=67 // pred_check_branch
        %7153 = sbr.rel (%p7151) target = $region72
      $region71: #{transformer3d_aux_forward.8} parent=67 // pred_region
        %s7154 = smul.u32 2, %s23
      $region72: #{transformer3d_aux_forward.8} parent=67 // pred_fallthru
        _
    $region68: #{transformer3d_aux_forward.8} parent=5 // pred_fallthru
      _
    %p7155 = scmp.le.s32.totalorder 2, %s18
    // Predicated region
    $region73: #{transformer3d_aux_forward.8} parent=5 // pred_check
      %p7156 = pneg %p7155
    $region74: #{transformer3d_aux_forward.8} parent=5 // pred_check_branch
      %7158 = sbr.rel (%p7156) target = $region76
    $region75: #{transformer3d_aux_forward.8} parent=5 // pred_region
      %s7159 = ssub.s32 %s18, 2
      // Predicated region
      $region77: #{transformer3d_aux_forward.8} parent=75 // pred_check
        %p7160 = pneg %p304
      $region78: #{transformer3d_aux_forward.8} parent=75 // pred_check_branch
        %7162 = sbr.rel (%p7160) target = $region80
      $region79: #{transformer3d_aux_forward.8} parent=75 // pred_region
        %s7163 = smul.u32 2, %s24
        %p7164 = scmp.lt.s32.totalorder %s7163, 3
        %s7165 = scalar_select %p7164, %s7163, 3
        %s7166 = smul.addr %s7165, 8
        %s7167 = smul.addr %s7166, 8
        %s7168 = scalar_lea.vmem %s12, %s7167
      $region80: #{transformer3d_aux_forward.8} parent=75 // pred_fallthru
        _
    $region76: #{transformer3d_aux_forward.8} parent=5 // pred_fallthru
      _
  $region6: #{transformer3d_aux_forward.8} parent=0 // loop_footer
    %s22 = sadd.s32 1, %s18
  $region7: #{transformer3d_aux_forward.8} parent=0 // loop_footer_branch
    %17 = sbr.rel target = $region3
  $region8: #{transformer3d_aux_forward.8} parent=0 // loop_exit
    _

</llo_original>
